<compile_context>
chip_gen: v6e
topology: v6e:2x2x1
jax: 0.10.0
libtpu: 0.0.40
codegen_flags: <defaults>
</compile_context>

<pallas_src>
import functools

import jax
import jax.numpy as jnp
from jax.experimental import pallas as pl
from jax.experimental.pallas import tpu as pltpu


NEG_SLOPE = 0.2        # LeakyReLU slope used by GATLayer / SpatialAttentionLayer
MASK_BIAS = 9.0e15     # matches the -9e15 masking constant of the reference


# --------------------------------------------------------------------------
# Fused multi-head (spatial-)GAT layer kernel
# --------------------------------------------------------------------------
def _gat_heads_kernel(h_ref, wcat_ref, adj_ref, out_ref, *, heads_per_prog, fout,
                      apply_log_softmax):
    """One group of attention heads.

    wcat lane layout: [ W_0 | ... | W_{hg-1} | f1 cols (hg) | f2 cols (hg) ]
    so a single h @ wcat MXU pass produces every head's Wh plus both
    attention-projection vectors (row term f1, column term f2).
    """
    hg, f = heads_per_prog, fout
    h = h_ref[...]                                   # (N, Fin)
    wcat = wcat_ref[0]                               # (Fin, hg*f + 2*hg)
    adj = adj_ref[...]                               # (N, N), 0/1

    whf = jnp.dot(h, wcat, preferred_element_type=jnp.float32)   # (N, hg*f+2*hg)

    # additive adjacency mask: 0 on edges, -9e15 elsewhere (one FMA, no select)
    bias = (adj - 1.0) * MASK_BIAS

    outs = []
    for k in range(hg):
        wh_k = whf[:, k * f:(k + 1) * f]                        # (N, f)
        f1_k = whf[:, hg * f + k:hg * f + k + 1]                # (N, 1) row term
        f2_k = whf[:, hg * f + hg + k:hg * f + hg + k + 1]      # (N, 1) col term

        e = f1_k + f2_k.T                                       # (N, N)
        e = jnp.where(e > 0, e, NEG_SLOPE * e)                  # LeakyReLU(0.2)
        e = e + bias                                            # adjacency mask
        e = e - jnp.max(e, axis=1, keepdims=True)
        p = jnp.exp(e)
        inv = pl.reciprocal(jnp.sum(p, axis=1, keepdims=True), approx=True)
        att = p * inv
        # TODO(synk): F.dropout(attention) skipped (eval-mode identity).
        hp = jnp.dot(att, wh_k, preferred_element_type=jnp.float32)   # (N, f)
        outs.append(jnp.where(hp > 0, hp, jnp.exp(hp) - 1.0))         # ELU

    y = outs[0] if hg == 1 else jnp.concatenate(outs, axis=1)   # (N, hg*f)

    if apply_log_softmax:
        # only used by the single-head "out_att" layers (class axis = lanes)
        z = y - jnp.max(y, axis=1, keepdims=True)
        y = z - jnp.log(jnp.sum(jnp.exp(z), axis=1, keepdims=True))

    out_ref[...] = y


def gat_heads(h, adj, wcat, *, n_heads, fout, apply_log_softmax=False):
    """h: (N, Fin), adj: (N, N), wcat: (G, Fin, hg*fout + 2*hg) -> (N, n_heads*fout)."""
    n, fin = h.shape
    groups = wcat.shape[0]
    hg = n_heads // groups
    assert hg * groups == n_heads
    cols = hg * fout + 2 * hg
    assert wcat.shape == (groups, fin, cols)

    cost = pl.CostEstimate(
        flops=groups * 2 * n * fin * cols + n_heads * (2 * n * n * fout + 6 * n * n),
        transcendentals=n_heads * n * (n + fout + 1),
        bytes_accessed=4 * (groups * (n * fin + n * n) + groups * fin * cols
                            + n * n_heads * fout),
    )
    kern = functools.partial(_gat_heads_kernel, heads_per_prog=hg, fout=fout,
                             apply_log_softmax=apply_log_softmax)
    return pl.pallas_call(
        kern,
        out_shape=jax.ShapeDtypeStruct((n, n_heads * fout), jnp.float32),
        grid_spec=pltpu.PrefetchScalarGridSpec(
            num_scalar_prefetch=0,
            grid=(groups,),
            in_specs=[
                pl.BlockSpec((n, fin), lambda g: (0, 0)),
                pl.BlockSpec((1, fin, cols), lambda g: (g, 0, 0)),
                pl.BlockSpec((n, n), lambda g: (0, 0)),
            ],
            out_specs=pl.BlockSpec((n, hg * fout), lambda g: (0, g)),
        ),
        compiler_params=pltpu.CompilerParams(
            dimension_semantics=("parallel",),     # head groups -> both v7x TCs
            vmem_limit_bytes=32 * 1024 * 1024,
        ),
        cost_estimate=cost,
    )(h, wcat, adj)


# --------------------------------------------------------------------------
# FusionLayer matmul + final log_softmax kernel
# --------------------------------------------------------------------------
def _fusion_kernel(x_ref, w_ref, out_ref):
    y = jnp.dot(x_ref[...], w_ref[...], preferred_element_type=jnp.float32)
    z = y - jnp.max(y, axis=1, keepdims=True)
    out_ref[...] = z - jnp.log(jnp.sum(jnp.exp(z), axis=1, keepdims=True))


def fusion_log_softmax(x, w):
    n, fin = x.shape
    fout = w.shape[1]
    return pl.pallas_call(
        _fusion_kernel,
        out_shape=jax.ShapeDtypeStruct((n, fout), jnp.float32),
        grid_spec=pltpu.PrefetchScalarGridSpec(
            num_scalar_prefetch=0,
            grid=(1,),
            in_specs=[pl.BlockSpec((n, fin), lambda i: (0, 0)),
                      pl.BlockSpec((fin, fout), lambda i: (0, 0))],
            out_specs=pl.BlockSpec((n, fout), lambda i: (0, 0)),
        ),
        compiler_params=pltpu.CompilerParams(
            dimension_semantics=("arbitrary",),
            vmem_limit_bytes=32 * 1024 * 1024),
        cost_estimate=pl.CostEstimate(
            flops=2 * n * fin * fout + 4 * n * fout,
            transcendentals=n * fout,
            bytes_accessed=4 * (n * fin + fin * fout + n * fout)),
    )(x, w)


# --------------------------------------------------------------------------
# Wrapper-side weight folding (tiny XLA ops, done once per call)
# --------------------------------------------------------------------------
def build_wcat_gat(Ws, As, fout, groups):
    """GATLayer:  e[i,j] = a[:F].Wh[i] + a[F:].Wh[j]."""
    n_heads = len(Ws)
    hg = n_heads // groups
    mats = []
    for g in range(groups):
        hw = [Ws[g * hg + k] for k in range(hg)]
        f1 = [Ws[g * hg + k] @ As[g * hg + k][:fout] for k in range(hg)]    # row term
        f2 = [Ws[g * hg + k] @ As[g * hg + k][fout:] for k in range(hg)]    # col term
        mats.append(jnp.concatenate(hw + f1 + f2, axis=1))
    return jnp.stack(mats, axis=0)                 # (G, Fin, hg*F + 2*hg)


def build_wcat_spatial(Ws, As, fout, groups):
    """SpatialAttentionLayer on extended input [h, pos]:
       e[i,j] = a[F:2F].Wh[i] + a[:F].Wh[j] + a[2F:].(pos[i]-pos[j])."""
    n_heads = len(Ws)
    hg = n_heads // groups
    mats = []
    for g in range(groups):
        hw, f1, f2 = [], [], []
        for k in range(hg):
            W, a = Ws[g * hg + k], As[g * hg + k]
            zero3 = jnp.zeros((3, fout), jnp.float32)
            hw.append(jnp.concatenate([W, zero3], axis=0))                          # Wh
            f1.append(jnp.concatenate([W @ a[fout:2 * fout], a[2 * fout:]], axis=0))   # +pos.a
            f2.append(jnp.concatenate([W @ a[:fout], -a[2 * fout:]], axis=0))          # -pos.a
        mats.append(jnp.concatenate(hw + f1 + f2, axis=1))
    return jnp.stack(mats, axis=0)                 # (G, Fin+3, hg*F + 2*hg)


# --------------------------------------------------------------------------
# HoloMol forward (eval mode)
# --------------------------------------------------------------------------
def gat_2d_forward(x, adj, p, *, nhid, nclass, nheads, groups):
    wcat_h = build_wcat_gat(p["head_W"], p["head_a"], nhid, groups)
    y = gat_heads(x, adj, wcat_h, n_heads=nheads, fout=nhid)
    wcat_o = build_wcat_gat([p["out_W"]], [p["out_a"]], nclass, 1)
    return gat_heads(y, adj, wcat_o, n_heads=1, fout=nclass, apply_log_softmax=True)


def gat_3d_forward(x, pos, p, *, nhid, nclass, nheads, groups):
    n = x.shape[0]
    ones_adj = jnp.ones((n, n), jnp.float32)       # spatial attention is unmasked
    xe = jnp.concatenate([x, pos], axis=1)
    wcat_h = build_wcat_spatial(p["head_W"], p["head_a"], nhid, groups)
    y = gat_heads(xe, ones_adj, wcat_h, n_heads=nheads, fout=nhid)
    ye = jnp.concatenate([y, pos], axis=1)
    wcat_o = build_wcat_spatial([p["out_W"]], [p["out_a"]], nclass, 1)
    return gat_heads(ye, ones_adj, wcat_o, n_heads=1, fout=nclass, apply_log_softmax=True)


@functools.partial(jax.jit, static_argnames=("nhid", "nclass", "nheads", "groups"))
def holomol_forward(x2, adj2, x3, pos3, params, *, nhid, nclass, nheads, groups):
    z2 = gat_2d_forward(x2, adj2, params["gat2d"],
                        nhid=nhid, nclass=nclass, nheads=nheads, groups=groups)
    z3 = gat_3d_forward(x3, pos3, params["gat3d"],
                        nhid=nhid, nclass=nclass, nheads=nheads, groups=groups)
    x = jnp.concatenate([z2, z3], axis=1)
    return fusion_log_softmax(x, params["fusion_W"])


# --------------------------------------------------------------------------
# Pure-JAX reference mirroring the PyTorch module (eval mode)
# --------------------------------------------------------------------------
def _gat_layer_ref(h, adj, W, a, fout):
    Wh = h @ W
    e = Wh @ a[:fout] + (Wh @ a[fout:]).T
    e = jnp.where(e > 0, e, NEG_SLOPE * e)
    att = jnp.where(adj > 0, e, jnp.full_like(e, -MASK_BIAS))
    att = jax.nn.softmax(att, axis=1)
    hp = att @ Wh
    return jnp.where(hp > 0, hp, jnp.exp(hp) - 1.0)


def _spatial_layer_ref(h, pos, W, a, fout):
    Wh = h @ W
    g = pos @ a[2 * fout:]
    e = (Wh @ a[fout:2 * fout] + g) + (Wh @ a[:fout] - g).T
    e = jnp.where(e > 0, e, NEG_SLOPE * e)
    att = jax.nn.softmax(e, axis=1)
    hp = att @ Wh
    return jnp.where(hp > 0, hp, jnp.exp(hp) - 1.0)


def holomol_ref(x2, adj, x3, pos, params, *, nhid, nclass):
    p2 = params["gat2d"]
    y2 = jnp.concatenate([_gat_layer_ref(x2, adj, W, a, nhid)
                          for W, a in zip(p2["head_W"], p2["head_a"])], axis=1)
    z2 = jax.nn.log_softmax(_gat_layer_ref(y2, adj, p2["out_W"], p2["out_a"], nclass), axis=1)
    p3 = params["gat3d"]
    y3 = jnp.concatenate([_spatial_layer_ref(x3, pos, W, a, nhid)
                          for W, a in zip(p3["head_W"], p3["head_a"])], axis=1)
    z3 = jax.nn.log_softmax(_spatial_layer_ref(y3, pos, p3["out_W"], p3["out_a"], nclass), axis=1)
    x = jnp.concatenate([z2, z3], axis=1) @ params["fusion_W"]
    return jax.nn.log_softmax(x, axis=1)


# --------------------------------------------------------------------------
def xavier_uniform(key, shape, gain=1.414):
    bound = gain * (6.0 / (shape[0] + shape[1])) ** 0.5
    return jax.random.uniform(key, shape, jnp.float32, -bound, bound)


if __name__ == "__main__":
    N = 64             # graph nodes (atoms)
    NFEAT_2D = 32
    NFEAT_3D = 16
    NHID = 64
    NCLASS = 64        # FusionLayer(nhid*2, nclass) applied to cat of two (N, nclass)
                       # branch outputs requires nclass == nhid in the original module.
    NHEADS = 8
    GROUPS = 2         # 4 heads per program; "parallel" head-group grid axis

    key = jax.random.PRNGKey(0)
    k_in, k_2d, k_3d, k_fuse = jax.random.split(key, 4)

    # ---- inputs ----
    k_x2, k_adj, k_x3, k_pos = jax.random.split(k_in, 4)
    x2 = jax.random.normal(k_x2, (N, NFEAT_2D), jnp.float32)
    adj = (jax.random.uniform(k_adj, (N, N)) > 0.5).astype(jnp.float32)
    adj = jnp.maximum(adj, jnp.eye(N, dtype=jnp.float32))      # self loops
    x3 = jax.random.normal(k_x3, (N, NFEAT_3D), jnp.float32)
    pos = jax.random.normal(k_pos, (N, 3), jnp.float32)

    # ---- parameters (xavier_uniform_, gain=1.414 as in the module __init__) ----
    def make_branch_params(k, fin, nhid, nclass, nheads, extra):
        ks = jax.random.split(k, 2 * nheads + 2)
        return dict(
            head_W=[xavier_uniform(ks[2 * i], (fin, nhid)) for i in range(nheads)],
            head_a=[xavier_uniform(ks[2 * i + 1], (2 * nhid + extra, 1)) for i in range(nheads)],
            out_W=xavier_uniform(ks[-2], (nhid * nheads, nclass)),
            out_a=xavier_uniform(ks[-1], (2 * nclass + extra, 1)),
        )

    params = dict(
        gat2d=make_branch_params(k_2d, NFEAT_2D, NHID, NCLASS, NHEADS, extra=0),
        gat3d=make_branch_params(k_3d, NFEAT_3D, NHID, NCLASS, NHEADS, extra=3),
        fusion_W=xavier_uniform(k_fuse, (2 * NHID, NCLASS)),
    )

    out = holomol_forward(x2, adj, x3, pos, params,
                          nhid=NHID, nclass=NCLASS, nheads=NHEADS, groups=GROUPS)
    out = jax.block_until_ready(out)

    ref = holomol_ref(x2, adj, x3, pos, params, nhid=NHID, nclass=NCLASS)

    assert out.shape == (N, NCLASS)
    assert bool(jnp.all(jnp.isfinite(out)))
    # Loose-ish tolerance: approx EUP reciprocal + different (but valid) matmul
    # association orders compound across two stacked attention layers + fusion.
    max_diff = float(jnp.max(jnp.abs(out - ref)))
    assert jnp.allclose(out, ref, atol=5e-2, rtol=5e-2), f"max abs diff {max_diff}"

    print("KERNEL_OK")
</pallas_src>

<mosaic_0001>
module attributes {stable_mosaic.version = 11 : i64} {
  func.func @_gat_heads_kernel(%arg0: i32, %arg1: memref<64x19xf32, #tpu.memory_space<vmem>>, %arg2: memref<1x19x264xf32, #tpu.memory_space<vmem>>, %arg3: memref<64x64xf32, #tpu.memory_space<vmem>>, %arg4: memref<64x256xf32, #tpu.memory_space<vmem>>) attributes {dimension_semantics = [#tpu.dimension_semantics<parallel>], iteration_bounds = array<i64: 2>, scalar_prefetch = 0 : i64, scratch_operands = 0 : i64, tpu.core_type = #tpu.core_type<tc>, window_params = [{pipeline_mode = #tpu.pipeline_mode<synchronous>, transform_indices = @transform_0, window_bounds = array<i64: 64, 19>}, {transform_indices = @transform_1, window_bounds = array<i64: 1, 19, 264>}, {pipeline_mode = #tpu.pipeline_mode<synchronous>, transform_indices = @transform_2, window_bounds = array<i64: 64, 64>}, {transform_indices = @transform_3, window_bounds = array<i64: 64, 256>}]} {
    %c0 = arith.constant 0 : index
    %c0_0 = arith.constant 0 : index
    %0 = vector.load %arg1[%c0, %c0_0] : memref<64x19xf32, #tpu.memory_space<vmem>>, vector<64x19xf32>
    %c0_1 = arith.constant 0 : index
    %c0_2 = arith.constant 0 : index
    %c0_3 = arith.constant 0 : index
    %1 = vector.load %arg2[%c0_1, %c0_2, %c0_3] : memref<1x19x264xf32, #tpu.memory_space<vmem>>, vector<1x19x264xf32>
    %2 = vector.shape_cast %1 : vector<1x19x264xf32> to vector<19x264xf32>
    %c0_4 = arith.constant 0 : index
    %c0_5 = arith.constant 0 : index
    %3 = vector.load %arg3[%c0_4, %c0_5] : memref<64x64xf32, #tpu.memory_space<vmem>>, vector<64x64xf32>
    %cst = arith.constant dense<0.000000e+00> : vector<64x264xf32>
    %4 = tpu.matmul %0, %2, %cst {dimension_numbers = #tpu.dot_dimension_numbers<[1], [0], [0], [1], [0, 0, 1, 1], [], []>} : vector<64x19xf32>, vector<19x264xf32>, vector<64x264xf32> -> vector<64x264xf32>
    %cst_6 = arith.constant 1.000000e+00 : f32
    %5 = vector.broadcast %cst_6 : f32 to vector<64x64xf32>
    %6 = arith.subf %3, %5 : vector<64x64xf32>
    %cst_7 = arith.constant 9.000000e+15 : f32
    %7 = vector.broadcast %cst_7 : f32 to vector<64x64xf32>
    %8 = arith.mulf %6, %7 : vector<64x64xf32>
    %9 = vector.extract_strided_slice %4 {offsets = [0, 0], sizes = [64, 64], strides = [1, 1]} : vector<64x264xf32> to vector<64x64xf32>
    %10 = vector.extract_strided_slice %4 {offsets = [0, 256], sizes = [64, 1], strides = [1, 1]} : vector<64x264xf32> to vector<64x1xf32>
    %11 = vector.extract_strided_slice %4 {offsets = [0, 260], sizes = [64, 1], strides = [1, 1]} : vector<64x264xf32> to vector<64x1xf32>
    %12 = tpu.transpose %11, [1, 0] : vector<64x1xf32> -> vector<1x64xf32>
    %13 = vector.broadcast %10 : vector<64x1xf32> to vector<64x64xf32>
    %14 = vector.broadcast %12 : vector<1x64xf32> to vector<64x64xf32>
    %15 = arith.addf %13, %14 : vector<64x64xf32>
    %cst_8 = arith.constant 0.000000e+00 : f32
    %16 = vector.broadcast %cst_8 : f32 to vector<64x64xf32>
    %17 = arith.cmpf ogt, %15, %16 : vector<64x64xf32>
    %cst_9 = arith.constant 2.000000e-01 : f32
    %18 = vector.broadcast %cst_9 : f32 to vector<64x64xf32>
    %19 = arith.mulf %18, %15 : vector<64x64xf32>
    %20 = arith.select %17, %15, %19 : vector<64x64xi1>, vector<64x64xf32>
    %21 = arith.addf %20, %8 : vector<64x64xf32>
    %cst_10 = arith.constant dense<0xFF800000> : vector<64xf32>
    %22 = vector.multi_reduction <maximumf>, %21, %cst_10 [1] : vector<64x64xf32> to vector<64xf32>
    %23 = vector.shape_cast %22 : vector<64xf32> to vector<64x1xf32>
    %24 = vector.broadcast %23 : vector<64x1xf32> to vector<64x64xf32>
    %25 = arith.subf %21, %24 : vector<64x64xf32>
    %26 = math.exp %25 : vector<64x64xf32>
    %cst_11 = arith.constant dense<0.000000e+00> : vector<64xf32>
    %27 = vector.multi_reduction <add>, %26, %cst_11 [1] : vector<64x64xf32> to vector<64xf32>
    %28 = vector.shape_cast %27 : vector<64xf32> to vector<64x1xf32>
    %29 = tpu.reciprocal %28 {approx = true} : vector<64x1xf32> -> vector<64x1xf32>
    %30 = vector.broadcast %29 : vector<64x1xf32> to vector<64x64xf32>
    %31 = arith.mulf %26, %30 : vector<64x64xf32>
    %cst_12 = arith.constant dense<0.000000e+00> : vector<64x64xf32>
    %32 = tpu.matmul %31, %9, %cst_12 {dimension_numbers = #tpu.dot_dimension_numbers<[1], [0], [0], [1], [0, 0, 1, 1], [], []>} : vector<64x64xf32>, vector<64x64xf32>, vector<64x64xf32> -> vector<64x64xf32>
    %cst_13 = arith.constant 0.000000e+00 : f32
    %33 = vector.broadcast %cst_13 : f32 to vector<64x64xf32>
    %34 = arith.cmpf ogt, %32, %33 : vector<64x64xf32>
    %35 = math.exp %32 : vector<64x64xf32>
    %cst_14 = arith.constant 1.000000e+00 : f32
    %36 = vector.broadcast %cst_14 : f32 to vector<64x64xf32>
    %37 = arith.subf %35, %36 : vector<64x64xf32>
    %38 = arith.select %34, %32, %37 : vector<64x64xi1>, vector<64x64xf32>
    %39 = vector.extract_strided_slice %4 {offsets = [0, 64], sizes = [64, 64], strides = [1, 1]} : vector<64x264xf32> to vector<64x64xf32>
    %40 = vector.extract_strided_slice %4 {offsets = [0, 257], sizes = [64, 1], strides = [1, 1]} : vector<64x264xf32> to vector<64x1xf32>
    %41 = vector.extract_strided_slice %4 {offsets = [0, 261], sizes = [64, 1], strides = [1, 1]} : vector<64x264xf32> to vector<64x1xf32>
    %42 = tpu.transpose %41, [1, 0] : vector<64x1xf32> -> vector<1x64xf32>
    %43 = vector.broadcast %40 : vector<64x1xf32> to vector<64x64xf32>
    %44 = vector.broadcast %42 : vector<1x64xf32> to vector<64x64xf32>
    %45 = arith.addf %43, %44 : vector<64x64xf32>
    %cst_15 = arith.constant 0.000000e+00 : f32
    %46 = vector.broadcast %cst_15 : f32 to vector<64x64xf32>
    %47 = arith.cmpf ogt, %45, %46 : vector<64x64xf32>
    %cst_16 = arith.constant 2.000000e-01 : f32
    %48 = vector.broadcast %cst_16 : f32 to vector<64x64xf32>
    %49 = arith.mulf %48, %45 : vector<64x64xf32>
    %50 = arith.select %47, %45, %49 : vector<64x64xi1>, vector<64x64xf32>
    %51 = arith.addf %50, %8 : vector<64x64xf32>
    %cst_17 = arith.constant dense<0xFF800000> : vector<64xf32>
    %52 = vector.multi_reduction <maximumf>, %51, %cst_17 [1] : vector<64x64xf32> to vector<64xf32>
    %53 = vector.shape_cast %52 : vector<64xf32> to vector<64x1xf32>
    %54 = vector.broadcast %53 : vector<64x1xf32> to vector<64x64xf32>
    %55 = arith.subf %51, %54 : vector<64x64xf32>
    %56 = math.exp %55 : vector<64x64xf32>
    %cst_18 = arith.constant dense<0.000000e+00> : vector<64xf32>
    %57 = vector.multi_reduction <add>, %56, %cst_18 [1] : vector<64x64xf32> to vector<64xf32>
    %58 = vector.shape_cast %57 : vector<64xf32> to vector<64x1xf32>
    %59 = tpu.reciprocal %58 {approx = true} : vector<64x1xf32> -> vector<64x1xf32>
    %60 = vector.broadcast %59 : vector<64x1xf32> to vector<64x64xf32>
    %61 = arith.mulf %56, %60 : vector<64x64xf32>
    %cst_19 = arith.constant dense<0.000000e+00> : vector<64x64xf32>
    %62 = tpu.matmul %61, %39, %cst_19 {dimension_numbers = #tpu.dot_dimension_numbers<[1], [0], [0], [1], [0, 0, 1, 1], [], []>} : vector<64x64xf32>, vector<64x64xf32>, vector<64x64xf32> -> vector<64x64xf32>
    %cst_20 = arith.constant 0.000000e+00 : f32
    %63 = vector.broadcast %cst_20 : f32 to vector<64x64xf32>
    %64 = arith.cmpf ogt, %62, %63 : vector<64x64xf32>
    %65 = math.exp %62 : vector<64x64xf32>
    %cst_21 = arith.constant 1.000000e+00 : f32
    %66 = vector.broadcast %cst_21 : f32 to vector<64x64xf32>
    %67 = arith.subf %65, %66 : vector<64x64xf32>
    %68 = arith.select %64, %62, %67 : vector<64x64xi1>, vector<64x64xf32>
    %69 = vector.extract_strided_slice %4 {offsets = [0, 128], sizes = [64, 64], strides = [1, 1]} : vector<64x264xf32> to vector<64x64xf32>
    %70 = vector.extract_strided_slice %4 {offsets = [0, 258], sizes = [64, 1], strides = [1, 1]} : vector<64x264xf32> to vector<64x1xf32>
    %71 = vector.extract_strided_slice %4 {offsets = [0, 262], sizes = [64, 1], strides = [1, 1]} : vector<64x264xf32> to vector<64x1xf32>
    %72 = tpu.transpose %71, [1, 0] : vector<64x1xf32> -> vector<1x64xf32>
    %73 = vector.broadcast %70 : vector<64x1xf32> to vector<64x64xf32>
    %74 = vector.broadcast %72 : vector<1x64xf32> to vector<64x64xf32>
    %75 = arith.addf %73, %74 : vector<64x64xf32>
    %cst_22 = arith.constant 0.000000e+00 : f32
    %76 = vector.broadcast %cst_22 : f32 to vector<64x64xf32>
    %77 = arith.cmpf ogt, %75, %76 : vector<64x64xf32>
    %cst_23 = arith.constant 2.000000e-01 : f32
    %78 = vector.broadcast %cst_23 : f32 to vector<64x64xf32>
    %79 = arith.mulf %78, %75 : vector<64x64xf32>
    %80 = arith.select %77, %75, %79 : vector<64x64xi1>, vector<64x64xf32>
    %81 = arith.addf %80, %8 : vector<64x64xf32>
    %cst_24 = arith.constant dense<0xFF800000> : vector<64xf32>
    %82 = vector.multi_reduction <maximumf>, %81, %cst_24 [1] : vector<64x64xf32> to vector<64xf32>
    %83 = vector.shape_cast %82 : vector<64xf32> to vector<64x1xf32>
    %84 = vector.broadcast %83 : vector<64x1xf32> to vector<64x64xf32>
    %85 = arith.subf %81, %84 : vector<64x64xf32>
    %86 = math.exp %85 : vector<64x64xf32>
    %cst_25 = arith.constant dense<0.000000e+00> : vector<64xf32>
    %87 = vector.multi_reduction <add>, %86, %cst_25 [1] : vector<64x64xf32> to vector<64xf32>
    %88 = vector.shape_cast %87 : vector<64xf32> to vector<64x1xf32>
    %89 = tpu.reciprocal %88 {approx = true} : vector<64x1xf32> -> vector<64x1xf32>
    %90 = vector.broadcast %89 : vector<64x1xf32> to vector<64x64xf32>
    %91 = arith.mulf %86, %90 : vector<64x64xf32>
    %cst_26 = arith.constant dense<0.000000e+00> : vector<64x64xf32>
    %92 = tpu.matmul %91, %69, %cst_26 {dimension_numbers = #tpu.dot_dimension_numbers<[1], [0], [0], [1], [0, 0, 1, 1], [], []>} : vector<64x64xf32>, vector<64x64xf32>, vector<64x64xf32> -> vector<64x64xf32>
    %cst_27 = arith.constant 0.000000e+00 : f32
    %93 = vector.broadcast %cst_27 : f32 to vector<64x64xf32>
    %94 = arith.cmpf ogt, %92, %93 : vector<64x64xf32>
    %95 = math.exp %92 : vector<64x64xf32>
    %cst_28 = arith.constant 1.000000e+00 : f32
    %96 = vector.broadcast %cst_28 : f32 to vector<64x64xf32>
    %97 = arith.subf %95, %96 : vector<64x64xf32>
    %98 = arith.select %94, %92, %97 : vector<64x64xi1>, vector<64x64xf32>
    %99 = vector.extract_strided_slice %4 {offsets = [0, 192], sizes = [64, 64], strides = [1, 1]} : vector<64x264xf32> to vector<64x64xf32>
    %100 = vector.extract_strided_slice %4 {offsets = [0, 259], sizes = [64, 1], strides = [1, 1]} : vector<64x264xf32> to vector<64x1xf32>
    %101 = vector.extract_strided_slice %4 {offsets = [0, 263], sizes = [64, 1], strides = [1, 1]} : vector<64x264xf32> to vector<64x1xf32>
    %102 = tpu.transpose %101, [1, 0] : vector<64x1xf32> -> vector<1x64xf32>
    %103 = vector.broadcast %100 : vector<64x1xf32> to vector<64x64xf32>
    %104 = vector.broadcast %102 : vector<1x64xf32> to vector<64x64xf32>
    %105 = arith.addf %103, %104 : vector<64x64xf32>
    %cst_29 = arith.constant 0.000000e+00 : f32
    %106 = vector.broadcast %cst_29 : f32 to vector<64x64xf32>
    %107 = arith.cmpf ogt, %105, %106 : vector<64x64xf32>
    %cst_30 = arith.constant 2.000000e-01 : f32
    %108 = vector.broadcast %cst_30 : f32 to vector<64x64xf32>
    %109 = arith.mulf %108, %105 : vector<64x64xf32>
    %110 = arith.select %107, %105, %109 : vector<64x64xi1>, vector<64x64xf32>
    %111 = arith.addf %110, %8 : vector<64x64xf32>
    %cst_31 = arith.constant dense<0xFF800000> : vector<64xf32>
    %112 = vector.multi_reduction <maximumf>, %111, %cst_31 [1] : vector<64x64xf32> to vector<64xf32>
    %113 = vector.shape_cast %112 : vector<64xf32> to vector<64x1xf32>
    %114 = vector.broadcast %113 : vector<64x1xf32> to vector<64x64xf32>
    %115 = arith.subf %111, %114 : vector<64x64xf32>
    %116 = math.exp %115 : vector<64x64xf32>
    %cst_32 = arith.constant dense<0.000000e+00> : vector<64xf32>
    %117 = vector.multi_reduction <add>, %116, %cst_32 [1] : vector<64x64xf32> to vector<64xf32>
    %118 = vector.shape_cast %117 : vector<64xf32> to vector<64x1xf32>
    %119 = tpu.reciprocal %118 {approx = true} : vector<64x1xf32> -> vector<64x1xf32>
    %120 = vector.broadcast %119 : vector<64x1xf32> to vector<64x64xf32>
    %121 = arith.mulf %116, %120 : vector<64x64xf32>
    %cst_33 = arith.constant dense<0.000000e+00> : vector<64x64xf32>
    %122 = tpu.matmul %121, %99, %cst_33 {dimension_numbers = #tpu.dot_dimension_numbers<[1], [0], [0], [1], [0, 0, 1, 1], [], []>} : vector<64x64xf32>, vector<64x64xf32>, vector<64x64xf32> -> vector<64x64xf32>
    %cst_34 = arith.constant 0.000000e+00 : f32
    %123 = vector.broadcast %cst_34 : f32 to vector<64x64xf32>
    %124 = arith.cmpf ogt, %122, %123 : vector<64x64xf32>
    %125 = math.exp %122 : vector<64x64xf32>
    %cst_35 = arith.constant 1.000000e+00 : f32
    %126 = vector.broadcast %cst_35 : f32 to vector<64x64xf32>
    %127 = arith.subf %125, %126 : vector<64x64xf32>
    %128 = arith.select %124, %122, %127 : vector<64x64xi1>, vector<64x64xf32>
    %129 = tpu.concatenate %38, %68, %98, %128 in 1 : vector<64x64xf32>, vector<64x64xf32>, vector<64x64xf32>, vector<64x64xf32> -> vector<64x256xf32>
    %c0_36 = arith.constant 0 : index
    %c0_37 = arith.constant 0 : index
    %130 = vector.load %arg4[%c0_36, %c0_37] : memref<64x256xf32, #tpu.memory_space<vmem>>, vector<64x256xf32>
    tpu.vector_store %arg4[%c0_36, %c0_37], %129 {strides = array<i32>} : memref<64x256xf32, #tpu.memory_space<vmem>>, vector<64x256xf32>,
    return
  }
  func.func @transform_0(%arg0: i32) -> (i32, i32) {
    %c0_i32 = arith.constant 0 : i32
    %c0_i32_0 = arith.constant 0 : i32
    %c0_i32_1 = arith.constant 0 : i32
    return %c0_i32, %c0_i32_0 : i32, i32
  }
  func.func @transform_1(%arg0: i32) -> (i32, i32, i32) {
    %c0_i32 = arith.constant 0 : i32
    %c0_i32_0 = arith.constant 0 : i32
    %c0_i32_1 = arith.constant 0 : i32
    return %arg0, %c0_i32, %c0_i32_0 : i32, i32, i32
  }
  func.func @transform_2(%arg0: i32) -> (i32, i32) {
    %c0_i32 = arith.constant 0 : i32
    %c0_i32_0 = arith.constant 0 : i32
    %c0_i32_1 = arith.constant 0 : i32
    return %c0_i32, %c0_i32_0 : i32, i32
  }
  func.func @transform_3(%arg0: i32) -> (i32, i32) {
    %c0_i32 = arith.constant 0 : i32
    %c0_i32_0 = arith.constant 0 : i32
    return %c0_i32, %arg0 : i32, i32
  }
}

module attributes {stable_mosaic.version = 11 : i64} {
  func.func @_gat_heads_kernel(%arg0: i32, %arg1: memref<64x515xf32, #tpu.memory_space<vmem>>, %arg2: memref<1x515x66xf32, #tpu.memory_space<vmem>>, %arg3: memref<64x64xf32, #tpu.memory_space<vmem>>, %arg4: memref<64x64xf32, #tpu.memory_space<vmem>>) attributes {dimension_semantics = [#tpu.dimension_semantics<parallel>], iteration_bounds = array<i64: 1>, scalar_prefetch = 0 : i64, scratch_operands = 0 : i64, tpu.core_type = #tpu.core_type<tc>, window_params = [{pipeline_mode = #tpu.pipeline_mode<synchronous>, transform_indices = @transform_0, window_bounds = array<i64: 64, 515>}, {transform_indices = @transform_1, window_bounds = array<i64: 1, 515, 66>}, {pipeline_mode = #tpu.pipeline_mode<synchronous>, transform_indices = @transform_2, window_bounds = array<i64: 64, 64>}, {transform_indices = @transform_3, window_bounds = array<i64: 64, 64>}]} {
    %c0 = arith.constant 0 : index
    %c0_0 = arith.constant 0 : index
    %0 = vector.load %arg1[%c0, %c0_0] : memref<64x515xf32, #tpu.memory_space<vmem>>, vector<64x515xf32>
    %c0_1 = arith.constant 0 : index
    %c0_2 = arith.constant 0 : index
    %c0_3 = arith.constant 0 : index
    %1 = vector.load %arg2[%c0_1, %c0_2, %c0_3] : memref<1x515x66xf32, #tpu.memory_space<vmem>>, vector<1x515x66xf32>
    %2 = vector.shape_cast %1 : vector<1x515x66xf32> to vector<515x66xf32>
    %c0_4 = arith.constant 0 : index
    %c0_5 = arith.constant 0 : index
    %3 = vector.load %arg3[%c0_4, %c0_5] : memref<64x64xf32, #tpu.memory_space<vmem>>, vector<64x64xf32>
    %cst = arith.constant dense<0.000000e+00> : vector<64x66xf32>
    %4 = tpu.matmul %0, %2, %cst {dimension_numbers = #tpu.dot_dimension_numbers<[1], [0], [0], [1], [0, 0, 1, 1], [], []>} : vector<64x515xf32>, vector<515x66xf32>, vector<64x66xf32> -> vector<64x66xf32>
    %cst_6 = arith.constant 1.000000e+00 : f32
    %5 = vector.broadcast %cst_6 : f32 to vector<64x64xf32>
    %6 = arith.subf %3, %5 : vector<64x64xf32>
    %cst_7 = arith.constant 9.000000e+15 : f32
    %7 = vector.broadcast %cst_7 : f32 to vector<64x64xf32>
    %8 = arith.mulf %6, %7 : vector<64x64xf32>
    %9 = vector.extract_strided_slice %4 {offsets = [0, 0], sizes = [64, 64], strides = [1, 1]} : vector<64x66xf32> to vector<64x64xf32>
    %10 = vector.extract_strided_slice %4 {offsets = [0, 64], sizes = [64, 1], strides = [1, 1]} : vector<64x66xf32> to vector<64x1xf32>
    %11 = vector.extract_strided_slice %4 {offsets = [0, 65], sizes = [64, 1], strides = [1, 1]} : vector<64x66xf32> to vector<64x1xf32>
    %12 = tpu.transpose %11, [1, 0] : vector<64x1xf32> -> vector<1x64xf32>
    %13 = vector.broadcast %10 : vector<64x1xf32> to vector<64x64xf32>
    %14 = vector.broadcast %12 : vector<1x64xf32> to vector<64x64xf32>
    %15 = arith.addf %13, %14 : vector<64x64xf32>
    %cst_8 = arith.constant 0.000000e+00 : f32
    %16 = vector.broadcast %cst_8 : f32 to vector<64x64xf32>
    %17 = arith.cmpf ogt, %15, %16 : vector<64x64xf32>
    %cst_9 = arith.constant 2.000000e-01 : f32
    %18 = vector.broadcast %cst_9 : f32 to vector<64x64xf32>
    %19 = arith.mulf %18, %15 : vector<64x64xf32>
    %20 = arith.select %17, %15, %19 : vector<64x64xi1>, vector<64x64xf32>
    %21 = arith.addf %20, %8 : vector<64x64xf32>
    %cst_10 = arith.constant dense<0xFF800000> : vector<64xf32>
    %22 = vector.multi_reduction <maximumf>, %21, %cst_10 [1] : vector<64x64xf32> to vector<64xf32>
    %23 = vector.shape_cast %22 : vector<64xf32> to vector<64x1xf32>
    %24 = vector.broadcast %23 : vector<64x1xf32> to vector<64x64xf32>
    %25 = arith.subf %21, %24 : vector<64x64xf32>
    %26 = math.exp %25 : vector<64x64xf32>
    %cst_11 = arith.constant dense<0.000000e+00> : vector<64xf32>
    %27 = vector.multi_reduction <add>, %26, %cst_11 [1] : vector<64x64xf32> to vector<64xf32>
    %28 = vector.shape_cast %27 : vector<64xf32> to vector<64x1xf32>
    %29 = tpu.reciprocal %28 {approx = true} : vector<64x1xf32> -> vector<64x1xf32>
    %30 = vector.broadcast %29 : vector<64x1xf32> to vector<64x64xf32>
    %31 = arith.mulf %26, %30 : vector<64x64xf32>
    %cst_12 = arith.constant dense<0.000000e+00> : vector<64x64xf32>
    %32 = tpu.matmul %31, %9, %cst_12 {dimension_numbers = #tpu.dot_dimension_numbers<[1], [0], [0], [1], [0, 0, 1, 1], [], []>} : vector<64x64xf32>, vector<64x64xf32>, vector<64x64xf32> -> vector<64x64xf32>
    %cst_13 = arith.constant 0.000000e+00 : f32
    %33 = vector.broadcast %cst_13 : f32 to vector<64x64xf32>
    %34 = arith.cmpf ogt, %32, %33 : vector<64x64xf32>
    %35 = math.exp %32 : vector<64x64xf32>
    %cst_14 = arith.constant 1.000000e+00 : f32
    %36 = vector.broadcast %cst_14 : f32 to vector<64x64xf32>
    %37 = arith.subf %35, %36 : vector<64x64xf32>
    %38 = arith.select %34, %32, %37 : vector<64x64xi1>, vector<64x64xf32>
    %cst_15 = arith.constant dense<0xFF800000> : vector<64xf32>
    %39 = vector.multi_reduction <maximumf>, %38, %cst_15 [1] : vector<64x64xf32> to vector<64xf32>
    %40 = vector.shape_cast %39 : vector<64xf32> to vector<64x1xf32>
    %41 = vector.broadcast %40 : vector<64x1xf32> to vector<64x64xf32>
    %42 = arith.subf %38, %41 : vector<64x64xf32>
    %43 = math.exp %42 : vector<64x64xf32>
    %cst_16 = arith.constant dense<0.000000e+00> : vector<64xf32>
    %44 = vector.multi_reduction <add>, %43, %cst_16 [1] : vector<64x64xf32> to vector<64xf32>
    %45 = vector.shape_cast %44 : vector<64xf32> to vector<64x1xf32>
    %46 = math.log %45 : vector<64x1xf32>
    %47 = vector.broadcast %46 : vector<64x1xf32> to vector<64x64xf32>
    %48 = arith.subf %42, %47 : vector<64x64xf32>
    %c0_17 = arith.constant 0 : index
    %c0_18 = arith.constant 0 : index
    %49 = vector.load %arg4[%c0_17, %c0_18] : memref<64x64xf32, #tpu.memory_space<vmem>>, vector<64x64xf32>
    tpu.vector_store %arg4[%c0_17, %c0_18], %48 {strides = array<i32>} : memref<64x64xf32, #tpu.memory_space<vmem>>, vector<64x64xf32>,
    return
  }
  func.func @transform_0(%arg0: i32) -> (i32, i32) {
    %c0_i32 = arith.constant 0 : i32
    %c0_i32_0 = arith.constant 0 : i32
    %c0_i32_1 = arith.constant 0 : i32
    return %c0_i32, %c0_i32_0 : i32, i32
  }
  func.func @transform_1(%arg0: i32) -> (i32, i32, i32) {
    %c0_i32 = arith.constant 0 : i32
    %c0_i32_0 = arith.constant 0 : i32
    %c0_i32_1 = arith.constant 0 : i32
    return %arg0, %c0_i32, %c0_i32_0 : i32, i32, i32
  }
  func.func @transform_2(%arg0: i32) -> (i32, i32) {
    %c0_i32 = arith.constant 0 : i32
    %c0_i32_0 = arith.constant 0 : i32
    %c0_i32_1 = arith.constant 0 : i32
    return %c0_i32, %c0_i32_0 : i32, i32
  }
  func.func @transform_3(%arg0: i32) -> (i32, i32) {
    %c0_i32 = arith.constant 0 : i32
    %c0_i32_0 = arith.constant 0 : i32
    return %c0_i32, %arg0 : i32, i32
  }
}

module attributes {stable_mosaic.version = 11 : i64} {
  func.func @_gat_heads_kernel(%arg0: i32, %arg1: memref<64x32xf32, #tpu.memory_space<vmem>>, %arg2: memref<1x32x264xf32, #tpu.memory_space<vmem>>, %arg3: memref<64x64xf32, #tpu.memory_space<vmem>>, %arg4: memref<64x256xf32, #tpu.memory_space<vmem>>) attributes {dimension_semantics = [#tpu.dimension_semantics<parallel>], iteration_bounds = array<i64: 2>, scalar_prefetch = 0 : i64, scratch_operands = 0 : i64, tpu.core_type = #tpu.core_type<tc>, window_params = [{pipeline_mode = #tpu.pipeline_mode<synchronous>, transform_indices = @transform_0, window_bounds = array<i64: 64, 32>}, {transform_indices = @transform_1, window_bounds = array<i64: 1, 32, 264>}, {pipeline_mode = #tpu.pipeline_mode<synchronous>, transform_indices = @transform_2, window_bounds = array<i64: 64, 64>}, {transform_indices = @transform_3, window_bounds = array<i64: 64, 256>}]} {
    %c0 = arith.constant 0 : index
    %c0_0 = arith.constant 0 : index
    %0 = vector.load %arg1[%c0, %c0_0] : memref<64x32xf32, #tpu.memory_space<vmem>>, vector<64x32xf32>
    %c0_1 = arith.constant 0 : index
    %c0_2 = arith.constant 0 : index
    %c0_3 = arith.constant 0 : index
    %1 = vector.load %arg2[%c0_1, %c0_2, %c0_3] : memref<1x32x264xf32, #tpu.memory_space<vmem>>, vector<1x32x264xf32>
    %2 = vector.shape_cast %1 : vector<1x32x264xf32> to vector<32x264xf32>
    %c0_4 = arith.constant 0 : index
    %c0_5 = arith.constant 0 : index
    %3 = vector.load %arg3[%c0_4, %c0_5] : memref<64x64xf32, #tpu.memory_space<vmem>>, vector<64x64xf32>
    %cst = arith.constant dense<0.000000e+00> : vector<64x264xf32>
    %4 = tpu.matmul %0, %2, %cst {dimension_numbers = #tpu.dot_dimension_numbers<[1], [0], [0], [1], [0, 0, 1, 1], [], []>} : vector<64x32xf32>, vector<32x264xf32>, vector<64x264xf32> -> vector<64x264xf32>
    %cst_6 = arith.constant 1.000000e+00 : f32
    %5 = vector.broadcast %cst_6 : f32 to vector<64x64xf32>
    %6 = arith.subf %3, %5 : vector<64x64xf32>
    %cst_7 = arith.constant 9.000000e+15 : f32
    %7 = vector.broadcast %cst_7 : f32 to vector<64x64xf32>
    %8 = arith.mulf %6, %7 : vector<64x64xf32>
    %9 = vector.extract_strided_slice %4 {offsets = [0, 0], sizes = [64, 64], strides = [1, 1]} : vector<64x264xf32> to vector<64x64xf32>
    %10 = vector.extract_strided_slice %4 {offsets = [0, 256], sizes = [64, 1], strides = [1, 1]} : vector<64x264xf32> to vector<64x1xf32>
    %11 = vector.extract_strided_slice %4 {offsets = [0, 260], sizes = [64, 1], strides = [1, 1]} : vector<64x264xf32> to vector<64x1xf32>
    %12 = tpu.transpose %11, [1, 0] : vector<64x1xf32> -> vector<1x64xf32>
    %13 = vector.broadcast %10 : vector<64x1xf32> to vector<64x64xf32>
    %14 = vector.broadcast %12 : vector<1x64xf32> to vector<64x64xf32>
    %15 = arith.addf %13, %14 : vector<64x64xf32>
    %cst_8 = arith.constant 0.000000e+00 : f32
    %16 = vector.broadcast %cst_8 : f32 to vector<64x64xf32>
    %17 = arith.cmpf ogt, %15, %16 : vector<64x64xf32>
    %cst_9 = arith.constant 2.000000e-01 : f32
    %18 = vector.broadcast %cst_9 : f32 to vector<64x64xf32>
    %19 = arith.mulf %18, %15 : vector<64x64xf32>
    %20 = arith.select %17, %15, %19 : vector<64x64xi1>, vector<64x64xf32>
    %21 = arith.addf %20, %8 : vector<64x64xf32>
    %cst_10 = arith.constant dense<0xFF800000> : vector<64xf32>
    %22 = vector.multi_reduction <maximumf>, %21, %cst_10 [1] : vector<64x64xf32> to vector<64xf32>
    %23 = vector.shape_cast %22 : vector<64xf32> to vector<64x1xf32>
    %24 = vector.broadcast %23 : vector<64x1xf32> to vector<64x64xf32>
    %25 = arith.subf %21, %24 : vector<64x64xf32>
    %26 = math.exp %25 : vector<64x64xf32>
    %cst_11 = arith.constant dense<0.000000e+00> : vector<64xf32>
    %27 = vector.multi_reduction <add>, %26, %cst_11 [1] : vector<64x64xf32> to vector<64xf32>
    %28 = vector.shape_cast %27 : vector<64xf32> to vector<64x1xf32>
    %29 = tpu.reciprocal %28 {approx = true} : vector<64x1xf32> -> vector<64x1xf32>
    %30 = vector.broadcast %29 : vector<64x1xf32> to vector<64x64xf32>
    %31 = arith.mulf %26, %30 : vector<64x64xf32>
    %cst_12 = arith.constant dense<0.000000e+00> : vector<64x64xf32>
    %32 = tpu.matmul %31, %9, %cst_12 {dimension_numbers = #tpu.dot_dimension_numbers<[1], [0], [0], [1], [0, 0, 1, 1], [], []>} : vector<64x64xf32>, vector<64x64xf32>, vector<64x64xf32> -> vector<64x64xf32>
    %cst_13 = arith.constant 0.000000e+00 : f32
    %33 = vector.broadcast %cst_13 : f32 to vector<64x64xf32>
    %34 = arith.cmpf ogt, %32, %33 : vector<64x64xf32>
    %35 = math.exp %32 : vector<64x64xf32>
    %cst_14 = arith.constant 1.000000e+00 : f32
    %36 = vector.broadcast %cst_14 : f32 to vector<64x64xf32>
    %37 = arith.subf %35, %36 : vector<64x64xf32>
    %38 = arith.select %34, %32, %37 : vector<64x64xi1>, vector<64x64xf32>
    %39 = vector.extract_strided_slice %4 {offsets = [0, 64], sizes = [64, 64], strides = [1, 1]} : vector<64x264xf32> to vector<64x64xf32>
    %40 = vector.extract_strided_slice %4 {offsets = [0, 257], sizes = [64, 1], strides = [1, 1]} : vector<64x264xf32> to vector<64x1xf32>
    %41 = vector.extract_strided_slice %4 {offsets = [0, 261], sizes = [64, 1], strides = [1, 1]} : vector<64x264xf32> to vector<64x1xf32>
    %42 = tpu.transpose %41, [1, 0] : vector<64x1xf32> -> vector<1x64xf32>
    %43 = vector.broadcast %40 : vector<64x1xf32> to vector<64x64xf32>
    %44 = vector.broadcast %42 : vector<1x64xf32> to vector<64x64xf32>
    %45 = arith.addf %43, %44 : vector<64x64xf32>
    %cst_15 = arith.constant 0.000000e+00 : f32
    %46 = vector.broadcast %cst_15 : f32 to vector<64x64xf32>
    %47 = arith.cmpf ogt, %45, %46 : vector<64x64xf32>
    %cst_16 = arith.constant 2.000000e-01 : f32
    %48 = vector.broadcast %cst_16 : f32 to vector<64x64xf32>
    %49 = arith.mulf %48, %45 : vector<64x64xf32>
    %50 = arith.select %47, %45, %49 : vector<64x64xi1>, vector<64x64xf32>
    %51 = arith.addf %50, %8 : vector<64x64xf32>
    %cst_17 = arith.constant dense<0xFF800000> : vector<64xf32>
    %52 = vector.multi_reduction <maximumf>, %51, %cst_17 [1] : vector<64x64xf32> to vector<64xf32>
    %53 = vector.shape_cast %52 : vector<64xf32> to vector<64x1xf32>
    %54 = vector.broadcast %53 : vector<64x1xf32> to vector<64x64xf32>
    %55 = arith.subf %51, %54 : vector<64x64xf32>
    %56 = math.exp %55 : vector<64x64xf32>
    %cst_18 = arith.constant dense<0.000000e+00> : vector<64xf32>
    %57 = vector.multi_reduction <add>, %56, %cst_18 [1] : vector<64x64xf32> to vector<64xf32>
    %58 = vector.shape_cast %57 : vector<64xf32> to vector<64x1xf32>
    %59 = tpu.reciprocal %58 {approx = true} : vector<64x1xf32> -> vector<64x1xf32>
    %60 = vector.broadcast %59 : vector<64x1xf32> to vector<64x64xf32>
    %61 = arith.mulf %56, %60 : vector<64x64xf32>
    %cst_19 = arith.constant dense<0.000000e+00> : vector<64x64xf32>
    %62 = tpu.matmul %61, %39, %cst_19 {dimension_numbers = #tpu.dot_dimension_numbers<[1], [0], [0], [1], [0, 0, 1, 1], [], []>} : vector<64x64xf32>, vector<64x64xf32>, vector<64x64xf32> -> vector<64x64xf32>
    %cst_20 = arith.constant 0.000000e+00 : f32
    %63 = vector.broadcast %cst_20 : f32 to vector<64x64xf32>
    %64 = arith.cmpf ogt, %62, %63 : vector<64x64xf32>
    %65 = math.exp %62 : vector<64x64xf32>
    %cst_21 = arith.constant 1.000000e+00 : f32
    %66 = vector.broadcast %cst_21 : f32 to vector<64x64xf32>
    %67 = arith.subf %65, %66 : vector<64x64xf32>
    %68 = arith.select %64, %62, %67 : vector<64x64xi1>, vector<64x64xf32>
    %69 = vector.extract_strided_slice %4 {offsets = [0, 128], sizes = [64, 64], strides = [1, 1]} : vector<64x264xf32> to vector<64x64xf32>
    %70 = vector.extract_strided_slice %4 {offsets = [0, 258], sizes = [64, 1], strides = [1, 1]} : vector<64x264xf32> to vector<64x1xf32>
    %71 = vector.extract_strided_slice %4 {offsets = [0, 262], sizes = [64, 1], strides = [1, 1]} : vector<64x264xf32> to vector<64x1xf32>
    %72 = tpu.transpose %71, [1, 0] : vector<64x1xf32> -> vector<1x64xf32>
    %73 = vector.broadcast %70 : vector<64x1xf32> to vector<64x64xf32>
    %74 = vector.broadcast %72 : vector<1x64xf32> to vector<64x64xf32>
    %75 = arith.addf %73, %74 : vector<64x64xf32>
    %cst_22 = arith.constant 0.000000e+00 : f32
    %76 = vector.broadcast %cst_22 : f32 to vector<64x64xf32>
    %77 = arith.cmpf ogt, %75, %76 : vector<64x64xf32>
    %cst_23 = arith.constant 2.000000e-01 : f32
    %78 = vector.broadcast %cst_23 : f32 to vector<64x64xf32>
    %79 = arith.mulf %78, %75 : vector<64x64xf32>
    %80 = arith.select %77, %75, %79 : vector<64x64xi1>, vector<64x64xf32>
    %81 = arith.addf %80, %8 : vector<64x64xf32>
    %cst_24 = arith.constant dense<0xFF800000> : vector<64xf32>
    %82 = vector.multi_reduction <maximumf>, %81, %cst_24 [1] : vector<64x64xf32> to vector<64xf32>
    %83 = vector.shape_cast %82 : vector<64xf32> to vector<64x1xf32>
    %84 = vector.broadcast %83 : vector<64x1xf32> to vector<64x64xf32>
    %85 = arith.subf %81, %84 : vector<64x64xf32>
    %86 = math.exp %85 : vector<64x64xf32>
    %cst_25 = arith.constant dense<0.000000e+00> : vector<64xf32>
    %87 = vector.multi_reduction <add>, %86, %cst_25 [1] : vector<64x64xf32> to vector<64xf32>
    %88 = vector.shape_cast %87 : vector<64xf32> to vector<64x1xf32>
    %89 = tpu.reciprocal %88 {approx = true} : vector<64x1xf32> -> vector<64x1xf32>
    %90 = vector.broadcast %89 : vector<64x1xf32> to vector<64x64xf32>
    %91 = arith.mulf %86, %90 : vector<64x64xf32>
    %cst_26 = arith.constant dense<0.000000e+00> : vector<64x64xf32>
    %92 = tpu.matmul %91, %69, %cst_26 {dimension_numbers = #tpu.dot_dimension_numbers<[1], [0], [0], [1], [0, 0, 1, 1], [], []>} : vector<64x64xf32>, vector<64x64xf32>, vector<64x64xf32> -> vector<64x64xf32>
    %cst_27 = arith.constant 0.000000e+00 : f32
    %93 = vector.broadcast %cst_27 : f32 to vector<64x64xf32>
    %94 = arith.cmpf ogt, %92, %93 : vector<64x64xf32>
    %95 = math.exp %92 : vector<64x64xf32>
    %cst_28 = arith.constant 1.000000e+00 : f32
    %96 = vector.broadcast %cst_28 : f32 to vector<64x64xf32>
    %97 = arith.subf %95, %96 : vector<64x64xf32>
    %98 = arith.select %94, %92, %97 : vector<64x64xi1>, vector<64x64xf32>
    %99 = vector.extract_strided_slice %4 {offsets = [0, 192], sizes = [64, 64], strides = [1, 1]} : vector<64x264xf32> to vector<64x64xf32>
    %100 = vector.extract_strided_slice %4 {offsets = [0, 259], sizes = [64, 1], strides = [1, 1]} : vector<64x264xf32> to vector<64x1xf32>
    %101 = vector.extract_strided_slice %4 {offsets = [0, 263], sizes = [64, 1], strides = [1, 1]} : vector<64x264xf32> to vector<64x1xf32>
    %102 = tpu.transpose %101, [1, 0] : vector<64x1xf32> -> vector<1x64xf32>
    %103 = vector.broadcast %100 : vector<64x1xf32> to vector<64x64xf32>
    %104 = vector.broadcast %102 : vector<1x64xf32> to vector<64x64xf32>
    %105 = arith.addf %103, %104 : vector<64x64xf32>
    %cst_29 = arith.constant 0.000000e+00 : f32
    %106 = vector.broadcast %cst_29 : f32 to vector<64x64xf32>
    %107 = arith.cmpf ogt, %105, %106 : vector<64x64xf32>
    %cst_30 = arith.constant 2.000000e-01 : f32
    %108 = vector.broadcast %cst_30 : f32 to vector<64x64xf32>
    %109 = arith.mulf %108, %105 : vector<64x64xf32>
    %110 = arith.select %107, %105, %109 : vector<64x64xi1>, vector<64x64xf32>
    %111 = arith.addf %110, %8 : vector<64x64xf32>
    %cst_31 = arith.constant dense<0xFF800000> : vector<64xf32>
    %112 = vector.multi_reduction <maximumf>, %111, %cst_31 [1] : vector<64x64xf32> to vector<64xf32>
    %113 = vector.shape_cast %112 : vector<64xf32> to vector<64x1xf32>
    %114 = vector.broadcast %113 : vector<64x1xf32> to vector<64x64xf32>
    %115 = arith.subf %111, %114 : vector<64x64xf32>
    %116 = math.exp %115 : vector<64x64xf32>
    %cst_32 = arith.constant dense<0.000000e+00> : vector<64xf32>
    %117 = vector.multi_reduction <add>, %116, %cst_32 [1] : vector<64x64xf32> to vector<64xf32>
    %118 = vector.shape_cast %117 : vector<64xf32> to vector<64x1xf32>
    %119 = tpu.reciprocal %118 {approx = true} : vector<64x1xf32> -> vector<64x1xf32>
    %120 = vector.broadcast %119 : vector<64x1xf32> to vector<64x64xf32>
    %121 = arith.mulf %116, %120 : vector<64x64xf32>
    %cst_33 = arith.constant dense<0.000000e+00> : vector<64x64xf32>
    %122 = tpu.matmul %121, %99, %cst_33 {dimension_numbers = #tpu.dot_dimension_numbers<[1], [0], [0], [1], [0, 0, 1, 1], [], []>} : vector<64x64xf32>, vector<64x64xf32>, vector<64x64xf32> -> vector<64x64xf32>
    %cst_34 = arith.constant 0.000000e+00 : f32
    %123 = vector.broadcast %cst_34 : f32 to vector<64x64xf32>
    %124 = arith.cmpf ogt, %122, %123 : vector<64x64xf32>
    %125 = math.exp %122 : vector<64x64xf32>
    %cst_35 = arith.constant 1.000000e+00 : f32
    %126 = vector.broadcast %cst_35 : f32 to vector<64x64xf32>
    %127 = arith.subf %125, %126 : vector<64x64xf32>
    %128 = arith.select %124, %122, %127 : vector<64x64xi1>, vector<64x64xf32>
    %129 = tpu.concatenate %38, %68, %98, %128 in 1 : vector<64x64xf32>, vector<64x64xf32>, vector<64x64xf32>, vector<64x64xf32> -> vector<64x256xf32>
    %c0_36 = arith.constant 0 : index
    %c0_37 = arith.constant 0 : index
    %130 = vector.load %arg4[%c0_36, %c0_37] : memref<64x256xf32, #tpu.memory_space<vmem>>, vector<64x256xf32>
    tpu.vector_store %arg4[%c0_36, %c0_37], %129 {strides = array<i32>} : memref<64x256xf32, #tpu.memory_space<vmem>>, vector<64x256xf32>,
    return
  }
  func.func @transform_0(%arg0: i32) -> (i32, i32) {
    %c0_i32 = arith.constant 0 : i32
    %c0_i32_0 = arith.constant 0 : i32
    %c0_i32_1 = arith.constant 0 : i32
    return %c0_i32, %c0_i32_0 : i32, i32
  }
  func.func @transform_1(%arg0: i32) -> (i32, i32, i32) {
    %c0_i32 = arith.constant 0 : i32
    %c0_i32_0 = arith.constant 0 : i32
    %c0_i32_1 = arith.constant 0 : i32
    return %arg0, %c0_i32, %c0_i32_0 : i32, i32, i32
  }
  func.func @transform_2(%arg0: i32) -> (i32, i32) {
    %c0_i32 = arith.constant 0 : i32
    %c0_i32_0 = arith.constant 0 : i32
    %c0_i32_1 = arith.constant 0 : i32
    return %c0_i32, %c0_i32_0 : i32, i32
  }
  func.func @transform_3(%arg0: i32) -> (i32, i32) {
    %c0_i32 = arith.constant 0 : i32
    %c0_i32_0 = arith.constant 0 : i32
    return %c0_i32, %arg0 : i32, i32
  }
}

module attributes {stable_mosaic.version = 11 : i64} {
  func.func @_gat_heads_kernel(%arg0: i32, %arg1: memref<64x512xf32, #tpu.memory_space<vmem>>, %arg2: memref<1x512x66xf32, #tpu.memory_space<vmem>>, %arg3: memref<64x64xf32, #tpu.memory_space<vmem>>, %arg4: memref<64x64xf32, #tpu.memory_space<vmem>>) attributes {dimension_semantics = [#tpu.dimension_semantics<parallel>], iteration_bounds = array<i64: 1>, scalar_prefetch = 0 : i64, scratch_operands = 0 : i64, tpu.core_type = #tpu.core_type<tc>, window_params = [{pipeline_mode = #tpu.pipeline_mode<synchronous>, transform_indices = @transform_0, window_bounds = array<i64: 64, 512>}, {transform_indices = @transform_1, window_bounds = array<i64: 1, 512, 66>}, {pipeline_mode = #tpu.pipeline_mode<synchronous>, transform_indices = @transform_2, window_bounds = array<i64: 64, 64>}, {transform_indices = @transform_3, window_bounds = array<i64: 64, 64>}]} {
    %c0 = arith.constant 0 : index
    %c0_0 = arith.constant 0 : index
    %0 = vector.load %arg1[%c0, %c0_0] : memref<64x512xf32, #tpu.memory_space<vmem>>, vector<64x512xf32>
    %c0_1 = arith.constant 0 : index
    %c0_2 = arith.constant 0 : index
    %c0_3 = arith.constant 0 : index
    %1 = vector.load %arg2[%c0_1, %c0_2, %c0_3] : memref<1x512x66xf32, #tpu.memory_space<vmem>>, vector<1x512x66xf32>
    %2 = vector.shape_cast %1 : vector<1x512x66xf32> to vector<512x66xf32>
    %c0_4 = arith.constant 0 : index
    %c0_5 = arith.constant 0 : index
    %3 = vector.load %arg3[%c0_4, %c0_5] : memref<64x64xf32, #tpu.memory_space<vmem>>, vector<64x64xf32>
    %cst = arith.constant dense<0.000000e+00> : vector<64x66xf32>
    %4 = tpu.matmul %0, %2, %cst {dimension_numbers = #tpu.dot_dimension_numbers<[1], [0], [0], [1], [0, 0, 1, 1], [], []>} : vector<64x512xf32>, vector<512x66xf32>, vector<64x66xf32> -> vector<64x66xf32>
    %cst_6 = arith.constant 1.000000e+00 : f32
    %5 = vector.broadcast %cst_6 : f32 to vector<64x64xf32>
    %6 = arith.subf %3, %5 : vector<64x64xf32>
    %cst_7 = arith.constant 9.000000e+15 : f32
    %7 = vector.broadcast %cst_7 : f32 to vector<64x64xf32>
    %8 = arith.mulf %6, %7 : vector<64x64xf32>
    %9 = vector.extract_strided_slice %4 {offsets = [0, 0], sizes = [64, 64], strides = [1, 1]} : vector<64x66xf32> to vector<64x64xf32>
    %10 = vector.extract_strided_slice %4 {offsets = [0, 64], sizes = [64, 1], strides = [1, 1]} : vector<64x66xf32> to vector<64x1xf32>
    %11 = vector.extract_strided_slice %4 {offsets = [0, 65], sizes = [64, 1], strides = [1, 1]} : vector<64x66xf32> to vector<64x1xf32>
    %12 = tpu.transpose %11, [1, 0] : vector<64x1xf32> -> vector<1x64xf32>
    %13 = vector.broadcast %10 : vector<64x1xf32> to vector<64x64xf32>
    %14 = vector.broadcast %12 : vector<1x64xf32> to vector<64x64xf32>
    %15 = arith.addf %13, %14 : vector<64x64xf32>
    %cst_8 = arith.constant 0.000000e+00 : f32
    %16 = vector.broadcast %cst_8 : f32 to vector<64x64xf32>
    %17 = arith.cmpf ogt, %15, %16 : vector<64x64xf32>
    %cst_9 = arith.constant 2.000000e-01 : f32
    %18 = vector.broadcast %cst_9 : f32 to vector<64x64xf32>
    %19 = arith.mulf %18, %15 : vector<64x64xf32>
    %20 = arith.select %17, %15, %19 : vector<64x64xi1>, vector<64x64xf32>
    %21 = arith.addf %20, %8 : vector<64x64xf32>
    %cst_10 = arith.constant dense<0xFF800000> : vector<64xf32>
    %22 = vector.multi_reduction <maximumf>, %21, %cst_10 [1] : vector<64x64xf32> to vector<64xf32>
    %23 = vector.shape_cast %22 : vector<64xf32> to vector<64x1xf32>
    %24 = vector.broadcast %23 : vector<64x1xf32> to vector<64x64xf32>
    %25 = arith.subf %21, %24 : vector<64x64xf32>
    %26 = math.exp %25 : vector<64x64xf32>
    %cst_11 = arith.constant dense<0.000000e+00> : vector<64xf32>
    %27 = vector.multi_reduction <add>, %26, %cst_11 [1] : vector<64x64xf32> to vector<64xf32>
    %28 = vector.shape_cast %27 : vector<64xf32> to vector<64x1xf32>
    %29 = tpu.reciprocal %28 {approx = true} : vector<64x1xf32> -> vector<64x1xf32>
    %30 = vector.broadcast %29 : vector<64x1xf32> to vector<64x64xf32>
    %31 = arith.mulf %26, %30 : vector<64x64xf32>
    %cst_12 = arith.constant dense<0.000000e+00> : vector<64x64xf32>
    %32 = tpu.matmul %31, %9, %cst_12 {dimension_numbers = #tpu.dot_dimension_numbers<[1], [0], [0], [1], [0, 0, 1, 1], [], []>} : vector<64x64xf32>, vector<64x64xf32>, vector<64x64xf32> -> vector<64x64xf32>
    %cst_13 = arith.constant 0.000000e+00 : f32
    %33 = vector.broadcast %cst_13 : f32 to vector<64x64xf32>
    %34 = arith.cmpf ogt, %32, %33 : vector<64x64xf32>
    %35 = math.exp %32 : vector<64x64xf32>
    %cst_14 = arith.constant 1.000000e+00 : f32
    %36 = vector.broadcast %cst_14 : f32 to vector<64x64xf32>
    %37 = arith.subf %35, %36 : vector<64x64xf32>
    %38 = arith.select %34, %32, %37 : vector<64x64xi1>, vector<64x64xf32>
    %cst_15 = arith.constant dense<0xFF800000> : vector<64xf32>
    %39 = vector.multi_reduction <maximumf>, %38, %cst_15 [1] : vector<64x64xf32> to vector<64xf32>
    %40 = vector.shape_cast %39 : vector<64xf32> to vector<64x1xf32>
    %41 = vector.broadcast %40 : vector<64x1xf32> to vector<64x64xf32>
    %42 = arith.subf %38, %41 : vector<64x64xf32>
    %43 = math.exp %42 : vector<64x64xf32>
    %cst_16 = arith.constant dense<0.000000e+00> : vector<64xf32>
    %44 = vector.multi_reduction <add>, %43, %cst_16 [1] : vector<64x64xf32> to vector<64xf32>
    %45 = vector.shape_cast %44 : vector<64xf32> to vector<64x1xf32>
    %46 = math.log %45 : vector<64x1xf32>
    %47 = vector.broadcast %46 : vector<64x1xf32> to vector<64x64xf32>
    %48 = arith.subf %42, %47 : vector<64x64xf32>
    %c0_17 = arith.constant 0 : index
    %c0_18 = arith.constant 0 : index
    %49 = vector.load %arg4[%c0_17, %c0_18] : memref<64x64xf32, #tpu.memory_space<vmem>>, vector<64x64xf32>
    tpu.vector_store %arg4[%c0_17, %c0_18], %48 {strides = array<i32>} : memref<64x64xf32, #tpu.memory_space<vmem>>, vector<64x64xf32>,
    return
  }
  func.func @transform_0(%arg0: i32) -> (i32, i32) {
    %c0_i32 = arith.constant 0 : i32
    %c0_i32_0 = arith.constant 0 : i32
    %c0_i32_1 = arith.constant 0 : i32
    return %c0_i32, %c0_i32_0 : i32, i32
  }
  func.func @transform_1(%arg0: i32) -> (i32, i32, i32) {
    %c0_i32 = arith.constant 0 : i32
    %c0_i32_0 = arith.constant 0 : i32
    %c0_i32_1 = arith.constant 0 : i32
    return %arg0, %c0_i32, %c0_i32_0 : i32, i32, i32
  }
  func.func @transform_2(%arg0: i32) -> (i32, i32) {
    %c0_i32 = arith.constant 0 : i32
    %c0_i32_0 = arith.constant 0 : i32
    %c0_i32_1 = arith.constant 0 : i32
    return %c0_i32, %c0_i32_0 : i32, i32
  }
  func.func @transform_3(%arg0: i32) -> (i32, i32) {
    %c0_i32 = arith.constant 0 : i32
    %c0_i32_0 = arith.constant 0 : i32
    return %c0_i32, %arg0 : i32, i32
  }
}

module attributes {stable_mosaic.version = 11 : i64} {
  func.func @_fusion_kernel(%arg0: i32, %arg1: memref<64x128xf32, #tpu.memory_space<vmem>>, %arg2: memref<128x64xf32, #tpu.memory_space<vmem>>, %arg3: memref<64x64xf32, #tpu.memory_space<vmem>>) attributes {dimension_semantics = [#tpu.dimension_semantics<arbitrary>], iteration_bounds = array<i64: 1>, scalar_prefetch = 0 : i64, scratch_operands = 0 : i64, tpu.core_type = #tpu.core_type<tc>, window_params = [{pipeline_mode = #tpu.pipeline_mode<synchronous>, transform_indices = @transform_0, window_bounds = array<i64: 64, 128>}, {pipeline_mode = #tpu.pipeline_mode<synchronous>, transform_indices = @transform_1, window_bounds = array<i64: 128, 64>}, {pipeline_mode = #tpu.pipeline_mode<synchronous>, transform_indices = @transform_2, window_bounds = array<i64: 64, 64>}]} {
    %c0 = arith.constant 0 : index
    %c0_0 = arith.constant 0 : index
    %0 = vector.load %arg1[%c0, %c0_0] : memref<64x128xf32, #tpu.memory_space<vmem>>, vector<64x128xf32>
    %c0_1 = arith.constant 0 : index
    %c0_2 = arith.constant 0 : index
    %1 = vector.load %arg2[%c0_1, %c0_2] : memref<128x64xf32, #tpu.memory_space<vmem>>, vector<128x64xf32>
    %cst = arith.constant dense<0.000000e+00> : vector<64x64xf32>
    %2 = tpu.matmul %0, %1, %cst {dimension_numbers = #tpu.dot_dimension_numbers<[1], [0], [0], [1], [0, 0, 1, 1], [], []>} : vector<64x128xf32>, vector<128x64xf32>, vector<64x64xf32> -> vector<64x64xf32>
    %cst_3 = arith.constant dense<0xFF800000> : vector<64xf32>
    %3 = vector.multi_reduction <maximumf>, %2, %cst_3 [1] : vector<64x64xf32> to vector<64xf32>
    %4 = vector.shape_cast %3 : vector<64xf32> to vector<64x1xf32>
    %5 = vector.broadcast %4 : vector<64x1xf32> to vector<64x64xf32>
    %6 = arith.subf %2, %5 : vector<64x64xf32>
    %7 = math.exp %6 : vector<64x64xf32>
    %cst_4 = arith.constant dense<0.000000e+00> : vector<64xf32>
    %8 = vector.multi_reduction <add>, %7, %cst_4 [1] : vector<64x64xf32> to vector<64xf32>
    %9 = vector.shape_cast %8 : vector<64xf32> to vector<64x1xf32>
    %10 = math.log %9 : vector<64x1xf32>
    %11 = vector.broadcast %10 : vector<64x1xf32> to vector<64x64xf32>
    %12 = arith.subf %6, %11 : vector<64x64xf32>
    %c0_5 = arith.constant 0 : index
    %c0_6 = arith.constant 0 : index
    %13 = vector.load %arg3[%c0_5, %c0_6] : memref<64x64xf32, #tpu.memory_space<vmem>>, vector<64x64xf32>
    tpu.vector_store %arg3[%c0_5, %c0_6], %12 {strides = array<i32>} : memref<64x64xf32, #tpu.memory_space<vmem>>, vector<64x64xf32>,
    return
  }
  func.func @transform_0(%arg0: i32) -> (i32, i32) {
    %c0_i32 = arith.constant 0 : i32
    %c0_i32_0 = arith.constant 0 : i32
    %c0_i32_1 = arith.constant 0 : i32
    return %c0_i32, %c0_i32_0 : i32, i32
  }
  func.func @transform_1(%arg0: i32) -> (i32, i32) {
    %c0_i32 = arith.constant 0 : i32
    %c0_i32_0 = arith.constant 0 : i32
    %c0_i32_1 = arith.constant 0 : i32
    return %c0_i32, %c0_i32_0 : i32, i32
  }
  func.func @transform_2(%arg0: i32) -> (i32, i32) {
    %c0_i32 = arith.constant 0 : i32
    %c0_i32_0 = arith.constant 0 : i32
    %c0_i32_1 = arith.constant 0 : i32
    return %c0_i32, %c0_i32_0 : i32, i32
  }
}

</mosaic_0001>

<llo_original>
// kernel: holomol_forward.8
$region0: #{holomol_forward.8}
  #allocation0 [shape = 'u32[]', space=smem, size = 0x4, offset = 0x4, fixed_abs, tag = 'smem constant byte address 0x4 - core index']
  #allocation1 [shape = 'u32[144,128]{1,0:T(1,128)}', space=vmem, size = 0x12000, scoped, tag = 'internal scratch']
  %s0 = inlined_call_operand.vmem [shape: f32[64,515], index: 0, kind: input, shape index: {}]
  %s1 = inlined_call_operand.vmem [shape: f32[1,515,66], index: 1, kind: input, shape index: {}]
  %s2 = inlined_call_operand.vmem [shape: f32[64,64], index: 2, kind: input, shape index: {}]
  %s3 = inlined_call_operand.vmem [shape: f32[64,64], index: 3, kind: output, shape index: {}]
  %s4 = sld [smem:[#allocation0]]
  $region22: #{holomol_forward.8} parent=0
    _
  %s6 = ssub.s32 1, %s4
  %s7 = scalar_select 0, %s6, %s4
  // Predicated region
  $region2: #{holomol_forward.8} parent=0 // pred_check
    _
  $region3: #{holomol_forward.8} parent=0 // pred_check_branch
    %9 = sbr.rel (0) target = $region5
  $region4: #{holomol_forward.8} parent=0 // pred_region
    _
  $region5: #{holomol_forward.8} parent=0 // pred_fallthru
    _
  // Predicated region
  $region6: #{holomol_forward.8} parent=0 // pred_check
    _
  $region7: #{holomol_forward.8} parent=0 // pred_check_branch
    %11 = sbr.rel (0) target = $region9
  $region8: #{holomol_forward.8} parent=0 // pred_region
    _
  $region9: #{holomol_forward.8} parent=0 // pred_fallthru
    _
  // Predicated region
  $region10: #{holomol_forward.8} parent=0 // pred_check
    _
  $region11: #{holomol_forward.8} parent=0 // pred_check_branch
    %13 = sbr.rel (0) target = $region13
  $region12: #{holomol_forward.8} parent=0 // pred_region
    _
  $region13: #{holomol_forward.8} parent=0 // pred_fallthru
    _
  %v14 = vld [vmem:[%s0] sm:$0xff]
  %v15 = vld [vmem:[%s0 + $0x8] sm:$0xff]
  %v16 = vld [vmem:[%s0 + $0x10] sm:$0xff]
  %v17 = vld [vmem:[%s0 + $0x18] sm:$0xff]
  %v18 = vld [vmem:[%s0 + $0x20] sm:$0xff]
  %v19 = vld [vmem:[%s0 + $0x28] sm:$0xff]
  %v20 = vld [vmem:[%s0 + $0x30] sm:$0xff]
  %v21 = vld [vmem:[%s0 + $0x38] sm:$0xff]
  %v22 = vld [vmem:[%s0 + $0x40] sm:$0xff]
  %v23 = vld [vmem:[%s0 + $0x48] sm:$0xff]
  %v24 = vld [vmem:[%s0 + $0x50] sm:$0xff]
  %v25 = vld [vmem:[%s0 + $0x58] sm:$0xff]
  %v26 = vld [vmem:[%s0 + $0x60] sm:$0xff]
  %v27 = vld [vmem:[%s0 + $0x68] sm:$0xff]
  %v28 = vld [vmem:[%s0 + $0x70] sm:$0xff]
  %v29 = vld [vmem:[%s0 + $0x78] sm:$0xff]
  %v30 = vld [vmem:[%s0 + $0x80] sm:$0xff]
  %v31 = vld [vmem:[%s0 + $0x88] sm:$0xff]
  %v32 = vld [vmem:[%s0 + $0x90] sm:$0xff]
  %v33 = vld [vmem:[%s0 + $0x98] sm:$0xff]
  %v34 = vld [vmem:[%s0 + $0xa0] sm:$0xff]
  %v35 = vld [vmem:[%s0 + $0xa8] sm:$0xff]
  %v36 = vld [vmem:[%s0 + $0xb0] sm:$0xff]
  %v37 = vld [vmem:[%s0 + $0xb8] sm:$0xff]
  %v38 = vld [vmem:[%s0 + $0xc0] sm:$0xff]
  %v39 = vld [vmem:[%s0 + $0xc8] sm:$0xff]
  %v40 = vld [vmem:[%s0 + $0xd0] sm:$0xff]
  %v41 = vld [vmem:[%s0 + $0xd8] sm:$0xff]
  %v42 = vld [vmem:[%s0 + $0xe0] sm:$0xff]
  %v43 = vld [vmem:[%s0 + $0xe8] sm:$0xff]
  %v44 = vld [vmem:[%s0 + $0xf0] sm:$0xff]
  %v45 = vld [vmem:[%s0 + $0xf8] sm:$0xff]
  %v46 = vld [vmem:[%s0 + $0x100] sm:$0xff]
  %v47 = vld [vmem:[%s0 + $0x108] sm:$0xff]
  %v48 = vld [vmem:[%s0 + $0x110] sm:$0xff]
  %v49 = vld [vmem:[%s0 + $0x118] sm:$0xff]
  %v50 = vld [vmem:[%s0 + $0x120] sm:$0xff]
  %v51 = vld [vmem:[%s0 + $0x128] sm:$0xff]
  %v52 = vld [vmem:[%s0 + $0x130] sm:$0xff]
  %v53 = vld [vmem:[%s0 + $0x138] sm:$0xff]
  %v54 = vld [vmem:[%s1] sm:$0xff]
  %v55 = vld [vmem:[%s1 + $0x8] sm:$0xff]
  %v56 = vld [vmem:[%s1 + $0x10] sm:$0xff]
  %v57 = vld [vmem:[%s1 + $0x18] sm:$0xff]
  %v58 = vld [vmem:[%s1 + $0x20] sm:$0xff]
  %v59 = vld [vmem:[%s1 + $0x28] sm:$0xff]
  %v60 = vld [vmem:[%s1 + $0x30] sm:$0xff]
  %v61 = vld [vmem:[%s1 + $0x38] sm:$0xff]
  %v62 = vld [vmem:[%s1 + $0x40] sm:$0xff]
  %v63 = vld [vmem:[%s1 + $0x48] sm:$0xff]
  %v64 = vld [vmem:[%s1 + $0x50] sm:$0xff]
  %v65 = vld [vmem:[%s1 + $0x58] sm:$0xff]
  %v66 = vld [vmem:[%s1 + $0x60] sm:$0xff]
  %v67 = vld [vmem:[%s1 + $0x68] sm:$0xff]
  %v68 = vld [vmem:[%s1 + $0x70] sm:$0xff]
  %v69 = vld [vmem:[%s1 + $0x78] sm:$0xff]
  %v70 = vld [vmem:[%s1 + $0x80] sm:$0xff]
  %v71 = vld [vmem:[%s1 + $0x88] sm:$0xff]
  %v72 = vld [vmem:[%s1 + $0x90] sm:$0xff]
  %v73 = vld [vmem:[%s1 + $0x98] sm:$0xff]
  %v74 = vld [vmem:[%s1 + $0xa0] sm:$0xff]
  %v75 = vld [vmem:[%s1 + $0xa8] sm:$0xff]
  %v76 = vld [vmem:[%s1 + $0xb0] sm:$0xff]
  %v77 = vld [vmem:[%s1 + $0xb8] sm:$0xff]
  %v78 = vld [vmem:[%s1 + $0xc0] sm:$0xff]
  %v79 = vld [vmem:[%s1 + $0xc8] sm:$0xff]
  %v80 = vld [vmem:[%s1 + $0xd0] sm:$0xff]
  %v81 = vld [vmem:[%s1 + $0xd8] sm:$0xff]
  %v82 = vld [vmem:[%s1 + $0xe0] sm:$0xff]
  %v83 = vld [vmem:[%s1 + $0xe8] sm:$0xff]
  %v84 = vld [vmem:[%s1 + $0xf0] sm:$0xff]
  %v85 = vld [vmem:[%s1 + $0xf8] sm:$0xff]
  %v86 = vld [vmem:[%s1 + $0x100] sm:$0xff]
  %v87 = vld [vmem:[%s1 + $0x108] sm:$0xff]
  %v88 = vld [vmem:[%s1 + $0x110] sm:$0xff]
  %v89 = vld [vmem:[%s1 + $0x118] sm:$0xff]
  %v90 = vld [vmem:[%s1 + $0x120] sm:$0xff]
  %v91 = vld [vmem:[%s1 + $0x128] sm:$0xff]
  %v92 = vld [vmem:[%s1 + $0x130] sm:$0xff]
  %v93 = vld [vmem:[%s1 + $0x138] sm:$0xff]
  %v94 = vld [vmem:[%s1 + $0x140] sm:$0xff]
  %v95 = vld [vmem:[%s1 + $0x148] sm:$0xff]
  %v96 = vld [vmem:[%s1 + $0x150] sm:$0xff]
  %v97 = vld [vmem:[%s1 + $0x158] sm:$0xff]
  %v98 = vld [vmem:[%s1 + $0x160] sm:$0xff]
  %v99 = vld [vmem:[%s1 + $0x168] sm:$0xff]
  %v100 = vld [vmem:[%s1 + $0x170] sm:$0xff]
  %v101 = vld [vmem:[%s1 + $0x178] sm:$0xff]
  %v102 = vld [vmem:[%s1 + $0x180] sm:$0xff]
  %v103 = vld [vmem:[%s1 + $0x188] sm:$0xff]
  %v104 = vld [vmem:[%s1 + $0x190] sm:$0xff]
  %v105 = vld [vmem:[%s1 + $0x198] sm:$0xff]
  %v106 = vld [vmem:[%s1 + $0x1a0] sm:$0xff]
  %v107 = vld [vmem:[%s1 + $0x1a8] sm:$0xff]
  %v108 = vld [vmem:[%s1 + $0x1b0] sm:$0xff]
  %v109 = vld [vmem:[%s1 + $0x1b8] sm:$0xff]
  %v110 = vld [vmem:[%s1 + $0x1c0] sm:$0xff]
  %v111 = vld [vmem:[%s1 + $0x1c8] sm:$0xff]
  %v112 = vld [vmem:[%s1 + $0x1d0] sm:$0xff]
  %v113 = vld [vmem:[%s1 + $0x1d8] sm:$0xff]
  %v114 = vld [vmem:[%s1 + $0x1e0] sm:$0xff]
  %v115 = vld [vmem:[%s1 + $0x1e8] sm:$0xff]
  %v116 = vld [vmem:[%s1 + $0x1f0] sm:$0xff]
  %v117 = vld [vmem:[%s1 + $0x1f8] sm:$0xff]
  %v118 = vld [vmem:[%s1 + $0x200] sm:$0x7]
  %v119 = vld [vmem:[%s2] sm:$0xff]
  %v120 = vld [vmem:[%s2 + $0x8] sm:$0xff]
  %v121 = vld [vmem:[%s2 + $0x10] sm:$0xff]
  %v122 = vld [vmem:[%s2 + $0x18] sm:$0xff]
  %v123 = vld [vmem:[%s2 + $0x20] sm:$0xff]
  %v124 = vld [vmem:[%s2 + $0x28] sm:$0xff]
  %v125 = vld [vmem:[%s2 + $0x30] sm:$0xff]
  %v126 = vld [vmem:[%s2 + $0x38] sm:$0xff]
  %vm127 = vcmask 23552
  %v129 = vsel %vm127, %v18, 0
  %v132 = vsel %vm127, %v23, 0
  %v135 = vsel %vm127, %v28, 0
  %v138 = vsel %vm127, %v33, 0
  %v141 = vsel %vm127, %v38, 0
  %v144 = vsel %vm127, %v43, 0
  %v147 = vsel %vm127, %v48, 0
  %v150 = vsel %vm127, %v53, 0
  %vm152 = vcmask 1042432
  %v154 = vsel %vm152, %v118, 0
  %156 = vmatprep.subr.mxu0 0.0
  %157 = vmatpush1.msra.mxu0 %v69
  %158 = vmatprep.subr.mxu0 0.0
  %159 = vmatpush1.msra.mxu0 %v68
  %160 = vmatprep.subr.mxu0 0.0
  %161 = vmatpush1.msra.mxu0 %v67
  %162 = vmatprep.subr.mxu0 0.0
  %163 = vmatpush1.msra.mxu0 %v66
  %164 = vmatprep.subr.mxu0 0.0
  %165 = vmatpush1.msra.mxu0 %v65
  %166 = vmatprep.subr.mxu0 0.0
  %167 = vmatpush1.msra.mxu0 %v64
  %168 = vmatprep.subr.mxu0 0.0
  %169 = vmatpush1.msra.mxu0 %v63
  %170 = vmatprep.subr.mxu0 0.0
  %171 = vmatpush1.msra.mxu0 %v62
  %172 = vmatprep.subr.mxu0 0.0
  %173 = vmatpush1.msra.mxu0 %v61
  %174 = vmatprep.subr.mxu0 0.0
  %175 = vmatpush1.msra.mxu0 %v60
  %176 = vmatprep.subr.mxu0 0.0
  %177 = vmatpush1.msra.mxu0 %v59
  %178 = vmatprep.subr.mxu0 0.0
  %179 = vmatpush1.msra.mxu0 %v58
  %180 = vmatprep.subr.mxu0 0.0
  %181 = vmatpush1.msra.mxu0 %v57
  %182 = vmatprep.subr.mxu0 0.0
  %183 = vmatpush1.msra.mxu0 %v56
  %184 = vmatprep.subr.mxu0 0.0
  %185 = vmatpush1.msra.mxu0 %v55
  %186 = vmatprep.subr.mxu0 0.0
  %187 = vmatpush1.msra.mxu0 %v54
  %188 = vmatprep.subr.mxu0 0.0
  %189 = vmatpush2.msra.mxu0 %v85
  %190 = vmatprep.subr.mxu0 0.0
  %191 = vmatpush2.msra.mxu0 %v84
  %192 = vmatprep.subr.mxu0 0.0
  %193 = vmatpush2.msra.mxu0 %v83
  %194 = vmatprep.subr.mxu0 0.0
  %195 = vmatpush2.msra.mxu0 %v82
  %196 = vmatprep.subr.mxu0 0.0
  %197 = vmatpush2.msra.mxu0 %v81
  %198 = vmatprep.subr.mxu0 0.0
  %199 = vmatpush2.msra.mxu0 %v80
  %200 = vmatprep.subr.mxu0 0.0
  %201 = vmatpush2.msra.mxu0 %v79
  %202 = vmatprep.subr.mxu0 0.0
  %203 = vmatpush2.msra.mxu0 %v78
  %204 = vmatprep.subr.mxu0 0.0
  %205 = vmatpush2.msra.mxu0 %v77
  %206 = vmatprep.subr.mxu0 0.0
  %207 = vmatpush2.msra.mxu0 %v76
  %208 = vmatprep.subr.mxu0 0.0
  %209 = vmatpush2.msra.mxu0 %v75
  %210 = vmatprep.subr.mxu0 0.0
  %211 = vmatpush2.msra.mxu0 %v74
  %212 = vmatprep.subr.mxu0 0.0
  %213 = vmatpush2.msra.mxu0 %v73
  %214 = vmatprep.subr.mxu0 0.0
  %215 = vmatpush2.msra.mxu0 %v72
  %216 = vmatprep.subr.mxu0 0.0
  %217 = vmatpush2.msra.mxu0 %v71
  %218 = vmatprep.subr.mxu0 0.0
  %219 = vmatpush2.msra.mxu0 %v70
  %220 = vmatprep.mubr.f32.mxu0 %v15
  %221 = vmatmul.mubr.f32.gmra.mxu0 %v14
  %v222 = vpop.f32.mrf.mxu0
  %v223 = vadd.f32 0.0, %v222
  %v224 = vpop.f32.mrf.mxu0
  %225 = vmatprep.mubr.f32.mxu0 %v20
  %226 = vmatmul.mubr.f32.gmra.mxu0 %v19
  %v227 = vpop.f32.mrf.mxu0
  %v228 = vadd.f32 0.0, %v227
  %v229 = vpop.f32.mrf.mxu0
  %230 = vmatprep.mubr.f32.mxu0 %v25
  %231 = vmatmul.mubr.f32.gmra.mxu0 %v24
  %v232 = vpop.f32.mrf.mxu0
  %v233 = vadd.f32 0.0, %v232
  %v234 = vpop.f32.mrf.mxu0
  %235 = vmatprep.mubr.f32.mxu0 %v30
  %236 = vmatmul.mubr.f32.gmra.mxu0 %v29
  %v237 = vpop.f32.mrf.mxu0
  %v238 = vadd.f32 0.0, %v237
  %v239 = vpop.f32.mrf.mxu0
  %240 = vmatprep.mubr.f32.mxu0 %v35
  %241 = vmatmul.mubr.f32.gmra.mxu0 %v34
  %v242 = vpop.f32.mrf.mxu0
  %v243 = vadd.f32 0.0, %v242
  %v244 = vpop.f32.mrf.mxu0
  %245 = vmatprep.mubr.f32.mxu0 %v40
  %246 = vmatmul.mubr.f32.gmra.mxu0 %v39
  %v247 = vpop.f32.mrf.mxu0
  %v248 = vadd.f32 0.0, %v247
  %v249 = vpop.f32.mrf.mxu0
  %250 = vmatprep.mubr.f32.mxu0 %v45
  %251 = vmatmul.mubr.f32.gmra.mxu0 %v44
  %v252 = vpop.f32.mrf.mxu0
  %v253 = vadd.f32 0.0, %v252
  %v254 = vpop.f32.mrf.mxu0
  %255 = vmatprep.mubr.f32.mxu0 %v50
  %256 = vmatmul.mubr.f32.gmra.mxu0 %v49
  %v257 = vpop.f32.mrf.mxu0
  %v258 = vadd.f32 0.0, %v257
  %v259 = vpop.f32.mrf.mxu0
  %260 = vdwg.mxu0
  %261 = vmatprep.subr.mxu0 0.0
  %262 = vmatpush1.msra.mxu0 %v101
  %263 = vmatprep.subr.mxu0 0.0
  %264 = vmatpush1.msra.mxu0 %v100
  %265 = vmatprep.subr.mxu0 0.0
  %266 = vmatpush1.msra.mxu0 %v99
  %267 = vmatprep.subr.mxu0 0.0
  %268 = vmatpush1.msra.mxu0 %v98
  %269 = vmatprep.subr.mxu0 0.0
  %270 = vmatpush1.msra.mxu0 %v97
  %271 = vmatprep.subr.mxu0 0.0
  %272 = vmatpush1.msra.mxu0 %v96
  %273 = vmatprep.subr.mxu0 0.0
  %274 = vmatpush1.msra.mxu0 %v95
  %275 = vmatprep.subr.mxu0 0.0
  %276 = vmatpush1.msra.mxu0 %v94
  %277 = vmatprep.subr.mxu0 0.0
  %278 = vmatpush1.msra.mxu0 %v93
  %279 = vmatprep.subr.mxu0 0.0
  %280 = vmatpush1.msra.mxu0 %v92
  %281 = vmatprep.subr.mxu0 0.0
  %282 = vmatpush1.msra.mxu0 %v91
  %283 = vmatprep.subr.mxu0 0.0
  %284 = vmatpush1.msra.mxu0 %v90
  %285 = vmatprep.subr.mxu0 0.0
  %286 = vmatpush1.msra.mxu0 %v89
  %287 = vmatprep.subr.mxu0 0.0
  %288 = vmatpush1.msra.mxu0 %v88
  %289 = vmatprep.subr.mxu0 0.0
  %290 = vmatpush1.msra.mxu0 %v87
  %291 = vmatprep.subr.mxu0 0.0
  %292 = vmatpush1.msra.mxu0 %v86
  %293 = vmatprep.subr.mxu0 0.0
  %294 = vmatpush2.msra.mxu0 %v117
  %295 = vmatprep.subr.mxu0 0.0
  %296 = vmatpush2.msra.mxu0 %v116
  %297 = vmatprep.subr.mxu0 0.0
  %298 = vmatpush2.msra.mxu0 %v115
  %299 = vmatprep.subr.mxu0 0.0
  %300 = vmatpush2.msra.mxu0 %v114
  %301 = vmatprep.subr.mxu0 0.0
  %302 = vmatpush2.msra.mxu0 %v113
  %303 = vmatprep.subr.mxu0 0.0
  %304 = vmatpush2.msra.mxu0 %v112
  %305 = vmatprep.subr.mxu0 0.0
  %306 = vmatpush2.msra.mxu0 %v111
  %307 = vmatprep.subr.mxu0 0.0
  %308 = vmatpush2.msra.mxu0 %v110
  %309 = vmatprep.subr.mxu0 0.0
  %310 = vmatpush2.msra.mxu0 %v109
  %311 = vmatprep.subr.mxu0 0.0
  %312 = vmatpush2.msra.mxu0 %v108
  %313 = vmatprep.subr.mxu0 0.0
  %314 = vmatpush2.msra.mxu0 %v107
  %315 = vmatprep.subr.mxu0 0.0
  %316 = vmatpush2.msra.mxu0 %v106
  %317 = vmatprep.subr.mxu0 0.0
  %318 = vmatpush2.msra.mxu0 %v105
  %319 = vmatprep.subr.mxu0 0.0
  %320 = vmatpush2.msra.mxu0 %v104
  %321 = vmatprep.subr.mxu0 0.0
  %322 = vmatpush2.msra.mxu0 %v103
  %323 = vmatprep.subr.mxu0 0.0
  %324 = vmatpush2.msra.mxu0 %v102
  %325 = vmatprep.mubr.f32.mxu0 %v17
  %326 = vmatmul.mubr.f32.gmra.mxu0 %v16
  %v327 = vpop.f32.mrf.mxu0
  %v328 = vadd.f32 %v223, %v327
  %v329 = vpop.f32.mrf.mxu0
  %330 = vmatprep.mubr.f32.mxu0 %v22
  %331 = vmatmul.mubr.f32.gmra.mxu0 %v21
  %v332 = vpop.f32.mrf.mxu0
  %v333 = vadd.f32 %v228, %v332
  %v334 = vpop.f32.mrf.mxu0
  %335 = vmatprep.mubr.f32.mxu0 %v27
  %336 = vmatmul.mubr.f32.gmra.mxu0 %v26
  %v337 = vpop.f32.mrf.mxu0
  %v338 = vadd.f32 %v233, %v337
  %v339 = vpop.f32.mrf.mxu0
  %340 = vmatprep.mubr.f32.mxu0 %v32
  %341 = vmatmul.mubr.f32.gmra.mxu0 %v31
  %v342 = vpop.f32.mrf.mxu0
  %v343 = vadd.f32 %v238, %v342
  %v344 = vpop.f32.mrf.mxu0
  %345 = vmatprep.mubr.f32.mxu0 %v37
  %346 = vmatmul.mubr.f32.gmra.mxu0 %v36
  %v347 = vpop.f32.mrf.mxu0
  %v348 = vadd.f32 %v243, %v347
  %v349 = vpop.f32.mrf.mxu0
  %350 = vmatprep.mubr.f32.mxu0 %v42
  %351 = vmatmul.mubr.f32.gmra.mxu0 %v41
  %v352 = vpop.f32.mrf.mxu0
  %v353 = vadd.f32 %v248, %v352
  %v354 = vpop.f32.mrf.mxu0
  %355 = vmatprep.mubr.f32.mxu0 %v47
  %356 = vmatmul.mubr.f32.gmra.mxu0 %v46
  %v357 = vpop.f32.mrf.mxu0
  %v358 = vadd.f32 %v253, %v357
  %v359 = vpop.f32.mrf.mxu0
  %360 = vmatprep.mubr.f32.mxu0 %v52
  %361 = vmatmul.mubr.f32.gmra.mxu0 %v51
  %v362 = vpop.f32.mrf.mxu0
  %v363 = vadd.f32 %v258, %v362
  %v364 = vpop.f32.mrf.mxu0
  %365 = vdwg.mxu0
  %366 = vmatprep.subr.mxu0 0.0
  %367 = vmatpush1.msra.mxu0 0.0
  %368 = vmatprep.subr.mxu0 0.0
  %369 = vmatpush1.msra.mxu0 0.0
  %370 = vmatprep.subr.mxu0 0.0
  %371 = vmatpush1.msra.mxu0 0.0
  %372 = vmatprep.subr.mxu0 0.0
  %373 = vmatpush1.msra.mxu0 0.0
  %374 = vmatprep.subr.mxu0 0.0
  %375 = vmatpush1.msra.mxu0 0.0
  %376 = vmatprep.subr.mxu0 0.0
  %377 = vmatpush1.msra.mxu0 0.0
  %378 = vmatprep.subr.mxu0 0.0
  %379 = vmatpush1.msra.mxu0 0.0
  %380 = vmatprep.subr.mxu0 0.0
  %381 = vmatpush1.msra.mxu0 0.0
  %382 = vmatprep.subr.mxu0 0.0
  %383 = vmatpush1.msra.mxu0 0.0
  %384 = vmatprep.subr.mxu0 0.0
  %385 = vmatpush1.msra.mxu0 0.0
  %386 = vmatprep.subr.mxu0 0.0
  %387 = vmatpush1.msra.mxu0 0.0
  %388 = vmatprep.subr.mxu0 0.0
  %389 = vmatpush1.msra.mxu0 0.0
  %390 = vmatprep.subr.mxu0 0.0
  %391 = vmatpush1.msra.mxu0 0.0
  %392 = vmatprep.subr.mxu0 0.0
  %393 = vmatpush1.msra.mxu0 0.0
  %394 = vmatprep.subr.mxu0 0.0
  %395 = vmatpush1.msra.mxu0 0.0
  %396 = vmatprep.subr.mxu0 0.0
  %397 = vmatpush1.msra.mxu0 %v154
  %398 = vmatprep.subr.mxu0 0.0
  %399 = vmatpush2.msra.mxu0 0.0
  %400 = vmatprep.subr.mxu0 0.0
  %401 = vmatpush2.msra.mxu0 0.0
  %402 = vmatprep.subr.mxu0 0.0
  %403 = vmatpush2.msra.mxu0 0.0
  %404 = vmatprep.subr.mxu0 0.0
  %405 = vmatpush2.msra.mxu0 0.0
  %406 = vmatprep.subr.mxu0 0.0
  %407 = vmatpush2.msra.mxu0 0.0
  %408 = vmatprep.subr.mxu0 0.0
  %409 = vmatpush2.msra.mxu0 0.0
  %410 = vmatprep.subr.mxu0 0.0
  %411 = vmatpush2.msra.mxu0 0.0
  %412 = vmatprep.subr.mxu0 0.0
  %413 = vmatpush2.msra.mxu0 0.0
  %414 = vmatprep.subr.mxu0 0.0
  %415 = vmatpush2.msra.mxu0 0.0
  %416 = vmatprep.subr.mxu0 0.0
  %417 = vmatpush2.msra.mxu0 0.0
  %418 = vmatprep.subr.mxu0 0.0
  %419 = vmatpush2.msra.mxu0 0.0
  %420 = vmatprep.subr.mxu0 0.0
  %421 = vmatpush2.msra.mxu0 0.0
  %422 = vmatprep.subr.mxu0 0.0
  %423 = vmatpush2.msra.mxu0 0.0
  %424 = vmatprep.subr.mxu0 0.0
  %425 = vmatpush2.msra.mxu0 0.0
  %426 = vmatprep.subr.mxu0 0.0
  %427 = vmatpush2.msra.mxu0 0.0
  %428 = vmatprep.subr.mxu0 0.0
  %429 = vmatpush2.msra.mxu0 0.0
  %430 = vmatprep.mubr.f32.mxu0 0.0
  %431 = vmatmul.mubr.f32.gmra.mxu0 %v129
  %v432 = vpop.f32.mrf.mxu0
  %v433 = vadd.f32 %v328, %v432
  %v434 = vpop.f32.mrf.mxu0
  %435 = vmatprep.mubr.f32.mxu0 0.0
  %436 = vmatmul.mubr.f32.gmra.mxu0 %v132
  %v437 = vpop.f32.mrf.mxu0
  %v438 = vadd.f32 %v333, %v437
  %v439 = vpop.f32.mrf.mxu0
  %440 = vmatprep.mubr.f32.mxu0 0.0
  %441 = vmatmul.mubr.f32.gmra.mxu0 %v135
  %v442 = vpop.f32.mrf.mxu0
  %v443 = vadd.f32 %v338, %v442
  %v444 = vpop.f32.mrf.mxu0
  %445 = vmatprep.mubr.f32.mxu0 0.0
  %446 = vmatmul.mubr.f32.gmra.mxu0 %v138
  %v447 = vpop.f32.mrf.mxu0
  %v448 = vadd.f32 %v343, %v447
  %v449 = vpop.f32.mrf.mxu0
  %450 = vmatprep.mubr.f32.mxu0 0.0
  %451 = vmatmul.mubr.f32.gmra.mxu0 %v141
  %v452 = vpop.f32.mrf.mxu0
  %v453 = vadd.f32 %v348, %v452
  %v454 = vpop.f32.mrf.mxu0
  %455 = vmatprep.mubr.f32.mxu0 0.0
  %456 = vmatmul.mubr.f32.gmra.mxu0 %v144
  %v457 = vpop.f32.mrf.mxu0
  %v458 = vadd.f32 %v353, %v457
  %v459 = vpop.f32.mrf.mxu0
  %460 = vmatprep.mubr.f32.mxu0 0.0
  %461 = vmatmul.mubr.f32.gmra.mxu0 %v147
  %v462 = vpop.f32.mrf.mxu0
  %v463 = vadd.f32 %v358, %v462
  %v464 = vpop.f32.mrf.mxu0
  %465 = vmatprep.mubr.f32.mxu0 0.0
  %466 = vmatmul.mubr.f32.gmra.mxu0 %v150
  %v467 = vpop.f32.mrf.mxu0
  %v468 = vadd.f32 %v363, %v467
  %v469 = vpop.f32.mrf.mxu0
  %470 = vdwg.mxu0
  %v471 = vsub.f32 %v119, 1.0
  %v472 = vsub.f32 %v120, 1.0
  %v473 = vsub.f32 %v121, 1.0
  %v474 = vsub.f32 %v122, 1.0
  %v475 = vsub.f32 %v123, 1.0
  %v476 = vsub.f32 %v124, 1.0
  %v477 = vsub.f32 %v125, 1.0
  %v478 = vsub.f32 %v126, 1.0
  %v479 = vmul.f32 %v471, 9e+15
  %v480 = vmul.f32 %v472, 9e+15
  %v481 = vmul.f32 %v473, 9e+15
  %v482 = vmul.f32 %v474, 9e+15
  %v483 = vmul.f32 %v475, 9e+15
  %v484 = vmul.f32 %v476, 9e+15
  %v485 = vmul.f32 %v477, 9e+15
  %v486 = vmul.f32 %v478, 9e+15
  %495 = vrot.lane.b32.xlu0 %v433, 63
  %v496 = vpop.permute.xlu0 %495
  %497 = vrot.lane.b32.xlu0 %v438, 63
  %v498 = vpop.permute.xlu0 %497
  %499 = vrot.lane.b32.xlu0 %v443, 63
  %v500 = vpop.permute.xlu0 %499
  %501 = vrot.lane.b32.xlu0 %v448, 63
  %v502 = vpop.permute.xlu0 %501
  %503 = vrot.lane.b32.xlu0 %v453, 63
  %v504 = vpop.permute.xlu0 %503
  %505 = vrot.lane.b32.xlu0 %v458, 63
  %v506 = vpop.permute.xlu0 %505
  %507 = vrot.lane.b32.xlu0 %v463, 63
  %v508 = vpop.permute.xlu0 %507
  %509 = vrot.lane.b32.xlu0 %v468, 63
  %v510 = vpop.permute.xlu0 %509
  %519 = vxpose.xlu0.b32.start [1/16] %v496, 128
  %520 = vxpose.xlu0.b32.cont [2/16] %v498, 128
  %521 = vxpose.xlu0.b32.cont [3/16] %v500, 128
  %522 = vxpose.xlu0.b32.cont [4/16] %v502, 128
  %523 = vxpose.xlu0.b32.cont [5/16] %v504, 128
  %524 = vxpose.xlu0.b32.cont [6/16] %v506, 128
  %525 = vxpose.xlu0.b32.cont [7/16] %v508, 128
  %526 = vxpose.xlu0.b32.cont [8/16] %v510, 128
  %527 = vxpose.xlu0.b32.cont [9/16] 0.0, 128
  %528 = vxpose.xlu0.b32.cont [10/16] 0.0, 128
  %529 = vxpose.xlu0.b32.cont [11/16] 0.0, 128
  %530 = vxpose.xlu0.b32.cont [12/16] 0.0, 128
  %531 = vxpose.xlu0.b32.cont [13/16] 0.0, 128
  %532 = vxpose.xlu0.b32.cont [14/16] 0.0, 128
  %533 = vxpose.xlu0.b32.cont [15/16] 0.0, 128
  %534 = vxpose.xlu0.b32.end [16/16] 0.0, 128
  %v535 = vpop.trf.xlu0
  %v536 = vpop.trf.xlu0
  %v537 = vpop.trf.xlu0
  %v538 = vpop.trf.xlu0
  %v539 = vpop.trf.xlu0
  %v540 = vpop.trf.xlu0
  %v541 = vpop.trf.xlu0
  %v542 = vpop.trf.xlu0
  %v543 = vpop.trf.xlu0
  %v544 = vpop.trf.xlu0
  %v545 = vpop.trf.xlu0
  %v546 = vpop.trf.xlu0
  %v547 = vpop.trf.xlu0
  %v548 = vpop.trf.xlu0
  %v549 = vpop.trf.xlu0
  %v550 = vpop.trf.xlu0
  %551 = vset.pattern.permute.xlu0 64
  %552 = vperm.xlu0 %551, %v433
  %v553 = vpop.permute.xlu0 %552
  %555 = vset.pattern.permute.xlu0 64
  %556 = vperm.xlu0 %555, %v438
  %v557 = vpop.permute.xlu0 %556
  %559 = vset.pattern.permute.xlu0 64
  %560 = vperm.xlu0 %559, %v443
  %v561 = vpop.permute.xlu0 %560
  %563 = vset.pattern.permute.xlu0 64
  %564 = vperm.xlu0 %563, %v448
  %v565 = vpop.permute.xlu0 %564
  %567 = vset.pattern.permute.xlu0 64
  %568 = vperm.xlu0 %567, %v453
  %v569 = vpop.permute.xlu0 %568
  %571 = vset.pattern.permute.xlu0 64
  %572 = vperm.xlu0 %571, %v458
  %v573 = vpop.permute.xlu0 %572
  %575 = vset.pattern.permute.xlu0 64
  %576 = vperm.xlu0 %575, %v463
  %v577 = vpop.permute.xlu0 %576
  %579 = vset.pattern.permute.xlu0 64
  %580 = vperm.xlu0 %579, %v468
  %v581 = vpop.permute.xlu0 %580
  %v583 = vlaneseq
  %v584 = vshrl.u32 %v583, 7
  %v585 = vsub.s32 0, %v584
  %v586 = vrot.slane %v535, %v585
  %v587 = vadd.f32 %v553, %v586
  %v588 = vadd.f32 %v557, %v586
  %v589 = vadd.f32 %v561, %v586
  %v590 = vadd.f32 %v565, %v586
  %v591 = vadd.f32 %v569, %v586
  %v592 = vadd.f32 %v573, %v586
  %v593 = vadd.f32 %v577, %v586
  %v594 = vadd.f32 %v581, %v586
  %vm595 = vcmp.gt.f32.partialorder %v587, 0.0
  %vm596 = vcmp.gt.f32.partialorder %v588, 0.0
  %vm597 = vcmp.gt.f32.partialorder %v589, 0.0
  %vm598 = vcmp.gt.f32.partialorder %v590, 0.0
  %vm599 = vcmp.gt.f32.partialorder %v591, 0.0
  %vm600 = vcmp.gt.f32.partialorder %v592, 0.0
  %vm601 = vcmp.gt.f32.partialorder %v593, 0.0
  %vm602 = vcmp.gt.f32.partialorder %v594, 0.0
  %v603 = vmul.f32 %v587, 0.2
  %v604 = vmul.f32 %v588, 0.2
  %v605 = vmul.f32 %v589, 0.2
  %v606 = vmul.f32 %v590, 0.2
  %v607 = vmul.f32 %v591, 0.2
  %v608 = vmul.f32 %v592, 0.2
  %v609 = vmul.f32 %v593, 0.2
  %v610 = vmul.f32 %v594, 0.2
  %v611 = vsel %vm595, %v587, %v603
  %v612 = vsel %vm596, %v588, %v604
  %v613 = vsel %vm597, %v589, %v605
  %v614 = vsel %vm598, %v590, %v606
  %v615 = vsel %vm599, %v591, %v607
  %v616 = vsel %vm600, %v592, %v608
  %v617 = vsel %vm601, %v593, %v609
  %v618 = vsel %vm602, %v594, %v610
  %v619 = vadd.f32 %v611, %v479
  %v620 = vadd.f32 %v612, %v480
  %v621 = vadd.f32 %v613, %v481
  %v622 = vadd.f32 %v614, %v482
  %v623 = vadd.f32 %v615, %v483
  %v624 = vadd.f32 %v616, %v484
  %v625 = vadd.f32 %v617, %v485
  %v626 = vadd.f32 %v618, %v486
  %vm627 = vcmask 523264
  %v628 = vsel %vm627, %v619, -inf
  %629 = vmax.xlane.f32.xlu0 %v628
  %v630 = vpop.xlane.xlu0 %629
  %v631 = vsel %vm627, %v620, -inf
  %632 = vmax.xlane.f32.xlu0 %v631
  %v633 = vpop.xlane.xlu0 %632
  %v634 = vsel %vm627, %v621, -inf
  %635 = vmax.xlane.f32.xlu0 %v634
  %v636 = vpop.xlane.xlu0 %635
  %v637 = vsel %vm627, %v622, -inf
  %638 = vmax.xlane.f32.xlu0 %v637
  %v639 = vpop.xlane.xlu0 %638
  %v640 = vsel %vm627, %v623, -inf
  %641 = vmax.xlane.f32.xlu0 %v640
  %v642 = vpop.xlane.xlu0 %641
  %v643 = vsel %vm627, %v624, -inf
  %644 = vmax.xlane.f32.xlu0 %v643
  %v645 = vpop.xlane.xlu0 %644
  %v646 = vsel %vm627, %v625, -inf
  %647 = vmax.xlane.f32.xlu0 %v646
  %v648 = vpop.xlane.xlu0 %647
  %v649 = vsel %vm627, %v626, -inf
  %650 = vmax.xlane.f32.xlu0 %v649
  %v651 = vpop.xlane.xlu0 %650
  %v652 = vsub.f32 %v619, %v630
  %v653 = vsub.f32 %v620, %v633
  %v654 = vsub.f32 %v621, %v636
  %v655 = vsub.f32 %v622, %v639
  %v656 = vsub.f32 %v623, %v642
  %v657 = vsub.f32 %v624, %v645
  %v658 = vsub.f32 %v625, %v648
  %v659 = vsub.f32 %v626, %v651
  %v660 = vmul.f32 %v652, 1.442695
  %v661 = vpow.pop %v660
  %v662 = vmul.f32 %v653, 1.442695
  %v663 = vpow.pop %v662
  %v664 = vmul.f32 %v654, 1.442695
  %v665 = vpow.pop %v664
  %v666 = vmul.f32 %v655, 1.442695
  %v667 = vpow.pop %v666
  %v668 = vmul.f32 %v656, 1.442695
  %v669 = vpow.pop %v668
  %v670 = vmul.f32 %v657, 1.442695
  %v671 = vpow.pop %v670
  %v672 = vmul.f32 %v658, 1.442695
  %v673 = vpow.pop %v672
  %v674 = vmul.f32 %v659, 1.442695
  %v675 = vpow.pop %v674
  %v676 = vsel %vm627, %v661, 0.0
  %677 = vadd.xlane.f32.xlu0 %v676
  %v678 = vpop.xlane.xlu0 %677
  %v679 = vsel %vm627, %v663, 0.0
  %680 = vadd.xlane.f32.xlu0 %v679
  %v681 = vpop.xlane.xlu0 %680
  %v682 = vsel %vm627, %v665, 0.0
  %683 = vadd.xlane.f32.xlu0 %v682
  %v684 = vpop.xlane.xlu0 %683
  %v685 = vsel %vm627, %v667, 0.0
  %686 = vadd.xlane.f32.xlu0 %v685
  %v687 = vpop.xlane.xlu0 %686
  %v688 = vsel %vm627, %v669, 0.0
  %689 = vadd.xlane.f32.xlu0 %v688
  %v690 = vpop.xlane.xlu0 %689
  %v691 = vsel %vm627, %v671, 0.0
  %692 = vadd.xlane.f32.xlu0 %v691
  %v693 = vpop.xlane.xlu0 %692
  %v694 = vsel %vm627, %v673, 0.0
  %695 = vadd.xlane.f32.xlu0 %v694
  %v696 = vpop.xlane.xlu0 %695
  %v697 = vsel %vm627, %v675, 0.0
  %698 = vadd.xlane.f32.xlu0 %v697
  %v699 = vpop.xlane.xlu0 %698
  %v700 = vrcp.pop %v678
  %v701 = vrcp.pop %v681
  %v702 = vrcp.pop %v684
  %v703 = vrcp.pop %v687
  %v704 = vrcp.pop %v690
  %v705 = vrcp.pop %v693
  %v706 = vrcp.pop %v696
  %v707 = vrcp.pop %v699
  %v708 = vmul.f32 %v661, %v700
  %v709 = vmul.f32 %v663, %v701
  %v710 = vmul.f32 %v665, %v702
  %v711 = vmul.f32 %v667, %v703
  %v712 = vmul.f32 %v669, %v704
  %v713 = vmul.f32 %v671, %v705
  %v714 = vmul.f32 %v673, %v706
  %v715 = vmul.f32 %v675, %v707
  %v717 = vsel %vm627, %v708, 0
  %v720 = vsel %vm627, %v709, 0
  %v723 = vsel %vm627, %v710, 0
  %v726 = vsel %vm627, %v711, 0
  %v729 = vsel %vm627, %v712, 0
  %v732 = vsel %vm627, %v713, 0
  %v735 = vsel %vm627, %v714, 0
  %v738 = vsel %vm627, %v715, 0
  %740 = vmatprep.subr.mxu0 0.0
  %741 = vmatpush1.msra.mxu0 0.0
  %742 = vmatprep.subr.mxu0 0.0
  %743 = vmatpush1.msra.mxu0 0.0
  %744 = vmatprep.subr.mxu0 0.0
  %745 = vmatpush1.msra.mxu0 0.0
  %746 = vmatprep.subr.mxu0 0.0
  %747 = vmatpush1.msra.mxu0 0.0
  %748 = vmatprep.subr.mxu0 0.0
  %749 = vmatpush1.msra.mxu0 0.0
  %750 = vmatprep.subr.mxu0 0.0
  %751 = vmatpush1.msra.mxu0 0.0
  %752 = vmatprep.subr.mxu0 0.0
  %753 = vmatpush1.msra.mxu0 0.0
  %754 = vmatprep.subr.mxu0 0.0
  %755 = vmatpush1.msra.mxu0 0.0
  %756 = vmatprep.subr.mxu0 0.0
  %757 = vmatpush1.msra.mxu0 %v468
  %758 = vmatprep.subr.mxu0 0.0
  %759 = vmatpush1.msra.mxu0 %v463
  %760 = vmatprep.subr.mxu0 0.0
  %761 = vmatpush1.msra.mxu0 %v458
  %762 = vmatprep.subr.mxu0 0.0
  %763 = vmatpush1.msra.mxu0 %v453
  %764 = vmatprep.subr.mxu0 0.0
  %765 = vmatpush1.msra.mxu0 %v448
  %766 = vmatprep.subr.mxu0 0.0
  %767 = vmatpush1.msra.mxu0 %v443
  %768 = vmatprep.subr.mxu0 0.0
  %769 = vmatpush1.msra.mxu0 %v438
  %770 = vmatprep.subr.mxu0 0.0
  %771 = vmatpush1.msra.mxu0 %v433
  %772 = vmatprep.subr.mxu0 0.0
  %773 = vmatpush2.msra.mxu0 0.0
  %774 = vmatprep.subr.mxu0 0.0
  %775 = vmatpush2.msra.mxu0 0.0
  %776 = vmatprep.subr.mxu0 0.0
  %777 = vmatpush2.msra.mxu0 0.0
  %778 = vmatprep.subr.mxu0 0.0
  %779 = vmatpush2.msra.mxu0 0.0
  %780 = vmatprep.subr.mxu0 0.0
  %781 = vmatpush2.msra.mxu0 0.0
  %782 = vmatprep.subr.mxu0 0.0
  %783 = vmatpush2.msra.mxu0 0.0
  %784 = vmatprep.subr.mxu0 0.0
  %785 = vmatpush2.msra.mxu0 0.0
  %786 = vmatprep.subr.mxu0 0.0
  %787 = vmatpush2.msra.mxu0 0.0
  %788 = vmatprep.subr.mxu0 0.0
  %789 = vmatpush2.msra.mxu0 0.0
  %790 = vmatprep.subr.mxu0 0.0
  %791 = vmatpush2.msra.mxu0 0.0
  %792 = vmatprep.subr.mxu0 0.0
  %793 = vmatpush2.msra.mxu0 0.0
  %794 = vmatprep.subr.mxu0 0.0
  %795 = vmatpush2.msra.mxu0 0.0
  %796 = vmatprep.subr.mxu0 0.0
  %797 = vmatpush2.msra.mxu0 0.0
  %798 = vmatprep.subr.mxu0 0.0
  %799 = vmatpush2.msra.mxu0 0.0
  %800 = vmatprep.subr.mxu0 0.0
  %801 = vmatpush2.msra.mxu0 0.0
  %802 = vmatprep.subr.mxu0 0.0
  %803 = vmatpush2.msra.mxu0 0.0
  %804 = vmatprep.mubr.f32.mxu0 0.0
  %805 = vmatmul.mubr.f32.gmra.mxu0 %v717
  %v806 = vpop.f32.mrf.mxu0
  %v807 = vadd.f32 0.0, %v806
  %v808 = vpop.f32.mrf.mxu0
  %809 = vmatprep.mubr.f32.mxu0 0.0
  %810 = vmatmul.mubr.f32.gmra.mxu0 %v720
  %v811 = vpop.f32.mrf.mxu0
  %v812 = vadd.f32 0.0, %v811
  %v813 = vpop.f32.mrf.mxu0
  %814 = vmatprep.mubr.f32.mxu0 0.0
  %815 = vmatmul.mubr.f32.gmra.mxu0 %v723
  %v816 = vpop.f32.mrf.mxu0
  %v817 = vadd.f32 0.0, %v816
  %v818 = vpop.f32.mrf.mxu0
  %819 = vmatprep.mubr.f32.mxu0 0.0
  %820 = vmatmul.mubr.f32.gmra.mxu0 %v726
  %v821 = vpop.f32.mrf.mxu0
  %v822 = vadd.f32 0.0, %v821
  %v823 = vpop.f32.mrf.mxu0
  %824 = vmatprep.mubr.f32.mxu0 0.0
  %825 = vmatmul.mubr.f32.gmra.mxu0 %v729
  %v826 = vpop.f32.mrf.mxu0
  %v827 = vadd.f32 0.0, %v826
  %v828 = vpop.f32.mrf.mxu0
  %829 = vmatprep.mubr.f32.mxu0 0.0
  %830 = vmatmul.mubr.f32.gmra.mxu0 %v732
  %v831 = vpop.f32.mrf.mxu0
  %v832 = vadd.f32 0.0, %v831
  %v833 = vpop.f32.mrf.mxu0
  %834 = vmatprep.mubr.f32.mxu0 0.0
  %835 = vmatmul.mubr.f32.gmra.mxu0 %v735
  %v836 = vpop.f32.mrf.mxu0
  %v837 = vadd.f32 0.0, %v836
  %v838 = vpop.f32.mrf.mxu0
  %839 = vmatprep.mubr.f32.mxu0 0.0
  %840 = vmatmul.mubr.f32.gmra.mxu0 %v738
  %v841 = vpop.f32.mrf.mxu0
  %v842 = vadd.f32 0.0, %v841
  %v843 = vpop.f32.mrf.mxu0
  %844 = vdwg.mxu0
  %vm845 = vcmp.gt.f32.partialorder %v807, 0.0
  %vm846 = vcmp.gt.f32.partialorder %v812, 0.0
  %vm847 = vcmp.gt.f32.partialorder %v817, 0.0
  %vm848 = vcmp.gt.f32.partialorder %v822, 0.0
  %vm849 = vcmp.gt.f32.partialorder %v827, 0.0
  %vm850 = vcmp.gt.f32.partialorder %v832, 0.0
  %vm851 = vcmp.gt.f32.partialorder %v837, 0.0
  %vm852 = vcmp.gt.f32.partialorder %v842, 0.0
  %v853 = vmul.f32 %v807, 1.442695
  %v854 = vpow.pop %v853
  %v855 = vmul.f32 %v812, 1.442695
  %v856 = vpow.pop %v855
  %v857 = vmul.f32 %v817, 1.442695
  %v858 = vpow.pop %v857
  %v859 = vmul.f32 %v822, 1.442695
  %v860 = vpow.pop %v859
  %v861 = vmul.f32 %v827, 1.442695
  %v862 = vpow.pop %v861
  %v863 = vmul.f32 %v832, 1.442695
  %v864 = vpow.pop %v863
  %v865 = vmul.f32 %v837, 1.442695
  %v866 = vpow.pop %v865
  %v867 = vmul.f32 %v842, 1.442695
  %v868 = vpow.pop %v867
  %v869 = vsub.f32 %v854, 1.0
  %v870 = vsub.f32 %v856, 1.0
  %v871 = vsub.f32 %v858, 1.0
  %v872 = vsub.f32 %v860, 1.0
  %v873 = vsub.f32 %v862, 1.0
  %v874 = vsub.f32 %v864, 1.0
  %v875 = vsub.f32 %v866, 1.0
  %v876 = vsub.f32 %v868, 1.0
  %v877 = vsel %vm845, %v807, %v869
  %v878 = vsel %vm846, %v812, %v870
  %v879 = vsel %vm847, %v817, %v871
  %v880 = vsel %vm848, %v822, %v872
  %v881 = vsel %vm849, %v827, %v873
  %v882 = vsel %vm850, %v832, %v874
  %v883 = vsel %vm851, %v837, %v875
  %v884 = vsel %vm852, %v842, %v876
  %v885 = vsel %vm627, %v877, -inf
  %886 = vmax.xlane.f32.xlu0 %v885
  %v887 = vpop.xlane.xlu0 %886
  %v888 = vsel %vm627, %v878, -inf
  %889 = vmax.xlane.f32.xlu0 %v888
  %v890 = vpop.xlane.xlu0 %889
  %v891 = vsel %vm627, %v879, -inf
  %892 = vmax.xlane.f32.xlu0 %v891
  %v893 = vpop.xlane.xlu0 %892
  %v894 = vsel %vm627, %v880, -inf
  %895 = vmax.xlane.f32.xlu0 %v894
  %v896 = vpop.xlane.xlu0 %895
  %v897 = vsel %vm627, %v881, -inf
  %898 = vmax.xlane.f32.xlu0 %v897
  %v899 = vpop.xlane.xlu0 %898
  %v900 = vsel %vm627, %v882, -inf
  %901 = vmax.xlane.f32.xlu0 %v900
  %v902 = vpop.xlane.xlu0 %901
  %v903 = vsel %vm627, %v883, -inf
  %904 = vmax.xlane.f32.xlu0 %v903
  %v905 = vpop.xlane.xlu0 %904
  %v906 = vsel %vm627, %v884, -inf
  %907 = vmax.xlane.f32.xlu0 %v906
  %v908 = vpop.xlane.xlu0 %907
  %v909 = vsub.f32 %v877, %v887
  %v910 = vsub.f32 %v878, %v890
  %v911 = vsub.f32 %v879, %v893
  %v912 = vsub.f32 %v880, %v896
  %v913 = vsub.f32 %v881, %v899
  %v914 = vsub.f32 %v882, %v902
  %v915 = vsub.f32 %v883, %v905
  %v916 = vsub.f32 %v884, %v908
  %v917 = vmul.f32 %v909, 1.442695
  %v918 = vpow.pop %v917
  %v919 = vmul.f32 %v910, 1.442695
  %v920 = vpow.pop %v919
  %v921 = vmul.f32 %v911, 1.442695
  %v922 = vpow.pop %v921
  %v923 = vmul.f32 %v912, 1.442695
  %v924 = vpow.pop %v923
  %v925 = vmul.f32 %v913, 1.442695
  %v926 = vpow.pop %v925
  %v927 = vmul.f32 %v914, 1.442695
  %v928 = vpow.pop %v927
  %v929 = vmul.f32 %v915, 1.442695
  %v930 = vpow.pop %v929
  %v931 = vmul.f32 %v916, 1.442695
  %v932 = vpow.pop %v931
  %v933 = vsel %vm627, %v918, 0.0
  %934 = vadd.xlane.f32.xlu0 %v933
  %v935 = vpop.xlane.xlu0 %934
  %v936 = vsel %vm627, %v920, 0.0
  %937 = vadd.xlane.f32.xlu0 %v936
  %v938 = vpop.xlane.xlu0 %937
  %v939 = vsel %vm627, %v922, 0.0
  %940 = vadd.xlane.f32.xlu0 %v939
  %v941 = vpop.xlane.xlu0 %940
  %v942 = vsel %vm627, %v924, 0.0
  %943 = vadd.xlane.f32.xlu0 %v942
  %v944 = vpop.xlane.xlu0 %943
  %v945 = vsel %vm627, %v926, 0.0
  %946 = vadd.xlane.f32.xlu0 %v945
  %v947 = vpop.xlane.xlu0 %946
  %v948 = vsel %vm627, %v928, 0.0
  %949 = vadd.xlane.f32.xlu0 %v948
  %v950 = vpop.xlane.xlu0 %949
  %v951 = vsel %vm627, %v930, 0.0
  %952 = vadd.xlane.f32.xlu0 %v951
  %v953 = vpop.xlane.xlu0 %952
  %v954 = vsel %vm627, %v932, 0.0
  %955 = vadd.xlane.f32.xlu0 %v954
  %v956 = vpop.xlane.xlu0 %955
  %v957 = vlog2.pop %v935
  %v958 = vmul.f32 %v957, 0.6931472
  %v959 = vlog2.pop %v938
  %v960 = vmul.f32 %v959, 0.6931472
  %v961 = vlog2.pop %v941
  %v962 = vmul.f32 %v961, 0.6931472
  %v963 = vlog2.pop %v944
  %v964 = vmul.f32 %v963, 0.6931472
  %v965 = vlog2.pop %v947
  %v966 = vmul.f32 %v965, 0.6931472
  %v967 = vlog2.pop %v950
  %v968 = vmul.f32 %v967, 0.6931472
  %v969 = vlog2.pop %v953
  %v970 = vmul.f32 %v969, 0.6931472
  %v971 = vlog2.pop %v956
  %v972 = vmul.f32 %v971, 0.6931472
  %v973 = vsub.f32 %v909, %v958
  %v974 = vsub.f32 %v910, %v960
  %v975 = vsub.f32 %v911, %v962
  %v976 = vsub.f32 %v912, %v964
  %v977 = vsub.f32 %v913, %v966
  %v978 = vsub.f32 %v914, %v968
  %v979 = vsub.f32 %v915, %v970
  %v980 = vsub.f32 %v916, %v972
  %981 = vst.msk [vmem:[%s3] sm:$0xff] %vm627, %v973
  %982 = vst.msk [vmem:[%s3 + $0x8] sm:$0xff] %vm627, %v974
  %983 = vst.msk [vmem:[%s3 + $0x10] sm:$0xff] %vm627, %v975
  %984 = vst.msk [vmem:[%s3 + $0x18] sm:$0xff] %vm627, %v976
  %985 = vst.msk [vmem:[%s3 + $0x20] sm:$0xff] %vm627, %v977
  %986 = vst.msk [vmem:[%s3 + $0x28] sm:$0xff] %vm627, %v978
  %987 = vst.msk [vmem:[%s3 + $0x30] sm:$0xff] %vm627, %v979
  %988 = vst.msk [vmem:[%s3 + $0x38] sm:$0xff] %vm627, %v980
  // Predicated region
  $region14: #{holomol_forward.8} parent=0 // pred_check
    _
  $region15: #{holomol_forward.8} parent=0 // pred_check_branch
    %990 = sbr.rel (0) target = $region17
  $region16: #{holomol_forward.8} parent=0 // pred_region
    _
  $region17: #{holomol_forward.8} parent=0 // pred_fallthru
    _
  // Predicated region
  $region18: #{holomol_forward.8} parent=0 // pred_check
    _
  $region19: #{holomol_forward.8} parent=0 // pred_check_branch
    %992 = sbr.rel (0) target = $region21
  $region20: #{holomol_forward.8} parent=0 // pred_region
    _
  $region21: #{holomol_forward.8} parent=0 // pred_fallthru
    _

// kernel: holomol_forward.7
$region0: #{holomol_forward.7}
  #allocation0 [shape = 'u32[]', space=smem, size = 0x4, offset = 0x4, fixed_abs, tag = 'smem constant byte address 0x4 - core index']
  #allocation1 [shape = 'u32[144,128]{1,0:T(1,128)}', space=vmem, size = 0x12000, scoped, tag = 'internal scratch']
  %s0 = inlined_call_operand.vmem [shape: f32[64,19], index: 0, kind: input, shape index: {}]
  %s1 = inlined_call_operand.vmem [shape: f32[2,19,264], index: 1, kind: input, shape index: {}]
  %s2 = inlined_call_operand.vmem [shape: f32[64,64], index: 2, kind: input, shape index: {}]
  %s3 = inlined_call_operand.vmem [shape: f32[64,512], index: 3, kind: output, shape index: {}]
  %s4 = sld [smem:[#allocation0]]
  $region64: #{holomol_forward.7} parent=0
    _
  %s6 = ssub.s32 1, %s4
  %s7 = scalar_select 0, %s6, %s4
  $region1: #{holomol_forward.7} parent=0
    #allocation2 [shape = 'u8[131072]{0}', space=vmem, size = 0x20000, scoped, tag = 'output window, operand 0']
    loop: start=0, step=1, limit=4
    $region2: #{holomol_forward.7} parent=1 // loop_pre_header
      _
    $region3: #{holomol_forward.7} parent=1 // loop_header
      %s9 = sphi 0, %s13
      %p10 = scmp.ge.s32.totalorder %s9, 4
      %s17 = sphi 0, %s17
      %s19 = sphi 0, %s17
      %s20 = sphi 0, %s19
      %s34 = sphi 0, %s20
      %s40 = sphi 0, %s42
      %s43 = sphi 0, %s40
      %s44 = sphi 0, %s43
      %s60 = sphi 0, %s44
      %s64 = sphi 0, %s64
      %s66 = sphi 0, %s64
      %s67 = sphi 0, %s66
      %s81 = sphi 0, %s67
      %s87 = sphi 0, %s89
      %s90 = sphi 0, %s87
      %s91 = sphi 0, %s90
      %s107 = sphi 0, %s91
    $region4: #{holomol_forward.7} parent=1 // loop_header_branch
      %12 = sbr.rel (%p10) target = $region8
    $region5: #{holomol_forward.7} parent=1 // loop_body
      %s14 = ssub.s32 %s9, 1
      %s15 = ssub.s32 %s9, 2
      %s16 = sadd.s32 %s9, 1
      %s18 = sadd.s32 %s17, 1
      %p21 = scmp.eq.s32.totalorder %s9, 1
      %p22 = scmp.ne.s32.totalorder %s17, %s19
      %p23 = scmp.eq.s32.totalorder %s9, 0
      %p24 = por %p22, %p23
      %p25 = scmp.ne.s32.totalorder %s17, %s19
      %p26 = scmp.eq.s32.totalorder %s14, 1
      %p27 = por %p25, %p26
      %p28 = scmp.ne.s32.totalorder %s19, %s20
      %p29 = scmp.eq.s32.totalorder %s14, 0
      %p30 = por %p28, %p29
      %p31 = scmp.ne.s32.totalorder %s19, %s20
      %p32 = scmp.eq.s32.totalorder %s15, 1
      %p33 = por %p31, %p32
      %p35 = scmp.ne.s32.totalorder %s20, %s34
      %p36 = scmp.eq.s32.totalorder %s15, 0
      %p37 = por %p35, %p36
      %s38 = ssub.s32 %s9, %s16
      %p39 = scmp.eq.s32.totalorder %s38, 0
      %s41 = sadd.s32 %s40, 1
      %s42 = scalar_select %p39, %s40, %s41
      %p45 = pneg %p39
      %p46 = scmp.eq.s32.totalorder %s9, 1
      %p47 = por %p45, %p46
      %p48 = scmp.ne.s32.totalorder %s40, %s43
      %p49 = scmp.eq.s32.totalorder %s9, 0
      %p50 = por %p48, %p49
      %p51 = scmp.ne.s32.totalorder %s40, %s43
      %p52 = scmp.eq.s32.totalorder %s14, 1
      %p53 = por %p51, %p52
      %p54 = scmp.ne.s32.totalorder %s43, %s44
      %p55 = scmp.eq.s32.totalorder %s14, 0
      %p56 = por %p54, %p55
      %p57 = scmp.ne.s32.totalorder %s43, %s44
      %p58 = scmp.eq.s32.totalorder %s15, 1
      %p59 = por %p57, %p58
      %p61 = scmp.ne.s32.totalorder %s44, %s60
      %p62 = scmp.eq.s32.totalorder %s15, 0
      %p63 = por %p61, %p62
      %s65 = sadd.s32 %s64, 1
      %p68 = scmp.eq.s32.totalorder %s9, 1
      %p69 = scmp.ne.s32.totalorder %s64, %s66
      %p70 = scmp.eq.s32.totalorder %s9, 0
      %p71 = por %p69, %p70
      %p72 = scmp.ne.s32.totalorder %s64, %s66
      %p73 = scmp.eq.s32.totalorder %s14, 1
      %p74 = por %p72, %p73
      %p75 = scmp.ne.s32.totalorder %s66, %s67
      %p76 = scmp.eq.s32.totalorder %s14, 0
      %p77 = por %p75, %p76
      %p78 = scmp.ne.s32.totalorder %s66, %s67
      %p79 = scmp.eq.s32.totalorder %s15, 1
      %p80 = por %p78, %p79
      %p82 = scmp.ne.s32.totalorder %s67, %s81
      %p83 = scmp.eq.s32.totalorder %s15, 0
      %p84 = por %p82, %p83
      %s85 = ssub.s32 %s9, %s16
      %p86 = scmp.eq.s32.totalorder %s85, 0
      %s88 = sadd.s32 %s87, 1
      %s89 = scalar_select %p86, %s87, %s88
      %p92 = pneg %p86
      %p93 = scmp.eq.s32.totalorder %s9, 1
      %p94 = por %p92, %p93
      %p95 = scmp.ne.s32.totalorder %s87, %s90
      %p96 = scmp.eq.s32.totalorder %s9, 0
      %p97 = por %p95, %p96
      %p98 = scmp.ne.s32.totalorder %s87, %s90
      %p99 = scmp.eq.s32.totalorder %s14, 1
      %p100 = por %p98, %p99
      %p101 = scmp.ne.s32.totalorder %s90, %s91
      %p102 = scmp.eq.s32.totalorder %s14, 0
      %p103 = por %p101, %p102
      %p104 = scmp.ne.s32.totalorder %s90, %s91
      %p105 = scmp.eq.s32.totalorder %s15, 1
      %p106 = por %p104, %p105
      %p108 = scmp.ne.s32.totalorder %s91, %s107
      %p109 = scmp.eq.s32.totalorder %s15, 0
      %p110 = por %p108, %p109
      %p111 = scmp.le.s32.totalorder 1, %s9
      %p112 = scmp.lt.s32.totalorder %s9, 3
      %p113 = pnand %p111, %p112
      %p114 = pneg %p113
      // Predicated region
      $region9: #{holomol_forward.7} parent=5 // pred_check
        _
      $region10: #{holomol_forward.7} parent=5 // pred_check_branch
        %116 = sbr.rel (%p113) target = $region12
      $region11: #{holomol_forward.7} parent=5 // pred_region
        %s117 = ssub.s32 %s9, 1
        // Predicated region
        $region13: #{holomol_forward.7} parent=11 // pred_check
          %p118 = pneg %p30
        $region14: #{holomol_forward.7} parent=11 // pred_check_branch
          %120 = sbr.rel (%p118) target = $region16
        $region15: #{holomol_forward.7} parent=11 // pred_region
          _
        $region16: #{holomol_forward.7} parent=11 // pred_fallthru
          _
        // Predicated region
        $region17: #{holomol_forward.7} parent=11 // pred_check
          %p121 = pneg %p77
        $region18: #{holomol_forward.7} parent=11 // pred_check_branch
          %123 = sbr.rel (%p121) target = $region20
        $region19: #{holomol_forward.7} parent=11 // pred_region
          _
        $region20: #{holomol_forward.7} parent=11 // pred_fallthru
          _
      $region12: #{holomol_forward.7} parent=5 // pred_fallthru
        _
      %p124 = scmp.lt.s32.totalorder %s9, 2
      // Predicated region
      $region21: #{holomol_forward.7} parent=5 // pred_check
        %p125 = pneg %p124
      $region22: #{holomol_forward.7} parent=5 // pred_check_branch
        %127 = sbr.rel (%p125) target = $region24
      $region23: #{holomol_forward.7} parent=5 // pred_region
        // Predicated region
        $region25: #{holomol_forward.7} parent=23 // pred_check
          %p128 = pneg %p50
        $region26: #{holomol_forward.7} parent=23 // pred_check_branch
          %130 = sbr.rel (%p128) target = $region28
        $region27: #{holomol_forward.7} parent=23 // pred_region
          %p131 = scmp.lt.s32.totalorder %s9, 1
          %s132 = scalar_select %p131, %s9, 1
          %s133 = smul.addr %s132, 9
          %s134 = smul.addr %s133, 8
          %s135 = scalar_lea.vmem %s1, %s134
        $region28: #{holomol_forward.7} parent=23 // pred_fallthru
          _
      $region24: #{holomol_forward.7} parent=5 // pred_fallthru
        _
      %p136 = scmp.le.s32.totalorder 1, %s9
      %p137 = scmp.lt.s32.totalorder %s9, 3
      %p138 = pnand %p136, %p137
      %p139 = pneg %p138
      // Predicated region
      $region29: #{holomol_forward.7} parent=5 // pred_check
        _
      $region30: #{holomol_forward.7} parent=5 // pred_check_branch
        %141 = sbr.rel (%p138) target = $region32
      $region31: #{holomol_forward.7} parent=5 // pred_region
        %s142 = ssub.s32 %s9, 1
        %p143 = pneg %p30
        %p144 = pneg %p27
        %p145 = scmp.lt.s32.totalorder %s14, 1
        %s146 = scalar_select %p145, %s14, 1
        %s147 = smul.addr %s146, 9
        %s148 = smul.addr %s147, 8
        %s149 = scalar_lea.vmem %s1, %s148
        %p150 = pneg %p56
        %p151 = pneg %p53
        %p152 = pneg %p77
        %p153 = pneg %p74
        %p154 = pneg %p103
        %p155 = pneg %p100
        %s156 = sand.u32 %s90, 1
        %s157 = sand.u32 %s90, 1
        %s158 = smul.addr %s157, 128
        %s159 = scalar_lea.vmem [#allocation2], %s158
        %p160 = scmp.lt.s32.totalorder %s14, 1
        %s161 = scalar_select %p160, %s14, 1
        %s162 = smul.addr %s161, 9
        %s163 = smul.addr %s162, 8
        %s164 = scalar_lea.vmem %s1, %s163
        %s165 = smul.u32 2, %s14
        %v166 = vld [vmem:[%s0] sm:$0xff]
        %v167 = vld [vmem:[%s0 + $0x8] sm:$0xff]
        %v168 = vld [vmem:[%s0 + $0x10] sm:$0xff]
        %v169 = vld [vmem:[%s0 + $0x18] sm:$0xff]
        %v170 = vld [vmem:[%s0 + $0x20] sm:$0xff]
        %v171 = vld [vmem:[%s0 + $0x28] sm:$0xff]
        %v172 = vld [vmem:[%s0 + $0x30] sm:$0xff]
        %v173 = vld [vmem:[%s0 + $0x38] sm:$0xff]
        %v174 = vld [vmem:[%s164] sm:$0xff]
        %v175 = vld [vmem:[%s164 + $0x8] sm:$0xff]
        %v176 = vld [vmem:[%s164 + $0x10] sm:$0xff]
        %v177 = vld [vmem:[%s164 + $0x18] sm:$0xff]
        %v178 = vld [vmem:[%s164 + $0x20] sm:$0xff]
        %v179 = vld [vmem:[%s164 + $0x28] sm:$0xff]
        %v180 = vld [vmem:[%s164 + $0x30] sm:$0x7]
        %v181 = vld [vmem:[%s164 + $0x38] sm:$0x7]
        %v182 = vld [vmem:[%s164 + $0x40] sm:$0x7]
        %v183 = vld [vmem:[%s2] sm:$0xff]
        %v184 = vld [vmem:[%s2 + $0x8] sm:$0xff]
        %v185 = vld [vmem:[%s2 + $0x10] sm:$0xff]
        %v186 = vld [vmem:[%s2 + $0x18] sm:$0xff]
        %v187 = vld [vmem:[%s2 + $0x20] sm:$0xff]
        %v188 = vld [vmem:[%s2 + $0x28] sm:$0xff]
        %v189 = vld [vmem:[%s2 + $0x30] sm:$0xff]
        %v190 = vld [vmem:[%s2 + $0x38] sm:$0xff]
        %vm191 = vcmask 154624
        %v193 = vsel %vm191, %v166, 0
        %v196 = vsel %vm191, %v167, 0
        %v199 = vsel %vm191, %v168, 0
        %v202 = vsel %vm191, %v169, 0
        %v205 = vsel %vm191, %v170, 0
        %v208 = vsel %vm191, %v171, 0
        %v211 = vsel %vm191, %v172, 0
        %v214 = vsel %vm191, %v173, 0
        %vm216 = vcmask 1042432
        %v218 = vsel %vm216, %v180, 0
        %v221 = vsel %vm216, %v181, 0
        %v224 = vsel %vm216, %v182, 0
        %226 = vmatprep.subr.mxu0 0.0
        %227 = vmatpush1.msra.mxu0 0.0
        %228 = vmatprep.subr.mxu0 0.0
        %229 = vmatpush1.msra.mxu0 0.0
        %230 = vmatprep.subr.mxu0 0.0
        %231 = vmatpush1.msra.mxu0 0.0
        %232 = vmatprep.subr.mxu0 0.0
        %233 = vmatpush1.msra.mxu0 0.0
        %234 = vmatprep.subr.mxu0 0.0
        %235 = vmatpush1.msra.mxu0 0.0
        %236 = vmatprep.subr.mxu0 0.0
        %237 = vmatpush1.msra.mxu0 0.0
        %238 = vmatprep.subr.mxu0 0.0
        %239 = vmatpush1.msra.mxu0 0.0
        %240 = vmatprep.subr.mxu0 0.0
        %241 = vmatpush1.msra.mxu0 0.0
        %242 = vmatprep.subr.mxu0 0.0
        %243 = vmatpush1.msra.mxu0 0.0
        %244 = vmatprep.subr.mxu0 0.0
        %245 = vmatpush1.msra.mxu0 0.0
        %246 = vmatprep.subr.mxu0 0.0
        %247 = vmatpush1.msra.mxu0 0.0
        %248 = vmatprep.subr.mxu0 0.0
        %249 = vmatpush1.msra.mxu0 0.0
        %250 = vmatprep.subr.mxu0 0.0
        %251 = vmatpush1.msra.mxu0 0.0
        %252 = vmatprep.subr.mxu0 %v221
        %253 = vmatpush1.msra.mxu0 %v218
        %254 = vmatprep.subr.mxu0 %v178
        %255 = vmatpush1.msra.mxu0 %v177
        %256 = vmatprep.subr.mxu0 %v175
        %257 = vmatpush1.msra.mxu0 %v174
        %258 = vmatprep.subr.mxu0 0.0
        %259 = vmatpush2.msra.mxu0 0.0
        %260 = vmatprep.subr.mxu0 0.0
        %261 = vmatpush2.msra.mxu0 0.0
        %262 = vmatprep.subr.mxu0 0.0
        %263 = vmatpush2.msra.mxu0 0.0
        %264 = vmatprep.subr.mxu0 0.0
        %265 = vmatpush2.msra.mxu0 0.0
        %266 = vmatprep.subr.mxu0 0.0
        %267 = vmatpush2.msra.mxu0 0.0
        %268 = vmatprep.subr.mxu0 0.0
        %269 = vmatpush2.msra.mxu0 0.0
        %270 = vmatprep.subr.mxu0 0.0
        %271 = vmatpush2.msra.mxu0 0.0
        %272 = vmatprep.subr.mxu0 0.0
        %273 = vmatpush2.msra.mxu0 0.0
        %274 = vmatprep.subr.mxu0 0.0
        %275 = vmatpush2.msra.mxu0 0.0
        %276 = vmatprep.subr.mxu0 0.0
        %277 = vmatpush2.msra.mxu0 0.0
        %278 = vmatprep.subr.mxu0 0.0
        %279 = vmatpush2.msra.mxu0 0.0
        %280 = vmatprep.subr.mxu0 0.0
        %281 = vmatpush2.msra.mxu0 0.0
        %282 = vmatprep.subr.mxu0 0.0
        %283 = vmatpush2.msra.mxu0 0.0
        %284 = vmatprep.subr.mxu0 0.0
        %285 = vmatpush2.msra.mxu0 0.0
        %286 = vmatprep.subr.mxu0 0.0
        %287 = vmatpush2.msra.mxu0 0.0
        %288 = vmatprep.subr.mxu0 0.0
        %289 = vmatpush2.msra.mxu0 0.0
        %290 = vmatprep.mubr.f32.mxu0 0.0
        %291 = vmatmul.mubr.f32.gmra.mxu0 %v193
        %v292 = vpop.f32.mrf.mxu0
        %v293 = vadd.f32 0.0, %v292
        %v294 = vpop.f32.mrf.mxu0
        %v295 = vadd.f32 0.0, %v294
        %296 = vmatprep.mubr.f32.mxu0 0.0
        %297 = vmatmul.mubr.f32.gmra.mxu0 %v196
        %v298 = vpop.f32.mrf.mxu0
        %v299 = vadd.f32 0.0, %v298
        %v300 = vpop.f32.mrf.mxu0
        %v301 = vadd.f32 0.0, %v300
        %302 = vmatprep.mubr.f32.mxu0 0.0
        %303 = vmatmul.mubr.f32.gmra.mxu0 %v199
        %v304 = vpop.f32.mrf.mxu0
        %v305 = vadd.f32 0.0, %v304
        %v306 = vpop.f32.mrf.mxu0
        %v307 = vadd.f32 0.0, %v306
        %308 = vmatprep.mubr.f32.mxu0 0.0
        %309 = vmatmul.mubr.f32.gmra.mxu0 %v202
        %v310 = vpop.f32.mrf.mxu0
        %v311 = vadd.f32 0.0, %v310
        %v312 = vpop.f32.mrf.mxu0
        %v313 = vadd.f32 0.0, %v312
        %314 = vmatprep.mubr.f32.mxu0 0.0
        %315 = vmatmul.mubr.f32.gmra.mxu0 %v205
        %v316 = vpop.f32.mrf.mxu0
        %v317 = vadd.f32 0.0, %v316
        %v318 = vpop.f32.mrf.mxu0
        %v319 = vadd.f32 0.0, %v318
        %320 = vmatprep.mubr.f32.mxu0 0.0
        %321 = vmatmul.mubr.f32.gmra.mxu0 %v208
        %v322 = vpop.f32.mrf.mxu0
        %v323 = vadd.f32 0.0, %v322
        %v324 = vpop.f32.mrf.mxu0
        %v325 = vadd.f32 0.0, %v324
        %326 = vmatprep.mubr.f32.mxu0 0.0
        %327 = vmatmul.mubr.f32.gmra.mxu0 %v211
        %v328 = vpop.f32.mrf.mxu0
        %v329 = vadd.f32 0.0, %v328
        %v330 = vpop.f32.mrf.mxu0
        %v331 = vadd.f32 0.0, %v330
        %332 = vmatprep.mubr.f32.mxu0 0.0
        %333 = vmatmul.mubr.f32.gmra.mxu0 %v214
        %v334 = vpop.f32.mrf.mxu0
        %v335 = vadd.f32 0.0, %v334
        %v336 = vpop.f32.mrf.mxu0
        %v337 = vadd.f32 0.0, %v336
        %338 = vdwg.mxu0
        %339 = vmatprep.subr.mxu0 0.0
        %340 = vmatpush1.msra.mxu0 0.0
        %341 = vmatprep.subr.mxu0 0.0
        %342 = vmatpush1.msra.mxu0 0.0
        %343 = vmatprep.subr.mxu0 0.0
        %344 = vmatpush1.msra.mxu0 0.0
        %345 = vmatprep.subr.mxu0 0.0
        %346 = vmatpush1.msra.mxu0 0.0
        %347 = vmatprep.subr.mxu0 0.0
        %348 = vmatpush1.msra.mxu0 0.0
        %349 = vmatprep.subr.mxu0 0.0
        %350 = vmatpush1.msra.mxu0 0.0
        %351 = vmatprep.subr.mxu0 0.0
        %352 = vmatpush1.msra.mxu0 0.0
        %353 = vmatprep.subr.mxu0 0.0
        %354 = vmatpush1.msra.mxu0 0.0
        %355 = vmatprep.subr.mxu0 0.0
        %356 = vmatpush1.msra.mxu0 0.0
        %357 = vmatprep.subr.mxu0 0.0
        %358 = vmatpush1.msra.mxu0 0.0
        %359 = vmatprep.subr.mxu0 0.0
        %360 = vmatpush1.msra.mxu0 0.0
        %361 = vmatprep.subr.mxu0 0.0
        %362 = vmatpush1.msra.mxu0 0.0
        %363 = vmatprep.subr.mxu0 0.0
        %364 = vmatpush1.msra.mxu0 0.0
        %365 = vmatprep.subr.mxu0 0.0
        %366 = vmatpush1.msra.mxu0 %v224
        %367 = vmatprep.subr.mxu0 0.0
        %368 = vmatpush1.msra.mxu0 %v179
        %369 = vmatprep.subr.mxu0 0.0
        %370 = vmatpush1.msra.mxu0 %v176
        %371 = vmatprep.subr.mxu0 0.0
        %372 = vmatpush2.msra.mxu0 0.0
        %373 = vmatprep.subr.mxu0 0.0
        %374 = vmatpush2.msra.mxu0 0.0
        %375 = vmatprep.subr.mxu0 0.0
        %376 = vmatpush2.msra.mxu0 0.0
        %377 = vmatprep.subr.mxu0 0.0
        %378 = vmatpush2.msra.mxu0 0.0
        %379 = vmatprep.subr.mxu0 0.0
        %380 = vmatpush2.msra.mxu0 0.0
        %381 = vmatprep.subr.mxu0 0.0
        %382 = vmatpush2.msra.mxu0 0.0
        %383 = vmatprep.subr.mxu0 0.0
        %384 = vmatpush2.msra.mxu0 0.0
        %385 = vmatprep.subr.mxu0 0.0
        %386 = vmatpush2.msra.mxu0 0.0
        %387 = vmatprep.subr.mxu0 0.0
        %388 = vmatpush2.msra.mxu0 0.0
        %389 = vmatprep.subr.mxu0 0.0
        %390 = vmatpush2.msra.mxu0 0.0
        %391 = vmatprep.subr.mxu0 0.0
        %392 = vmatpush2.msra.mxu0 0.0
        %393 = vmatprep.subr.mxu0 0.0
        %394 = vmatpush2.msra.mxu0 0.0
        %395 = vmatprep.subr.mxu0 0.0
        %396 = vmatpush2.msra.mxu0 0.0
        %397 = vmatprep.subr.mxu0 0.0
        %398 = vmatpush2.msra.mxu0 0.0
        %399 = vmatprep.subr.mxu0 0.0
        %400 = vmatpush2.msra.mxu0 0.0
        %401 = vmatprep.subr.mxu0 0.0
        %402 = vmatpush2.msra.mxu0 0.0
        %403 = vmatprep.mubr.f32.mxu0 0.0
        %404 = vmatmul.mubr.f32.gmra.mxu0 %v193
        %v405 = vpop.f32.mrf.mxu0
        %v406 = vadd.f32 0.0, %v405
        %v407 = vpop.f32.mrf.mxu0
        %408 = vmatprep.mubr.f32.mxu0 0.0
        %409 = vmatmul.mubr.f32.gmra.mxu0 %v196
        %v410 = vpop.f32.mrf.mxu0
        %v411 = vadd.f32 0.0, %v410
        %v412 = vpop.f32.mrf.mxu0
        %413 = vmatprep.mubr.f32.mxu0 0.0
        %414 = vmatmul.mubr.f32.gmra.mxu0 %v199
        %v415 = vpop.f32.mrf.mxu0
        %v416 = vadd.f32 0.0, %v415
        %v417 = vpop.f32.mrf.mxu0
        %418 = vmatprep.mubr.f32.mxu0 0.0
        %419 = vmatmul.mubr.f32.gmra.mxu0 %v202
        %v420 = vpop.f32.mrf.mxu0
        %v421 = vadd.f32 0.0, %v420
        %v422 = vpop.f32.mrf.mxu0
        %423 = vmatprep.mubr.f32.mxu0 0.0
        %424 = vmatmul.mubr.f32.gmra.mxu0 %v205
        %v425 = vpop.f32.mrf.mxu0
        %v426 = vadd.f32 0.0, %v425
        %v427 = vpop.f32.mrf.mxu0
        %428 = vmatprep.mubr.f32.mxu0 0.0
        %429 = vmatmul.mubr.f32.gmra.mxu0 %v208
        %v430 = vpop.f32.mrf.mxu0
        %v431 = vadd.f32 0.0, %v430
        %v432 = vpop.f32.mrf.mxu0
        %433 = vmatprep.mubr.f32.mxu0 0.0
        %434 = vmatmul.mubr.f32.gmra.mxu0 %v211
        %v435 = vpop.f32.mrf.mxu0
        %v436 = vadd.f32 0.0, %v435
        %v437 = vpop.f32.mrf.mxu0
        %438 = vmatprep.mubr.f32.mxu0 0.0
        %439 = vmatmul.mubr.f32.gmra.mxu0 %v214
        %v440 = vpop.f32.mrf.mxu0
        %v441 = vadd.f32 0.0, %v440
        %v442 = vpop.f32.mrf.mxu0
        %443 = vdwg.mxu0
        %v444 = vsub.f32 %v183, 1.0
        %v445 = vsub.f32 %v184, 1.0
        %v446 = vsub.f32 %v185, 1.0
        %v447 = vsub.f32 %v186, 1.0
        %v448 = vsub.f32 %v187, 1.0
        %v449 = vsub.f32 %v188, 1.0
        %v450 = vsub.f32 %v189, 1.0
        %v451 = vsub.f32 %v190, 1.0
        %v452 = vmul.f32 %v444, 9e+15
        %v453 = vmul.f32 %v445, 9e+15
        %v454 = vmul.f32 %v446, 9e+15
        %v455 = vmul.f32 %v447, 9e+15
        %v456 = vmul.f32 %v448, 9e+15
        %v457 = vmul.f32 %v449, 9e+15
        %v458 = vmul.f32 %v450, 9e+15
        %v459 = vmul.f32 %v451, 9e+15
        %468 = vrot.lane.b32.xlu0 %v406, 124
        %v469 = vpop.permute.xlu0 %468
        %470 = vrot.lane.b32.xlu0 %v411, 124
        %v471 = vpop.permute.xlu0 %470
        %472 = vrot.lane.b32.xlu0 %v416, 124
        %v473 = vpop.permute.xlu0 %472
        %474 = vrot.lane.b32.xlu0 %v421, 124
        %v475 = vpop.permute.xlu0 %474
        %476 = vrot.lane.b32.xlu0 %v426, 124
        %v477 = vpop.permute.xlu0 %476
        %478 = vrot.lane.b32.xlu0 %v431, 124
        %v479 = vpop.permute.xlu0 %478
        %480 = vrot.lane.b32.xlu0 %v436, 124
        %v481 = vpop.permute.xlu0 %480
        %482 = vrot.lane.b32.xlu0 %v441, 124
        %v483 = vpop.permute.xlu0 %482
        %492 = vxpose.xlu0.b32.start [1/16] %v469, 128
        %493 = vxpose.xlu0.b32.cont [2/16] %v471, 128
        %494 = vxpose.xlu0.b32.cont [3/16] %v473, 128
        %495 = vxpose.xlu0.b32.cont [4/16] %v475, 128
        %496 = vxpose.xlu0.b32.cont [5/16] %v477, 128
        %497 = vxpose.xlu0.b32.cont [6/16] %v479, 128
        %498 = vxpose.xlu0.b32.cont [7/16] %v481, 128
        %499 = vxpose.xlu0.b32.cont [8/16] %v483, 128
        %500 = vxpose.xlu0.b32.cont [9/16] 0.0, 128
        %501 = vxpose.xlu0.b32.cont [10/16] 0.0, 128
        %502 = vxpose.xlu0.b32.cont [11/16] 0.0, 128
        %503 = vxpose.xlu0.b32.cont [12/16] 0.0, 128
        %504 = vxpose.xlu0.b32.cont [13/16] 0.0, 128
        %505 = vxpose.xlu0.b32.cont [14/16] 0.0, 128
        %506 = vxpose.xlu0.b32.cont [15/16] 0.0, 128
        %507 = vxpose.xlu0.b32.end [16/16] 0.0, 128
        %v508 = vpop.trf.xlu0
        %v509 = vpop.trf.xlu0
        %v510 = vpop.trf.xlu0
        %v511 = vpop.trf.xlu0
        %v512 = vpop.trf.xlu0
        %v513 = vpop.trf.xlu0
        %v514 = vpop.trf.xlu0
        %v515 = vpop.trf.xlu0
        %v516 = vpop.trf.xlu0
        %v517 = vpop.trf.xlu0
        %v518 = vpop.trf.xlu0
        %v519 = vpop.trf.xlu0
        %v520 = vpop.trf.xlu0
        %v521 = vpop.trf.xlu0
        %v522 = vpop.trf.xlu0
        %v523 = vpop.trf.xlu0
        %524 = vset.pattern.permute.xlu0 0
        %525 = vperm.xlu0 %524, %v406
        %v526 = vpop.permute.xlu0 %525
        %528 = vset.pattern.permute.xlu0 0
        %529 = vperm.xlu0 %528, %v411
        %v530 = vpop.permute.xlu0 %529
        %532 = vset.pattern.permute.xlu0 0
        %533 = vperm.xlu0 %532, %v416
        %v534 = vpop.permute.xlu0 %533
        %536 = vset.pattern.permute.xlu0 0
        %537 = vperm.xlu0 %536, %v421
        %v538 = vpop.permute.xlu0 %537
        %540 = vset.pattern.permute.xlu0 0
        %541 = vperm.xlu0 %540, %v426
        %v542 = vpop.permute.xlu0 %541
        %544 = vset.pattern.permute.xlu0 0
        %545 = vperm.xlu0 %544, %v431
        %v546 = vpop.permute.xlu0 %545
        %548 = vset.pattern.permute.xlu0 0
        %549 = vperm.xlu0 %548, %v436
        %v550 = vpop.permute.xlu0 %549
        %552 = vset.pattern.permute.xlu0 0
        %553 = vperm.xlu0 %552, %v441
        %v554 = vpop.permute.xlu0 %553
        %v556 = vlaneseq
        %v557 = vshrl.u32 %v556, 7
        %v558 = vsub.s32 0, %v557
        %v559 = vrot.slane %v508, %v558
        %v560 = vadd.f32 %v526, %v559
        %v561 = vadd.f32 %v530, %v559
        %v562 = vadd.f32 %v534, %v559
        %v563 = vadd.f32 %v538, %v559
        %v564 = vadd.f32 %v542, %v559
        %v565 = vadd.f32 %v546, %v559
        %v566 = vadd.f32 %v550, %v559
        %v567 = vadd.f32 %v554, %v559
        %vm568 = vcmp.gt.f32.partialorder %v560, 0.0
        %vm569 = vcmp.gt.f32.partialorder %v561, 0.0
        %vm570 = vcmp.gt.f32.partialorder %v562, 0.0
        %vm571 = vcmp.gt.f32.partialorder %v563, 0.0
        %vm572 = vcmp.gt.f32.partialorder %v564, 0.0
        %vm573 = vcmp.gt.f32.partialorder %v565, 0.0
        %vm574 = vcmp.gt.f32.partialorder %v566, 0.0
        %vm575 = vcmp.gt.f32.partialorder %v567, 0.0
        %v576 = vmul.f32 %v560, 0.2
        %v577 = vmul.f32 %v561, 0.2
        %v578 = vmul.f32 %v562, 0.2
        %v579 = vmul.f32 %v563, 0.2
        %v580 = vmul.f32 %v564, 0.2
        %v581 = vmul.f32 %v565, 0.2
        %v582 = vmul.f32 %v566, 0.2
        %v583 = vmul.f32 %v567, 0.2
        %v584 = vsel %vm568, %v560, %v576
        %v585 = vsel %vm569, %v561, %v577
        %v586 = vsel %vm570, %v562, %v578
        %v587 = vsel %vm571, %v563, %v579
        %v588 = vsel %vm572, %v564, %v580
        %v589 = vsel %vm573, %v565, %v581
        %v590 = vsel %vm574, %v566, %v582
        %v591 = vsel %vm575, %v567, %v583
        %v592 = vadd.f32 %v584, %v452
        %v593 = vadd.f32 %v585, %v453
        %v594 = vadd.f32 %v586, %v454
        %v595 = vadd.f32 %v587, %v455
        %v596 = vadd.f32 %v588, %v456
        %v597 = vadd.f32 %v589, %v457
        %v598 = vadd.f32 %v590, %v458
        %v599 = vadd.f32 %v591, %v459
        %vm600 = vcmask 523264
        %v601 = vsel %vm600, %v592, -inf
        %602 = vmax.xlane.f32.xlu0 %v601
        %v603 = vpop.xlane.xlu0 %602
        %v604 = vsel %vm600, %v593, -inf
        %605 = vmax.xlane.f32.xlu0 %v604
        %v606 = vpop.xlane.xlu0 %605
        %v607 = vsel %vm600, %v594, -inf
        %608 = vmax.xlane.f32.xlu0 %v607
        %v609 = vpop.xlane.xlu0 %608
        %v610 = vsel %vm600, %v595, -inf
        %611 = vmax.xlane.f32.xlu0 %v610
        %v612 = vpop.xlane.xlu0 %611
        %v613 = vsel %vm600, %v596, -inf
        %614 = vmax.xlane.f32.xlu0 %v613
        %v615 = vpop.xlane.xlu0 %614
        %v616 = vsel %vm600, %v597, -inf
        %617 = vmax.xlane.f32.xlu0 %v616
        %v618 = vpop.xlane.xlu0 %617
        %v619 = vsel %vm600, %v598, -inf
        %620 = vmax.xlane.f32.xlu0 %v619
        %v621 = vpop.xlane.xlu0 %620
        %v622 = vsel %vm600, %v599, -inf
        %623 = vmax.xlane.f32.xlu0 %v622
        %v624 = vpop.xlane.xlu0 %623
        %v625 = vsub.f32 %v592, %v603
        %v626 = vsub.f32 %v593, %v606
        %v627 = vsub.f32 %v594, %v609
        %v628 = vsub.f32 %v595, %v612
        %v629 = vsub.f32 %v596, %v615
        %v630 = vsub.f32 %v597, %v618
        %v631 = vsub.f32 %v598, %v621
        %v632 = vsub.f32 %v599, %v624
        %v633 = vmul.f32 %v625, 1.442695
        %v634 = vpow.pop %v633
        %v635 = vmul.f32 %v626, 1.442695
        %v636 = vpow.pop %v635
        %v637 = vmul.f32 %v627, 1.442695
        %v638 = vpow.pop %v637
        %v639 = vmul.f32 %v628, 1.442695
        %v640 = vpow.pop %v639
        %v641 = vmul.f32 %v629, 1.442695
        %v642 = vpow.pop %v641
        %v643 = vmul.f32 %v630, 1.442695
        %v644 = vpow.pop %v643
        %v645 = vmul.f32 %v631, 1.442695
        %v646 = vpow.pop %v645
        %v647 = vmul.f32 %v632, 1.442695
        %v648 = vpow.pop %v647
        %v649 = vsel %vm600, %v634, 0.0
        %650 = vadd.xlane.f32.xlu0 %v649
        %v651 = vpop.xlane.xlu0 %650
        %v652 = vsel %vm600, %v636, 0.0
        %653 = vadd.xlane.f32.xlu0 %v652
        %v654 = vpop.xlane.xlu0 %653
        %v655 = vsel %vm600, %v638, 0.0
        %656 = vadd.xlane.f32.xlu0 %v655
        %v657 = vpop.xlane.xlu0 %656
        %v658 = vsel %vm600, %v640, 0.0
        %659 = vadd.xlane.f32.xlu0 %v658
        %v660 = vpop.xlane.xlu0 %659
        %v661 = vsel %vm600, %v642, 0.0
        %662 = vadd.xlane.f32.xlu0 %v661
        %v663 = vpop.xlane.xlu0 %662
        %v664 = vsel %vm600, %v644, 0.0
        %665 = vadd.xlane.f32.xlu0 %v664
        %v666 = vpop.xlane.xlu0 %665
        %v667 = vsel %vm600, %v646, 0.0
        %668 = vadd.xlane.f32.xlu0 %v667
        %v669 = vpop.xlane.xlu0 %668
        %v670 = vsel %vm600, %v648, 0.0
        %671 = vadd.xlane.f32.xlu0 %v670
        %v672 = vpop.xlane.xlu0 %671
        %v673 = vrcp.pop %v651
        %v674 = vrcp.pop %v654
        %v675 = vrcp.pop %v657
        %v676 = vrcp.pop %v660
        %v677 = vrcp.pop %v663
        %v678 = vrcp.pop %v666
        %v679 = vrcp.pop %v669
        %v680 = vrcp.pop %v672
        %v681 = vmul.f32 %v634, %v673
        %v682 = vmul.f32 %v636, %v674
        %v683 = vmul.f32 %v638, %v675
        %v684 = vmul.f32 %v640, %v676
        %v685 = vmul.f32 %v642, %v677
        %v686 = vmul.f32 %v644, %v678
        %v687 = vmul.f32 %v646, %v679
        %v688 = vmul.f32 %v648, %v680
        %v690 = vsel %vm600, %v681, 0
        %v693 = vsel %vm600, %v682, 0
        %v696 = vsel %vm600, %v683, 0
        %v699 = vsel %vm600, %v684, 0
        %v702 = vsel %vm600, %v685, 0
        %v705 = vsel %vm600, %v686, 0
        %v708 = vsel %vm600, %v687, 0
        %v711 = vsel %vm600, %v688, 0
        %713 = vmatprep.subr.mxu0 0.0
        %714 = vmatpush1.msra.mxu0 0.0
        %715 = vmatprep.subr.mxu0 0.0
        %716 = vmatpush1.msra.mxu0 0.0
        %717 = vmatprep.subr.mxu0 0.0
        %718 = vmatpush1.msra.mxu0 0.0
        %719 = vmatprep.subr.mxu0 0.0
        %720 = vmatpush1.msra.mxu0 0.0
        %721 = vmatprep.subr.mxu0 0.0
        %722 = vmatpush1.msra.mxu0 0.0
        %723 = vmatprep.subr.mxu0 0.0
        %724 = vmatpush1.msra.mxu0 0.0
        %725 = vmatprep.subr.mxu0 0.0
        %726 = vmatpush1.msra.mxu0 0.0
        %727 = vmatprep.subr.mxu0 0.0
        %728 = vmatpush1.msra.mxu0 0.0
        %729 = vmatprep.subr.mxu0 0.0
        %730 = vmatpush1.msra.mxu0 %v335
        %731 = vmatprep.subr.mxu0 0.0
        %732 = vmatpush1.msra.mxu0 %v329
        %733 = vmatprep.subr.mxu0 0.0
        %734 = vmatpush1.msra.mxu0 %v323
        %735 = vmatprep.subr.mxu0 0.0
        %736 = vmatpush1.msra.mxu0 %v317
        %737 = vmatprep.subr.mxu0 0.0
        %738 = vmatpush1.msra.mxu0 %v311
        %739 = vmatprep.subr.mxu0 0.0
        %740 = vmatpush1.msra.mxu0 %v305
        %741 = vmatprep.subr.mxu0 0.0
        %742 = vmatpush1.msra.mxu0 %v299
        %743 = vmatprep.subr.mxu0 0.0
        %744 = vmatpush1.msra.mxu0 %v293
        %745 = vmatprep.subr.mxu0 0.0
        %746 = vmatpush2.msra.mxu0 0.0
        %747 = vmatprep.subr.mxu0 0.0
        %748 = vmatpush2.msra.mxu0 0.0
        %749 = vmatprep.subr.mxu0 0.0
        %750 = vmatpush2.msra.mxu0 0.0
        %751 = vmatprep.subr.mxu0 0.0
        %752 = vmatpush2.msra.mxu0 0.0
        %753 = vmatprep.subr.mxu0 0.0
        %754 = vmatpush2.msra.mxu0 0.0
        %755 = vmatprep.subr.mxu0 0.0
        %756 = vmatpush2.msra.mxu0 0.0
        %757 = vmatprep.subr.mxu0 0.0
        %758 = vmatpush2.msra.mxu0 0.0
        %759 = vmatprep.subr.mxu0 0.0
        %760 = vmatpush2.msra.mxu0 0.0
        %761 = vmatprep.subr.mxu0 0.0
        %762 = vmatpush2.msra.mxu0 0.0
        %763 = vmatprep.subr.mxu0 0.0
        %764 = vmatpush2.msra.mxu0 0.0
        %765 = vmatprep.subr.mxu0 0.0
        %766 = vmatpush2.msra.mxu0 0.0
        %767 = vmatprep.subr.mxu0 0.0
        %768 = vmatpush2.msra.mxu0 0.0
        %769 = vmatprep.subr.mxu0 0.0
        %770 = vmatpush2.msra.mxu0 0.0
        %771 = vmatprep.subr.mxu0 0.0
        %772 = vmatpush2.msra.mxu0 0.0
        %773 = vmatprep.subr.mxu0 0.0
        %774 = vmatpush2.msra.mxu0 0.0
        %775 = vmatprep.subr.mxu0 0.0
        %776 = vmatpush2.msra.mxu0 0.0
        %777 = vmatprep.mubr.f32.mxu0 0.0
        %778 = vmatmul.mubr.f32.gmra.mxu0 %v690
        %v779 = vpop.f32.mrf.mxu0
        %v780 = vadd.f32 0.0, %v779
        %v781 = vpop.f32.mrf.mxu0
        %782 = vmatprep.mubr.f32.mxu0 0.0
        %783 = vmatmul.mubr.f32.gmra.mxu0 %v693
        %v784 = vpop.f32.mrf.mxu0
        %v785 = vadd.f32 0.0, %v784
        %v786 = vpop.f32.mrf.mxu0
        %787 = vmatprep.mubr.f32.mxu0 0.0
        %788 = vmatmul.mubr.f32.gmra.mxu0 %v696
        %v789 = vpop.f32.mrf.mxu0
        %v790 = vadd.f32 0.0, %v789
        %v791 = vpop.f32.mrf.mxu0
        %792 = vmatprep.mubr.f32.mxu0 0.0
        %793 = vmatmul.mubr.f32.gmra.mxu0 %v699
        %v794 = vpop.f32.mrf.mxu0
        %v795 = vadd.f32 0.0, %v794
        %v796 = vpop.f32.mrf.mxu0
        %797 = vmatprep.mubr.f32.mxu0 0.0
        %798 = vmatmul.mubr.f32.gmra.mxu0 %v702
        %v799 = vpop.f32.mrf.mxu0
        %v800 = vadd.f32 0.0, %v799
        %v801 = vpop.f32.mrf.mxu0
        %802 = vmatprep.mubr.f32.mxu0 0.0
        %803 = vmatmul.mubr.f32.gmra.mxu0 %v705
        %v804 = vpop.f32.mrf.mxu0
        %v805 = vadd.f32 0.0, %v804
        %v806 = vpop.f32.mrf.mxu0
        %807 = vmatprep.mubr.f32.mxu0 0.0
        %808 = vmatmul.mubr.f32.gmra.mxu0 %v708
        %v809 = vpop.f32.mrf.mxu0
        %v810 = vadd.f32 0.0, %v809
        %v811 = vpop.f32.mrf.mxu0
        %812 = vmatprep.mubr.f32.mxu0 0.0
        %813 = vmatmul.mubr.f32.gmra.mxu0 %v711
        %v814 = vpop.f32.mrf.mxu0
        %v815 = vadd.f32 0.0, %v814
        %v816 = vpop.f32.mrf.mxu0
        %817 = vdwg.mxu0
        %vm818 = vcmp.gt.f32.partialorder %v780, 0.0
        %vm819 = vcmp.gt.f32.partialorder %v785, 0.0
        %vm820 = vcmp.gt.f32.partialorder %v790, 0.0
        %vm821 = vcmp.gt.f32.partialorder %v795, 0.0
        %vm822 = vcmp.gt.f32.partialorder %v800, 0.0
        %vm823 = vcmp.gt.f32.partialorder %v805, 0.0
        %vm824 = vcmp.gt.f32.partialorder %v810, 0.0
        %vm825 = vcmp.gt.f32.partialorder %v815, 0.0
        %v826 = vmul.f32 %v780, 1.442695
        %v827 = vpow.pop %v826
        %v828 = vmul.f32 %v785, 1.442695
        %v829 = vpow.pop %v828
        %v830 = vmul.f32 %v790, 1.442695
        %v831 = vpow.pop %v830
        %v832 = vmul.f32 %v795, 1.442695
        %v833 = vpow.pop %v832
        %v834 = vmul.f32 %v800, 1.442695
        %v835 = vpow.pop %v834
        %v836 = vmul.f32 %v805, 1.442695
        %v837 = vpow.pop %v836
        %v838 = vmul.f32 %v810, 1.442695
        %v839 = vpow.pop %v838
        %v840 = vmul.f32 %v815, 1.442695
        %v841 = vpow.pop %v840
        %v842 = vsub.f32 %v827, 1.0
        %v843 = vsub.f32 %v829, 1.0
        %v844 = vsub.f32 %v831, 1.0
        %v845 = vsub.f32 %v833, 1.0
        %v846 = vsub.f32 %v835, 1.0
        %v847 = vsub.f32 %v837, 1.0
        %v848 = vsub.f32 %v839, 1.0
        %v849 = vsub.f32 %v841, 1.0
        %v850 = vsel %vm818, %v780, %v842
        %v851 = vsel %vm819, %v785, %v843
        %v852 = vsel %vm820, %v790, %v844
        %v853 = vsel %vm821, %v795, %v845
        %v854 = vsel %vm822, %v800, %v846
        %v855 = vsel %vm823, %v805, %v847
        %v856 = vsel %vm824, %v810, %v848
        %v857 = vsel %vm825, %v815, %v849
        %858 = vrot.lane.b32.xlu0 %v406, 123
        %v859 = vpop.permute.xlu0 %858
        %860 = vrot.lane.b32.xlu0 %v411, 123
        %v861 = vpop.permute.xlu0 %860
        %862 = vrot.lane.b32.xlu0 %v416, 123
        %v863 = vpop.permute.xlu0 %862
        %864 = vrot.lane.b32.xlu0 %v421, 123
        %v865 = vpop.permute.xlu0 %864
        %866 = vrot.lane.b32.xlu0 %v426, 123
        %v867 = vpop.permute.xlu0 %866
        %868 = vrot.lane.b32.xlu0 %v431, 123
        %v869 = vpop.permute.xlu0 %868
        %870 = vrot.lane.b32.xlu0 %v436, 123
        %v871 = vpop.permute.xlu0 %870
        %872 = vrot.lane.b32.xlu0 %v441, 123
        %v873 = vpop.permute.xlu0 %872
        %882 = vxpose.xlu0.b32.start [1/16] %v859, 128
        %883 = vxpose.xlu0.b32.cont [2/16] %v861, 128
        %884 = vxpose.xlu0.b32.cont [3/16] %v863, 128
        %885 = vxpose.xlu0.b32.cont [4/16] %v865, 128
        %886 = vxpose.xlu0.b32.cont [5/16] %v867, 128
        %887 = vxpose.xlu0.b32.cont [6/16] %v869, 128
        %888 = vxpose.xlu0.b32.cont [7/16] %v871, 128
        %889 = vxpose.xlu0.b32.cont [8/16] %v873, 128
        %890 = vxpose.xlu0.b32.cont [9/16] 0.0, 128
        %891 = vxpose.xlu0.b32.cont [10/16] 0.0, 128
        %892 = vxpose.xlu0.b32.cont [11/16] 0.0, 128
        %893 = vxpose.xlu0.b32.cont [12/16] 0.0, 128
        %894 = vxpose.xlu0.b32.cont [13/16] 0.0, 128
        %895 = vxpose.xlu0.b32.cont [14/16] 0.0, 128
        %896 = vxpose.xlu0.b32.cont [15/16] 0.0, 128
        %897 = vxpose.xlu0.b32.end [16/16] 0.0, 128
        %v898 = vpop.trf.xlu0
        %v899 = vpop.trf.xlu0
        %v900 = vpop.trf.xlu0
        %v901 = vpop.trf.xlu0
        %v902 = vpop.trf.xlu0
        %v903 = vpop.trf.xlu0
        %v904 = vpop.trf.xlu0
        %v905 = vpop.trf.xlu0
        %v906 = vpop.trf.xlu0
        %v907 = vpop.trf.xlu0
        %v908 = vpop.trf.xlu0
        %v909 = vpop.trf.xlu0
        %v910 = vpop.trf.xlu0
        %v911 = vpop.trf.xlu0
        %v912 = vpop.trf.xlu0
        %v913 = vpop.trf.xlu0
        %914 = vset.pattern.permute.xlu0 1
        %915 = vperm.xlu0 %914, %v406
        %v916 = vpop.permute.xlu0 %915
        %918 = vset.pattern.permute.xlu0 1
        %919 = vperm.xlu0 %918, %v411
        %v920 = vpop.permute.xlu0 %919
        %922 = vset.pattern.permute.xlu0 1
        %923 = vperm.xlu0 %922, %v416
        %v924 = vpop.permute.xlu0 %923
        %926 = vset.pattern.permute.xlu0 1
        %927 = vperm.xlu0 %926, %v421
        %v928 = vpop.permute.xlu0 %927
        %930 = vset.pattern.permute.xlu0 1
        %931 = vperm.xlu0 %930, %v426
        %v932 = vpop.permute.xlu0 %931
        %934 = vset.pattern.permute.xlu0 1
        %935 = vperm.xlu0 %934, %v431
        %v936 = vpop.permute.xlu0 %935
        %938 = vset.pattern.permute.xlu0 1
        %939 = vperm.xlu0 %938, %v436
        %v940 = vpop.permute.xlu0 %939
        %942 = vset.pattern.permute.xlu0 1
        %943 = vperm.xlu0 %942, %v441
        %v944 = vpop.permute.xlu0 %943
        %v946 = vlaneseq
        %v947 = vshrl.u32 %v946, 7
        %v948 = vsub.s32 0, %v947
        %v949 = vrot.slane %v898, %v948
        %v950 = vadd.f32 %v916, %v949
        %v951 = vadd.f32 %v920, %v949
        %v952 = vadd.f32 %v924, %v949
        %v953 = vadd.f32 %v928, %v949
        %v954 = vadd.f32 %v932, %v949
        %v955 = vadd.f32 %v936, %v949
        %v956 = vadd.f32 %v940, %v949
        %v957 = vadd.f32 %v944, %v949
        %vm958 = vcmp.gt.f32.partialorder %v950, 0.0
        %vm959 = vcmp.gt.f32.partialorder %v951, 0.0
        %vm960 = vcmp.gt.f32.partialorder %v952, 0.0
        %vm961 = vcmp.gt.f32.partialorder %v953, 0.0
        %vm962 = vcmp.gt.f32.partialorder %v954, 0.0
        %vm963 = vcmp.gt.f32.partialorder %v955, 0.0
        %vm964 = vcmp.gt.f32.partialorder %v956, 0.0
        %vm965 = vcmp.gt.f32.partialorder %v957, 0.0
        %v966 = vmul.f32 %v950, 0.2
        %v967 = vmul.f32 %v951, 0.2
        %v968 = vmul.f32 %v952, 0.2
        %v969 = vmul.f32 %v953, 0.2
        %v970 = vmul.f32 %v954, 0.2
        %v971 = vmul.f32 %v955, 0.2
        %v972 = vmul.f32 %v956, 0.2
        %v973 = vmul.f32 %v957, 0.2
        %v974 = vsel %vm958, %v950, %v966
        %v975 = vsel %vm959, %v951, %v967
        %v976 = vsel %vm960, %v952, %v968
        %v977 = vsel %vm961, %v953, %v969
        %v978 = vsel %vm962, %v954, %v970
        %v979 = vsel %vm963, %v955, %v971
        %v980 = vsel %vm964, %v956, %v972
        %v981 = vsel %vm965, %v957, %v973
        %v982 = vadd.f32 %v974, %v452
        %v983 = vadd.f32 %v975, %v453
        %v984 = vadd.f32 %v976, %v454
        %v985 = vadd.f32 %v977, %v455
        %v986 = vadd.f32 %v978, %v456
        %v987 = vadd.f32 %v979, %v457
        %v988 = vadd.f32 %v980, %v458
        %v989 = vadd.f32 %v981, %v459
        %v990 = vsel %vm600, %v982, -inf
        %991 = vmax.xlane.f32.xlu0 %v990
        %v992 = vpop.xlane.xlu0 %991
        %v993 = vsel %vm600, %v983, -inf
        %994 = vmax.xlane.f32.xlu0 %v993
        %v995 = vpop.xlane.xlu0 %994
        %v996 = vsel %vm600, %v984, -inf
        %997 = vmax.xlane.f32.xlu0 %v996
        %v998 = vpop.xlane.xlu0 %997
        %v999 = vsel %vm600, %v985, -inf
        %1000 = vmax.xlane.f32.xlu0 %v999
        %v1001 = vpop.xlane.xlu0 %1000
        %v1002 = vsel %vm600, %v986, -inf
        %1003 = vmax.xlane.f32.xlu0 %v1002
        %v1004 = vpop.xlane.xlu0 %1003
        %v1005 = vsel %vm600, %v987, -inf
        %1006 = vmax.xlane.f32.xlu0 %v1005
        %v1007 = vpop.xlane.xlu0 %1006
        %v1008 = vsel %vm600, %v988, -inf
        %1009 = vmax.xlane.f32.xlu0 %v1008
        %v1010 = vpop.xlane.xlu0 %1009
        %v1011 = vsel %vm600, %v989, -inf
        %1012 = vmax.xlane.f32.xlu0 %v1011
        %v1013 = vpop.xlane.xlu0 %1012
        %v1014 = vsub.f32 %v982, %v992
        %v1015 = vsub.f32 %v983, %v995
        %v1016 = vsub.f32 %v984, %v998
        %v1017 = vsub.f32 %v985, %v1001
        %v1018 = vsub.f32 %v986, %v1004
        %v1019 = vsub.f32 %v987, %v1007
        %v1020 = vsub.f32 %v988, %v1010
        %v1021 = vsub.f32 %v989, %v1013
        %v1022 = vmul.f32 %v1014, 1.442695
        %v1023 = vpow.pop %v1022
        %v1024 = vmul.f32 %v1015, 1.442695
        %v1025 = vpow.pop %v1024
        %v1026 = vmul.f32 %v1016, 1.442695
        %v1027 = vpow.pop %v1026
        %v1028 = vmul.f32 %v1017, 1.442695
        %v1029 = vpow.pop %v1028
        %v1030 = vmul.f32 %v1018, 1.442695
        %v1031 = vpow.pop %v1030
        %v1032 = vmul.f32 %v1019, 1.442695
        %v1033 = vpow.pop %v1032
        %v1034 = vmul.f32 %v1020, 1.442695
        %v1035 = vpow.pop %v1034
        %v1036 = vmul.f32 %v1021, 1.442695
        %v1037 = vpow.pop %v1036
        %v1038 = vsel %vm600, %v1023, 0.0
        %1039 = vadd.xlane.f32.xlu0 %v1038
        %v1040 = vpop.xlane.xlu0 %1039
        %v1041 = vsel %vm600, %v1025, 0.0
        %1042 = vadd.xlane.f32.xlu0 %v1041
        %v1043 = vpop.xlane.xlu0 %1042
        %v1044 = vsel %vm600, %v1027, 0.0
        %1045 = vadd.xlane.f32.xlu0 %v1044
        %v1046 = vpop.xlane.xlu0 %1045
        %v1047 = vsel %vm600, %v1029, 0.0
        %1048 = vadd.xlane.f32.xlu0 %v1047
        %v1049 = vpop.xlane.xlu0 %1048
        %v1050 = vsel %vm600, %v1031, 0.0
        %1051 = vadd.xlane.f32.xlu0 %v1050
        %v1052 = vpop.xlane.xlu0 %1051
        %v1053 = vsel %vm600, %v1033, 0.0
        %1054 = vadd.xlane.f32.xlu0 %v1053
        %v1055 = vpop.xlane.xlu0 %1054
        %v1056 = vsel %vm600, %v1035, 0.0
        %1057 = vadd.xlane.f32.xlu0 %v1056
        %v1058 = vpop.xlane.xlu0 %1057
        %v1059 = vsel %vm600, %v1037, 0.0
        %1060 = vadd.xlane.f32.xlu0 %v1059
        %v1061 = vpop.xlane.xlu0 %1060
        %v1062 = vrcp.pop %v1040
        %v1063 = vrcp.pop %v1043
        %v1064 = vrcp.pop %v1046
        %v1065 = vrcp.pop %v1049
        %v1066 = vrcp.pop %v1052
        %v1067 = vrcp.pop %v1055
        %v1068 = vrcp.pop %v1058
        %v1069 = vrcp.pop %v1061
        %v1070 = vmul.f32 %v1023, %v1062
        %v1071 = vmul.f32 %v1025, %v1063
        %v1072 = vmul.f32 %v1027, %v1064
        %v1073 = vmul.f32 %v1029, %v1065
        %v1074 = vmul.f32 %v1031, %v1066
        %v1075 = vmul.f32 %v1033, %v1067
        %v1076 = vmul.f32 %v1035, %v1068
        %v1077 = vmul.f32 %v1037, %v1069
        %1086 = vrot.lane.b32.xlu0 %v293, 64
        %v1087 = vpop.permute.xlu0 %1086
        %1088 = vrot.lane.b32.xlu0 %v299, 64
        %v1089 = vpop.permute.xlu0 %1088
        %1090 = vrot.lane.b32.xlu0 %v305, 64
        %v1091 = vpop.permute.xlu0 %1090
        %1092 = vrot.lane.b32.xlu0 %v311, 64
        %v1093 = vpop.permute.xlu0 %1092
        %1094 = vrot.lane.b32.xlu0 %v317, 64
        %v1095 = vpop.permute.xlu0 %1094
        %1096 = vrot.lane.b32.xlu0 %v323, 64
        %v1097 = vpop.permute.xlu0 %1096
        %1098 = vrot.lane.b32.xlu0 %v329, 64
        %v1099 = vpop.permute.xlu0 %1098
        %1100 = vrot.lane.b32.xlu0 %v335, 64
        %v1101 = vpop.permute.xlu0 %1100
        %v1111 = vsel %vm600, %v1070, 0
        %v1114 = vsel %vm600, %v1071, 0
        %v1117 = vsel %vm600, %v1072, 0
        %v1120 = vsel %vm600, %v1073, 0
        %v1123 = vsel %vm600, %v1074, 0
        %v1126 = vsel %vm600, %v1075, 0
        %v1129 = vsel %vm600, %v1076, 0
        %v1132 = vsel %vm600, %v1077, 0
        %1134 = vmatprep.subr.mxu0 0.0
        %1135 = vmatpush1.msra.mxu0 0.0
        %1136 = vmatprep.subr.mxu0 0.0
        %1137 = vmatpush1.msra.mxu0 0.0
        %1138 = vmatprep.subr.mxu0 0.0
        %1139 = vmatpush1.msra.mxu0 0.0
        %1140 = vmatprep.subr.mxu0 0.0
        %1141 = vmatpush1.msra.mxu0 0.0
        %1142 = vmatprep.subr.mxu0 0.0
        %1143 = vmatpush1.msra.mxu0 0.0
        %1144 = vmatprep.subr.mxu0 0.0
        %1145 = vmatpush1.msra.mxu0 0.0
        %1146 = vmatprep.subr.mxu0 0.0
        %1147 = vmatpush1.msra.mxu0 0.0
        %1148 = vmatprep.subr.mxu0 0.0
        %1149 = vmatpush1.msra.mxu0 0.0
        %1150 = vmatprep.subr.mxu0 0.0
        %1151 = vmatpush1.msra.mxu0 %v1101
        %1152 = vmatprep.subr.mxu0 0.0
        %1153 = vmatpush1.msra.mxu0 %v1099
        %1154 = vmatprep.subr.mxu0 0.0
        %1155 = vmatpush1.msra.mxu0 %v1097
        %1156 = vmatprep.subr.mxu0 0.0
        %1157 = vmatpush1.msra.mxu0 %v1095
        %1158 = vmatprep.subr.mxu0 0.0
        %1159 = vmatpush1.msra.mxu0 %v1093
        %1160 = vmatprep.subr.mxu0 0.0
        %1161 = vmatpush1.msra.mxu0 %v1091
        %1162 = vmatprep.subr.mxu0 0.0
        %1163 = vmatpush1.msra.mxu0 %v1089
        %1164 = vmatprep.subr.mxu0 0.0
        %1165 = vmatpush1.msra.mxu0 %v1087
        %1166 = vmatprep.subr.mxu0 0.0
        %1167 = vmatpush2.msra.mxu0 0.0
        %1168 = vmatprep.subr.mxu0 0.0
        %1169 = vmatpush2.msra.mxu0 0.0
        %1170 = vmatprep.subr.mxu0 0.0
        %1171 = vmatpush2.msra.mxu0 0.0
        %1172 = vmatprep.subr.mxu0 0.0
        %1173 = vmatpush2.msra.mxu0 0.0
        %1174 = vmatprep.subr.mxu0 0.0
        %1175 = vmatpush2.msra.mxu0 0.0
        %1176 = vmatprep.subr.mxu0 0.0
        %1177 = vmatpush2.msra.mxu0 0.0
        %1178 = vmatprep.subr.mxu0 0.0
        %1179 = vmatpush2.msra.mxu0 0.0
        %1180 = vmatprep.subr.mxu0 0.0
        %1181 = vmatpush2.msra.mxu0 0.0
        %1182 = vmatprep.subr.mxu0 0.0
        %1183 = vmatpush2.msra.mxu0 0.0
        %1184 = vmatprep.subr.mxu0 0.0
        %1185 = vmatpush2.msra.mxu0 0.0
        %1186 = vmatprep.subr.mxu0 0.0
        %1187 = vmatpush2.msra.mxu0 0.0
        %1188 = vmatprep.subr.mxu0 0.0
        %1189 = vmatpush2.msra.mxu0 0.0
        %1190 = vmatprep.subr.mxu0 0.0
        %1191 = vmatpush2.msra.mxu0 0.0
        %1192 = vmatprep.subr.mxu0 0.0
        %1193 = vmatpush2.msra.mxu0 0.0
        %1194 = vmatprep.subr.mxu0 0.0
        %1195 = vmatpush2.msra.mxu0 0.0
        %1196 = vmatprep.subr.mxu0 0.0
        %1197 = vmatpush2.msra.mxu0 0.0
        %1198 = vmatprep.mubr.f32.mxu0 0.0
        %1199 = vmatmul.mubr.f32.gmra.mxu0 %v1111
        %v1200 = vpop.f32.mrf.mxu0
        %v1201 = vadd.f32 0.0, %v1200
        %v1202 = vpop.f32.mrf.mxu0
        %1203 = vmatprep.mubr.f32.mxu0 0.0
        %1204 = vmatmul.mubr.f32.gmra.mxu0 %v1114
        %v1205 = vpop.f32.mrf.mxu0
        %v1206 = vadd.f32 0.0, %v1205
        %v1207 = vpop.f32.mrf.mxu0
        %1208 = vmatprep.mubr.f32.mxu0 0.0
        %1209 = vmatmul.mubr.f32.gmra.mxu0 %v1117
        %v1210 = vpop.f32.mrf.mxu0
        %v1211 = vadd.f32 0.0, %v1210
        %v1212 = vpop.f32.mrf.mxu0
        %1213 = vmatprep.mubr.f32.mxu0 0.0
        %1214 = vmatmul.mubr.f32.gmra.mxu0 %v1120
        %v1215 = vpop.f32.mrf.mxu0
        %v1216 = vadd.f32 0.0, %v1215
        %v1217 = vpop.f32.mrf.mxu0
        %1218 = vmatprep.mubr.f32.mxu0 0.0
        %1219 = vmatmul.mubr.f32.gmra.mxu0 %v1123
        %v1220 = vpop.f32.mrf.mxu0
        %v1221 = vadd.f32 0.0, %v1220
        %v1222 = vpop.f32.mrf.mxu0
        %1223 = vmatprep.mubr.f32.mxu0 0.0
        %1224 = vmatmul.mubr.f32.gmra.mxu0 %v1126
        %v1225 = vpop.f32.mrf.mxu0
        %v1226 = vadd.f32 0.0, %v1225
        %v1227 = vpop.f32.mrf.mxu0
        %1228 = vmatprep.mubr.f32.mxu0 0.0
        %1229 = vmatmul.mubr.f32.gmra.mxu0 %v1129
        %v1230 = vpop.f32.mrf.mxu0
        %v1231 = vadd.f32 0.0, %v1230
        %v1232 = vpop.f32.mrf.mxu0
        %1233 = vmatprep.mubr.f32.mxu0 0.0
        %1234 = vmatmul.mubr.f32.gmra.mxu0 %v1132
        %v1235 = vpop.f32.mrf.mxu0
        %v1236 = vadd.f32 0.0, %v1235
        %v1237 = vpop.f32.mrf.mxu0
        %1238 = vdwg.mxu0
        %vm1239 = vcmp.gt.f32.partialorder %v1201, 0.0
        %vm1240 = vcmp.gt.f32.partialorder %v1206, 0.0
        %vm1241 = vcmp.gt.f32.partialorder %v1211, 0.0
        %vm1242 = vcmp.gt.f32.partialorder %v1216, 0.0
        %vm1243 = vcmp.gt.f32.partialorder %v1221, 0.0
        %vm1244 = vcmp.gt.f32.partialorder %v1226, 0.0
        %vm1245 = vcmp.gt.f32.partialorder %v1231, 0.0
        %vm1246 = vcmp.gt.f32.partialorder %v1236, 0.0
        %v1247 = vmul.f32 %v1201, 1.442695
        %v1248 = vpow.pop %v1247
        %v1249 = vmul.f32 %v1206, 1.442695
        %v1250 = vpow.pop %v1249
        %v1251 = vmul.f32 %v1211, 1.442695
        %v1252 = vpow.pop %v1251
        %v1253 = vmul.f32 %v1216, 1.442695
        %v1254 = vpow.pop %v1253
        %v1255 = vmul.f32 %v1221, 1.442695
        %v1256 = vpow.pop %v1255
        %v1257 = vmul.f32 %v1226, 1.442695
        %v1258 = vpow.pop %v1257
        %v1259 = vmul.f32 %v1231, 1.442695
        %v1260 = vpow.pop %v1259
        %v1261 = vmul.f32 %v1236, 1.442695
        %v1262 = vpow.pop %v1261
        %v1263 = vsub.f32 %v1248, 1.0
        %v1264 = vsub.f32 %v1250, 1.0
        %v1265 = vsub.f32 %v1252, 1.0
        %v1266 = vsub.f32 %v1254, 1.0
        %v1267 = vsub.f32 %v1256, 1.0
        %v1268 = vsub.f32 %v1258, 1.0
        %v1269 = vsub.f32 %v1260, 1.0
        %v1270 = vsub.f32 %v1262, 1.0
        %v1271 = vsel %vm1239, %v1201, %v1263
        %v1272 = vsel %vm1240, %v1206, %v1264
        %v1273 = vsel %vm1241, %v1211, %v1265
        %v1274 = vsel %vm1242, %v1216, %v1266
        %v1275 = vsel %vm1243, %v1221, %v1267
        %v1276 = vsel %vm1244, %v1226, %v1268
        %v1277 = vsel %vm1245, %v1231, %v1269
        %v1278 = vsel %vm1246, %v1236, %v1270
        %1279 = vrot.lane.b32.xlu0 %v406, 122
        %v1280 = vpop.permute.xlu0 %1279
        %1281 = vrot.lane.b32.xlu0 %v411, 122
        %v1282 = vpop.permute.xlu0 %1281
        %1283 = vrot.lane.b32.xlu0 %v416, 122
        %v1284 = vpop.permute.xlu0 %1283
        %1285 = vrot.lane.b32.xlu0 %v421, 122
        %v1286 = vpop.permute.xlu0 %1285
        %1287 = vrot.lane.b32.xlu0 %v426, 122
        %v1288 = vpop.permute.xlu0 %1287
        %1289 = vrot.lane.b32.xlu0 %v431, 122
        %v1290 = vpop.permute.xlu0 %1289
        %1291 = vrot.lane.b32.xlu0 %v436, 122
        %v1292 = vpop.permute.xlu0 %1291
        %1293 = vrot.lane.b32.xlu0 %v441, 122
        %v1294 = vpop.permute.xlu0 %1293
        %1303 = vxpose.xlu0.b32.start [1/16] %v1280, 128
        %1304 = vxpose.xlu0.b32.cont [2/16] %v1282, 128
        %1305 = vxpose.xlu0.b32.cont [3/16] %v1284, 128
        %1306 = vxpose.xlu0.b32.cont [4/16] %v1286, 128
        %1307 = vxpose.xlu0.b32.cont [5/16] %v1288, 128
        %1308 = vxpose.xlu0.b32.cont [6/16] %v1290, 128
        %1309 = vxpose.xlu0.b32.cont [7/16] %v1292, 128
        %1310 = vxpose.xlu0.b32.cont [8/16] %v1294, 128
        %1311 = vxpose.xlu0.b32.cont [9/16] 0.0, 128
        %1312 = vxpose.xlu0.b32.cont [10/16] 0.0, 128
        %1313 = vxpose.xlu0.b32.cont [11/16] 0.0, 128
        %1314 = vxpose.xlu0.b32.cont [12/16] 0.0, 128
        %1315 = vxpose.xlu0.b32.cont [13/16] 0.0, 128
        %1316 = vxpose.xlu0.b32.cont [14/16] 0.0, 128
        %1317 = vxpose.xlu0.b32.cont [15/16] 0.0, 128
        %1318 = vxpose.xlu0.b32.end [16/16] 0.0, 128
        %v1319 = vpop.trf.xlu0
        %v1320 = vpop.trf.xlu0
        %v1321 = vpop.trf.xlu0
        %v1322 = vpop.trf.xlu0
        %v1323 = vpop.trf.xlu0
        %v1324 = vpop.trf.xlu0
        %v1325 = vpop.trf.xlu0
        %v1326 = vpop.trf.xlu0
        %v1327 = vpop.trf.xlu0
        %v1328 = vpop.trf.xlu0
        %v1329 = vpop.trf.xlu0
        %v1330 = vpop.trf.xlu0
        %v1331 = vpop.trf.xlu0
        %v1332 = vpop.trf.xlu0
        %v1333 = vpop.trf.xlu0
        %v1334 = vpop.trf.xlu0
        %1335 = vset.pattern.permute.xlu0 2
        %1336 = vperm.xlu0 %1335, %v406
        %v1337 = vpop.permute.xlu0 %1336
        %1339 = vset.pattern.permute.xlu0 2
        %1340 = vperm.xlu0 %1339, %v411
        %v1341 = vpop.permute.xlu0 %1340
        %1343 = vset.pattern.permute.xlu0 2
        %1344 = vperm.xlu0 %1343, %v416
        %v1345 = vpop.permute.xlu0 %1344
        %1347 = vset.pattern.permute.xlu0 2
        %1348 = vperm.xlu0 %1347, %v421
        %v1349 = vpop.permute.xlu0 %1348
        %1351 = vset.pattern.permute.xlu0 2
        %1352 = vperm.xlu0 %1351, %v426
        %v1353 = vpop.permute.xlu0 %1352
        %1355 = vset.pattern.permute.xlu0 2
        %1356 = vperm.xlu0 %1355, %v431
        %v1357 = vpop.permute.xlu0 %1356
        %1359 = vset.pattern.permute.xlu0 2
        %1360 = vperm.xlu0 %1359, %v436
        %v1361 = vpop.permute.xlu0 %1360
        %1363 = vset.pattern.permute.xlu0 2
        %1364 = vperm.xlu0 %1363, %v441
        %v1365 = vpop.permute.xlu0 %1364
        %v1367 = vlaneseq
        %v1368 = vshrl.u32 %v1367, 7
        %v1369 = vsub.s32 0, %v1368
        %v1370 = vrot.slane %v1319, %v1369
        %v1371 = vadd.f32 %v1337, %v1370
        %v1372 = vadd.f32 %v1341, %v1370
        %v1373 = vadd.f32 %v1345, %v1370
        %v1374 = vadd.f32 %v1349, %v1370
        %v1375 = vadd.f32 %v1353, %v1370
        %v1376 = vadd.f32 %v1357, %v1370
        %v1377 = vadd.f32 %v1361, %v1370
        %v1378 = vadd.f32 %v1365, %v1370
        %vm1379 = vcmp.gt.f32.partialorder %v1371, 0.0
        %vm1380 = vcmp.gt.f32.partialorder %v1372, 0.0
        %vm1381 = vcmp.gt.f32.partialorder %v1373, 0.0
        %vm1382 = vcmp.gt.f32.partialorder %v1374, 0.0
        %vm1383 = vcmp.gt.f32.partialorder %v1375, 0.0
        %vm1384 = vcmp.gt.f32.partialorder %v1376, 0.0
        %vm1385 = vcmp.gt.f32.partialorder %v1377, 0.0
        %vm1386 = vcmp.gt.f32.partialorder %v1378, 0.0
        %v1387 = vmul.f32 %v1371, 0.2
        %v1388 = vmul.f32 %v1372, 0.2
        %v1389 = vmul.f32 %v1373, 0.2
        %v1390 = vmul.f32 %v1374, 0.2
        %v1391 = vmul.f32 %v1375, 0.2
        %v1392 = vmul.f32 %v1376, 0.2
        %v1393 = vmul.f32 %v1377, 0.2
        %v1394 = vmul.f32 %v1378, 0.2
        %v1395 = vsel %vm1379, %v1371, %v1387
        %v1396 = vsel %vm1380, %v1372, %v1388
        %v1397 = vsel %vm1381, %v1373, %v1389
        %v1398 = vsel %vm1382, %v1374, %v1390
        %v1399 = vsel %vm1383, %v1375, %v1391
        %v1400 = vsel %vm1384, %v1376, %v1392
        %v1401 = vsel %vm1385, %v1377, %v1393
        %v1402 = vsel %vm1386, %v1378, %v1394
        %v1403 = vadd.f32 %v1395, %v452
        %v1404 = vadd.f32 %v1396, %v453
        %v1405 = vadd.f32 %v1397, %v454
        %v1406 = vadd.f32 %v1398, %v455
        %v1407 = vadd.f32 %v1399, %v456
        %v1408 = vadd.f32 %v1400, %v457
        %v1409 = vadd.f32 %v1401, %v458
        %v1410 = vadd.f32 %v1402, %v459
        %v1411 = vsel %vm600, %v1403, -inf
        %1412 = vmax.xlane.f32.xlu0 %v1411
        %v1413 = vpop.xlane.xlu0 %1412
        %v1414 = vsel %vm600, %v1404, -inf
        %1415 = vmax.xlane.f32.xlu0 %v1414
        %v1416 = vpop.xlane.xlu0 %1415
        %v1417 = vsel %vm600, %v1405, -inf
        %1418 = vmax.xlane.f32.xlu0 %v1417
        %v1419 = vpop.xlane.xlu0 %1418
        %v1420 = vsel %vm600, %v1406, -inf
        %1421 = vmax.xlane.f32.xlu0 %v1420
        %v1422 = vpop.xlane.xlu0 %1421
        %v1423 = vsel %vm600, %v1407, -inf
        %1424 = vmax.xlane.f32.xlu0 %v1423
        %v1425 = vpop.xlane.xlu0 %1424
        %v1426 = vsel %vm600, %v1408, -inf
        %1427 = vmax.xlane.f32.xlu0 %v1426
        %v1428 = vpop.xlane.xlu0 %1427
        %v1429 = vsel %vm600, %v1409, -inf
        %1430 = vmax.xlane.f32.xlu0 %v1429
        %v1431 = vpop.xlane.xlu0 %1430
        %v1432 = vsel %vm600, %v1410, -inf
        %1433 = vmax.xlane.f32.xlu0 %v1432
        %v1434 = vpop.xlane.xlu0 %1433
        %v1435 = vsub.f32 %v1403, %v1413
        %v1436 = vsub.f32 %v1404, %v1416
        %v1437 = vsub.f32 %v1405, %v1419
        %v1438 = vsub.f32 %v1406, %v1422
        %v1439 = vsub.f32 %v1407, %v1425
        %v1440 = vsub.f32 %v1408, %v1428
        %v1441 = vsub.f32 %v1409, %v1431
        %v1442 = vsub.f32 %v1410, %v1434
        %v1443 = vmul.f32 %v1435, 1.442695
        %v1444 = vpow.pop %v1443
        %v1445 = vmul.f32 %v1436, 1.442695
        %v1446 = vpow.pop %v1445
        %v1447 = vmul.f32 %v1437, 1.442695
        %v1448 = vpow.pop %v1447
        %v1449 = vmul.f32 %v1438, 1.442695
        %v1450 = vpow.pop %v1449
        %v1451 = vmul.f32 %v1439, 1.442695
        %v1452 = vpow.pop %v1451
        %v1453 = vmul.f32 %v1440, 1.442695
        %v1454 = vpow.pop %v1453
        %v1455 = vmul.f32 %v1441, 1.442695
        %v1456 = vpow.pop %v1455
        %v1457 = vmul.f32 %v1442, 1.442695
        %v1458 = vpow.pop %v1457
        %v1459 = vsel %vm600, %v1444, 0.0
        %1460 = vadd.xlane.f32.xlu0 %v1459
        %v1461 = vpop.xlane.xlu0 %1460
        %v1462 = vsel %vm600, %v1446, 0.0
        %1463 = vadd.xlane.f32.xlu0 %v1462
        %v1464 = vpop.xlane.xlu0 %1463
        %v1465 = vsel %vm600, %v1448, 0.0
        %1466 = vadd.xlane.f32.xlu0 %v1465
        %v1467 = vpop.xlane.xlu0 %1466
        %v1468 = vsel %vm600, %v1450, 0.0
        %1469 = vadd.xlane.f32.xlu0 %v1468
        %v1470 = vpop.xlane.xlu0 %1469
        %v1471 = vsel %vm600, %v1452, 0.0
        %1472 = vadd.xlane.f32.xlu0 %v1471
        %v1473 = vpop.xlane.xlu0 %1472
        %v1474 = vsel %vm600, %v1454, 0.0
        %1475 = vadd.xlane.f32.xlu0 %v1474
        %v1476 = vpop.xlane.xlu0 %1475
        %v1477 = vsel %vm600, %v1456, 0.0
        %1478 = vadd.xlane.f32.xlu0 %v1477
        %v1479 = vpop.xlane.xlu0 %1478
        %v1480 = vsel %vm600, %v1458, 0.0
        %1481 = vadd.xlane.f32.xlu0 %v1480
        %v1482 = vpop.xlane.xlu0 %1481
        %v1483 = vrcp.pop %v1461
        %v1484 = vrcp.pop %v1464
        %v1485 = vrcp.pop %v1467
        %v1486 = vrcp.pop %v1470
        %v1487 = vrcp.pop %v1473
        %v1488 = vrcp.pop %v1476
        %v1489 = vrcp.pop %v1479
        %v1490 = vrcp.pop %v1482
        %v1491 = vmul.f32 %v1444, %v1483
        %v1492 = vmul.f32 %v1446, %v1484
        %v1493 = vmul.f32 %v1448, %v1485
        %v1494 = vmul.f32 %v1450, %v1486
        %v1495 = vmul.f32 %v1452, %v1487
        %v1496 = vmul.f32 %v1454, %v1488
        %v1497 = vmul.f32 %v1456, %v1489
        %v1498 = vmul.f32 %v1458, %v1490
        %v1500 = vsel %vm600, %v1491, 0
        %v1503 = vsel %vm600, %v1492, 0
        %v1506 = vsel %vm600, %v1493, 0
        %v1509 = vsel %vm600, %v1494, 0
        %v1512 = vsel %vm600, %v1495, 0
        %v1515 = vsel %vm600, %v1496, 0
        %v1518 = vsel %vm600, %v1497, 0
        %v1521 = vsel %vm600, %v1498, 0
        %1523 = vmatprep.subr.mxu0 0.0
        %1524 = vmatpush1.msra.mxu0 0.0
        %1525 = vmatprep.subr.mxu0 0.0
        %1526 = vmatpush1.msra.mxu0 0.0
        %1527 = vmatprep.subr.mxu0 0.0
        %1528 = vmatpush1.msra.mxu0 0.0
        %1529 = vmatprep.subr.mxu0 0.0
        %1530 = vmatpush1.msra.mxu0 0.0
        %1531 = vmatprep.subr.mxu0 0.0
        %1532 = vmatpush1.msra.mxu0 0.0
        %1533 = vmatprep.subr.mxu0 0.0
        %1534 = vmatpush1.msra.mxu0 0.0
        %1535 = vmatprep.subr.mxu0 0.0
        %1536 = vmatpush1.msra.mxu0 0.0
        %1537 = vmatprep.subr.mxu0 0.0
        %1538 = vmatpush1.msra.mxu0 0.0
        %1539 = vmatprep.subr.mxu0 0.0
        %1540 = vmatpush1.msra.mxu0 %v337
        %1541 = vmatprep.subr.mxu0 0.0
        %1542 = vmatpush1.msra.mxu0 %v331
        %1543 = vmatprep.subr.mxu0 0.0
        %1544 = vmatpush1.msra.mxu0 %v325
        %1545 = vmatprep.subr.mxu0 0.0
        %1546 = vmatpush1.msra.mxu0 %v319
        %1547 = vmatprep.subr.mxu0 0.0
        %1548 = vmatpush1.msra.mxu0 %v313
        %1549 = vmatprep.subr.mxu0 0.0
        %1550 = vmatpush1.msra.mxu0 %v307
        %1551 = vmatprep.subr.mxu0 0.0
        %1552 = vmatpush1.msra.mxu0 %v301
        %1553 = vmatprep.subr.mxu0 0.0
        %1554 = vmatpush1.msra.mxu0 %v295
        %1555 = vmatprep.subr.mxu0 0.0
        %1556 = vmatpush2.msra.mxu0 0.0
        %1557 = vmatprep.subr.mxu0 0.0
        %1558 = vmatpush2.msra.mxu0 0.0
        %1559 = vmatprep.subr.mxu0 0.0
        %1560 = vmatpush2.msra.mxu0 0.0
        %1561 = vmatprep.subr.mxu0 0.0
        %1562 = vmatpush2.msra.mxu0 0.0
        %1563 = vmatprep.subr.mxu0 0.0
        %1564 = vmatpush2.msra.mxu0 0.0
        %1565 = vmatprep.subr.mxu0 0.0
        %1566 = vmatpush2.msra.mxu0 0.0
        %1567 = vmatprep.subr.mxu0 0.0
        %1568 = vmatpush2.msra.mxu0 0.0
        %1569 = vmatprep.subr.mxu0 0.0
        %1570 = vmatpush2.msra.mxu0 0.0
        %1571 = vmatprep.subr.mxu0 0.0
        %1572 = vmatpush2.msra.mxu0 0.0
        %1573 = vmatprep.subr.mxu0 0.0
        %1574 = vmatpush2.msra.mxu0 0.0
        %1575 = vmatprep.subr.mxu0 0.0
        %1576 = vmatpush2.msra.mxu0 0.0
        %1577 = vmatprep.subr.mxu0 0.0
        %1578 = vmatpush2.msra.mxu0 0.0
        %1579 = vmatprep.subr.mxu0 0.0
        %1580 = vmatpush2.msra.mxu0 0.0
        %1581 = vmatprep.subr.mxu0 0.0
        %1582 = vmatpush2.msra.mxu0 0.0
        %1583 = vmatprep.subr.mxu0 0.0
        %1584 = vmatpush2.msra.mxu0 0.0
        %1585 = vmatprep.subr.mxu0 0.0
        %1586 = vmatpush2.msra.mxu0 0.0
        %1587 = vmatprep.mubr.f32.mxu0 0.0
        %1588 = vmatmul.mubr.f32.gmra.mxu0 %v1500
        %v1589 = vpop.f32.mrf.mxu0
        %v1590 = vadd.f32 0.0, %v1589
        %v1591 = vpop.f32.mrf.mxu0
        %1592 = vmatprep.mubr.f32.mxu0 0.0
        %1593 = vmatmul.mubr.f32.gmra.mxu0 %v1503
        %v1594 = vpop.f32.mrf.mxu0
        %v1595 = vadd.f32 0.0, %v1594
        %v1596 = vpop.f32.mrf.mxu0
        %1597 = vmatprep.mubr.f32.mxu0 0.0
        %1598 = vmatmul.mubr.f32.gmra.mxu0 %v1506
        %v1599 = vpop.f32.mrf.mxu0
        %v1600 = vadd.f32 0.0, %v1599
        %v1601 = vpop.f32.mrf.mxu0
        %1602 = vmatprep.mubr.f32.mxu0 0.0
        %1603 = vmatmul.mubr.f32.gmra.mxu0 %v1509
        %v1604 = vpop.f32.mrf.mxu0
        %v1605 = vadd.f32 0.0, %v1604
        %v1606 = vpop.f32.mrf.mxu0
        %1607 = vmatprep.mubr.f32.mxu0 0.0
        %1608 = vmatmul.mubr.f32.gmra.mxu0 %v1512
        %v1609 = vpop.f32.mrf.mxu0
        %v1610 = vadd.f32 0.0, %v1609
        %v1611 = vpop.f32.mrf.mxu0
        %1612 = vmatprep.mubr.f32.mxu0 0.0
        %1613 = vmatmul.mubr.f32.gmra.mxu0 %v1515
        %v1614 = vpop.f32.mrf.mxu0
        %v1615 = vadd.f32 0.0, %v1614
        %v1616 = vpop.f32.mrf.mxu0
        %1617 = vmatprep.mubr.f32.mxu0 0.0
        %1618 = vmatmul.mubr.f32.gmra.mxu0 %v1518
        %v1619 = vpop.f32.mrf.mxu0
        %v1620 = vadd.f32 0.0, %v1619
        %v1621 = vpop.f32.mrf.mxu0
        %1622 = vmatprep.mubr.f32.mxu0 0.0
        %1623 = vmatmul.mubr.f32.gmra.mxu0 %v1521
        %v1624 = vpop.f32.mrf.mxu0
        %v1625 = vadd.f32 0.0, %v1624
        %v1626 = vpop.f32.mrf.mxu0
        %1627 = vdwg.mxu0
        %vm1628 = vcmp.gt.f32.partialorder %v1590, 0.0
        %vm1629 = vcmp.gt.f32.partialorder %v1595, 0.0
        %vm1630 = vcmp.gt.f32.partialorder %v1600, 0.0
        %vm1631 = vcmp.gt.f32.partialorder %v1605, 0.0
        %vm1632 = vcmp.gt.f32.partialorder %v1610, 0.0
        %vm1633 = vcmp.gt.f32.partialorder %v1615, 0.0
        %vm1634 = vcmp.gt.f32.partialorder %v1620, 0.0
        %vm1635 = vcmp.gt.f32.partialorder %v1625, 0.0
        %v1636 = vmul.f32 %v1590, 1.442695
        %v1637 = vpow.pop %v1636
        %v1638 = vmul.f32 %v1595, 1.442695
        %v1639 = vpow.pop %v1638
        %v1640 = vmul.f32 %v1600, 1.442695
        %v1641 = vpow.pop %v1640
        %v1642 = vmul.f32 %v1605, 1.442695
        %v1643 = vpow.pop %v1642
        %v1644 = vmul.f32 %v1610, 1.442695
        %v1645 = vpow.pop %v1644
        %v1646 = vmul.f32 %v1615, 1.442695
        %v1647 = vpow.pop %v1646
        %v1648 = vmul.f32 %v1620, 1.442695
        %v1649 = vpow.pop %v1648
        %v1650 = vmul.f32 %v1625, 1.442695
        %v1651 = vpow.pop %v1650
        %v1652 = vsub.f32 %v1637, 1.0
        %v1653 = vsub.f32 %v1639, 1.0
        %v1654 = vsub.f32 %v1641, 1.0
        %v1655 = vsub.f32 %v1643, 1.0
        %v1656 = vsub.f32 %v1645, 1.0
        %v1657 = vsub.f32 %v1647, 1.0
        %v1658 = vsub.f32 %v1649, 1.0
        %v1659 = vsub.f32 %v1651, 1.0
        %v1660 = vsel %vm1628, %v1590, %v1652
        %v1661 = vsel %vm1629, %v1595, %v1653
        %v1662 = vsel %vm1630, %v1600, %v1654
        %v1663 = vsel %vm1631, %v1605, %v1655
        %v1664 = vsel %vm1632, %v1610, %v1656
        %v1665 = vsel %vm1633, %v1615, %v1657
        %v1666 = vsel %vm1634, %v1620, %v1658
        %v1667 = vsel %vm1635, %v1625, %v1659
        %1668 = vrot.lane.b32.xlu0 %v406, 121
        %v1669 = vpop.permute.xlu0 %1668
        %1670 = vrot.lane.b32.xlu0 %v411, 121
        %v1671 = vpop.permute.xlu0 %1670
        %1672 = vrot.lane.b32.xlu0 %v416, 121
        %v1673 = vpop.permute.xlu0 %1672
        %1674 = vrot.lane.b32.xlu0 %v421, 121
        %v1675 = vpop.permute.xlu0 %1674
        %1676 = vrot.lane.b32.xlu0 %v426, 121
        %v1677 = vpop.permute.xlu0 %1676
        %1678 = vrot.lane.b32.xlu0 %v431, 121
        %v1679 = vpop.permute.xlu0 %1678
        %1680 = vrot.lane.b32.xlu0 %v436, 121
        %v1681 = vpop.permute.xlu0 %1680
        %1682 = vrot.lane.b32.xlu0 %v441, 121
        %v1683 = vpop.permute.xlu0 %1682
        %1692 = vxpose.xlu0.b32.start [1/16] %v1669, 128
        %1693 = vxpose.xlu0.b32.cont [2/16] %v1671, 128
        %1694 = vxpose.xlu0.b32.cont [3/16] %v1673, 128
        %1695 = vxpose.xlu0.b32.cont [4/16] %v1675, 128
        %1696 = vxpose.xlu0.b32.cont [5/16] %v1677, 128
        %1697 = vxpose.xlu0.b32.cont [6/16] %v1679, 128
        %1698 = vxpose.xlu0.b32.cont [7/16] %v1681, 128
        %1699 = vxpose.xlu0.b32.cont [8/16] %v1683, 128
        %1700 = vxpose.xlu0.b32.cont [9/16] 0.0, 128
        %1701 = vxpose.xlu0.b32.cont [10/16] 0.0, 128
        %1702 = vxpose.xlu0.b32.cont [11/16] 0.0, 128
        %1703 = vxpose.xlu0.b32.cont [12/16] 0.0, 128
        %1704 = vxpose.xlu0.b32.cont [13/16] 0.0, 128
        %1705 = vxpose.xlu0.b32.cont [14/16] 0.0, 128
        %1706 = vxpose.xlu0.b32.cont [15/16] 0.0, 128
        %1707 = vxpose.xlu0.b32.end [16/16] 0.0, 128
        %v1708 = vpop.trf.xlu0
        %v1709 = vpop.trf.xlu0
        %v1710 = vpop.trf.xlu0
        %v1711 = vpop.trf.xlu0
        %v1712 = vpop.trf.xlu0
        %v1713 = vpop.trf.xlu0
        %v1714 = vpop.trf.xlu0
        %v1715 = vpop.trf.xlu0
        %v1716 = vpop.trf.xlu0
        %v1717 = vpop.trf.xlu0
        %v1718 = vpop.trf.xlu0
        %v1719 = vpop.trf.xlu0
        %v1720 = vpop.trf.xlu0
        %v1721 = vpop.trf.xlu0
        %v1722 = vpop.trf.xlu0
        %v1723 = vpop.trf.xlu0
        %1724 = vset.pattern.permute.xlu0 3
        %1725 = vperm.xlu0 %1724, %v406
        %v1726 = vpop.permute.xlu0 %1725
        %1728 = vset.pattern.permute.xlu0 3
        %1729 = vperm.xlu0 %1728, %v411
        %v1730 = vpop.permute.xlu0 %1729
        %1732 = vset.pattern.permute.xlu0 3
        %1733 = vperm.xlu0 %1732, %v416
        %v1734 = vpop.permute.xlu0 %1733
        %1736 = vset.pattern.permute.xlu0 3
        %1737 = vperm.xlu0 %1736, %v421
        %v1738 = vpop.permute.xlu0 %1737
        %1740 = vset.pattern.permute.xlu0 3
        %1741 = vperm.xlu0 %1740, %v426
        %v1742 = vpop.permute.xlu0 %1741
        %1744 = vset.pattern.permute.xlu0 3
        %1745 = vperm.xlu0 %1744, %v431
        %v1746 = vpop.permute.xlu0 %1745
        %1748 = vset.pattern.permute.xlu0 3
        %1749 = vperm.xlu0 %1748, %v436
        %v1750 = vpop.permute.xlu0 %1749
        %1752 = vset.pattern.permute.xlu0 3
        %1753 = vperm.xlu0 %1752, %v441
        %v1754 = vpop.permute.xlu0 %1753
        %v1756 = vlaneseq
        %v1757 = vshrl.u32 %v1756, 7
        %v1758 = vsub.s32 0, %v1757
        %v1759 = vrot.slane %v1708, %v1758
        %v1760 = vadd.f32 %v1726, %v1759
        %v1761 = vadd.f32 %v1730, %v1759
        %v1762 = vadd.f32 %v1734, %v1759
        %v1763 = vadd.f32 %v1738, %v1759
        %v1764 = vadd.f32 %v1742, %v1759
        %v1765 = vadd.f32 %v1746, %v1759
        %v1766 = vadd.f32 %v1750, %v1759
        %v1767 = vadd.f32 %v1754, %v1759
        %vm1768 = vcmp.gt.f32.partialorder %v1760, 0.0
        %vm1769 = vcmp.gt.f32.partialorder %v1761, 0.0
        %vm1770 = vcmp.gt.f32.partialorder %v1762, 0.0
        %vm1771 = vcmp.gt.f32.partialorder %v1763, 0.0
        %vm1772 = vcmp.gt.f32.partialorder %v1764, 0.0
        %vm1773 = vcmp.gt.f32.partialorder %v1765, 0.0
        %vm1774 = vcmp.gt.f32.partialorder %v1766, 0.0
        %vm1775 = vcmp.gt.f32.partialorder %v1767, 0.0
        %v1776 = vmul.f32 %v1760, 0.2
        %v1777 = vmul.f32 %v1761, 0.2
        %v1778 = vmul.f32 %v1762, 0.2
        %v1779 = vmul.f32 %v1763, 0.2
        %v1780 = vmul.f32 %v1764, 0.2
        %v1781 = vmul.f32 %v1765, 0.2
        %v1782 = vmul.f32 %v1766, 0.2
        %v1783 = vmul.f32 %v1767, 0.2
        %v1784 = vsel %vm1768, %v1760, %v1776
        %v1785 = vsel %vm1769, %v1761, %v1777
        %v1786 = vsel %vm1770, %v1762, %v1778
        %v1787 = vsel %vm1771, %v1763, %v1779
        %v1788 = vsel %vm1772, %v1764, %v1780
        %v1789 = vsel %vm1773, %v1765, %v1781
        %v1790 = vsel %vm1774, %v1766, %v1782
        %v1791 = vsel %vm1775, %v1767, %v1783
        %v1792 = vadd.f32 %v1784, %v452
        %v1793 = vadd.f32 %v1785, %v453
        %v1794 = vadd.f32 %v1786, %v454
        %v1795 = vadd.f32 %v1787, %v455
        %v1796 = vadd.f32 %v1788, %v456
        %v1797 = vadd.f32 %v1789, %v457
        %v1798 = vadd.f32 %v1790, %v458
        %v1799 = vadd.f32 %v1791, %v459
        %v1800 = vsel %vm600, %v1792, -inf
        %1801 = vmax.xlane.f32.xlu0 %v1800
        %v1802 = vpop.xlane.xlu0 %1801
        %v1803 = vsel %vm600, %v1793, -inf
        %1804 = vmax.xlane.f32.xlu0 %v1803
        %v1805 = vpop.xlane.xlu0 %1804
        %v1806 = vsel %vm600, %v1794, -inf
        %1807 = vmax.xlane.f32.xlu0 %v1806
        %v1808 = vpop.xlane.xlu0 %1807
        %v1809 = vsel %vm600, %v1795, -inf
        %1810 = vmax.xlane.f32.xlu0 %v1809
        %v1811 = vpop.xlane.xlu0 %1810
        %v1812 = vsel %vm600, %v1796, -inf
        %1813 = vmax.xlane.f32.xlu0 %v1812
        %v1814 = vpop.xlane.xlu0 %1813
        %v1815 = vsel %vm600, %v1797, -inf
        %1816 = vmax.xlane.f32.xlu0 %v1815
        %v1817 = vpop.xlane.xlu0 %1816
        %v1818 = vsel %vm600, %v1798, -inf
        %1819 = vmax.xlane.f32.xlu0 %v1818
        %v1820 = vpop.xlane.xlu0 %1819
        %v1821 = vsel %vm600, %v1799, -inf
        %1822 = vmax.xlane.f32.xlu0 %v1821
        %v1823 = vpop.xlane.xlu0 %1822
        %v1824 = vsub.f32 %v1792, %v1802
        %v1825 = vsub.f32 %v1793, %v1805
        %v1826 = vsub.f32 %v1794, %v1808
        %v1827 = vsub.f32 %v1795, %v1811
        %v1828 = vsub.f32 %v1796, %v1814
        %v1829 = vsub.f32 %v1797, %v1817
        %v1830 = vsub.f32 %v1798, %v1820
        %v1831 = vsub.f32 %v1799, %v1823
        %v1832 = vmul.f32 %v1824, 1.442695
        %v1833 = vpow.pop %v1832
        %v1834 = vmul.f32 %v1825, 1.442695
        %v1835 = vpow.pop %v1834
        %v1836 = vmul.f32 %v1826, 1.442695
        %v1837 = vpow.pop %v1836
        %v1838 = vmul.f32 %v1827, 1.442695
        %v1839 = vpow.pop %v1838
        %v1840 = vmul.f32 %v1828, 1.442695
        %v1841 = vpow.pop %v1840
        %v1842 = vmul.f32 %v1829, 1.442695
        %v1843 = vpow.pop %v1842
        %v1844 = vmul.f32 %v1830, 1.442695
        %v1845 = vpow.pop %v1844
        %v1846 = vmul.f32 %v1831, 1.442695
        %v1847 = vpow.pop %v1846
        %v1848 = vsel %vm600, %v1833, 0.0
        %1849 = vadd.xlane.f32.xlu0 %v1848
        %v1850 = vpop.xlane.xlu0 %1849
        %v1851 = vsel %vm600, %v1835, 0.0
        %1852 = vadd.xlane.f32.xlu0 %v1851
        %v1853 = vpop.xlane.xlu0 %1852
        %v1854 = vsel %vm600, %v1837, 0.0
        %1855 = vadd.xlane.f32.xlu0 %v1854
        %v1856 = vpop.xlane.xlu0 %1855
        %v1857 = vsel %vm600, %v1839, 0.0
        %1858 = vadd.xlane.f32.xlu0 %v1857
        %v1859 = vpop.xlane.xlu0 %1858
        %v1860 = vsel %vm600, %v1841, 0.0
        %1861 = vadd.xlane.f32.xlu0 %v1860
        %v1862 = vpop.xlane.xlu0 %1861
        %v1863 = vsel %vm600, %v1843, 0.0
        %1864 = vadd.xlane.f32.xlu0 %v1863
        %v1865 = vpop.xlane.xlu0 %1864
        %v1866 = vsel %vm600, %v1845, 0.0
        %1867 = vadd.xlane.f32.xlu0 %v1866
        %v1868 = vpop.xlane.xlu0 %1867
        %v1869 = vsel %vm600, %v1847, 0.0
        %1870 = vadd.xlane.f32.xlu0 %v1869
        %v1871 = vpop.xlane.xlu0 %1870
        %v1872 = vrcp.pop %v1850
        %v1873 = vrcp.pop %v1853
        %v1874 = vrcp.pop %v1856
        %v1875 = vrcp.pop %v1859
        %v1876 = vrcp.pop %v1862
        %v1877 = vrcp.pop %v1865
        %v1878 = vrcp.pop %v1868
        %v1879 = vrcp.pop %v1871
        %v1880 = vmul.f32 %v1833, %v1872
        %v1881 = vmul.f32 %v1835, %v1873
        %v1882 = vmul.f32 %v1837, %v1874
        %v1883 = vmul.f32 %v1839, %v1875
        %v1884 = vmul.f32 %v1841, %v1876
        %v1885 = vmul.f32 %v1843, %v1877
        %v1886 = vmul.f32 %v1845, %v1878
        %v1887 = vmul.f32 %v1847, %v1879
        %1896 = vrot.lane.b32.xlu0 %v295, 64
        %v1897 = vpop.permute.xlu0 %1896
        %1898 = vrot.lane.b32.xlu0 %v301, 64
        %v1899 = vpop.permute.xlu0 %1898
        %1900 = vrot.lane.b32.xlu0 %v307, 64
        %v1901 = vpop.permute.xlu0 %1900
        %1902 = vrot.lane.b32.xlu0 %v313, 64
        %v1903 = vpop.permute.xlu0 %1902
        %1904 = vrot.lane.b32.xlu0 %v319, 64
        %v1905 = vpop.permute.xlu0 %1904
        %1906 = vrot.lane.b32.xlu0 %v325, 64
        %v1907 = vpop.permute.xlu0 %1906
        %1908 = vrot.lane.b32.xlu0 %v331, 64
        %v1909 = vpop.permute.xlu0 %1908
        %1910 = vrot.lane.b32.xlu0 %v337, 64
        %v1911 = vpop.permute.xlu0 %1910
        %v1921 = vsel %vm600, %v1880, 0
        %v1924 = vsel %vm600, %v1881, 0
        %v1927 = vsel %vm600, %v1882, 0
        %v1930 = vsel %vm600, %v1883, 0
        %v1933 = vsel %vm600, %v1884, 0
        %v1936 = vsel %vm600, %v1885, 0
        %v1939 = vsel %vm600, %v1886, 0
        %v1942 = vsel %vm600, %v1887, 0
        %1944 = vmatprep.subr.mxu0 0.0
        %1945 = vmatpush1.msra.mxu0 0.0
        %1946 = vmatprep.subr.mxu0 0.0
        %1947 = vmatpush1.msra.mxu0 0.0
        %1948 = vmatprep.subr.mxu0 0.0
        %1949 = vmatpush1.msra.mxu0 0.0
        %1950 = vmatprep.subr.mxu0 0.0
        %1951 = vmatpush1.msra.mxu0 0.0
        %1952 = vmatprep.subr.mxu0 0.0
        %1953 = vmatpush1.msra.mxu0 0.0
        %1954 = vmatprep.subr.mxu0 0.0
        %1955 = vmatpush1.msra.mxu0 0.0
        %1956 = vmatprep.subr.mxu0 0.0
        %1957 = vmatpush1.msra.mxu0 0.0
        %1958 = vmatprep.subr.mxu0 0.0
        %1959 = vmatpush1.msra.mxu0 0.0
        %1960 = vmatprep.subr.mxu0 0.0
        %1961 = vmatpush1.msra.mxu0 %v1911
        %1962 = vmatprep.subr.mxu0 0.0
        %1963 = vmatpush1.msra.mxu0 %v1909
        %1964 = vmatprep.subr.mxu0 0.0
        %1965 = vmatpush1.msra.mxu0 %v1907
        %1966 = vmatprep.subr.mxu0 0.0
        %1967 = vmatpush1.msra.mxu0 %v1905
        %1968 = vmatprep.subr.mxu0 0.0
        %1969 = vmatpush1.msra.mxu0 %v1903
        %1970 = vmatprep.subr.mxu0 0.0
        %1971 = vmatpush1.msra.mxu0 %v1901
        %1972 = vmatprep.subr.mxu0 0.0
        %1973 = vmatpush1.msra.mxu0 %v1899
        %1974 = vmatprep.subr.mxu0 0.0
        %1975 = vmatpush1.msra.mxu0 %v1897
        %1976 = vmatprep.subr.mxu0 0.0
        %1977 = vmatpush2.msra.mxu0 0.0
        %1978 = vmatprep.subr.mxu0 0.0
        %1979 = vmatpush2.msra.mxu0 0.0
        %1980 = vmatprep.subr.mxu0 0.0
        %1981 = vmatpush2.msra.mxu0 0.0
        %1982 = vmatprep.subr.mxu0 0.0
        %1983 = vmatpush2.msra.mxu0 0.0
        %1984 = vmatprep.subr.mxu0 0.0
        %1985 = vmatpush2.msra.mxu0 0.0
        %1986 = vmatprep.subr.mxu0 0.0
        %1987 = vmatpush2.msra.mxu0 0.0
        %1988 = vmatprep.subr.mxu0 0.0
        %1989 = vmatpush2.msra.mxu0 0.0
        %1990 = vmatprep.subr.mxu0 0.0
        %1991 = vmatpush2.msra.mxu0 0.0
        %1992 = vmatprep.subr.mxu0 0.0
        %1993 = vmatpush2.msra.mxu0 0.0
        %1994 = vmatprep.subr.mxu0 0.0
        %1995 = vmatpush2.msra.mxu0 0.0
        %1996 = vmatprep.subr.mxu0 0.0
        %1997 = vmatpush2.msra.mxu0 0.0
        %1998 = vmatprep.subr.mxu0 0.0
        %1999 = vmatpush2.msra.mxu0 0.0
        %2000 = vmatprep.subr.mxu0 0.0
        %2001 = vmatpush2.msra.mxu0 0.0
        %2002 = vmatprep.subr.mxu0 0.0
        %2003 = vmatpush2.msra.mxu0 0.0
        %2004 = vmatprep.subr.mxu0 0.0
        %2005 = vmatpush2.msra.mxu0 0.0
        %2006 = vmatprep.subr.mxu0 0.0
        %2007 = vmatpush2.msra.mxu0 0.0
        %2008 = vmatprep.mubr.f32.mxu0 0.0
        %2009 = vmatmul.mubr.f32.gmra.mxu0 %v1921
        %v2010 = vpop.f32.mrf.mxu0
        %v2011 = vadd.f32 0.0, %v2010
        %v2012 = vpop.f32.mrf.mxu0
        %2013 = vmatprep.mubr.f32.mxu0 0.0
        %2014 = vmatmul.mubr.f32.gmra.mxu0 %v1924
        %v2015 = vpop.f32.mrf.mxu0
        %v2016 = vadd.f32 0.0, %v2015
        %v2017 = vpop.f32.mrf.mxu0
        %2018 = vmatprep.mubr.f32.mxu0 0.0
        %2019 = vmatmul.mubr.f32.gmra.mxu0 %v1927
        %v2020 = vpop.f32.mrf.mxu0
        %v2021 = vadd.f32 0.0, %v2020
        %v2022 = vpop.f32.mrf.mxu0
        %2023 = vmatprep.mubr.f32.mxu0 0.0
        %2024 = vmatmul.mubr.f32.gmra.mxu0 %v1930
        %v2025 = vpop.f32.mrf.mxu0
        %v2026 = vadd.f32 0.0, %v2025
        %v2027 = vpop.f32.mrf.mxu0
        %2028 = vmatprep.mubr.f32.mxu0 0.0
        %2029 = vmatmul.mubr.f32.gmra.mxu0 %v1933
        %v2030 = vpop.f32.mrf.mxu0
        %v2031 = vadd.f32 0.0, %v2030
        %v2032 = vpop.f32.mrf.mxu0
        %2033 = vmatprep.mubr.f32.mxu0 0.0
        %2034 = vmatmul.mubr.f32.gmra.mxu0 %v1936
        %v2035 = vpop.f32.mrf.mxu0
        %v2036 = vadd.f32 0.0, %v2035
        %v2037 = vpop.f32.mrf.mxu0
        %2038 = vmatprep.mubr.f32.mxu0 0.0
        %2039 = vmatmul.mubr.f32.gmra.mxu0 %v1939
        %v2040 = vpop.f32.mrf.mxu0
        %v2041 = vadd.f32 0.0, %v2040
        %v2042 = vpop.f32.mrf.mxu0
        %2043 = vmatprep.mubr.f32.mxu0 0.0
        %2044 = vmatmul.mubr.f32.gmra.mxu0 %v1942
        %v2045 = vpop.f32.mrf.mxu0
        %v2046 = vadd.f32 0.0, %v2045
        %v2047 = vpop.f32.mrf.mxu0
        %2048 = vdwg.mxu0
        %vm2049 = vcmp.gt.f32.partialorder %v2011, 0.0
        %vm2050 = vcmp.gt.f32.partialorder %v2016, 0.0
        %vm2051 = vcmp.gt.f32.partialorder %v2021, 0.0
        %vm2052 = vcmp.gt.f32.partialorder %v2026, 0.0
        %vm2053 = vcmp.gt.f32.partialorder %v2031, 0.0
        %vm2054 = vcmp.gt.f32.partialorder %v2036, 0.0
        %vm2055 = vcmp.gt.f32.partialorder %v2041, 0.0
        %vm2056 = vcmp.gt.f32.partialorder %v2046, 0.0
        %v2057 = vmul.f32 %v2011, 1.442695
        %v2058 = vpow.pop %v2057
        %v2059 = vmul.f32 %v2016, 1.442695
        %v2060 = vpow.pop %v2059
        %v2061 = vmul.f32 %v2021, 1.442695
        %v2062 = vpow.pop %v2061
        %v2063 = vmul.f32 %v2026, 1.442695
        %v2064 = vpow.pop %v2063
        %v2065 = vmul.f32 %v2031, 1.442695
        %v2066 = vpow.pop %v2065
        %v2067 = vmul.f32 %v2036, 1.442695
        %v2068 = vpow.pop %v2067
        %v2069 = vmul.f32 %v2041, 1.442695
        %v2070 = vpow.pop %v2069
        %v2071 = vmul.f32 %v2046, 1.442695
        %v2072 = vpow.pop %v2071
        %v2073 = vsub.f32 %v2058, 1.0
        %v2074 = vsub.f32 %v2060, 1.0
        %v2075 = vsub.f32 %v2062, 1.0
        %v2076 = vsub.f32 %v2064, 1.0
        %v2077 = vsub.f32 %v2066, 1.0
        %v2078 = vsub.f32 %v2068, 1.0
        %v2079 = vsub.f32 %v2070, 1.0
        %v2080 = vsub.f32 %v2072, 1.0
        %v2081 = vsel %vm2049, %v2011, %v2073
        %v2082 = vsel %vm2050, %v2016, %v2074
        %v2083 = vsel %vm2051, %v2021, %v2075
        %v2084 = vsel %vm2052, %v2026, %v2076
        %v2085 = vsel %vm2053, %v2031, %v2077
        %v2086 = vsel %vm2054, %v2036, %v2078
        %v2087 = vsel %vm2055, %v2041, %v2079
        %v2088 = vsel %vm2056, %v2046, %v2080
        %2097 = vrot.lane.b32.xlu0 %v1271, 64
        %v2098 = vpop.permute.xlu0 %2097
        %2099 = vrot.lane.b32.xlu0 %v1272, 64
        %v2100 = vpop.permute.xlu0 %2099
        %2101 = vrot.lane.b32.xlu0 %v1273, 64
        %v2102 = vpop.permute.xlu0 %2101
        %2103 = vrot.lane.b32.xlu0 %v1274, 64
        %v2104 = vpop.permute.xlu0 %2103
        %2105 = vrot.lane.b32.xlu0 %v1275, 64
        %v2106 = vpop.permute.xlu0 %2105
        %2107 = vrot.lane.b32.xlu0 %v1276, 64
        %v2108 = vpop.permute.xlu0 %2107
        %2109 = vrot.lane.b32.xlu0 %v1277, 64
        %v2110 = vpop.permute.xlu0 %2109
        %2111 = vrot.lane.b32.xlu0 %v1278, 64
        %v2112 = vpop.permute.xlu0 %2111
        %2129 = vrot.lane.b32.xlu0 %v2081, 64
        %v2130 = vpop.permute.xlu0 %2129
        %2131 = vrot.lane.b32.xlu0 %v2082, 64
        %v2132 = vpop.permute.xlu0 %2131
        %2133 = vrot.lane.b32.xlu0 %v2083, 64
        %v2134 = vpop.permute.xlu0 %2133
        %2135 = vrot.lane.b32.xlu0 %v2084, 64
        %v2136 = vpop.permute.xlu0 %2135
        %2137 = vrot.lane.b32.xlu0 %v2085, 64
        %v2138 = vpop.permute.xlu0 %2137
        %2139 = vrot.lane.b32.xlu0 %v2086, 64
        %v2140 = vpop.permute.xlu0 %2139
        %2141 = vrot.lane.b32.xlu0 %v2087, 64
        %v2142 = vpop.permute.xlu0 %2141
        %2143 = vrot.lane.b32.xlu0 %v2088, 64
        %v2144 = vpop.permute.xlu0 %2143
        %v2153 = vsel %vm600, %v850, %v2098
        %v2154 = vsel %vm600, %v851, %v2100
        %v2155 = vsel %vm600, %v852, %v2102
        %v2156 = vsel %vm600, %v853, %v2104
        %v2157 = vsel %vm600, %v854, %v2106
        %v2158 = vsel %vm600, %v855, %v2108
        %v2159 = vsel %vm600, %v856, %v2110
        %v2160 = vsel %vm600, %v857, %v2112
        %v2161 = vsel %vm600, %v1660, %v2130
        %v2162 = vsel %vm600, %v1661, %v2132
        %v2163 = vsel %vm600, %v1662, %v2134
        %v2164 = vsel %vm600, %v1663, %v2136
        %v2165 = vsel %vm600, %v1664, %v2138
        %v2166 = vsel %vm600, %v1665, %v2140
        %v2167 = vsel %vm600, %v1666, %v2142
        %v2168 = vsel %vm600, %v1667, %v2144
        %2169 = vst [vmem:[%s159] sm:$0xff] %v2153
        %2170 = vst [vmem:[%s159 + $0x8] sm:$0xff] %v2161
        %2171 = vst [vmem:[%s159 + $0x10] sm:$0xff] %v2154
        %2172 = vst [vmem:[%s159 + $0x18] sm:$0xff] %v2162
        %2173 = vst [vmem:[%s159 + $0x20] sm:$0xff] %v2155
        %2174 = vst [vmem:[%s159 + $0x28] sm:$0xff] %v2163
        %2175 = vst [vmem:[%s159 + $0x30] sm:$0xff] %v2156
        %2176 = vst [vmem:[%s159 + $0x38] sm:$0xff] %v2164
        %2177 = vst [vmem:[%s159 + $0x40] sm:$0xff] %v2157
        %2178 = vst [vmem:[%s159 + $0x48] sm:$0xff] %v2165
        %2179 = vst [vmem:[%s159 + $0x50] sm:$0xff] %v2158
        %2180 = vst [vmem:[%s159 + $0x58] sm:$0xff] %v2166
        %2181 = vst [vmem:[%s159 + $0x60] sm:$0xff] %v2159
        %2182 = vst [vmem:[%s159 + $0x68] sm:$0xff] %v2167
        %2183 = vst [vmem:[%s159 + $0x70] sm:$0xff] %v2160
        %2184 = vst [vmem:[%s159 + $0x78] sm:$0xff] %v2168
        %s2185 = sand.u32 %s90, 1
        %s2186 = sand.u32 %s90, 1
        %s2187 = smul.addr %s2186, 128
        %s2188 = scalar_lea.vmem [#allocation2], %s2187
        // Predicated region
        $region33: #{holomol_forward.7} parent=31 // pred_check
          %p2189 = pneg %p100
        $region34: #{holomol_forward.7} parent=31 // pred_check_branch
          %2191 = sbr.rel (%p2189) target = $region36
        $region35: #{holomol_forward.7} parent=31 // pred_region
          %s2192 = smul.u32 2, %s14
          %s2193 = smul.addr %s2192, 8
          %s2194 = scalar_lea.vmem %s3, %s2193
          // Predicated region
          $region37: #{holomol_forward.7} parent=35 // pred_check
            _
          $region38: #{holomol_forward.7} parent=35 // pred_check_branch
            %2196 = sbr.rel (0) target = $region40
          $region39: #{holomol_forward.7} parent=35 // pred_region
            // Predicated region
            $region41: #{holomol_forward.7} parent=39 // pred_check
              _
            $region42: #{holomol_forward.7} parent=39 // pred_check_branch
              %2198 = sbr.rel (0) target = $region44
            $region43: #{holomol_forward.7} parent=39 // pred_region
              loop: start=0, step=1, limit=1
              $region45: #{holomol_forward.7} parent=43 // loop_pre_header
                _
              $region46: #{holomol_forward.7} parent=43 // loop_header
                %s2200 = sphi 0, %s2204
                %p2201 = scmp.ge.s32.totalorder %s2200, 1
                %s2205 = sphi %s2188, %s2188
                %s2206 = sphi %s2194, %s2194
              $region47: #{holomol_forward.7} parent=43 // loop_header_branch
                %2203 = sbr.rel (%p2201) target = $region51
              $region48: #{holomol_forward.7} parent=43 // loop_body
                %v2207 = vld [vmem:[%s2205] sm:$0xff]
                %2208 = vst [vmem:[%s2206] sm:$0xff] %v2207
                %v2209 = vld [vmem:[%s2205 + $0x8] sm:$0xff]
                %2210 = vst [vmem:[%s2206 + $0x8] sm:$0xff] %v2209
                %v2211 = vld [vmem:[%s2205 + $0x10] sm:$0xff]
                %2212 = vst [vmem:[%s2206 + $0x20] sm:$0xff] %v2211
                %v2213 = vld [vmem:[%s2205 + $0x18] sm:$0xff]
                %2214 = vst [vmem:[%s2206 + $0x28] sm:$0xff] %v2213
                %v2215 = vld [vmem:[%s2205 + $0x20] sm:$0xff]
                %2216 = vst [vmem:[%s2206 + $0x40] sm:$0xff] %v2215
                %v2217 = vld [vmem:[%s2205 + $0x28] sm:$0xff]
                %2218 = vst [vmem:[%s2206 + $0x48] sm:$0xff] %v2217
                %v2219 = vld [vmem:[%s2205 + $0x30] sm:$0xff]
                %2220 = vst [vmem:[%s2206 + $0x60] sm:$0xff] %v2219
                %v2221 = vld [vmem:[%s2205 + $0x38] sm:$0xff]
                %2222 = vst [vmem:[%s2206 + $0x68] sm:$0xff] %v2221
                %v2223 = vld [vmem:[%s2205 + $0x40] sm:$0xff]
                %2224 = vst [vmem:[%s2206 + $0x80] sm:$0xff] %v2223
                %v2225 = vld [vmem:[%s2205 + $0x48] sm:$0xff]
                %2226 = vst [vmem:[%s2206 + $0x88] sm:$0xff] %v2225
                %v2227 = vld [vmem:[%s2205 + $0x50] sm:$0xff]
                %2228 = vst [vmem:[%s2206 + $0xa0] sm:$0xff] %v2227
                %v2229 = vld [vmem:[%s2205 + $0x58] sm:$0xff]
                %2230 = vst [vmem:[%s2206 + $0xa8] sm:$0xff] %v2229
                %v2231 = vld [vmem:[%s2205 + $0x60] sm:$0xff]
                %2232 = vst [vmem:[%s2206 + $0xc0] sm:$0xff] %v2231
                %v2233 = vld [vmem:[%s2205 + $0x68] sm:$0xff]
                %2234 = vst [vmem:[%s2206 + $0xc8] sm:$0xff] %v2233
                %v2235 = vld [vmem:[%s2205 + $0x70] sm:$0xff]
                %2236 = vst [vmem:[%s2206 + $0xe0] sm:$0xff] %v2235
                %v2237 = vld [vmem:[%s2205 + $0x78] sm:$0xff]
                %2238 = vst [vmem:[%s2206 + $0xe8] sm:$0xff] %v2237
              $region49: #{holomol_forward.7} parent=43 // loop_footer
                %s2204 = sadd.s32 1, %s2200
              $region50: #{holomol_forward.7} parent=43 // loop_footer_branch
                %2199 = sbr.rel target = $region46
              $region51: #{holomol_forward.7} parent=43 // loop_exit
                _
            $region44: #{holomol_forward.7} parent=39 // pred_fallthru
              _
            // Predicated region
            $region52: #{holomol_forward.7} parent=39 // pred_check
              _
            $region53: #{holomol_forward.7} parent=39 // pred_check_branch
              %2240 = sbr.rel target = $region55
            $region54: #{holomol_forward.7} parent=39 // pred_region
              _
            $region55: #{holomol_forward.7} parent=39 // pred_fallthru
              _
          $region40: #{holomol_forward.7} parent=35 // pred_fallthru
            _
          %2241 = vnop
        $region36: #{holomol_forward.7} parent=31 // pred_fallthru
          _
      $region32: #{holomol_forward.7} parent=5 // pred_fallthru
        _
      %p2242 = scmp.le.s32.totalorder 2, %s9
      // Predicated region
      $region56: #{holomol_forward.7} parent=5 // pred_check
        %p2243 = pneg %p2242
      $region57: #{holomol_forward.7} parent=5 // pred_check_branch
        %2245 = sbr.rel (%p2243) target = $region59
      $region58: #{holomol_forward.7} parent=5 // pred_region
        %s2246 = ssub.s32 %s9, 2
        // Predicated region
        $region60: #{holomol_forward.7} parent=58 // pred_check
          %p2247 = pneg %p106
        $region61: #{holomol_forward.7} parent=58 // pred_check_branch
          %2249 = sbr.rel (%p2247) target = $region63
        $region62: #{holomol_forward.7} parent=58 // pred_region
          %s2250 = sand.u32 %s91, 1
          %s2251 = sand.u32 %s91, 1
          %s2252 = smul.addr %s2251, 128
          %s2253 = scalar_lea.vmem [#allocation2], %s2252
        $region63: #{holomol_forward.7} parent=58 // pred_fallthru
          _
      $region59: #{holomol_forward.7} parent=5 // pred_fallthru
        _
    $region6: #{holomol_forward.7} parent=1 // loop_footer
      %s13 = sadd.s32 1, %s9
    $region7: #{holomol_forward.7} parent=1 // loop_footer_branch
      %8 = sbr.rel target = $region3
    $region8: #{holomol_forward.7} parent=1 // loop_exit
      _

// kernel: holomol_forward.5
$region0: #{holomol_forward.5}
  #allocation0 [shape = 'u32[]', space=smem, size = 0x4, offset = 0x4, fixed_abs, tag = 'smem constant byte address 0x4 - core index']
  #allocation1 [shape = 'u32[144,128]{1,0:T(1,128)}', space=vmem, size = 0x12000, scoped, tag = 'internal scratch']
  %s0 = inlined_call_operand.vmem [shape: f32[64,32], index: 0, kind: input, shape index: {}]
  %s1 = inlined_call_operand.vmem [shape: f32[2,32,264], index: 1, kind: input, shape index: {}]
  %s2 = inlined_call_operand.vmem [shape: f32[64,64], index: 2, kind: input, shape index: {}]
  %s3 = inlined_call_operand.vmem [shape: f32[64,512], index: 3, kind: output, shape index: {}]
  %s4 = sld [smem:[#allocation0]]
  $region64: #{holomol_forward.5} parent=0
    _
  %s6 = ssub.s32 1, %s4
  %s7 = scalar_select 0, %s6, %s4
  $region1: #{holomol_forward.5} parent=0
    #allocation2 [shape = 'u8[131072]{0}', space=vmem, size = 0x20000, scoped, tag = 'output window, operand 0']
    loop: start=0, step=1, limit=4
    $region2: #{holomol_forward.5} parent=1 // loop_pre_header
      _
    $region3: #{holomol_forward.5} parent=1 // loop_header
      %s9 = sphi 0, %s13
      %p10 = scmp.ge.s32.totalorder %s9, 4
      %s17 = sphi 0, %s17
      %s19 = sphi 0, %s17
      %s20 = sphi 0, %s19
      %s34 = sphi 0, %s20
      %s40 = sphi 0, %s42
      %s43 = sphi 0, %s40
      %s44 = sphi 0, %s43
      %s60 = sphi 0, %s44
      %s64 = sphi 0, %s64
      %s66 = sphi 0, %s64
      %s67 = sphi 0, %s66
      %s81 = sphi 0, %s67
      %s87 = sphi 0, %s89
      %s90 = sphi 0, %s87
      %s91 = sphi 0, %s90
      %s107 = sphi 0, %s91
    $region4: #{holomol_forward.5} parent=1 // loop_header_branch
      %12 = sbr.rel (%p10) target = $region8
    $region5: #{holomol_forward.5} parent=1 // loop_body
      %s14 = ssub.s32 %s9, 1
      %s15 = ssub.s32 %s9, 2
      %s16 = sadd.s32 %s9, 1
      %s18 = sadd.s32 %s17, 1
      %p21 = scmp.eq.s32.totalorder %s9, 1
      %p22 = scmp.ne.s32.totalorder %s17, %s19
      %p23 = scmp.eq.s32.totalorder %s9, 0
      %p24 = por %p22, %p23
      %p25 = scmp.ne.s32.totalorder %s17, %s19
      %p26 = scmp.eq.s32.totalorder %s14, 1
      %p27 = por %p25, %p26
      %p28 = scmp.ne.s32.totalorder %s19, %s20
      %p29 = scmp.eq.s32.totalorder %s14, 0
      %p30 = por %p28, %p29
      %p31 = scmp.ne.s32.totalorder %s19, %s20
      %p32 = scmp.eq.s32.totalorder %s15, 1
      %p33 = por %p31, %p32
      %p35 = scmp.ne.s32.totalorder %s20, %s34
      %p36 = scmp.eq.s32.totalorder %s15, 0
      %p37 = por %p35, %p36
      %s38 = ssub.s32 %s9, %s16
      %p39 = scmp.eq.s32.totalorder %s38, 0
      %s41 = sadd.s32 %s40, 1
      %s42 = scalar_select %p39, %s40, %s41
      %p45 = pneg %p39
      %p46 = scmp.eq.s32.totalorder %s9, 1
      %p47 = por %p45, %p46
      %p48 = scmp.ne.s32.totalorder %s40, %s43
      %p49 = scmp.eq.s32.totalorder %s9, 0
      %p50 = por %p48, %p49
      %p51 = scmp.ne.s32.totalorder %s40, %s43
      %p52 = scmp.eq.s32.totalorder %s14, 1
      %p53 = por %p51, %p52
      %p54 = scmp.ne.s32.totalorder %s43, %s44
      %p55 = scmp.eq.s32.totalorder %s14, 0
      %p56 = por %p54, %p55
      %p57 = scmp.ne.s32.totalorder %s43, %s44
      %p58 = scmp.eq.s32.totalorder %s15, 1
      %p59 = por %p57, %p58
      %p61 = scmp.ne.s32.totalorder %s44, %s60
      %p62 = scmp.eq.s32.totalorder %s15, 0
      %p63 = por %p61, %p62
      %s65 = sadd.s32 %s64, 1
      %p68 = scmp.eq.s32.totalorder %s9, 1
      %p69 = scmp.ne.s32.totalorder %s64, %s66
      %p70 = scmp.eq.s32.totalorder %s9, 0
      %p71 = por %p69, %p70
      %p72 = scmp.ne.s32.totalorder %s64, %s66
      %p73 = scmp.eq.s32.totalorder %s14, 1
      %p74 = por %p72, %p73
      %p75 = scmp.ne.s32.totalorder %s66, %s67
      %p76 = scmp.eq.s32.totalorder %s14, 0
      %p77 = por %p75, %p76
      %p78 = scmp.ne.s32.totalorder %s66, %s67
      %p79 = scmp.eq.s32.totalorder %s15, 1
      %p80 = por %p78, %p79
      %p82 = scmp.ne.s32.totalorder %s67, %s81
      %p83 = scmp.eq.s32.totalorder %s15, 0
      %p84 = por %p82, %p83
      %s85 = ssub.s32 %s9, %s16
      %p86 = scmp.eq.s32.totalorder %s85, 0
      %s88 = sadd.s32 %s87, 1
      %s89 = scalar_select %p86, %s87, %s88
      %p92 = pneg %p86
      %p93 = scmp.eq.s32.totalorder %s9, 1
      %p94 = por %p92, %p93
      %p95 = scmp.ne.s32.totalorder %s87, %s90
      %p96 = scmp.eq.s32.totalorder %s9, 0
      %p97 = por %p95, %p96
      %p98 = scmp.ne.s32.totalorder %s87, %s90
      %p99 = scmp.eq.s32.totalorder %s14, 1
      %p100 = por %p98, %p99
      %p101 = scmp.ne.s32.totalorder %s90, %s91
      %p102 = scmp.eq.s32.totalorder %s14, 0
      %p103 = por %p101, %p102
      %p104 = scmp.ne.s32.totalorder %s90, %s91
      %p105 = scmp.eq.s32.totalorder %s15, 1
      %p106 = por %p104, %p105
      %p108 = scmp.ne.s32.totalorder %s91, %s107
      %p109 = scmp.eq.s32.totalorder %s15, 0
      %p110 = por %p108, %p109
      %p111 = scmp.le.s32.totalorder 1, %s9
      %p112 = scmp.lt.s32.totalorder %s9, 3
      %p113 = pnand %p111, %p112
      %p114 = pneg %p113
      // Predicated region
      $region9: #{holomol_forward.5} parent=5 // pred_check
        _
      $region10: #{holomol_forward.5} parent=5 // pred_check_branch
        %116 = sbr.rel (%p113) target = $region12
      $region11: #{holomol_forward.5} parent=5 // pred_region
        %s117 = ssub.s32 %s9, 1
        // Predicated region
        $region13: #{holomol_forward.5} parent=11 // pred_check
          %p118 = pneg %p30
        $region14: #{holomol_forward.5} parent=11 // pred_check_branch
          %120 = sbr.rel (%p118) target = $region16
        $region15: #{holomol_forward.5} parent=11 // pred_region
          _
        $region16: #{holomol_forward.5} parent=11 // pred_fallthru
          _
        // Predicated region
        $region17: #{holomol_forward.5} parent=11 // pred_check
          %p121 = pneg %p77
        $region18: #{holomol_forward.5} parent=11 // pred_check_branch
          %123 = sbr.rel (%p121) target = $region20
        $region19: #{holomol_forward.5} parent=11 // pred_region
          _
        $region20: #{holomol_forward.5} parent=11 // pred_fallthru
          _
      $region12: #{holomol_forward.5} parent=5 // pred_fallthru
        _
      %p124 = scmp.lt.s32.totalorder %s9, 2
      // Predicated region
      $region21: #{holomol_forward.5} parent=5 // pred_check
        %p125 = pneg %p124
      $region22: #{holomol_forward.5} parent=5 // pred_check_branch
        %127 = sbr.rel (%p125) target = $region24
      $region23: #{holomol_forward.5} parent=5 // pred_region
        // Predicated region
        $region25: #{holomol_forward.5} parent=23 // pred_check
          %p128 = pneg %p50
        $region26: #{holomol_forward.5} parent=23 // pred_check_branch
          %130 = sbr.rel (%p128) target = $region28
        $region27: #{holomol_forward.5} parent=23 // pred_region
          %p131 = scmp.lt.s32.totalorder %s9, 1
          %s132 = scalar_select %p131, %s9, 1
          %s133 = smul.addr %s132, 12
          %s134 = smul.addr %s133, 8
          %s135 = scalar_lea.vmem %s1, %s134
        $region28: #{holomol_forward.5} parent=23 // pred_fallthru
          _
      $region24: #{holomol_forward.5} parent=5 // pred_fallthru
        _
      %p136 = scmp.le.s32.totalorder 1, %s9
      %p137 = scmp.lt.s32.totalorder %s9, 3
      %p138 = pnand %p136, %p137
      %p139 = pneg %p138
      // Predicated region
      $region29: #{holomol_forward.5} parent=5 // pred_check
        _
      $region30: #{holomol_forward.5} parent=5 // pred_check_branch
        %141 = sbr.rel (%p138) target = $region32
      $region31: #{holomol_forward.5} parent=5 // pred_region
        %s142 = ssub.s32 %s9, 1
        %p143 = pneg %p30
        %p144 = pneg %p27
        %p145 = scmp.lt.s32.totalorder %s14, 1
        %s146 = scalar_select %p145, %s14, 1
        %s147 = smul.addr %s146, 12
        %s148 = smul.addr %s147, 8
        %s149 = scalar_lea.vmem %s1, %s148
        %p150 = pneg %p56
        %p151 = pneg %p53
        %p152 = pneg %p77
        %p153 = pneg %p74
        %p154 = pneg %p103
        %p155 = pneg %p100
        %s156 = sand.u32 %s90, 1
        %s157 = sand.u32 %s90, 1
        %s158 = smul.addr %s157, 128
        %s159 = scalar_lea.vmem [#allocation2], %s158
        %p160 = scmp.lt.s32.totalorder %s14, 1
        %s161 = scalar_select %p160, %s14, 1
        %s162 = smul.addr %s161, 12
        %s163 = smul.addr %s162, 8
        %s164 = scalar_lea.vmem %s1, %s163
        %s165 = smul.u32 2, %s14
        %v166 = vld [vmem:[%s0] sm:$0xff]
        %v167 = vld [vmem:[%s0 + $0x8] sm:$0xff]
        %v168 = vld [vmem:[%s0 + $0x10] sm:$0xff]
        %v169 = vld [vmem:[%s0 + $0x18] sm:$0xff]
        %v170 = vld [vmem:[%s0 + $0x20] sm:$0xff]
        %v171 = vld [vmem:[%s0 + $0x28] sm:$0xff]
        %v172 = vld [vmem:[%s0 + $0x30] sm:$0xff]
        %v173 = vld [vmem:[%s0 + $0x38] sm:$0xff]
        %v174 = vld [vmem:[%s164] sm:$0xff]
        %v175 = vld [vmem:[%s164 + $0x8] sm:$0xff]
        %v176 = vld [vmem:[%s164 + $0x10] sm:$0xff]
        %v177 = vld [vmem:[%s164 + $0x18] sm:$0xff]
        %v178 = vld [vmem:[%s164 + $0x20] sm:$0xff]
        %v179 = vld [vmem:[%s164 + $0x28] sm:$0xff]
        %v180 = vld [vmem:[%s164 + $0x30] sm:$0xff]
        %v181 = vld [vmem:[%s164 + $0x38] sm:$0xff]
        %v182 = vld [vmem:[%s164 + $0x40] sm:$0xff]
        %v183 = vld [vmem:[%s164 + $0x48] sm:$0xff]
        %v184 = vld [vmem:[%s164 + $0x50] sm:$0xff]
        %v185 = vld [vmem:[%s164 + $0x58] sm:$0xff]
        %v186 = vld [vmem:[%s2] sm:$0xff]
        %v187 = vld [vmem:[%s2 + $0x8] sm:$0xff]
        %v188 = vld [vmem:[%s2 + $0x10] sm:$0xff]
        %v189 = vld [vmem:[%s2 + $0x18] sm:$0xff]
        %v190 = vld [vmem:[%s2 + $0x20] sm:$0xff]
        %v191 = vld [vmem:[%s2 + $0x28] sm:$0xff]
        %v192 = vld [vmem:[%s2 + $0x30] sm:$0xff]
        %v193 = vld [vmem:[%s2 + $0x38] sm:$0xff]
        %vm194 = vcmask 261120
        %v196 = vsel %vm194, %v166, 0
        %v199 = vsel %vm194, %v167, 0
        %v202 = vsel %vm194, %v168, 0
        %v205 = vsel %vm194, %v169, 0
        %v208 = vsel %vm194, %v170, 0
        %v211 = vsel %vm194, %v171, 0
        %v214 = vsel %vm194, %v172, 0
        %v217 = vsel %vm194, %v173, 0
        %219 = vmatprep.subr.mxu0 0.0
        %220 = vmatpush1.msra.mxu0 0.0
        %221 = vmatprep.subr.mxu0 0.0
        %222 = vmatpush1.msra.mxu0 0.0
        %223 = vmatprep.subr.mxu0 0.0
        %224 = vmatpush1.msra.mxu0 0.0
        %225 = vmatprep.subr.mxu0 0.0
        %226 = vmatpush1.msra.mxu0 0.0
        %227 = vmatprep.subr.mxu0 0.0
        %228 = vmatpush1.msra.mxu0 0.0
        %229 = vmatprep.subr.mxu0 0.0
        %230 = vmatpush1.msra.mxu0 0.0
        %231 = vmatprep.subr.mxu0 0.0
        %232 = vmatpush1.msra.mxu0 0.0
        %233 = vmatprep.subr.mxu0 0.0
        %234 = vmatpush1.msra.mxu0 0.0
        %235 = vmatprep.subr.mxu0 0.0
        %236 = vmatpush1.msra.mxu0 0.0
        %237 = vmatprep.subr.mxu0 0.0
        %238 = vmatpush1.msra.mxu0 0.0
        %239 = vmatprep.subr.mxu0 0.0
        %240 = vmatpush1.msra.mxu0 0.0
        %241 = vmatprep.subr.mxu0 0.0
        %242 = vmatpush1.msra.mxu0 0.0
        %243 = vmatprep.subr.mxu0 %v184
        %244 = vmatpush1.msra.mxu0 %v183
        %245 = vmatprep.subr.mxu0 %v181
        %246 = vmatpush1.msra.mxu0 %v180
        %247 = vmatprep.subr.mxu0 %v178
        %248 = vmatpush1.msra.mxu0 %v177
        %249 = vmatprep.subr.mxu0 %v175
        %250 = vmatpush1.msra.mxu0 %v174
        %251 = vmatprep.subr.mxu0 0.0
        %252 = vmatpush2.msra.mxu0 0.0
        %253 = vmatprep.subr.mxu0 0.0
        %254 = vmatpush2.msra.mxu0 0.0
        %255 = vmatprep.subr.mxu0 0.0
        %256 = vmatpush2.msra.mxu0 0.0
        %257 = vmatprep.subr.mxu0 0.0
        %258 = vmatpush2.msra.mxu0 0.0
        %259 = vmatprep.subr.mxu0 0.0
        %260 = vmatpush2.msra.mxu0 0.0
        %261 = vmatprep.subr.mxu0 0.0
        %262 = vmatpush2.msra.mxu0 0.0
        %263 = vmatprep.subr.mxu0 0.0
        %264 = vmatpush2.msra.mxu0 0.0
        %265 = vmatprep.subr.mxu0 0.0
        %266 = vmatpush2.msra.mxu0 0.0
        %267 = vmatprep.subr.mxu0 0.0
        %268 = vmatpush2.msra.mxu0 0.0
        %269 = vmatprep.subr.mxu0 0.0
        %270 = vmatpush2.msra.mxu0 0.0
        %271 = vmatprep.subr.mxu0 0.0
        %272 = vmatpush2.msra.mxu0 0.0
        %273 = vmatprep.subr.mxu0 0.0
        %274 = vmatpush2.msra.mxu0 0.0
        %275 = vmatprep.subr.mxu0 0.0
        %276 = vmatpush2.msra.mxu0 0.0
        %277 = vmatprep.subr.mxu0 0.0
        %278 = vmatpush2.msra.mxu0 0.0
        %279 = vmatprep.subr.mxu0 0.0
        %280 = vmatpush2.msra.mxu0 0.0
        %281 = vmatprep.subr.mxu0 0.0
        %282 = vmatpush2.msra.mxu0 0.0
        %283 = vmatprep.mubr.f32.mxu0 0.0
        %284 = vmatmul.mubr.f32.gmra.mxu0 %v196
        %v285 = vpop.f32.mrf.mxu0
        %v286 = vadd.f32 0.0, %v285
        %v287 = vpop.f32.mrf.mxu0
        %v288 = vadd.f32 0.0, %v287
        %289 = vmatprep.mubr.f32.mxu0 0.0
        %290 = vmatmul.mubr.f32.gmra.mxu0 %v199
        %v291 = vpop.f32.mrf.mxu0
        %v292 = vadd.f32 0.0, %v291
        %v293 = vpop.f32.mrf.mxu0
        %v294 = vadd.f32 0.0, %v293
        %295 = vmatprep.mubr.f32.mxu0 0.0
        %296 = vmatmul.mubr.f32.gmra.mxu0 %v202
        %v297 = vpop.f32.mrf.mxu0
        %v298 = vadd.f32 0.0, %v297
        %v299 = vpop.f32.mrf.mxu0
        %v300 = vadd.f32 0.0, %v299
        %301 = vmatprep.mubr.f32.mxu0 0.0
        %302 = vmatmul.mubr.f32.gmra.mxu0 %v205
        %v303 = vpop.f32.mrf.mxu0
        %v304 = vadd.f32 0.0, %v303
        %v305 = vpop.f32.mrf.mxu0
        %v306 = vadd.f32 0.0, %v305
        %307 = vmatprep.mubr.f32.mxu0 0.0
        %308 = vmatmul.mubr.f32.gmra.mxu0 %v208
        %v309 = vpop.f32.mrf.mxu0
        %v310 = vadd.f32 0.0, %v309
        %v311 = vpop.f32.mrf.mxu0
        %v312 = vadd.f32 0.0, %v311
        %313 = vmatprep.mubr.f32.mxu0 0.0
        %314 = vmatmul.mubr.f32.gmra.mxu0 %v211
        %v315 = vpop.f32.mrf.mxu0
        %v316 = vadd.f32 0.0, %v315
        %v317 = vpop.f32.mrf.mxu0
        %v318 = vadd.f32 0.0, %v317
        %319 = vmatprep.mubr.f32.mxu0 0.0
        %320 = vmatmul.mubr.f32.gmra.mxu0 %v214
        %v321 = vpop.f32.mrf.mxu0
        %v322 = vadd.f32 0.0, %v321
        %v323 = vpop.f32.mrf.mxu0
        %v324 = vadd.f32 0.0, %v323
        %325 = vmatprep.mubr.f32.mxu0 0.0
        %326 = vmatmul.mubr.f32.gmra.mxu0 %v217
        %v327 = vpop.f32.mrf.mxu0
        %v328 = vadd.f32 0.0, %v327
        %v329 = vpop.f32.mrf.mxu0
        %v330 = vadd.f32 0.0, %v329
        %331 = vdwg.mxu0
        %332 = vmatprep.subr.mxu0 0.0
        %333 = vmatpush1.msra.mxu0 0.0
        %334 = vmatprep.subr.mxu0 0.0
        %335 = vmatpush1.msra.mxu0 0.0
        %336 = vmatprep.subr.mxu0 0.0
        %337 = vmatpush1.msra.mxu0 0.0
        %338 = vmatprep.subr.mxu0 0.0
        %339 = vmatpush1.msra.mxu0 0.0
        %340 = vmatprep.subr.mxu0 0.0
        %341 = vmatpush1.msra.mxu0 0.0
        %342 = vmatprep.subr.mxu0 0.0
        %343 = vmatpush1.msra.mxu0 0.0
        %344 = vmatprep.subr.mxu0 0.0
        %345 = vmatpush1.msra.mxu0 0.0
        %346 = vmatprep.subr.mxu0 0.0
        %347 = vmatpush1.msra.mxu0 0.0
        %348 = vmatprep.subr.mxu0 0.0
        %349 = vmatpush1.msra.mxu0 0.0
        %350 = vmatprep.subr.mxu0 0.0
        %351 = vmatpush1.msra.mxu0 0.0
        %352 = vmatprep.subr.mxu0 0.0
        %353 = vmatpush1.msra.mxu0 0.0
        %354 = vmatprep.subr.mxu0 0.0
        %355 = vmatpush1.msra.mxu0 0.0
        %356 = vmatprep.subr.mxu0 0.0
        %357 = vmatpush1.msra.mxu0 %v185
        %358 = vmatprep.subr.mxu0 0.0
        %359 = vmatpush1.msra.mxu0 %v182
        %360 = vmatprep.subr.mxu0 0.0
        %361 = vmatpush1.msra.mxu0 %v179
        %362 = vmatprep.subr.mxu0 0.0
        %363 = vmatpush1.msra.mxu0 %v176
        %364 = vmatprep.subr.mxu0 0.0
        %365 = vmatpush2.msra.mxu0 0.0
        %366 = vmatprep.subr.mxu0 0.0
        %367 = vmatpush2.msra.mxu0 0.0
        %368 = vmatprep.subr.mxu0 0.0
        %369 = vmatpush2.msra.mxu0 0.0
        %370 = vmatprep.subr.mxu0 0.0
        %371 = vmatpush2.msra.mxu0 0.0
        %372 = vmatprep.subr.mxu0 0.0
        %373 = vmatpush2.msra.mxu0 0.0
        %374 = vmatprep.subr.mxu0 0.0
        %375 = vmatpush2.msra.mxu0 0.0
        %376 = vmatprep.subr.mxu0 0.0
        %377 = vmatpush2.msra.mxu0 0.0
        %378 = vmatprep.subr.mxu0 0.0
        %379 = vmatpush2.msra.mxu0 0.0
        %380 = vmatprep.subr.mxu0 0.0
        %381 = vmatpush2.msra.mxu0 0.0
        %382 = vmatprep.subr.mxu0 0.0
        %383 = vmatpush2.msra.mxu0 0.0
        %384 = vmatprep.subr.mxu0 0.0
        %385 = vmatpush2.msra.mxu0 0.0
        %386 = vmatprep.subr.mxu0 0.0
        %387 = vmatpush2.msra.mxu0 0.0
        %388 = vmatprep.subr.mxu0 0.0
        %389 = vmatpush2.msra.mxu0 0.0
        %390 = vmatprep.subr.mxu0 0.0
        %391 = vmatpush2.msra.mxu0 0.0
        %392 = vmatprep.subr.mxu0 0.0
        %393 = vmatpush2.msra.mxu0 0.0
        %394 = vmatprep.subr.mxu0 0.0
        %395 = vmatpush2.msra.mxu0 0.0
        %396 = vmatprep.mubr.f32.mxu0 0.0
        %397 = vmatmul.mubr.f32.gmra.mxu0 %v196
        %v398 = vpop.f32.mrf.mxu0
        %v399 = vadd.f32 0.0, %v398
        %v400 = vpop.f32.mrf.mxu0
        %401 = vmatprep.mubr.f32.mxu0 0.0
        %402 = vmatmul.mubr.f32.gmra.mxu0 %v199
        %v403 = vpop.f32.mrf.mxu0
        %v404 = vadd.f32 0.0, %v403
        %v405 = vpop.f32.mrf.mxu0
        %406 = vmatprep.mubr.f32.mxu0 0.0
        %407 = vmatmul.mubr.f32.gmra.mxu0 %v202
        %v408 = vpop.f32.mrf.mxu0
        %v409 = vadd.f32 0.0, %v408
        %v410 = vpop.f32.mrf.mxu0
        %411 = vmatprep.mubr.f32.mxu0 0.0
        %412 = vmatmul.mubr.f32.gmra.mxu0 %v205
        %v413 = vpop.f32.mrf.mxu0
        %v414 = vadd.f32 0.0, %v413
        %v415 = vpop.f32.mrf.mxu0
        %416 = vmatprep.mubr.f32.mxu0 0.0
        %417 = vmatmul.mubr.f32.gmra.mxu0 %v208
        %v418 = vpop.f32.mrf.mxu0
        %v419 = vadd.f32 0.0, %v418
        %v420 = vpop.f32.mrf.mxu0
        %421 = vmatprep.mubr.f32.mxu0 0.0
        %422 = vmatmul.mubr.f32.gmra.mxu0 %v211
        %v423 = vpop.f32.mrf.mxu0
        %v424 = vadd.f32 0.0, %v423
        %v425 = vpop.f32.mrf.mxu0
        %426 = vmatprep.mubr.f32.mxu0 0.0
        %427 = vmatmul.mubr.f32.gmra.mxu0 %v214
        %v428 = vpop.f32.mrf.mxu0
        %v429 = vadd.f32 0.0, %v428
        %v430 = vpop.f32.mrf.mxu0
        %431 = vmatprep.mubr.f32.mxu0 0.0
        %432 = vmatmul.mubr.f32.gmra.mxu0 %v217
        %v433 = vpop.f32.mrf.mxu0
        %v434 = vadd.f32 0.0, %v433
        %v435 = vpop.f32.mrf.mxu0
        %436 = vdwg.mxu0
        %v437 = vsub.f32 %v186, 1.0
        %v438 = vsub.f32 %v187, 1.0
        %v439 = vsub.f32 %v188, 1.0
        %v440 = vsub.f32 %v189, 1.0
        %v441 = vsub.f32 %v190, 1.0
        %v442 = vsub.f32 %v191, 1.0
        %v443 = vsub.f32 %v192, 1.0
        %v444 = vsub.f32 %v193, 1.0
        %v445 = vmul.f32 %v437, 9e+15
        %v446 = vmul.f32 %v438, 9e+15
        %v447 = vmul.f32 %v439, 9e+15
        %v448 = vmul.f32 %v440, 9e+15
        %v449 = vmul.f32 %v441, 9e+15
        %v450 = vmul.f32 %v442, 9e+15
        %v451 = vmul.f32 %v443, 9e+15
        %v452 = vmul.f32 %v444, 9e+15
        %461 = vrot.lane.b32.xlu0 %v399, 124
        %v462 = vpop.permute.xlu0 %461
        %463 = vrot.lane.b32.xlu0 %v404, 124
        %v464 = vpop.permute.xlu0 %463
        %465 = vrot.lane.b32.xlu0 %v409, 124
        %v466 = vpop.permute.xlu0 %465
        %467 = vrot.lane.b32.xlu0 %v414, 124
        %v468 = vpop.permute.xlu0 %467
        %469 = vrot.lane.b32.xlu0 %v419, 124
        %v470 = vpop.permute.xlu0 %469
        %471 = vrot.lane.b32.xlu0 %v424, 124
        %v472 = vpop.permute.xlu0 %471
        %473 = vrot.lane.b32.xlu0 %v429, 124
        %v474 = vpop.permute.xlu0 %473
        %475 = vrot.lane.b32.xlu0 %v434, 124
        %v476 = vpop.permute.xlu0 %475
        %485 = vxpose.xlu0.b32.start [1/16] %v462, 128
        %486 = vxpose.xlu0.b32.cont [2/16] %v464, 128
        %487 = vxpose.xlu0.b32.cont [3/16] %v466, 128
        %488 = vxpose.xlu0.b32.cont [4/16] %v468, 128
        %489 = vxpose.xlu0.b32.cont [5/16] %v470, 128
        %490 = vxpose.xlu0.b32.cont [6/16] %v472, 128
        %491 = vxpose.xlu0.b32.cont [7/16] %v474, 128
        %492 = vxpose.xlu0.b32.cont [8/16] %v476, 128
        %493 = vxpose.xlu0.b32.cont [9/16] 0.0, 128
        %494 = vxpose.xlu0.b32.cont [10/16] 0.0, 128
        %495 = vxpose.xlu0.b32.cont [11/16] 0.0, 128
        %496 = vxpose.xlu0.b32.cont [12/16] 0.0, 128
        %497 = vxpose.xlu0.b32.cont [13/16] 0.0, 128
        %498 = vxpose.xlu0.b32.cont [14/16] 0.0, 128
        %499 = vxpose.xlu0.b32.cont [15/16] 0.0, 128
        %500 = vxpose.xlu0.b32.end [16/16] 0.0, 128
        %v501 = vpop.trf.xlu0
        %v502 = vpop.trf.xlu0
        %v503 = vpop.trf.xlu0
        %v504 = vpop.trf.xlu0
        %v505 = vpop.trf.xlu0
        %v506 = vpop.trf.xlu0
        %v507 = vpop.trf.xlu0
        %v508 = vpop.trf.xlu0
        %v509 = vpop.trf.xlu0
        %v510 = vpop.trf.xlu0
        %v511 = vpop.trf.xlu0
        %v512 = vpop.trf.xlu0
        %v513 = vpop.trf.xlu0
        %v514 = vpop.trf.xlu0
        %v515 = vpop.trf.xlu0
        %v516 = vpop.trf.xlu0
        %517 = vset.pattern.permute.xlu0 0
        %518 = vperm.xlu0 %517, %v399
        %v519 = vpop.permute.xlu0 %518
        %521 = vset.pattern.permute.xlu0 0
        %522 = vperm.xlu0 %521, %v404
        %v523 = vpop.permute.xlu0 %522
        %525 = vset.pattern.permute.xlu0 0
        %526 = vperm.xlu0 %525, %v409
        %v527 = vpop.permute.xlu0 %526
        %529 = vset.pattern.permute.xlu0 0
        %530 = vperm.xlu0 %529, %v414
        %v531 = vpop.permute.xlu0 %530
        %533 = vset.pattern.permute.xlu0 0
        %534 = vperm.xlu0 %533, %v419
        %v535 = vpop.permute.xlu0 %534
        %537 = vset.pattern.permute.xlu0 0
        %538 = vperm.xlu0 %537, %v424
        %v539 = vpop.permute.xlu0 %538
        %541 = vset.pattern.permute.xlu0 0
        %542 = vperm.xlu0 %541, %v429
        %v543 = vpop.permute.xlu0 %542
        %545 = vset.pattern.permute.xlu0 0
        %546 = vperm.xlu0 %545, %v434
        %v547 = vpop.permute.xlu0 %546
        %v549 = vlaneseq
        %v550 = vshrl.u32 %v549, 7
        %v551 = vsub.s32 0, %v550
        %v552 = vrot.slane %v501, %v551
        %v553 = vadd.f32 %v519, %v552
        %v554 = vadd.f32 %v523, %v552
        %v555 = vadd.f32 %v527, %v552
        %v556 = vadd.f32 %v531, %v552
        %v557 = vadd.f32 %v535, %v552
        %v558 = vadd.f32 %v539, %v552
        %v559 = vadd.f32 %v543, %v552
        %v560 = vadd.f32 %v547, %v552
        %vm561 = vcmp.gt.f32.partialorder %v553, 0.0
        %vm562 = vcmp.gt.f32.partialorder %v554, 0.0
        %vm563 = vcmp.gt.f32.partialorder %v555, 0.0
        %vm564 = vcmp.gt.f32.partialorder %v556, 0.0
        %vm565 = vcmp.gt.f32.partialorder %v557, 0.0
        %vm566 = vcmp.gt.f32.partialorder %v558, 0.0
        %vm567 = vcmp.gt.f32.partialorder %v559, 0.0
        %vm568 = vcmp.gt.f32.partialorder %v560, 0.0
        %v569 = vmul.f32 %v553, 0.2
        %v570 = vmul.f32 %v554, 0.2
        %v571 = vmul.f32 %v555, 0.2
        %v572 = vmul.f32 %v556, 0.2
        %v573 = vmul.f32 %v557, 0.2
        %v574 = vmul.f32 %v558, 0.2
        %v575 = vmul.f32 %v559, 0.2
        %v576 = vmul.f32 %v560, 0.2
        %v577 = vsel %vm561, %v553, %v569
        %v578 = vsel %vm562, %v554, %v570
        %v579 = vsel %vm563, %v555, %v571
        %v580 = vsel %vm564, %v556, %v572
        %v581 = vsel %vm565, %v557, %v573
        %v582 = vsel %vm566, %v558, %v574
        %v583 = vsel %vm567, %v559, %v575
        %v584 = vsel %vm568, %v560, %v576
        %v585 = vadd.f32 %v577, %v445
        %v586 = vadd.f32 %v578, %v446
        %v587 = vadd.f32 %v579, %v447
        %v588 = vadd.f32 %v580, %v448
        %v589 = vadd.f32 %v581, %v449
        %v590 = vadd.f32 %v582, %v450
        %v591 = vadd.f32 %v583, %v451
        %v592 = vadd.f32 %v584, %v452
        %vm593 = vcmask 523264
        %v594 = vsel %vm593, %v585, -inf
        %595 = vmax.xlane.f32.xlu0 %v594
        %v596 = vpop.xlane.xlu0 %595
        %v597 = vsel %vm593, %v586, -inf
        %598 = vmax.xlane.f32.xlu0 %v597
        %v599 = vpop.xlane.xlu0 %598
        %v600 = vsel %vm593, %v587, -inf
        %601 = vmax.xlane.f32.xlu0 %v600
        %v602 = vpop.xlane.xlu0 %601
        %v603 = vsel %vm593, %v588, -inf
        %604 = vmax.xlane.f32.xlu0 %v603
        %v605 = vpop.xlane.xlu0 %604
        %v606 = vsel %vm593, %v589, -inf
        %607 = vmax.xlane.f32.xlu0 %v606
        %v608 = vpop.xlane.xlu0 %607
        %v609 = vsel %vm593, %v590, -inf
        %610 = vmax.xlane.f32.xlu0 %v609
        %v611 = vpop.xlane.xlu0 %610
        %v612 = vsel %vm593, %v591, -inf
        %613 = vmax.xlane.f32.xlu0 %v612
        %v614 = vpop.xlane.xlu0 %613
        %v615 = vsel %vm593, %v592, -inf
        %616 = vmax.xlane.f32.xlu0 %v615
        %v617 = vpop.xlane.xlu0 %616
        %v618 = vsub.f32 %v585, %v596
        %v619 = vsub.f32 %v586, %v599
        %v620 = vsub.f32 %v587, %v602
        %v621 = vsub.f32 %v588, %v605
        %v622 = vsub.f32 %v589, %v608
        %v623 = vsub.f32 %v590, %v611
        %v624 = vsub.f32 %v591, %v614
        %v625 = vsub.f32 %v592, %v617
        %v626 = vmul.f32 %v618, 1.442695
        %v627 = vpow.pop %v626
        %v628 = vmul.f32 %v619, 1.442695
        %v629 = vpow.pop %v628
        %v630 = vmul.f32 %v620, 1.442695
        %v631 = vpow.pop %v630
        %v632 = vmul.f32 %v621, 1.442695
        %v633 = vpow.pop %v632
        %v634 = vmul.f32 %v622, 1.442695
        %v635 = vpow.pop %v634
        %v636 = vmul.f32 %v623, 1.442695
        %v637 = vpow.pop %v636
        %v638 = vmul.f32 %v624, 1.442695
        %v639 = vpow.pop %v638
        %v640 = vmul.f32 %v625, 1.442695
        %v641 = vpow.pop %v640
        %v642 = vsel %vm593, %v627, 0.0
        %643 = vadd.xlane.f32.xlu0 %v642
        %v644 = vpop.xlane.xlu0 %643
        %v645 = vsel %vm593, %v629, 0.0
        %646 = vadd.xlane.f32.xlu0 %v645
        %v647 = vpop.xlane.xlu0 %646
        %v648 = vsel %vm593, %v631, 0.0
        %649 = vadd.xlane.f32.xlu0 %v648
        %v650 = vpop.xlane.xlu0 %649
        %v651 = vsel %vm593, %v633, 0.0
        %652 = vadd.xlane.f32.xlu0 %v651
        %v653 = vpop.xlane.xlu0 %652
        %v654 = vsel %vm593, %v635, 0.0
        %655 = vadd.xlane.f32.xlu0 %v654
        %v656 = vpop.xlane.xlu0 %655
        %v657 = vsel %vm593, %v637, 0.0
        %658 = vadd.xlane.f32.xlu0 %v657
        %v659 = vpop.xlane.xlu0 %658
        %v660 = vsel %vm593, %v639, 0.0
        %661 = vadd.xlane.f32.xlu0 %v660
        %v662 = vpop.xlane.xlu0 %661
        %v663 = vsel %vm593, %v641, 0.0
        %664 = vadd.xlane.f32.xlu0 %v663
        %v665 = vpop.xlane.xlu0 %664
        %v666 = vrcp.pop %v644
        %v667 = vrcp.pop %v647
        %v668 = vrcp.pop %v650
        %v669 = vrcp.pop %v653
        %v670 = vrcp.pop %v656
        %v671 = vrcp.pop %v659
        %v672 = vrcp.pop %v662
        %v673 = vrcp.pop %v665
        %v674 = vmul.f32 %v627, %v666
        %v675 = vmul.f32 %v629, %v667
        %v676 = vmul.f32 %v631, %v668
        %v677 = vmul.f32 %v633, %v669
        %v678 = vmul.f32 %v635, %v670
        %v679 = vmul.f32 %v637, %v671
        %v680 = vmul.f32 %v639, %v672
        %v681 = vmul.f32 %v641, %v673
        %v683 = vsel %vm593, %v674, 0
        %v686 = vsel %vm593, %v675, 0
        %v689 = vsel %vm593, %v676, 0
        %v692 = vsel %vm593, %v677, 0
        %v695 = vsel %vm593, %v678, 0
        %v698 = vsel %vm593, %v679, 0
        %v701 = vsel %vm593, %v680, 0
        %v704 = vsel %vm593, %v681, 0
        %706 = vmatprep.subr.mxu0 0.0
        %707 = vmatpush1.msra.mxu0 0.0
        %708 = vmatprep.subr.mxu0 0.0
        %709 = vmatpush1.msra.mxu0 0.0
        %710 = vmatprep.subr.mxu0 0.0
        %711 = vmatpush1.msra.mxu0 0.0
        %712 = vmatprep.subr.mxu0 0.0
        %713 = vmatpush1.msra.mxu0 0.0
        %714 = vmatprep.subr.mxu0 0.0
        %715 = vmatpush1.msra.mxu0 0.0
        %716 = vmatprep.subr.mxu0 0.0
        %717 = vmatpush1.msra.mxu0 0.0
        %718 = vmatprep.subr.mxu0 0.0
        %719 = vmatpush1.msra.mxu0 0.0
        %720 = vmatprep.subr.mxu0 0.0
        %721 = vmatpush1.msra.mxu0 0.0
        %722 = vmatprep.subr.mxu0 0.0
        %723 = vmatpush1.msra.mxu0 %v328
        %724 = vmatprep.subr.mxu0 0.0
        %725 = vmatpush1.msra.mxu0 %v322
        %726 = vmatprep.subr.mxu0 0.0
        %727 = vmatpush1.msra.mxu0 %v316
        %728 = vmatprep.subr.mxu0 0.0
        %729 = vmatpush1.msra.mxu0 %v310
        %730 = vmatprep.subr.mxu0 0.0
        %731 = vmatpush1.msra.mxu0 %v304
        %732 = vmatprep.subr.mxu0 0.0
        %733 = vmatpush1.msra.mxu0 %v298
        %734 = vmatprep.subr.mxu0 0.0
        %735 = vmatpush1.msra.mxu0 %v292
        %736 = vmatprep.subr.mxu0 0.0
        %737 = vmatpush1.msra.mxu0 %v286
        %738 = vmatprep.subr.mxu0 0.0
        %739 = vmatpush2.msra.mxu0 0.0
        %740 = vmatprep.subr.mxu0 0.0
        %741 = vmatpush2.msra.mxu0 0.0
        %742 = vmatprep.subr.mxu0 0.0
        %743 = vmatpush2.msra.mxu0 0.0
        %744 = vmatprep.subr.mxu0 0.0
        %745 = vmatpush2.msra.mxu0 0.0
        %746 = vmatprep.subr.mxu0 0.0
        %747 = vmatpush2.msra.mxu0 0.0
        %748 = vmatprep.subr.mxu0 0.0
        %749 = vmatpush2.msra.mxu0 0.0
        %750 = vmatprep.subr.mxu0 0.0
        %751 = vmatpush2.msra.mxu0 0.0
        %752 = vmatprep.subr.mxu0 0.0
        %753 = vmatpush2.msra.mxu0 0.0
        %754 = vmatprep.subr.mxu0 0.0
        %755 = vmatpush2.msra.mxu0 0.0
        %756 = vmatprep.subr.mxu0 0.0
        %757 = vmatpush2.msra.mxu0 0.0
        %758 = vmatprep.subr.mxu0 0.0
        %759 = vmatpush2.msra.mxu0 0.0
        %760 = vmatprep.subr.mxu0 0.0
        %761 = vmatpush2.msra.mxu0 0.0
        %762 = vmatprep.subr.mxu0 0.0
        %763 = vmatpush2.msra.mxu0 0.0
        %764 = vmatprep.subr.mxu0 0.0
        %765 = vmatpush2.msra.mxu0 0.0
        %766 = vmatprep.subr.mxu0 0.0
        %767 = vmatpush2.msra.mxu0 0.0
        %768 = vmatprep.subr.mxu0 0.0
        %769 = vmatpush2.msra.mxu0 0.0
        %770 = vmatprep.mubr.f32.mxu0 0.0
        %771 = vmatmul.mubr.f32.gmra.mxu0 %v683
        %v772 = vpop.f32.mrf.mxu0
        %v773 = vadd.f32 0.0, %v772
        %v774 = vpop.f32.mrf.mxu0
        %775 = vmatprep.mubr.f32.mxu0 0.0
        %776 = vmatmul.mubr.f32.gmra.mxu0 %v686
        %v777 = vpop.f32.mrf.mxu0
        %v778 = vadd.f32 0.0, %v777
        %v779 = vpop.f32.mrf.mxu0
        %780 = vmatprep.mubr.f32.mxu0 0.0
        %781 = vmatmul.mubr.f32.gmra.mxu0 %v689
        %v782 = vpop.f32.mrf.mxu0
        %v783 = vadd.f32 0.0, %v782
        %v784 = vpop.f32.mrf.mxu0
        %785 = vmatprep.mubr.f32.mxu0 0.0
        %786 = vmatmul.mubr.f32.gmra.mxu0 %v692
        %v787 = vpop.f32.mrf.mxu0
        %v788 = vadd.f32 0.0, %v787
        %v789 = vpop.f32.mrf.mxu0
        %790 = vmatprep.mubr.f32.mxu0 0.0
        %791 = vmatmul.mubr.f32.gmra.mxu0 %v695
        %v792 = vpop.f32.mrf.mxu0
        %v793 = vadd.f32 0.0, %v792
        %v794 = vpop.f32.mrf.mxu0
        %795 = vmatprep.mubr.f32.mxu0 0.0
        %796 = vmatmul.mubr.f32.gmra.mxu0 %v698
        %v797 = vpop.f32.mrf.mxu0
        %v798 = vadd.f32 0.0, %v797
        %v799 = vpop.f32.mrf.mxu0
        %800 = vmatprep.mubr.f32.mxu0 0.0
        %801 = vmatmul.mubr.f32.gmra.mxu0 %v701
        %v802 = vpop.f32.mrf.mxu0
        %v803 = vadd.f32 0.0, %v802
        %v804 = vpop.f32.mrf.mxu0
        %805 = vmatprep.mubr.f32.mxu0 0.0
        %806 = vmatmul.mubr.f32.gmra.mxu0 %v704
        %v807 = vpop.f32.mrf.mxu0
        %v808 = vadd.f32 0.0, %v807
        %v809 = vpop.f32.mrf.mxu0
        %810 = vdwg.mxu0
        %vm811 = vcmp.gt.f32.partialorder %v773, 0.0
        %vm812 = vcmp.gt.f32.partialorder %v778, 0.0
        %vm813 = vcmp.gt.f32.partialorder %v783, 0.0
        %vm814 = vcmp.gt.f32.partialorder %v788, 0.0
        %vm815 = vcmp.gt.f32.partialorder %v793, 0.0
        %vm816 = vcmp.gt.f32.partialorder %v798, 0.0
        %vm817 = vcmp.gt.f32.partialorder %v803, 0.0
        %vm818 = vcmp.gt.f32.partialorder %v808, 0.0
        %v819 = vmul.f32 %v773, 1.442695
        %v820 = vpow.pop %v819
        %v821 = vmul.f32 %v778, 1.442695
        %v822 = vpow.pop %v821
        %v823 = vmul.f32 %v783, 1.442695
        %v824 = vpow.pop %v823
        %v825 = vmul.f32 %v788, 1.442695
        %v826 = vpow.pop %v825
        %v827 = vmul.f32 %v793, 1.442695
        %v828 = vpow.pop %v827
        %v829 = vmul.f32 %v798, 1.442695
        %v830 = vpow.pop %v829
        %v831 = vmul.f32 %v803, 1.442695
        %v832 = vpow.pop %v831
        %v833 = vmul.f32 %v808, 1.442695
        %v834 = vpow.pop %v833
        %v835 = vsub.f32 %v820, 1.0
        %v836 = vsub.f32 %v822, 1.0
        %v837 = vsub.f32 %v824, 1.0
        %v838 = vsub.f32 %v826, 1.0
        %v839 = vsub.f32 %v828, 1.0
        %v840 = vsub.f32 %v830, 1.0
        %v841 = vsub.f32 %v832, 1.0
        %v842 = vsub.f32 %v834, 1.0
        %v843 = vsel %vm811, %v773, %v835
        %v844 = vsel %vm812, %v778, %v836
        %v845 = vsel %vm813, %v783, %v837
        %v846 = vsel %vm814, %v788, %v838
        %v847 = vsel %vm815, %v793, %v839
        %v848 = vsel %vm816, %v798, %v840
        %v849 = vsel %vm817, %v803, %v841
        %v850 = vsel %vm818, %v808, %v842
        %851 = vrot.lane.b32.xlu0 %v399, 123
        %v852 = vpop.permute.xlu0 %851
        %853 = vrot.lane.b32.xlu0 %v404, 123
        %v854 = vpop.permute.xlu0 %853
        %855 = vrot.lane.b32.xlu0 %v409, 123
        %v856 = vpop.permute.xlu0 %855
        %857 = vrot.lane.b32.xlu0 %v414, 123
        %v858 = vpop.permute.xlu0 %857
        %859 = vrot.lane.b32.xlu0 %v419, 123
        %v860 = vpop.permute.xlu0 %859
        %861 = vrot.lane.b32.xlu0 %v424, 123
        %v862 = vpop.permute.xlu0 %861
        %863 = vrot.lane.b32.xlu0 %v429, 123
        %v864 = vpop.permute.xlu0 %863
        %865 = vrot.lane.b32.xlu0 %v434, 123
        %v866 = vpop.permute.xlu0 %865
        %875 = vxpose.xlu0.b32.start [1/16] %v852, 128
        %876 = vxpose.xlu0.b32.cont [2/16] %v854, 128
        %877 = vxpose.xlu0.b32.cont [3/16] %v856, 128
        %878 = vxpose.xlu0.b32.cont [4/16] %v858, 128
        %879 = vxpose.xlu0.b32.cont [5/16] %v860, 128
        %880 = vxpose.xlu0.b32.cont [6/16] %v862, 128
        %881 = vxpose.xlu0.b32.cont [7/16] %v864, 128
        %882 = vxpose.xlu0.b32.cont [8/16] %v866, 128
        %883 = vxpose.xlu0.b32.cont [9/16] 0.0, 128
        %884 = vxpose.xlu0.b32.cont [10/16] 0.0, 128
        %885 = vxpose.xlu0.b32.cont [11/16] 0.0, 128
        %886 = vxpose.xlu0.b32.cont [12/16] 0.0, 128
        %887 = vxpose.xlu0.b32.cont [13/16] 0.0, 128
        %888 = vxpose.xlu0.b32.cont [14/16] 0.0, 128
        %889 = vxpose.xlu0.b32.cont [15/16] 0.0, 128
        %890 = vxpose.xlu0.b32.end [16/16] 0.0, 128
        %v891 = vpop.trf.xlu0
        %v892 = vpop.trf.xlu0
        %v893 = vpop.trf.xlu0
        %v894 = vpop.trf.xlu0
        %v895 = vpop.trf.xlu0
        %v896 = vpop.trf.xlu0
        %v897 = vpop.trf.xlu0
        %v898 = vpop.trf.xlu0
        %v899 = vpop.trf.xlu0
        %v900 = vpop.trf.xlu0
        %v901 = vpop.trf.xlu0
        %v902 = vpop.trf.xlu0
        %v903 = vpop.trf.xlu0
        %v904 = vpop.trf.xlu0
        %v905 = vpop.trf.xlu0
        %v906 = vpop.trf.xlu0
        %907 = vset.pattern.permute.xlu0 1
        %908 = vperm.xlu0 %907, %v399
        %v909 = vpop.permute.xlu0 %908
        %911 = vset.pattern.permute.xlu0 1
        %912 = vperm.xlu0 %911, %v404
        %v913 = vpop.permute.xlu0 %912
        %915 = vset.pattern.permute.xlu0 1
        %916 = vperm.xlu0 %915, %v409
        %v917 = vpop.permute.xlu0 %916
        %919 = vset.pattern.permute.xlu0 1
        %920 = vperm.xlu0 %919, %v414
        %v921 = vpop.permute.xlu0 %920
        %923 = vset.pattern.permute.xlu0 1
        %924 = vperm.xlu0 %923, %v419
        %v925 = vpop.permute.xlu0 %924
        %927 = vset.pattern.permute.xlu0 1
        %928 = vperm.xlu0 %927, %v424
        %v929 = vpop.permute.xlu0 %928
        %931 = vset.pattern.permute.xlu0 1
        %932 = vperm.xlu0 %931, %v429
        %v933 = vpop.permute.xlu0 %932
        %935 = vset.pattern.permute.xlu0 1
        %936 = vperm.xlu0 %935, %v434
        %v937 = vpop.permute.xlu0 %936
        %v939 = vlaneseq
        %v940 = vshrl.u32 %v939, 7
        %v941 = vsub.s32 0, %v940
        %v942 = vrot.slane %v891, %v941
        %v943 = vadd.f32 %v909, %v942
        %v944 = vadd.f32 %v913, %v942
        %v945 = vadd.f32 %v917, %v942
        %v946 = vadd.f32 %v921, %v942
        %v947 = vadd.f32 %v925, %v942
        %v948 = vadd.f32 %v929, %v942
        %v949 = vadd.f32 %v933, %v942
        %v950 = vadd.f32 %v937, %v942
        %vm951 = vcmp.gt.f32.partialorder %v943, 0.0
        %vm952 = vcmp.gt.f32.partialorder %v944, 0.0
        %vm953 = vcmp.gt.f32.partialorder %v945, 0.0
        %vm954 = vcmp.gt.f32.partialorder %v946, 0.0
        %vm955 = vcmp.gt.f32.partialorder %v947, 0.0
        %vm956 = vcmp.gt.f32.partialorder %v948, 0.0
        %vm957 = vcmp.gt.f32.partialorder %v949, 0.0
        %vm958 = vcmp.gt.f32.partialorder %v950, 0.0
        %v959 = vmul.f32 %v943, 0.2
        %v960 = vmul.f32 %v944, 0.2
        %v961 = vmul.f32 %v945, 0.2
        %v962 = vmul.f32 %v946, 0.2
        %v963 = vmul.f32 %v947, 0.2
        %v964 = vmul.f32 %v948, 0.2
        %v965 = vmul.f32 %v949, 0.2
        %v966 = vmul.f32 %v950, 0.2
        %v967 = vsel %vm951, %v943, %v959
        %v968 = vsel %vm952, %v944, %v960
        %v969 = vsel %vm953, %v945, %v961
        %v970 = vsel %vm954, %v946, %v962
        %v971 = vsel %vm955, %v947, %v963
        %v972 = vsel %vm956, %v948, %v964
        %v973 = vsel %vm957, %v949, %v965
        %v974 = vsel %vm958, %v950, %v966
        %v975 = vadd.f32 %v967, %v445
        %v976 = vadd.f32 %v968, %v446
        %v977 = vadd.f32 %v969, %v447
        %v978 = vadd.f32 %v970, %v448
        %v979 = vadd.f32 %v971, %v449
        %v980 = vadd.f32 %v972, %v450
        %v981 = vadd.f32 %v973, %v451
        %v982 = vadd.f32 %v974, %v452
        %v983 = vsel %vm593, %v975, -inf
        %984 = vmax.xlane.f32.xlu0 %v983
        %v985 = vpop.xlane.xlu0 %984
        %v986 = vsel %vm593, %v976, -inf
        %987 = vmax.xlane.f32.xlu0 %v986
        %v988 = vpop.xlane.xlu0 %987
        %v989 = vsel %vm593, %v977, -inf
        %990 = vmax.xlane.f32.xlu0 %v989
        %v991 = vpop.xlane.xlu0 %990
        %v992 = vsel %vm593, %v978, -inf
        %993 = vmax.xlane.f32.xlu0 %v992
        %v994 = vpop.xlane.xlu0 %993
        %v995 = vsel %vm593, %v979, -inf
        %996 = vmax.xlane.f32.xlu0 %v995
        %v997 = vpop.xlane.xlu0 %996
        %v998 = vsel %vm593, %v980, -inf
        %999 = vmax.xlane.f32.xlu0 %v998
        %v1000 = vpop.xlane.xlu0 %999
        %v1001 = vsel %vm593, %v981, -inf
        %1002 = vmax.xlane.f32.xlu0 %v1001
        %v1003 = vpop.xlane.xlu0 %1002
        %v1004 = vsel %vm593, %v982, -inf
        %1005 = vmax.xlane.f32.xlu0 %v1004
        %v1006 = vpop.xlane.xlu0 %1005
        %v1007 = vsub.f32 %v975, %v985
        %v1008 = vsub.f32 %v976, %v988
        %v1009 = vsub.f32 %v977, %v991
        %v1010 = vsub.f32 %v978, %v994
        %v1011 = vsub.f32 %v979, %v997
        %v1012 = vsub.f32 %v980, %v1000
        %v1013 = vsub.f32 %v981, %v1003
        %v1014 = vsub.f32 %v982, %v1006
        %v1015 = vmul.f32 %v1007, 1.442695
        %v1016 = vpow.pop %v1015
        %v1017 = vmul.f32 %v1008, 1.442695
        %v1018 = vpow.pop %v1017
        %v1019 = vmul.f32 %v1009, 1.442695
        %v1020 = vpow.pop %v1019
        %v1021 = vmul.f32 %v1010, 1.442695
        %v1022 = vpow.pop %v1021
        %v1023 = vmul.f32 %v1011, 1.442695
        %v1024 = vpow.pop %v1023
        %v1025 = vmul.f32 %v1012, 1.442695
        %v1026 = vpow.pop %v1025
        %v1027 = vmul.f32 %v1013, 1.442695
        %v1028 = vpow.pop %v1027
        %v1029 = vmul.f32 %v1014, 1.442695
        %v1030 = vpow.pop %v1029
        %v1031 = vsel %vm593, %v1016, 0.0
        %1032 = vadd.xlane.f32.xlu0 %v1031
        %v1033 = vpop.xlane.xlu0 %1032
        %v1034 = vsel %vm593, %v1018, 0.0
        %1035 = vadd.xlane.f32.xlu0 %v1034
        %v1036 = vpop.xlane.xlu0 %1035
        %v1037 = vsel %vm593, %v1020, 0.0
        %1038 = vadd.xlane.f32.xlu0 %v1037
        %v1039 = vpop.xlane.xlu0 %1038
        %v1040 = vsel %vm593, %v1022, 0.0
        %1041 = vadd.xlane.f32.xlu0 %v1040
        %v1042 = vpop.xlane.xlu0 %1041
        %v1043 = vsel %vm593, %v1024, 0.0
        %1044 = vadd.xlane.f32.xlu0 %v1043
        %v1045 = vpop.xlane.xlu0 %1044
        %v1046 = vsel %vm593, %v1026, 0.0
        %1047 = vadd.xlane.f32.xlu0 %v1046
        %v1048 = vpop.xlane.xlu0 %1047
        %v1049 = vsel %vm593, %v1028, 0.0
        %1050 = vadd.xlane.f32.xlu0 %v1049
        %v1051 = vpop.xlane.xlu0 %1050
        %v1052 = vsel %vm593, %v1030, 0.0
        %1053 = vadd.xlane.f32.xlu0 %v1052
        %v1054 = vpop.xlane.xlu0 %1053
        %v1055 = vrcp.pop %v1033
        %v1056 = vrcp.pop %v1036
        %v1057 = vrcp.pop %v1039
        %v1058 = vrcp.pop %v1042
        %v1059 = vrcp.pop %v1045
        %v1060 = vrcp.pop %v1048
        %v1061 = vrcp.pop %v1051
        %v1062 = vrcp.pop %v1054
        %v1063 = vmul.f32 %v1016, %v1055
        %v1064 = vmul.f32 %v1018, %v1056
        %v1065 = vmul.f32 %v1020, %v1057
        %v1066 = vmul.f32 %v1022, %v1058
        %v1067 = vmul.f32 %v1024, %v1059
        %v1068 = vmul.f32 %v1026, %v1060
        %v1069 = vmul.f32 %v1028, %v1061
        %v1070 = vmul.f32 %v1030, %v1062
        %1079 = vrot.lane.b32.xlu0 %v286, 64
        %v1080 = vpop.permute.xlu0 %1079
        %1081 = vrot.lane.b32.xlu0 %v292, 64
        %v1082 = vpop.permute.xlu0 %1081
        %1083 = vrot.lane.b32.xlu0 %v298, 64
        %v1084 = vpop.permute.xlu0 %1083
        %1085 = vrot.lane.b32.xlu0 %v304, 64
        %v1086 = vpop.permute.xlu0 %1085
        %1087 = vrot.lane.b32.xlu0 %v310, 64
        %v1088 = vpop.permute.xlu0 %1087
        %1089 = vrot.lane.b32.xlu0 %v316, 64
        %v1090 = vpop.permute.xlu0 %1089
        %1091 = vrot.lane.b32.xlu0 %v322, 64
        %v1092 = vpop.permute.xlu0 %1091
        %1093 = vrot.lane.b32.xlu0 %v328, 64
        %v1094 = vpop.permute.xlu0 %1093
        %v1104 = vsel %vm593, %v1063, 0
        %v1107 = vsel %vm593, %v1064, 0
        %v1110 = vsel %vm593, %v1065, 0
        %v1113 = vsel %vm593, %v1066, 0
        %v1116 = vsel %vm593, %v1067, 0
        %v1119 = vsel %vm593, %v1068, 0
        %v1122 = vsel %vm593, %v1069, 0
        %v1125 = vsel %vm593, %v1070, 0
        %1127 = vmatprep.subr.mxu0 0.0
        %1128 = vmatpush1.msra.mxu0 0.0
        %1129 = vmatprep.subr.mxu0 0.0
        %1130 = vmatpush1.msra.mxu0 0.0
        %1131 = vmatprep.subr.mxu0 0.0
        %1132 = vmatpush1.msra.mxu0 0.0
        %1133 = vmatprep.subr.mxu0 0.0
        %1134 = vmatpush1.msra.mxu0 0.0
        %1135 = vmatprep.subr.mxu0 0.0
        %1136 = vmatpush1.msra.mxu0 0.0
        %1137 = vmatprep.subr.mxu0 0.0
        %1138 = vmatpush1.msra.mxu0 0.0
        %1139 = vmatprep.subr.mxu0 0.0
        %1140 = vmatpush1.msra.mxu0 0.0
        %1141 = vmatprep.subr.mxu0 0.0
        %1142 = vmatpush1.msra.mxu0 0.0
        %1143 = vmatprep.subr.mxu0 0.0
        %1144 = vmatpush1.msra.mxu0 %v1094
        %1145 = vmatprep.subr.mxu0 0.0
        %1146 = vmatpush1.msra.mxu0 %v1092
        %1147 = vmatprep.subr.mxu0 0.0
        %1148 = vmatpush1.msra.mxu0 %v1090
        %1149 = vmatprep.subr.mxu0 0.0
        %1150 = vmatpush1.msra.mxu0 %v1088
        %1151 = vmatprep.subr.mxu0 0.0
        %1152 = vmatpush1.msra.mxu0 %v1086
        %1153 = vmatprep.subr.mxu0 0.0
        %1154 = vmatpush1.msra.mxu0 %v1084
        %1155 = vmatprep.subr.mxu0 0.0
        %1156 = vmatpush1.msra.mxu0 %v1082
        %1157 = vmatprep.subr.mxu0 0.0
        %1158 = vmatpush1.msra.mxu0 %v1080
        %1159 = vmatprep.subr.mxu0 0.0
        %1160 = vmatpush2.msra.mxu0 0.0
        %1161 = vmatprep.subr.mxu0 0.0
        %1162 = vmatpush2.msra.mxu0 0.0
        %1163 = vmatprep.subr.mxu0 0.0
        %1164 = vmatpush2.msra.mxu0 0.0
        %1165 = vmatprep.subr.mxu0 0.0
        %1166 = vmatpush2.msra.mxu0 0.0
        %1167 = vmatprep.subr.mxu0 0.0
        %1168 = vmatpush2.msra.mxu0 0.0
        %1169 = vmatprep.subr.mxu0 0.0
        %1170 = vmatpush2.msra.mxu0 0.0
        %1171 = vmatprep.subr.mxu0 0.0
        %1172 = vmatpush2.msra.mxu0 0.0
        %1173 = vmatprep.subr.mxu0 0.0
        %1174 = vmatpush2.msra.mxu0 0.0
        %1175 = vmatprep.subr.mxu0 0.0
        %1176 = vmatpush2.msra.mxu0 0.0
        %1177 = vmatprep.subr.mxu0 0.0
        %1178 = vmatpush2.msra.mxu0 0.0
        %1179 = vmatprep.subr.mxu0 0.0
        %1180 = vmatpush2.msra.mxu0 0.0
        %1181 = vmatprep.subr.mxu0 0.0
        %1182 = vmatpush2.msra.mxu0 0.0
        %1183 = vmatprep.subr.mxu0 0.0
        %1184 = vmatpush2.msra.mxu0 0.0
        %1185 = vmatprep.subr.mxu0 0.0
        %1186 = vmatpush2.msra.mxu0 0.0
        %1187 = vmatprep.subr.mxu0 0.0
        %1188 = vmatpush2.msra.mxu0 0.0
        %1189 = vmatprep.subr.mxu0 0.0
        %1190 = vmatpush2.msra.mxu0 0.0
        %1191 = vmatprep.mubr.f32.mxu0 0.0
        %1192 = vmatmul.mubr.f32.gmra.mxu0 %v1104
        %v1193 = vpop.f32.mrf.mxu0
        %v1194 = vadd.f32 0.0, %v1193
        %v1195 = vpop.f32.mrf.mxu0
        %1196 = vmatprep.mubr.f32.mxu0 0.0
        %1197 = vmatmul.mubr.f32.gmra.mxu0 %v1107
        %v1198 = vpop.f32.mrf.mxu0
        %v1199 = vadd.f32 0.0, %v1198
        %v1200 = vpop.f32.mrf.mxu0
        %1201 = vmatprep.mubr.f32.mxu0 0.0
        %1202 = vmatmul.mubr.f32.gmra.mxu0 %v1110
        %v1203 = vpop.f32.mrf.mxu0
        %v1204 = vadd.f32 0.0, %v1203
        %v1205 = vpop.f32.mrf.mxu0
        %1206 = vmatprep.mubr.f32.mxu0 0.0
        %1207 = vmatmul.mubr.f32.gmra.mxu0 %v1113
        %v1208 = vpop.f32.mrf.mxu0
        %v1209 = vadd.f32 0.0, %v1208
        %v1210 = vpop.f32.mrf.mxu0
        %1211 = vmatprep.mubr.f32.mxu0 0.0
        %1212 = vmatmul.mubr.f32.gmra.mxu0 %v1116
        %v1213 = vpop.f32.mrf.mxu0
        %v1214 = vadd.f32 0.0, %v1213
        %v1215 = vpop.f32.mrf.mxu0
        %1216 = vmatprep.mubr.f32.mxu0 0.0
        %1217 = vmatmul.mubr.f32.gmra.mxu0 %v1119
        %v1218 = vpop.f32.mrf.mxu0
        %v1219 = vadd.f32 0.0, %v1218
        %v1220 = vpop.f32.mrf.mxu0
        %1221 = vmatprep.mubr.f32.mxu0 0.0
        %1222 = vmatmul.mubr.f32.gmra.mxu0 %v1122
        %v1223 = vpop.f32.mrf.mxu0
        %v1224 = vadd.f32 0.0, %v1223
        %v1225 = vpop.f32.mrf.mxu0
        %1226 = vmatprep.mubr.f32.mxu0 0.0
        %1227 = vmatmul.mubr.f32.gmra.mxu0 %v1125
        %v1228 = vpop.f32.mrf.mxu0
        %v1229 = vadd.f32 0.0, %v1228
        %v1230 = vpop.f32.mrf.mxu0
        %1231 = vdwg.mxu0
        %vm1232 = vcmp.gt.f32.partialorder %v1194, 0.0
        %vm1233 = vcmp.gt.f32.partialorder %v1199, 0.0
        %vm1234 = vcmp.gt.f32.partialorder %v1204, 0.0
        %vm1235 = vcmp.gt.f32.partialorder %v1209, 0.0
        %vm1236 = vcmp.gt.f32.partialorder %v1214, 0.0
        %vm1237 = vcmp.gt.f32.partialorder %v1219, 0.0
        %vm1238 = vcmp.gt.f32.partialorder %v1224, 0.0
        %vm1239 = vcmp.gt.f32.partialorder %v1229, 0.0
        %v1240 = vmul.f32 %v1194, 1.442695
        %v1241 = vpow.pop %v1240
        %v1242 = vmul.f32 %v1199, 1.442695
        %v1243 = vpow.pop %v1242
        %v1244 = vmul.f32 %v1204, 1.442695
        %v1245 = vpow.pop %v1244
        %v1246 = vmul.f32 %v1209, 1.442695
        %v1247 = vpow.pop %v1246
        %v1248 = vmul.f32 %v1214, 1.442695
        %v1249 = vpow.pop %v1248
        %v1250 = vmul.f32 %v1219, 1.442695
        %v1251 = vpow.pop %v1250
        %v1252 = vmul.f32 %v1224, 1.442695
        %v1253 = vpow.pop %v1252
        %v1254 = vmul.f32 %v1229, 1.442695
        %v1255 = vpow.pop %v1254
        %v1256 = vsub.f32 %v1241, 1.0
        %v1257 = vsub.f32 %v1243, 1.0
        %v1258 = vsub.f32 %v1245, 1.0
        %v1259 = vsub.f32 %v1247, 1.0
        %v1260 = vsub.f32 %v1249, 1.0
        %v1261 = vsub.f32 %v1251, 1.0
        %v1262 = vsub.f32 %v1253, 1.0
        %v1263 = vsub.f32 %v1255, 1.0
        %v1264 = vsel %vm1232, %v1194, %v1256
        %v1265 = vsel %vm1233, %v1199, %v1257
        %v1266 = vsel %vm1234, %v1204, %v1258
        %v1267 = vsel %vm1235, %v1209, %v1259
        %v1268 = vsel %vm1236, %v1214, %v1260
        %v1269 = vsel %vm1237, %v1219, %v1261
        %v1270 = vsel %vm1238, %v1224, %v1262
        %v1271 = vsel %vm1239, %v1229, %v1263
        %1272 = vrot.lane.b32.xlu0 %v399, 122
        %v1273 = vpop.permute.xlu0 %1272
        %1274 = vrot.lane.b32.xlu0 %v404, 122
        %v1275 = vpop.permute.xlu0 %1274
        %1276 = vrot.lane.b32.xlu0 %v409, 122
        %v1277 = vpop.permute.xlu0 %1276
        %1278 = vrot.lane.b32.xlu0 %v414, 122
        %v1279 = vpop.permute.xlu0 %1278
        %1280 = vrot.lane.b32.xlu0 %v419, 122
        %v1281 = vpop.permute.xlu0 %1280
        %1282 = vrot.lane.b32.xlu0 %v424, 122
        %v1283 = vpop.permute.xlu0 %1282
        %1284 = vrot.lane.b32.xlu0 %v429, 122
        %v1285 = vpop.permute.xlu0 %1284
        %1286 = vrot.lane.b32.xlu0 %v434, 122
        %v1287 = vpop.permute.xlu0 %1286
        %1296 = vxpose.xlu0.b32.start [1/16] %v1273, 128
        %1297 = vxpose.xlu0.b32.cont [2/16] %v1275, 128
        %1298 = vxpose.xlu0.b32.cont [3/16] %v1277, 128
        %1299 = vxpose.xlu0.b32.cont [4/16] %v1279, 128
        %1300 = vxpose.xlu0.b32.cont [5/16] %v1281, 128
        %1301 = vxpose.xlu0.b32.cont [6/16] %v1283, 128
        %1302 = vxpose.xlu0.b32.cont [7/16] %v1285, 128
        %1303 = vxpose.xlu0.b32.cont [8/16] %v1287, 128
        %1304 = vxpose.xlu0.b32.cont [9/16] 0.0, 128
        %1305 = vxpose.xlu0.b32.cont [10/16] 0.0, 128
        %1306 = vxpose.xlu0.b32.cont [11/16] 0.0, 128
        %1307 = vxpose.xlu0.b32.cont [12/16] 0.0, 128
        %1308 = vxpose.xlu0.b32.cont [13/16] 0.0, 128
        %1309 = vxpose.xlu0.b32.cont [14/16] 0.0, 128
        %1310 = vxpose.xlu0.b32.cont [15/16] 0.0, 128
        %1311 = vxpose.xlu0.b32.end [16/16] 0.0, 128
        %v1312 = vpop.trf.xlu0
        %v1313 = vpop.trf.xlu0
        %v1314 = vpop.trf.xlu0
        %v1315 = vpop.trf.xlu0
        %v1316 = vpop.trf.xlu0
        %v1317 = vpop.trf.xlu0
        %v1318 = vpop.trf.xlu0
        %v1319 = vpop.trf.xlu0
        %v1320 = vpop.trf.xlu0
        %v1321 = vpop.trf.xlu0
        %v1322 = vpop.trf.xlu0
        %v1323 = vpop.trf.xlu0
        %v1324 = vpop.trf.xlu0
        %v1325 = vpop.trf.xlu0
        %v1326 = vpop.trf.xlu0
        %v1327 = vpop.trf.xlu0
        %1328 = vset.pattern.permute.xlu0 2
        %1329 = vperm.xlu0 %1328, %v399
        %v1330 = vpop.permute.xlu0 %1329
        %1332 = vset.pattern.permute.xlu0 2
        %1333 = vperm.xlu0 %1332, %v404
        %v1334 = vpop.permute.xlu0 %1333
        %1336 = vset.pattern.permute.xlu0 2
        %1337 = vperm.xlu0 %1336, %v409
        %v1338 = vpop.permute.xlu0 %1337
        %1340 = vset.pattern.permute.xlu0 2
        %1341 = vperm.xlu0 %1340, %v414
        %v1342 = vpop.permute.xlu0 %1341
        %1344 = vset.pattern.permute.xlu0 2
        %1345 = vperm.xlu0 %1344, %v419
        %v1346 = vpop.permute.xlu0 %1345
        %1348 = vset.pattern.permute.xlu0 2
        %1349 = vperm.xlu0 %1348, %v424
        %v1350 = vpop.permute.xlu0 %1349
        %1352 = vset.pattern.permute.xlu0 2
        %1353 = vperm.xlu0 %1352, %v429
        %v1354 = vpop.permute.xlu0 %1353
        %1356 = vset.pattern.permute.xlu0 2
        %1357 = vperm.xlu0 %1356, %v434
        %v1358 = vpop.permute.xlu0 %1357
        %v1360 = vlaneseq
        %v1361 = vshrl.u32 %v1360, 7
        %v1362 = vsub.s32 0, %v1361
        %v1363 = vrot.slane %v1312, %v1362
        %v1364 = vadd.f32 %v1330, %v1363
        %v1365 = vadd.f32 %v1334, %v1363
        %v1366 = vadd.f32 %v1338, %v1363
        %v1367 = vadd.f32 %v1342, %v1363
        %v1368 = vadd.f32 %v1346, %v1363
        %v1369 = vadd.f32 %v1350, %v1363
        %v1370 = vadd.f32 %v1354, %v1363
        %v1371 = vadd.f32 %v1358, %v1363
        %vm1372 = vcmp.gt.f32.partialorder %v1364, 0.0
        %vm1373 = vcmp.gt.f32.partialorder %v1365, 0.0
        %vm1374 = vcmp.gt.f32.partialorder %v1366, 0.0
        %vm1375 = vcmp.gt.f32.partialorder %v1367, 0.0
        %vm1376 = vcmp.gt.f32.partialorder %v1368, 0.0
        %vm1377 = vcmp.gt.f32.partialorder %v1369, 0.0
        %vm1378 = vcmp.gt.f32.partialorder %v1370, 0.0
        %vm1379 = vcmp.gt.f32.partialorder %v1371, 0.0
        %v1380 = vmul.f32 %v1364, 0.2
        %v1381 = vmul.f32 %v1365, 0.2
        %v1382 = vmul.f32 %v1366, 0.2
        %v1383 = vmul.f32 %v1367, 0.2
        %v1384 = vmul.f32 %v1368, 0.2
        %v1385 = vmul.f32 %v1369, 0.2
        %v1386 = vmul.f32 %v1370, 0.2
        %v1387 = vmul.f32 %v1371, 0.2
        %v1388 = vsel %vm1372, %v1364, %v1380
        %v1389 = vsel %vm1373, %v1365, %v1381
        %v1390 = vsel %vm1374, %v1366, %v1382
        %v1391 = vsel %vm1375, %v1367, %v1383
        %v1392 = vsel %vm1376, %v1368, %v1384
        %v1393 = vsel %vm1377, %v1369, %v1385
        %v1394 = vsel %vm1378, %v1370, %v1386
        %v1395 = vsel %vm1379, %v1371, %v1387
        %v1396 = vadd.f32 %v1388, %v445
        %v1397 = vadd.f32 %v1389, %v446
        %v1398 = vadd.f32 %v1390, %v447
        %v1399 = vadd.f32 %v1391, %v448
        %v1400 = vadd.f32 %v1392, %v449
        %v1401 = vadd.f32 %v1393, %v450
        %v1402 = vadd.f32 %v1394, %v451
        %v1403 = vadd.f32 %v1395, %v452
        %v1404 = vsel %vm593, %v1396, -inf
        %1405 = vmax.xlane.f32.xlu0 %v1404
        %v1406 = vpop.xlane.xlu0 %1405
        %v1407 = vsel %vm593, %v1397, -inf
        %1408 = vmax.xlane.f32.xlu0 %v1407
        %v1409 = vpop.xlane.xlu0 %1408
        %v1410 = vsel %vm593, %v1398, -inf
        %1411 = vmax.xlane.f32.xlu0 %v1410
        %v1412 = vpop.xlane.xlu0 %1411
        %v1413 = vsel %vm593, %v1399, -inf
        %1414 = vmax.xlane.f32.xlu0 %v1413
        %v1415 = vpop.xlane.xlu0 %1414
        %v1416 = vsel %vm593, %v1400, -inf
        %1417 = vmax.xlane.f32.xlu0 %v1416
        %v1418 = vpop.xlane.xlu0 %1417
        %v1419 = vsel %vm593, %v1401, -inf
        %1420 = vmax.xlane.f32.xlu0 %v1419
        %v1421 = vpop.xlane.xlu0 %1420
        %v1422 = vsel %vm593, %v1402, -inf
        %1423 = vmax.xlane.f32.xlu0 %v1422
        %v1424 = vpop.xlane.xlu0 %1423
        %v1425 = vsel %vm593, %v1403, -inf
        %1426 = vmax.xlane.f32.xlu0 %v1425
        %v1427 = vpop.xlane.xlu0 %1426
        %v1428 = vsub.f32 %v1396, %v1406
        %v1429 = vsub.f32 %v1397, %v1409
        %v1430 = vsub.f32 %v1398, %v1412
        %v1431 = vsub.f32 %v1399, %v1415
        %v1432 = vsub.f32 %v1400, %v1418
        %v1433 = vsub.f32 %v1401, %v1421
        %v1434 = vsub.f32 %v1402, %v1424
        %v1435 = vsub.f32 %v1403, %v1427
        %v1436 = vmul.f32 %v1428, 1.442695
        %v1437 = vpow.pop %v1436
        %v1438 = vmul.f32 %v1429, 1.442695
        %v1439 = vpow.pop %v1438
        %v1440 = vmul.f32 %v1430, 1.442695
        %v1441 = vpow.pop %v1440
        %v1442 = vmul.f32 %v1431, 1.442695
        %v1443 = vpow.pop %v1442
        %v1444 = vmul.f32 %v1432, 1.442695
        %v1445 = vpow.pop %v1444
        %v1446 = vmul.f32 %v1433, 1.442695
        %v1447 = vpow.pop %v1446
        %v1448 = vmul.f32 %v1434, 1.442695
        %v1449 = vpow.pop %v1448
        %v1450 = vmul.f32 %v1435, 1.442695
        %v1451 = vpow.pop %v1450
        %v1452 = vsel %vm593, %v1437, 0.0
        %1453 = vadd.xlane.f32.xlu0 %v1452
        %v1454 = vpop.xlane.xlu0 %1453
        %v1455 = vsel %vm593, %v1439, 0.0
        %1456 = vadd.xlane.f32.xlu0 %v1455
        %v1457 = vpop.xlane.xlu0 %1456
        %v1458 = vsel %vm593, %v1441, 0.0
        %1459 = vadd.xlane.f32.xlu0 %v1458
        %v1460 = vpop.xlane.xlu0 %1459
        %v1461 = vsel %vm593, %v1443, 0.0
        %1462 = vadd.xlane.f32.xlu0 %v1461
        %v1463 = vpop.xlane.xlu0 %1462
        %v1464 = vsel %vm593, %v1445, 0.0
        %1465 = vadd.xlane.f32.xlu0 %v1464
        %v1466 = vpop.xlane.xlu0 %1465
        %v1467 = vsel %vm593, %v1447, 0.0
        %1468 = vadd.xlane.f32.xlu0 %v1467
        %v1469 = vpop.xlane.xlu0 %1468
        %v1470 = vsel %vm593, %v1449, 0.0
        %1471 = vadd.xlane.f32.xlu0 %v1470
        %v1472 = vpop.xlane.xlu0 %1471
        %v1473 = vsel %vm593, %v1451, 0.0
        %1474 = vadd.xlane.f32.xlu0 %v1473
        %v1475 = vpop.xlane.xlu0 %1474
        %v1476 = vrcp.pop %v1454
        %v1477 = vrcp.pop %v1457
        %v1478 = vrcp.pop %v1460
        %v1479 = vrcp.pop %v1463
        %v1480 = vrcp.pop %v1466
        %v1481 = vrcp.pop %v1469
        %v1482 = vrcp.pop %v1472
        %v1483 = vrcp.pop %v1475
        %v1484 = vmul.f32 %v1437, %v1476
        %v1485 = vmul.f32 %v1439, %v1477
        %v1486 = vmul.f32 %v1441, %v1478
        %v1487 = vmul.f32 %v1443, %v1479
        %v1488 = vmul.f32 %v1445, %v1480
        %v1489 = vmul.f32 %v1447, %v1481
        %v1490 = vmul.f32 %v1449, %v1482
        %v1491 = vmul.f32 %v1451, %v1483
        %v1493 = vsel %vm593, %v1484, 0
        %v1496 = vsel %vm593, %v1485, 0
        %v1499 = vsel %vm593, %v1486, 0
        %v1502 = vsel %vm593, %v1487, 0
        %v1505 = vsel %vm593, %v1488, 0
        %v1508 = vsel %vm593, %v1489, 0
        %v1511 = vsel %vm593, %v1490, 0
        %v1514 = vsel %vm593, %v1491, 0
        %1516 = vmatprep.subr.mxu0 0.0
        %1517 = vmatpush1.msra.mxu0 0.0
        %1518 = vmatprep.subr.mxu0 0.0
        %1519 = vmatpush1.msra.mxu0 0.0
        %1520 = vmatprep.subr.mxu0 0.0
        %1521 = vmatpush1.msra.mxu0 0.0
        %1522 = vmatprep.subr.mxu0 0.0
        %1523 = vmatpush1.msra.mxu0 0.0
        %1524 = vmatprep.subr.mxu0 0.0
        %1525 = vmatpush1.msra.mxu0 0.0
        %1526 = vmatprep.subr.mxu0 0.0
        %1527 = vmatpush1.msra.mxu0 0.0
        %1528 = vmatprep.subr.mxu0 0.0
        %1529 = vmatpush1.msra.mxu0 0.0
        %1530 = vmatprep.subr.mxu0 0.0
        %1531 = vmatpush1.msra.mxu0 0.0
        %1532 = vmatprep.subr.mxu0 0.0
        %1533 = vmatpush1.msra.mxu0 %v330
        %1534 = vmatprep.subr.mxu0 0.0
        %1535 = vmatpush1.msra.mxu0 %v324
        %1536 = vmatprep.subr.mxu0 0.0
        %1537 = vmatpush1.msra.mxu0 %v318
        %1538 = vmatprep.subr.mxu0 0.0
        %1539 = vmatpush1.msra.mxu0 %v312
        %1540 = vmatprep.subr.mxu0 0.0
        %1541 = vmatpush1.msra.mxu0 %v306
        %1542 = vmatprep.subr.mxu0 0.0
        %1543 = vmatpush1.msra.mxu0 %v300
        %1544 = vmatprep.subr.mxu0 0.0
        %1545 = vmatpush1.msra.mxu0 %v294
        %1546 = vmatprep.subr.mxu0 0.0
        %1547 = vmatpush1.msra.mxu0 %v288
        %1548 = vmatprep.subr.mxu0 0.0
        %1549 = vmatpush2.msra.mxu0 0.0
        %1550 = vmatprep.subr.mxu0 0.0
        %1551 = vmatpush2.msra.mxu0 0.0
        %1552 = vmatprep.subr.mxu0 0.0
        %1553 = vmatpush2.msra.mxu0 0.0
        %1554 = vmatprep.subr.mxu0 0.0
        %1555 = vmatpush2.msra.mxu0 0.0
        %1556 = vmatprep.subr.mxu0 0.0
        %1557 = vmatpush2.msra.mxu0 0.0
        %1558 = vmatprep.subr.mxu0 0.0
        %1559 = vmatpush2.msra.mxu0 0.0
        %1560 = vmatprep.subr.mxu0 0.0
        %1561 = vmatpush2.msra.mxu0 0.0
        %1562 = vmatprep.subr.mxu0 0.0
        %1563 = vmatpush2.msra.mxu0 0.0
        %1564 = vmatprep.subr.mxu0 0.0
        %1565 = vmatpush2.msra.mxu0 0.0
        %1566 = vmatprep.subr.mxu0 0.0
        %1567 = vmatpush2.msra.mxu0 0.0
        %1568 = vmatprep.subr.mxu0 0.0
        %1569 = vmatpush2.msra.mxu0 0.0
        %1570 = vmatprep.subr.mxu0 0.0
        %1571 = vmatpush2.msra.mxu0 0.0
        %1572 = vmatprep.subr.mxu0 0.0
        %1573 = vmatpush2.msra.mxu0 0.0
        %1574 = vmatprep.subr.mxu0 0.0
        %1575 = vmatpush2.msra.mxu0 0.0
        %1576 = vmatprep.subr.mxu0 0.0
        %1577 = vmatpush2.msra.mxu0 0.0
        %1578 = vmatprep.subr.mxu0 0.0
        %1579 = vmatpush2.msra.mxu0 0.0
        %1580 = vmatprep.mubr.f32.mxu0 0.0
        %1581 = vmatmul.mubr.f32.gmra.mxu0 %v1493
        %v1582 = vpop.f32.mrf.mxu0
        %v1583 = vadd.f32 0.0, %v1582
        %v1584 = vpop.f32.mrf.mxu0
        %1585 = vmatprep.mubr.f32.mxu0 0.0
        %1586 = vmatmul.mubr.f32.gmra.mxu0 %v1496
        %v1587 = vpop.f32.mrf.mxu0
        %v1588 = vadd.f32 0.0, %v1587
        %v1589 = vpop.f32.mrf.mxu0
        %1590 = vmatprep.mubr.f32.mxu0 0.0
        %1591 = vmatmul.mubr.f32.gmra.mxu0 %v1499
        %v1592 = vpop.f32.mrf.mxu0
        %v1593 = vadd.f32 0.0, %v1592
        %v1594 = vpop.f32.mrf.mxu0
        %1595 = vmatprep.mubr.f32.mxu0 0.0
        %1596 = vmatmul.mubr.f32.gmra.mxu0 %v1502
        %v1597 = vpop.f32.mrf.mxu0
        %v1598 = vadd.f32 0.0, %v1597
        %v1599 = vpop.f32.mrf.mxu0
        %1600 = vmatprep.mubr.f32.mxu0 0.0
        %1601 = vmatmul.mubr.f32.gmra.mxu0 %v1505
        %v1602 = vpop.f32.mrf.mxu0
        %v1603 = vadd.f32 0.0, %v1602
        %v1604 = vpop.f32.mrf.mxu0
        %1605 = vmatprep.mubr.f32.mxu0 0.0
        %1606 = vmatmul.mubr.f32.gmra.mxu0 %v1508
        %v1607 = vpop.f32.mrf.mxu0
        %v1608 = vadd.f32 0.0, %v1607
        %v1609 = vpop.f32.mrf.mxu0
        %1610 = vmatprep.mubr.f32.mxu0 0.0
        %1611 = vmatmul.mubr.f32.gmra.mxu0 %v1511
        %v1612 = vpop.f32.mrf.mxu0
        %v1613 = vadd.f32 0.0, %v1612
        %v1614 = vpop.f32.mrf.mxu0
        %1615 = vmatprep.mubr.f32.mxu0 0.0
        %1616 = vmatmul.mubr.f32.gmra.mxu0 %v1514
        %v1617 = vpop.f32.mrf.mxu0
        %v1618 = vadd.f32 0.0, %v1617
        %v1619 = vpop.f32.mrf.mxu0
        %1620 = vdwg.mxu0
        %vm1621 = vcmp.gt.f32.partialorder %v1583, 0.0
        %vm1622 = vcmp.gt.f32.partialorder %v1588, 0.0
        %vm1623 = vcmp.gt.f32.partialorder %v1593, 0.0
        %vm1624 = vcmp.gt.f32.partialorder %v1598, 0.0
        %vm1625 = vcmp.gt.f32.partialorder %v1603, 0.0
        %vm1626 = vcmp.gt.f32.partialorder %v1608, 0.0
        %vm1627 = vcmp.gt.f32.partialorder %v1613, 0.0
        %vm1628 = vcmp.gt.f32.partialorder %v1618, 0.0
        %v1629 = vmul.f32 %v1583, 1.442695
        %v1630 = vpow.pop %v1629
        %v1631 = vmul.f32 %v1588, 1.442695
        %v1632 = vpow.pop %v1631
        %v1633 = vmul.f32 %v1593, 1.442695
        %v1634 = vpow.pop %v1633
        %v1635 = vmul.f32 %v1598, 1.442695
        %v1636 = vpow.pop %v1635
        %v1637 = vmul.f32 %v1603, 1.442695
        %v1638 = vpow.pop %v1637
        %v1639 = vmul.f32 %v1608, 1.442695
        %v1640 = vpow.pop %v1639
        %v1641 = vmul.f32 %v1613, 1.442695
        %v1642 = vpow.pop %v1641
        %v1643 = vmul.f32 %v1618, 1.442695
        %v1644 = vpow.pop %v1643
        %v1645 = vsub.f32 %v1630, 1.0
        %v1646 = vsub.f32 %v1632, 1.0
        %v1647 = vsub.f32 %v1634, 1.0
        %v1648 = vsub.f32 %v1636, 1.0
        %v1649 = vsub.f32 %v1638, 1.0
        %v1650 = vsub.f32 %v1640, 1.0
        %v1651 = vsub.f32 %v1642, 1.0
        %v1652 = vsub.f32 %v1644, 1.0
        %v1653 = vsel %vm1621, %v1583, %v1645
        %v1654 = vsel %vm1622, %v1588, %v1646
        %v1655 = vsel %vm1623, %v1593, %v1647
        %v1656 = vsel %vm1624, %v1598, %v1648
        %v1657 = vsel %vm1625, %v1603, %v1649
        %v1658 = vsel %vm1626, %v1608, %v1650
        %v1659 = vsel %vm1627, %v1613, %v1651
        %v1660 = vsel %vm1628, %v1618, %v1652
        %1661 = vrot.lane.b32.xlu0 %v399, 121
        %v1662 = vpop.permute.xlu0 %1661
        %1663 = vrot.lane.b32.xlu0 %v404, 121
        %v1664 = vpop.permute.xlu0 %1663
        %1665 = vrot.lane.b32.xlu0 %v409, 121
        %v1666 = vpop.permute.xlu0 %1665
        %1667 = vrot.lane.b32.xlu0 %v414, 121
        %v1668 = vpop.permute.xlu0 %1667
        %1669 = vrot.lane.b32.xlu0 %v419, 121
        %v1670 = vpop.permute.xlu0 %1669
        %1671 = vrot.lane.b32.xlu0 %v424, 121
        %v1672 = vpop.permute.xlu0 %1671
        %1673 = vrot.lane.b32.xlu0 %v429, 121
        %v1674 = vpop.permute.xlu0 %1673
        %1675 = vrot.lane.b32.xlu0 %v434, 121
        %v1676 = vpop.permute.xlu0 %1675
        %1685 = vxpose.xlu0.b32.start [1/16] %v1662, 128
        %1686 = vxpose.xlu0.b32.cont [2/16] %v1664, 128
        %1687 = vxpose.xlu0.b32.cont [3/16] %v1666, 128
        %1688 = vxpose.xlu0.b32.cont [4/16] %v1668, 128
        %1689 = vxpose.xlu0.b32.cont [5/16] %v1670, 128
        %1690 = vxpose.xlu0.b32.cont [6/16] %v1672, 128
        %1691 = vxpose.xlu0.b32.cont [7/16] %v1674, 128
        %1692 = vxpose.xlu0.b32.cont [8/16] %v1676, 128
        %1693 = vxpose.xlu0.b32.cont [9/16] 0.0, 128
        %1694 = vxpose.xlu0.b32.cont [10/16] 0.0, 128
        %1695 = vxpose.xlu0.b32.cont [11/16] 0.0, 128
        %1696 = vxpose.xlu0.b32.cont [12/16] 0.0, 128
        %1697 = vxpose.xlu0.b32.cont [13/16] 0.0, 128
        %1698 = vxpose.xlu0.b32.cont [14/16] 0.0, 128
        %1699 = vxpose.xlu0.b32.cont [15/16] 0.0, 128
        %1700 = vxpose.xlu0.b32.end [16/16] 0.0, 128
        %v1701 = vpop.trf.xlu0
        %v1702 = vpop.trf.xlu0
        %v1703 = vpop.trf.xlu0
        %v1704 = vpop.trf.xlu0
        %v1705 = vpop.trf.xlu0
        %v1706 = vpop.trf.xlu0
        %v1707 = vpop.trf.xlu0
        %v1708 = vpop.trf.xlu0
        %v1709 = vpop.trf.xlu0
        %v1710 = vpop.trf.xlu0
        %v1711 = vpop.trf.xlu0
        %v1712 = vpop.trf.xlu0
        %v1713 = vpop.trf.xlu0
        %v1714 = vpop.trf.xlu0
        %v1715 = vpop.trf.xlu0
        %v1716 = vpop.trf.xlu0
        %1717 = vset.pattern.permute.xlu0 3
        %1718 = vperm.xlu0 %1717, %v399
        %v1719 = vpop.permute.xlu0 %1718
        %1721 = vset.pattern.permute.xlu0 3
        %1722 = vperm.xlu0 %1721, %v404
        %v1723 = vpop.permute.xlu0 %1722
        %1725 = vset.pattern.permute.xlu0 3
        %1726 = vperm.xlu0 %1725, %v409
        %v1727 = vpop.permute.xlu0 %1726
        %1729 = vset.pattern.permute.xlu0 3
        %1730 = vperm.xlu0 %1729, %v414
        %v1731 = vpop.permute.xlu0 %1730
        %1733 = vset.pattern.permute.xlu0 3
        %1734 = vperm.xlu0 %1733, %v419
        %v1735 = vpop.permute.xlu0 %1734
        %1737 = vset.pattern.permute.xlu0 3
        %1738 = vperm.xlu0 %1737, %v424
        %v1739 = vpop.permute.xlu0 %1738
        %1741 = vset.pattern.permute.xlu0 3
        %1742 = vperm.xlu0 %1741, %v429
        %v1743 = vpop.permute.xlu0 %1742
        %1745 = vset.pattern.permute.xlu0 3
        %1746 = vperm.xlu0 %1745, %v434
        %v1747 = vpop.permute.xlu0 %1746
        %v1749 = vlaneseq
        %v1750 = vshrl.u32 %v1749, 7
        %v1751 = vsub.s32 0, %v1750
        %v1752 = vrot.slane %v1701, %v1751
        %v1753 = vadd.f32 %v1719, %v1752
        %v1754 = vadd.f32 %v1723, %v1752
        %v1755 = vadd.f32 %v1727, %v1752
        %v1756 = vadd.f32 %v1731, %v1752
        %v1757 = vadd.f32 %v1735, %v1752
        %v1758 = vadd.f32 %v1739, %v1752
        %v1759 = vadd.f32 %v1743, %v1752
        %v1760 = vadd.f32 %v1747, %v1752
        %vm1761 = vcmp.gt.f32.partialorder %v1753, 0.0
        %vm1762 = vcmp.gt.f32.partialorder %v1754, 0.0
        %vm1763 = vcmp.gt.f32.partialorder %v1755, 0.0
        %vm1764 = vcmp.gt.f32.partialorder %v1756, 0.0
        %vm1765 = vcmp.gt.f32.partialorder %v1757, 0.0
        %vm1766 = vcmp.gt.f32.partialorder %v1758, 0.0
        %vm1767 = vcmp.gt.f32.partialorder %v1759, 0.0
        %vm1768 = vcmp.gt.f32.partialorder %v1760, 0.0
        %v1769 = vmul.f32 %v1753, 0.2
        %v1770 = vmul.f32 %v1754, 0.2
        %v1771 = vmul.f32 %v1755, 0.2
        %v1772 = vmul.f32 %v1756, 0.2
        %v1773 = vmul.f32 %v1757, 0.2
        %v1774 = vmul.f32 %v1758, 0.2
        %v1775 = vmul.f32 %v1759, 0.2
        %v1776 = vmul.f32 %v1760, 0.2
        %v1777 = vsel %vm1761, %v1753, %v1769
        %v1778 = vsel %vm1762, %v1754, %v1770
        %v1779 = vsel %vm1763, %v1755, %v1771
        %v1780 = vsel %vm1764, %v1756, %v1772
        %v1781 = vsel %vm1765, %v1757, %v1773
        %v1782 = vsel %vm1766, %v1758, %v1774
        %v1783 = vsel %vm1767, %v1759, %v1775
        %v1784 = vsel %vm1768, %v1760, %v1776
        %v1785 = vadd.f32 %v1777, %v445
        %v1786 = vadd.f32 %v1778, %v446
        %v1787 = vadd.f32 %v1779, %v447
        %v1788 = vadd.f32 %v1780, %v448
        %v1789 = vadd.f32 %v1781, %v449
        %v1790 = vadd.f32 %v1782, %v450
        %v1791 = vadd.f32 %v1783, %v451
        %v1792 = vadd.f32 %v1784, %v452
        %v1793 = vsel %vm593, %v1785, -inf
        %1794 = vmax.xlane.f32.xlu0 %v1793
        %v1795 = vpop.xlane.xlu0 %1794
        %v1796 = vsel %vm593, %v1786, -inf
        %1797 = vmax.xlane.f32.xlu0 %v1796
        %v1798 = vpop.xlane.xlu0 %1797
        %v1799 = vsel %vm593, %v1787, -inf
        %1800 = vmax.xlane.f32.xlu0 %v1799
        %v1801 = vpop.xlane.xlu0 %1800
        %v1802 = vsel %vm593, %v1788, -inf
        %1803 = vmax.xlane.f32.xlu0 %v1802
        %v1804 = vpop.xlane.xlu0 %1803
        %v1805 = vsel %vm593, %v1789, -inf
        %1806 = vmax.xlane.f32.xlu0 %v1805
        %v1807 = vpop.xlane.xlu0 %1806
        %v1808 = vsel %vm593, %v1790, -inf
        %1809 = vmax.xlane.f32.xlu0 %v1808
        %v1810 = vpop.xlane.xlu0 %1809
        %v1811 = vsel %vm593, %v1791, -inf
        %1812 = vmax.xlane.f32.xlu0 %v1811
        %v1813 = vpop.xlane.xlu0 %1812
        %v1814 = vsel %vm593, %v1792, -inf
        %1815 = vmax.xlane.f32.xlu0 %v1814
        %v1816 = vpop.xlane.xlu0 %1815
        %v1817 = vsub.f32 %v1785, %v1795
        %v1818 = vsub.f32 %v1786, %v1798
        %v1819 = vsub.f32 %v1787, %v1801
        %v1820 = vsub.f32 %v1788, %v1804
        %v1821 = vsub.f32 %v1789, %v1807
        %v1822 = vsub.f32 %v1790, %v1810
        %v1823 = vsub.f32 %v1791, %v1813
        %v1824 = vsub.f32 %v1792, %v1816
        %v1825 = vmul.f32 %v1817, 1.442695
        %v1826 = vpow.pop %v1825
        %v1827 = vmul.f32 %v1818, 1.442695
        %v1828 = vpow.pop %v1827
        %v1829 = vmul.f32 %v1819, 1.442695
        %v1830 = vpow.pop %v1829
        %v1831 = vmul.f32 %v1820, 1.442695
        %v1832 = vpow.pop %v1831
        %v1833 = vmul.f32 %v1821, 1.442695
        %v1834 = vpow.pop %v1833
        %v1835 = vmul.f32 %v1822, 1.442695
        %v1836 = vpow.pop %v1835
        %v1837 = vmul.f32 %v1823, 1.442695
        %v1838 = vpow.pop %v1837
        %v1839 = vmul.f32 %v1824, 1.442695
        %v1840 = vpow.pop %v1839
        %v1841 = vsel %vm593, %v1826, 0.0
        %1842 = vadd.xlane.f32.xlu0 %v1841
        %v1843 = vpop.xlane.xlu0 %1842
        %v1844 = vsel %vm593, %v1828, 0.0
        %1845 = vadd.xlane.f32.xlu0 %v1844
        %v1846 = vpop.xlane.xlu0 %1845
        %v1847 = vsel %vm593, %v1830, 0.0
        %1848 = vadd.xlane.f32.xlu0 %v1847
        %v1849 = vpop.xlane.xlu0 %1848
        %v1850 = vsel %vm593, %v1832, 0.0
        %1851 = vadd.xlane.f32.xlu0 %v1850
        %v1852 = vpop.xlane.xlu0 %1851
        %v1853 = vsel %vm593, %v1834, 0.0
        %1854 = vadd.xlane.f32.xlu0 %v1853
        %v1855 = vpop.xlane.xlu0 %1854
        %v1856 = vsel %vm593, %v1836, 0.0
        %1857 = vadd.xlane.f32.xlu0 %v1856
        %v1858 = vpop.xlane.xlu0 %1857
        %v1859 = vsel %vm593, %v1838, 0.0
        %1860 = vadd.xlane.f32.xlu0 %v1859
        %v1861 = vpop.xlane.xlu0 %1860
        %v1862 = vsel %vm593, %v1840, 0.0
        %1863 = vadd.xlane.f32.xlu0 %v1862
        %v1864 = vpop.xlane.xlu0 %1863
        %v1865 = vrcp.pop %v1843
        %v1866 = vrcp.pop %v1846
        %v1867 = vrcp.pop %v1849
        %v1868 = vrcp.pop %v1852
        %v1869 = vrcp.pop %v1855
        %v1870 = vrcp.pop %v1858
        %v1871 = vrcp.pop %v1861
        %v1872 = vrcp.pop %v1864
        %v1873 = vmul.f32 %v1826, %v1865
        %v1874 = vmul.f32 %v1828, %v1866
        %v1875 = vmul.f32 %v1830, %v1867
        %v1876 = vmul.f32 %v1832, %v1868
        %v1877 = vmul.f32 %v1834, %v1869
        %v1878 = vmul.f32 %v1836, %v1870
        %v1879 = vmul.f32 %v1838, %v1871
        %v1880 = vmul.f32 %v1840, %v1872
        %1889 = vrot.lane.b32.xlu0 %v288, 64
        %v1890 = vpop.permute.xlu0 %1889
        %1891 = vrot.lane.b32.xlu0 %v294, 64
        %v1892 = vpop.permute.xlu0 %1891
        %1893 = vrot.lane.b32.xlu0 %v300, 64
        %v1894 = vpop.permute.xlu0 %1893
        %1895 = vrot.lane.b32.xlu0 %v306, 64
        %v1896 = vpop.permute.xlu0 %1895
        %1897 = vrot.lane.b32.xlu0 %v312, 64
        %v1898 = vpop.permute.xlu0 %1897
        %1899 = vrot.lane.b32.xlu0 %v318, 64
        %v1900 = vpop.permute.xlu0 %1899
        %1901 = vrot.lane.b32.xlu0 %v324, 64
        %v1902 = vpop.permute.xlu0 %1901
        %1903 = vrot.lane.b32.xlu0 %v330, 64
        %v1904 = vpop.permute.xlu0 %1903
        %v1914 = vsel %vm593, %v1873, 0
        %v1917 = vsel %vm593, %v1874, 0
        %v1920 = vsel %vm593, %v1875, 0
        %v1923 = vsel %vm593, %v1876, 0
        %v1926 = vsel %vm593, %v1877, 0
        %v1929 = vsel %vm593, %v1878, 0
        %v1932 = vsel %vm593, %v1879, 0
        %v1935 = vsel %vm593, %v1880, 0
        %1937 = vmatprep.subr.mxu0 0.0
        %1938 = vmatpush1.msra.mxu0 0.0
        %1939 = vmatprep.subr.mxu0 0.0
        %1940 = vmatpush1.msra.mxu0 0.0
        %1941 = vmatprep.subr.mxu0 0.0
        %1942 = vmatpush1.msra.mxu0 0.0
        %1943 = vmatprep.subr.mxu0 0.0
        %1944 = vmatpush1.msra.mxu0 0.0
        %1945 = vmatprep.subr.mxu0 0.0
        %1946 = vmatpush1.msra.mxu0 0.0
        %1947 = vmatprep.subr.mxu0 0.0
        %1948 = vmatpush1.msra.mxu0 0.0
        %1949 = vmatprep.subr.mxu0 0.0
        %1950 = vmatpush1.msra.mxu0 0.0
        %1951 = vmatprep.subr.mxu0 0.0
        %1952 = vmatpush1.msra.mxu0 0.0
        %1953 = vmatprep.subr.mxu0 0.0
        %1954 = vmatpush1.msra.mxu0 %v1904
        %1955 = vmatprep.subr.mxu0 0.0
        %1956 = vmatpush1.msra.mxu0 %v1902
        %1957 = vmatprep.subr.mxu0 0.0
        %1958 = vmatpush1.msra.mxu0 %v1900
        %1959 = vmatprep.subr.mxu0 0.0
        %1960 = vmatpush1.msra.mxu0 %v1898
        %1961 = vmatprep.subr.mxu0 0.0
        %1962 = vmatpush1.msra.mxu0 %v1896
        %1963 = vmatprep.subr.mxu0 0.0
        %1964 = vmatpush1.msra.mxu0 %v1894
        %1965 = vmatprep.subr.mxu0 0.0
        %1966 = vmatpush1.msra.mxu0 %v1892
        %1967 = vmatprep.subr.mxu0 0.0
        %1968 = vmatpush1.msra.mxu0 %v1890
        %1969 = vmatprep.subr.mxu0 0.0
        %1970 = vmatpush2.msra.mxu0 0.0
        %1971 = vmatprep.subr.mxu0 0.0
        %1972 = vmatpush2.msra.mxu0 0.0
        %1973 = vmatprep.subr.mxu0 0.0
        %1974 = vmatpush2.msra.mxu0 0.0
        %1975 = vmatprep.subr.mxu0 0.0
        %1976 = vmatpush2.msra.mxu0 0.0
        %1977 = vmatprep.subr.mxu0 0.0
        %1978 = vmatpush2.msra.mxu0 0.0
        %1979 = vmatprep.subr.mxu0 0.0
        %1980 = vmatpush2.msra.mxu0 0.0
        %1981 = vmatprep.subr.mxu0 0.0
        %1982 = vmatpush2.msra.mxu0 0.0
        %1983 = vmatprep.subr.mxu0 0.0
        %1984 = vmatpush2.msra.mxu0 0.0
        %1985 = vmatprep.subr.mxu0 0.0
        %1986 = vmatpush2.msra.mxu0 0.0
        %1987 = vmatprep.subr.mxu0 0.0
        %1988 = vmatpush2.msra.mxu0 0.0
        %1989 = vmatprep.subr.mxu0 0.0
        %1990 = vmatpush2.msra.mxu0 0.0
        %1991 = vmatprep.subr.mxu0 0.0
        %1992 = vmatpush2.msra.mxu0 0.0
        %1993 = vmatprep.subr.mxu0 0.0
        %1994 = vmatpush2.msra.mxu0 0.0
        %1995 = vmatprep.subr.mxu0 0.0
        %1996 = vmatpush2.msra.mxu0 0.0
        %1997 = vmatprep.subr.mxu0 0.0
        %1998 = vmatpush2.msra.mxu0 0.0
        %1999 = vmatprep.subr.mxu0 0.0
        %2000 = vmatpush2.msra.mxu0 0.0
        %2001 = vmatprep.mubr.f32.mxu0 0.0
        %2002 = vmatmul.mubr.f32.gmra.mxu0 %v1914
        %v2003 = vpop.f32.mrf.mxu0
        %v2004 = vadd.f32 0.0, %v2003
        %v2005 = vpop.f32.mrf.mxu0
        %2006 = vmatprep.mubr.f32.mxu0 0.0
        %2007 = vmatmul.mubr.f32.gmra.mxu0 %v1917
        %v2008 = vpop.f32.mrf.mxu0
        %v2009 = vadd.f32 0.0, %v2008
        %v2010 = vpop.f32.mrf.mxu0
        %2011 = vmatprep.mubr.f32.mxu0 0.0
        %2012 = vmatmul.mubr.f32.gmra.mxu0 %v1920
        %v2013 = vpop.f32.mrf.mxu0
        %v2014 = vadd.f32 0.0, %v2013
        %v2015 = vpop.f32.mrf.mxu0
        %2016 = vmatprep.mubr.f32.mxu0 0.0
        %2017 = vmatmul.mubr.f32.gmra.mxu0 %v1923
        %v2018 = vpop.f32.mrf.mxu0
        %v2019 = vadd.f32 0.0, %v2018
        %v2020 = vpop.f32.mrf.mxu0
        %2021 = vmatprep.mubr.f32.mxu0 0.0
        %2022 = vmatmul.mubr.f32.gmra.mxu0 %v1926
        %v2023 = vpop.f32.mrf.mxu0
        %v2024 = vadd.f32 0.0, %v2023
        %v2025 = vpop.f32.mrf.mxu0
        %2026 = vmatprep.mubr.f32.mxu0 0.0
        %2027 = vmatmul.mubr.f32.gmra.mxu0 %v1929
        %v2028 = vpop.f32.mrf.mxu0
        %v2029 = vadd.f32 0.0, %v2028
        %v2030 = vpop.f32.mrf.mxu0
        %2031 = vmatprep.mubr.f32.mxu0 0.0
        %2032 = vmatmul.mubr.f32.gmra.mxu0 %v1932
        %v2033 = vpop.f32.mrf.mxu0
        %v2034 = vadd.f32 0.0, %v2033
        %v2035 = vpop.f32.mrf.mxu0
        %2036 = vmatprep.mubr.f32.mxu0 0.0
        %2037 = vmatmul.mubr.f32.gmra.mxu0 %v1935
        %v2038 = vpop.f32.mrf.mxu0
        %v2039 = vadd.f32 0.0, %v2038
        %v2040 = vpop.f32.mrf.mxu0
        %2041 = vdwg.mxu0
        %vm2042 = vcmp.gt.f32.partialorder %v2004, 0.0
        %vm2043 = vcmp.gt.f32.partialorder %v2009, 0.0
        %vm2044 = vcmp.gt.f32.partialorder %v2014, 0.0
        %vm2045 = vcmp.gt.f32.partialorder %v2019, 0.0
        %vm2046 = vcmp.gt.f32.partialorder %v2024, 0.0
        %vm2047 = vcmp.gt.f32.partialorder %v2029, 0.0
        %vm2048 = vcmp.gt.f32.partialorder %v2034, 0.0
        %vm2049 = vcmp.gt.f32.partialorder %v2039, 0.0
        %v2050 = vmul.f32 %v2004, 1.442695
        %v2051 = vpow.pop %v2050
        %v2052 = vmul.f32 %v2009, 1.442695
        %v2053 = vpow.pop %v2052
        %v2054 = vmul.f32 %v2014, 1.442695
        %v2055 = vpow.pop %v2054
        %v2056 = vmul.f32 %v2019, 1.442695
        %v2057 = vpow.pop %v2056
        %v2058 = vmul.f32 %v2024, 1.442695
        %v2059 = vpow.pop %v2058
        %v2060 = vmul.f32 %v2029, 1.442695
        %v2061 = vpow.pop %v2060
        %v2062 = vmul.f32 %v2034, 1.442695
        %v2063 = vpow.pop %v2062
        %v2064 = vmul.f32 %v2039, 1.442695
        %v2065 = vpow.pop %v2064
        %v2066 = vsub.f32 %v2051, 1.0
        %v2067 = vsub.f32 %v2053, 1.0
        %v2068 = vsub.f32 %v2055, 1.0
        %v2069 = vsub.f32 %v2057, 1.0
        %v2070 = vsub.f32 %v2059, 1.0
        %v2071 = vsub.f32 %v2061, 1.0
        %v2072 = vsub.f32 %v2063, 1.0
        %v2073 = vsub.f32 %v2065, 1.0
        %v2074 = vsel %vm2042, %v2004, %v2066
        %v2075 = vsel %vm2043, %v2009, %v2067
        %v2076 = vsel %vm2044, %v2014, %v2068
        %v2077 = vsel %vm2045, %v2019, %v2069
        %v2078 = vsel %vm2046, %v2024, %v2070
        %v2079 = vsel %vm2047, %v2029, %v2071
        %v2080 = vsel %vm2048, %v2034, %v2072
        %v2081 = vsel %vm2049, %v2039, %v2073
        %2090 = vrot.lane.b32.xlu0 %v1264, 64
        %v2091 = vpop.permute.xlu0 %2090
        %2092 = vrot.lane.b32.xlu0 %v1265, 64
        %v2093 = vpop.permute.xlu0 %2092
        %2094 = vrot.lane.b32.xlu0 %v1266, 64
        %v2095 = vpop.permute.xlu0 %2094
        %2096 = vrot.lane.b32.xlu0 %v1267, 64
        %v2097 = vpop.permute.xlu0 %2096
        %2098 = vrot.lane.b32.xlu0 %v1268, 64
        %v2099 = vpop.permute.xlu0 %2098
        %2100 = vrot.lane.b32.xlu0 %v1269, 64
        %v2101 = vpop.permute.xlu0 %2100
        %2102 = vrot.lane.b32.xlu0 %v1270, 64
        %v2103 = vpop.permute.xlu0 %2102
        %2104 = vrot.lane.b32.xlu0 %v1271, 64
        %v2105 = vpop.permute.xlu0 %2104
        %2122 = vrot.lane.b32.xlu0 %v2074, 64
        %v2123 = vpop.permute.xlu0 %2122
        %2124 = vrot.lane.b32.xlu0 %v2075, 64
        %v2125 = vpop.permute.xlu0 %2124
        %2126 = vrot.lane.b32.xlu0 %v2076, 64
        %v2127 = vpop.permute.xlu0 %2126
        %2128 = vrot.lane.b32.xlu0 %v2077, 64
        %v2129 = vpop.permute.xlu0 %2128
        %2130 = vrot.lane.b32.xlu0 %v2078, 64
        %v2131 = vpop.permute.xlu0 %2130
        %2132 = vrot.lane.b32.xlu0 %v2079, 64
        %v2133 = vpop.permute.xlu0 %2132
        %2134 = vrot.lane.b32.xlu0 %v2080, 64
        %v2135 = vpop.permute.xlu0 %2134
        %2136 = vrot.lane.b32.xlu0 %v2081, 64
        %v2137 = vpop.permute.xlu0 %2136
        %v2146 = vsel %vm593, %v843, %v2091
        %v2147 = vsel %vm593, %v844, %v2093
        %v2148 = vsel %vm593, %v845, %v2095
        %v2149 = vsel %vm593, %v846, %v2097
        %v2150 = vsel %vm593, %v847, %v2099
        %v2151 = vsel %vm593, %v848, %v2101
        %v2152 = vsel %vm593, %v849, %v2103
        %v2153 = vsel %vm593, %v850, %v2105
        %v2154 = vsel %vm593, %v1653, %v2123
        %v2155 = vsel %vm593, %v1654, %v2125
        %v2156 = vsel %vm593, %v1655, %v2127
        %v2157 = vsel %vm593, %v1656, %v2129
        %v2158 = vsel %vm593, %v1657, %v2131
        %v2159 = vsel %vm593, %v1658, %v2133
        %v2160 = vsel %vm593, %v1659, %v2135
        %v2161 = vsel %vm593, %v1660, %v2137
        %2162 = vst [vmem:[%s159] sm:$0xff] %v2146
        %2163 = vst [vmem:[%s159 + $0x8] sm:$0xff] %v2154
        %2164 = vst [vmem:[%s159 + $0x10] sm:$0xff] %v2147
        %2165 = vst [vmem:[%s159 + $0x18] sm:$0xff] %v2155
        %2166 = vst [vmem:[%s159 + $0x20] sm:$0xff] %v2148
        %2167 = vst [vmem:[%s159 + $0x28] sm:$0xff] %v2156
        %2168 = vst [vmem:[%s159 + $0x30] sm:$0xff] %v2149
        %2169 = vst [vmem:[%s159 + $0x38] sm:$0xff] %v2157
        %2170 = vst [vmem:[%s159 + $0x40] sm:$0xff] %v2150
        %2171 = vst [vmem:[%s159 + $0x48] sm:$0xff] %v2158
        %2172 = vst [vmem:[%s159 + $0x50] sm:$0xff] %v2151
        %2173 = vst [vmem:[%s159 + $0x58] sm:$0xff] %v2159
        %2174 = vst [vmem:[%s159 + $0x60] sm:$0xff] %v2152
        %2175 = vst [vmem:[%s159 + $0x68] sm:$0xff] %v2160
        %2176 = vst [vmem:[%s159 + $0x70] sm:$0xff] %v2153
        %2177 = vst [vmem:[%s159 + $0x78] sm:$0xff] %v2161
        %s2178 = sand.u32 %s90, 1
        %s2179 = sand.u32 %s90, 1
        %s2180 = smul.addr %s2179, 128
        %s2181 = scalar_lea.vmem [#allocation2], %s2180
        // Predicated region
        $region33: #{holomol_forward.5} parent=31 // pred_check
          %p2182 = pneg %p100
        $region34: #{holomol_forward.5} parent=31 // pred_check_branch
          %2184 = sbr.rel (%p2182) target = $region36
        $region35: #{holomol_forward.5} parent=31 // pred_region
          %s2185 = smul.u32 2, %s14
          %s2186 = smul.addr %s2185, 8
          %s2187 = scalar_lea.vmem %s3, %s2186
          // Predicated region
          $region37: #{holomol_forward.5} parent=35 // pred_check
            _
          $region38: #{holomol_forward.5} parent=35 // pred_check_branch
            %2189 = sbr.rel (0) target = $region40
          $region39: #{holomol_forward.5} parent=35 // pred_region
            // Predicated region
            $region41: #{holomol_forward.5} parent=39 // pred_check
              _
            $region42: #{holomol_forward.5} parent=39 // pred_check_branch
              %2191 = sbr.rel (0) target = $region44
            $region43: #{holomol_forward.5} parent=39 // pred_region
              loop: start=0, step=1, limit=1
              $region45: #{holomol_forward.5} parent=43 // loop_pre_header
                _
              $region46: #{holomol_forward.5} parent=43 // loop_header
                %s2193 = sphi 0, %s2197
                %p2194 = scmp.ge.s32.totalorder %s2193, 1
                %s2198 = sphi %s2181, %s2181
                %s2199 = sphi %s2187, %s2187
              $region47: #{holomol_forward.5} parent=43 // loop_header_branch
                %2196 = sbr.rel (%p2194) target = $region51
              $region48: #{holomol_forward.5} parent=43 // loop_body
                %v2200 = vld [vmem:[%s2198] sm:$0xff]
                %2201 = vst [vmem:[%s2199] sm:$0xff] %v2200
                %v2202 = vld [vmem:[%s2198 + $0x8] sm:$0xff]
                %2203 = vst [vmem:[%s2199 + $0x8] sm:$0xff] %v2202
                %v2204 = vld [vmem:[%s2198 + $0x10] sm:$0xff]
                %2205 = vst [vmem:[%s2199 + $0x20] sm:$0xff] %v2204
                %v2206 = vld [vmem:[%s2198 + $0x18] sm:$0xff]
                %2207 = vst [vmem:[%s2199 + $0x28] sm:$0xff] %v2206
                %v2208 = vld [vmem:[%s2198 + $0x20] sm:$0xff]
                %2209 = vst [vmem:[%s2199 + $0x40] sm:$0xff] %v2208
                %v2210 = vld [vmem:[%s2198 + $0x28] sm:$0xff]
                %2211 = vst [vmem:[%s2199 + $0x48] sm:$0xff] %v2210
                %v2212 = vld [vmem:[%s2198 + $0x30] sm:$0xff]
                %2213 = vst [vmem:[%s2199 + $0x60] sm:$0xff] %v2212
                %v2214 = vld [vmem:[%s2198 + $0x38] sm:$0xff]
                %2215 = vst [vmem:[%s2199 + $0x68] sm:$0xff] %v2214
                %v2216 = vld [vmem:[%s2198 + $0x40] sm:$0xff]
                %2217 = vst [vmem:[%s2199 + $0x80] sm:$0xff] %v2216
                %v2218 = vld [vmem:[%s2198 + $0x48] sm:$0xff]
                %2219 = vst [vmem:[%s2199 + $0x88] sm:$0xff] %v2218
                %v2220 = vld [vmem:[%s2198 + $0x50] sm:$0xff]
                %2221 = vst [vmem:[%s2199 + $0xa0] sm:$0xff] %v2220
                %v2222 = vld [vmem:[%s2198 + $0x58] sm:$0xff]
                %2223 = vst [vmem:[%s2199 + $0xa8] sm:$0xff] %v2222
                %v2224 = vld [vmem:[%s2198 + $0x60] sm:$0xff]
                %2225 = vst [vmem:[%s2199 + $0xc0] sm:$0xff] %v2224
                %v2226 = vld [vmem:[%s2198 + $0x68] sm:$0xff]
                %2227 = vst [vmem:[%s2199 + $0xc8] sm:$0xff] %v2226
                %v2228 = vld [vmem:[%s2198 + $0x70] sm:$0xff]
                %2229 = vst [vmem:[%s2199 + $0xe0] sm:$0xff] %v2228
                %v2230 = vld [vmem:[%s2198 + $0x78] sm:$0xff]
                %2231 = vst [vmem:[%s2199 + $0xe8] sm:$0xff] %v2230
              $region49: #{holomol_forward.5} parent=43 // loop_footer
                %s2197 = sadd.s32 1, %s2193
              $region50: #{holomol_forward.5} parent=43 // loop_footer_branch
                %2192 = sbr.rel target = $region46
              $region51: #{holomol_forward.5} parent=43 // loop_exit
                _
            $region44: #{holomol_forward.5} parent=39 // pred_fallthru
              _
            // Predicated region
            $region52: #{holomol_forward.5} parent=39 // pred_check
              _
            $region53: #{holomol_forward.5} parent=39 // pred_check_branch
              %2233 = sbr.rel target = $region55
            $region54: #{holomol_forward.5} parent=39 // pred_region
              _
            $region55: #{holomol_forward.5} parent=39 // pred_fallthru
              _
          $region40: #{holomol_forward.5} parent=35 // pred_fallthru
            _
          %2234 = vnop
        $region36: #{holomol_forward.5} parent=31 // pred_fallthru
          _
      $region32: #{holomol_forward.5} parent=5 // pred_fallthru
        _
      %p2235 = scmp.le.s32.totalorder 2, %s9
      // Predicated region
      $region56: #{holomol_forward.5} parent=5 // pred_check
        %p2236 = pneg %p2235
      $region57: #{holomol_forward.5} parent=5 // pred_check_branch
        %2238 = sbr.rel (%p2236) target = $region59
      $region58: #{holomol_forward.5} parent=5 // pred_region
        %s2239 = ssub.s32 %s9, 2
        // Predicated region
        $region60: #{holomol_forward.5} parent=58 // pred_check
          %p2240 = pneg %p106
        $region61: #{holomol_forward.5} parent=58 // pred_check_branch
          %2242 = sbr.rel (%p2240) target = $region63
        $region62: #{holomol_forward.5} parent=58 // pred_region
          %s2243 = sand.u32 %s91, 1
          %s2244 = sand.u32 %s91, 1
          %s2245 = smul.addr %s2244, 128
          %s2246 = scalar_lea.vmem [#allocation2], %s2245
        $region63: #{holomol_forward.5} parent=58 // pred_fallthru
          _
      $region59: #{holomol_forward.5} parent=5 // pred_fallthru
        _
    $region6: #{holomol_forward.5} parent=1 // loop_footer
      %s13 = sadd.s32 1, %s9
    $region7: #{holomol_forward.5} parent=1 // loop_footer_branch
      %8 = sbr.rel target = $region3
    $region8: #{holomol_forward.5} parent=1 // loop_exit
      _

// kernel: holomol_forward.6
$region0: #{holomol_forward.6}
  #allocation0 [shape = 'u32[]', space=smem, size = 0x4, offset = 0x4, fixed_abs, tag = 'smem constant byte address 0x4 - core index']
  #allocation1 [shape = 'u32[144,128]{1,0:T(1,128)}', space=vmem, size = 0x12000, scoped, tag = 'internal scratch']
  %s0 = inlined_call_operand.vmem [shape: f32[64,512], index: 0, kind: input, shape index: {}]
  %s1 = inlined_call_operand.vmem [shape: f32[1,512,66], index: 1, kind: input, shape index: {}]
  %s2 = inlined_call_operand.vmem [shape: f32[64,64], index: 2, kind: input, shape index: {}]
  %s3 = inlined_call_operand.vmem [shape: f32[64,64], index: 3, kind: output, shape index: {}]
  %s4 = sld [smem:[#allocation0]]
  $region22: #{holomol_forward.6} parent=0
    _
  %s6 = ssub.s32 1, %s4
  %s7 = scalar_select 0, %s6, %s4
  // Predicated region
  $region2: #{holomol_forward.6} parent=0 // pred_check
    _
  $region3: #{holomol_forward.6} parent=0 // pred_check_branch
    %9 = sbr.rel (0) target = $region5
  $region4: #{holomol_forward.6} parent=0 // pred_region
    _
  $region5: #{holomol_forward.6} parent=0 // pred_fallthru
    _
  // Predicated region
  $region6: #{holomol_forward.6} parent=0 // pred_check
    _
  $region7: #{holomol_forward.6} parent=0 // pred_check_branch
    %11 = sbr.rel (0) target = $region9
  $region8: #{holomol_forward.6} parent=0 // pred_region
    _
  $region9: #{holomol_forward.6} parent=0 // pred_fallthru
    _
  // Predicated region
  $region10: #{holomol_forward.6} parent=0 // pred_check
    _
  $region11: #{holomol_forward.6} parent=0 // pred_check_branch
    %13 = sbr.rel (0) target = $region13
  $region12: #{holomol_forward.6} parent=0 // pred_region
    _
  $region13: #{holomol_forward.6} parent=0 // pred_fallthru
    _
  %v14 = vld [vmem:[%s0] sm:$0xff]
  %v15 = vld [vmem:[%s0 + $0x8] sm:$0xff]
  %v16 = vld [vmem:[%s0 + $0x10] sm:$0xff]
  %v17 = vld [vmem:[%s0 + $0x18] sm:$0xff]
  %v18 = vld [vmem:[%s0 + $0x20] sm:$0xff]
  %v19 = vld [vmem:[%s0 + $0x28] sm:$0xff]
  %v20 = vld [vmem:[%s0 + $0x30] sm:$0xff]
  %v21 = vld [vmem:[%s0 + $0x38] sm:$0xff]
  %v22 = vld [vmem:[%s0 + $0x40] sm:$0xff]
  %v23 = vld [vmem:[%s0 + $0x48] sm:$0xff]
  %v24 = vld [vmem:[%s0 + $0x50] sm:$0xff]
  %v25 = vld [vmem:[%s0 + $0x58] sm:$0xff]
  %v26 = vld [vmem:[%s0 + $0x60] sm:$0xff]
  %v27 = vld [vmem:[%s0 + $0x68] sm:$0xff]
  %v28 = vld [vmem:[%s0 + $0x70] sm:$0xff]
  %v29 = vld [vmem:[%s0 + $0x78] sm:$0xff]
  %v30 = vld [vmem:[%s0 + $0x80] sm:$0xff]
  %v31 = vld [vmem:[%s0 + $0x88] sm:$0xff]
  %v32 = vld [vmem:[%s0 + $0x90] sm:$0xff]
  %v33 = vld [vmem:[%s0 + $0x98] sm:$0xff]
  %v34 = vld [vmem:[%s0 + $0xa0] sm:$0xff]
  %v35 = vld [vmem:[%s0 + $0xa8] sm:$0xff]
  %v36 = vld [vmem:[%s0 + $0xb0] sm:$0xff]
  %v37 = vld [vmem:[%s0 + $0xb8] sm:$0xff]
  %v38 = vld [vmem:[%s0 + $0xc0] sm:$0xff]
  %v39 = vld [vmem:[%s0 + $0xc8] sm:$0xff]
  %v40 = vld [vmem:[%s0 + $0xd0] sm:$0xff]
  %v41 = vld [vmem:[%s0 + $0xd8] sm:$0xff]
  %v42 = vld [vmem:[%s0 + $0xe0] sm:$0xff]
  %v43 = vld [vmem:[%s0 + $0xe8] sm:$0xff]
  %v44 = vld [vmem:[%s0 + $0xf0] sm:$0xff]
  %v45 = vld [vmem:[%s0 + $0xf8] sm:$0xff]
  %v46 = vld [vmem:[%s1] sm:$0xff]
  %v47 = vld [vmem:[%s1 + $0x8] sm:$0xff]
  %v48 = vld [vmem:[%s1 + $0x10] sm:$0xff]
  %v49 = vld [vmem:[%s1 + $0x18] sm:$0xff]
  %v50 = vld [vmem:[%s1 + $0x20] sm:$0xff]
  %v51 = vld [vmem:[%s1 + $0x28] sm:$0xff]
  %v52 = vld [vmem:[%s1 + $0x30] sm:$0xff]
  %v53 = vld [vmem:[%s1 + $0x38] sm:$0xff]
  %v54 = vld [vmem:[%s1 + $0x40] sm:$0xff]
  %v55 = vld [vmem:[%s1 + $0x48] sm:$0xff]
  %v56 = vld [vmem:[%s1 + $0x50] sm:$0xff]
  %v57 = vld [vmem:[%s1 + $0x58] sm:$0xff]
  %v58 = vld [vmem:[%s1 + $0x60] sm:$0xff]
  %v59 = vld [vmem:[%s1 + $0x68] sm:$0xff]
  %v60 = vld [vmem:[%s1 + $0x70] sm:$0xff]
  %v61 = vld [vmem:[%s1 + $0x78] sm:$0xff]
  %v62 = vld [vmem:[%s1 + $0x80] sm:$0xff]
  %v63 = vld [vmem:[%s1 + $0x88] sm:$0xff]
  %v64 = vld [vmem:[%s1 + $0x90] sm:$0xff]
  %v65 = vld [vmem:[%s1 + $0x98] sm:$0xff]
  %v66 = vld [vmem:[%s1 + $0xa0] sm:$0xff]
  %v67 = vld [vmem:[%s1 + $0xa8] sm:$0xff]
  %v68 = vld [vmem:[%s1 + $0xb0] sm:$0xff]
  %v69 = vld [vmem:[%s1 + $0xb8] sm:$0xff]
  %v70 = vld [vmem:[%s1 + $0xc0] sm:$0xff]
  %v71 = vld [vmem:[%s1 + $0xc8] sm:$0xff]
  %v72 = vld [vmem:[%s1 + $0xd0] sm:$0xff]
  %v73 = vld [vmem:[%s1 + $0xd8] sm:$0xff]
  %v74 = vld [vmem:[%s1 + $0xe0] sm:$0xff]
  %v75 = vld [vmem:[%s1 + $0xe8] sm:$0xff]
  %v76 = vld [vmem:[%s1 + $0xf0] sm:$0xff]
  %v77 = vld [vmem:[%s1 + $0xf8] sm:$0xff]
  %v78 = vld [vmem:[%s1 + $0x100] sm:$0xff]
  %v79 = vld [vmem:[%s1 + $0x108] sm:$0xff]
  %v80 = vld [vmem:[%s1 + $0x110] sm:$0xff]
  %v81 = vld [vmem:[%s1 + $0x118] sm:$0xff]
  %v82 = vld [vmem:[%s1 + $0x120] sm:$0xff]
  %v83 = vld [vmem:[%s1 + $0x128] sm:$0xff]
  %v84 = vld [vmem:[%s1 + $0x130] sm:$0xff]
  %v85 = vld [vmem:[%s1 + $0x138] sm:$0xff]
  %v86 = vld [vmem:[%s1 + $0x140] sm:$0xff]
  %v87 = vld [vmem:[%s1 + $0x148] sm:$0xff]
  %v88 = vld [vmem:[%s1 + $0x150] sm:$0xff]
  %v89 = vld [vmem:[%s1 + $0x158] sm:$0xff]
  %v90 = vld [vmem:[%s1 + $0x160] sm:$0xff]
  %v91 = vld [vmem:[%s1 + $0x168] sm:$0xff]
  %v92 = vld [vmem:[%s1 + $0x170] sm:$0xff]
  %v93 = vld [vmem:[%s1 + $0x178] sm:$0xff]
  %v94 = vld [vmem:[%s1 + $0x180] sm:$0xff]
  %v95 = vld [vmem:[%s1 + $0x188] sm:$0xff]
  %v96 = vld [vmem:[%s1 + $0x190] sm:$0xff]
  %v97 = vld [vmem:[%s1 + $0x198] sm:$0xff]
  %v98 = vld [vmem:[%s1 + $0x1a0] sm:$0xff]
  %v99 = vld [vmem:[%s1 + $0x1a8] sm:$0xff]
  %v100 = vld [vmem:[%s1 + $0x1b0] sm:$0xff]
  %v101 = vld [vmem:[%s1 + $0x1b8] sm:$0xff]
  %v102 = vld [vmem:[%s1 + $0x1c0] sm:$0xff]
  %v103 = vld [vmem:[%s1 + $0x1c8] sm:$0xff]
  %v104 = vld [vmem:[%s1 + $0x1d0] sm:$0xff]
  %v105 = vld [vmem:[%s1 + $0x1d8] sm:$0xff]
  %v106 = vld [vmem:[%s1 + $0x1e0] sm:$0xff]
  %v107 = vld [vmem:[%s1 + $0x1e8] sm:$0xff]
  %v108 = vld [vmem:[%s1 + $0x1f0] sm:$0xff]
  %v109 = vld [vmem:[%s1 + $0x1f8] sm:$0xff]
  %v110 = vld [vmem:[%s2] sm:$0xff]
  %v111 = vld [vmem:[%s2 + $0x8] sm:$0xff]
  %v112 = vld [vmem:[%s2 + $0x10] sm:$0xff]
  %v113 = vld [vmem:[%s2 + $0x18] sm:$0xff]
  %v114 = vld [vmem:[%s2 + $0x20] sm:$0xff]
  %v115 = vld [vmem:[%s2 + $0x28] sm:$0xff]
  %v116 = vld [vmem:[%s2 + $0x30] sm:$0xff]
  %v117 = vld [vmem:[%s2 + $0x38] sm:$0xff]
  %118 = vmatprep.subr.mxu0 0.0
  %119 = vmatpush1.msra.mxu0 %v61
  %120 = vmatprep.subr.mxu0 0.0
  %121 = vmatpush1.msra.mxu0 %v60
  %122 = vmatprep.subr.mxu0 0.0
  %123 = vmatpush1.msra.mxu0 %v59
  %124 = vmatprep.subr.mxu0 0.0
  %125 = vmatpush1.msra.mxu0 %v58
  %126 = vmatprep.subr.mxu0 0.0
  %127 = vmatpush1.msra.mxu0 %v57
  %128 = vmatprep.subr.mxu0 0.0
  %129 = vmatpush1.msra.mxu0 %v56
  %130 = vmatprep.subr.mxu0 0.0
  %131 = vmatpush1.msra.mxu0 %v55
  %132 = vmatprep.subr.mxu0 0.0
  %133 = vmatpush1.msra.mxu0 %v54
  %134 = vmatprep.subr.mxu0 0.0
  %135 = vmatpush1.msra.mxu0 %v53
  %136 = vmatprep.subr.mxu0 0.0
  %137 = vmatpush1.msra.mxu0 %v52
  %138 = vmatprep.subr.mxu0 0.0
  %139 = vmatpush1.msra.mxu0 %v51
  %140 = vmatprep.subr.mxu0 0.0
  %141 = vmatpush1.msra.mxu0 %v50
  %142 = vmatprep.subr.mxu0 0.0
  %143 = vmatpush1.msra.mxu0 %v49
  %144 = vmatprep.subr.mxu0 0.0
  %145 = vmatpush1.msra.mxu0 %v48
  %146 = vmatprep.subr.mxu0 0.0
  %147 = vmatpush1.msra.mxu0 %v47
  %148 = vmatprep.subr.mxu0 0.0
  %149 = vmatpush1.msra.mxu0 %v46
  %150 = vmatprep.subr.mxu0 0.0
  %151 = vmatpush2.msra.mxu0 %v77
  %152 = vmatprep.subr.mxu0 0.0
  %153 = vmatpush2.msra.mxu0 %v76
  %154 = vmatprep.subr.mxu0 0.0
  %155 = vmatpush2.msra.mxu0 %v75
  %156 = vmatprep.subr.mxu0 0.0
  %157 = vmatpush2.msra.mxu0 %v74
  %158 = vmatprep.subr.mxu0 0.0
  %159 = vmatpush2.msra.mxu0 %v73
  %160 = vmatprep.subr.mxu0 0.0
  %161 = vmatpush2.msra.mxu0 %v72
  %162 = vmatprep.subr.mxu0 0.0
  %163 = vmatpush2.msra.mxu0 %v71
  %164 = vmatprep.subr.mxu0 0.0
  %165 = vmatpush2.msra.mxu0 %v70
  %166 = vmatprep.subr.mxu0 0.0
  %167 = vmatpush2.msra.mxu0 %v69
  %168 = vmatprep.subr.mxu0 0.0
  %169 = vmatpush2.msra.mxu0 %v68
  %170 = vmatprep.subr.mxu0 0.0
  %171 = vmatpush2.msra.mxu0 %v67
  %172 = vmatprep.subr.mxu0 0.0
  %173 = vmatpush2.msra.mxu0 %v66
  %174 = vmatprep.subr.mxu0 0.0
  %175 = vmatpush2.msra.mxu0 %v65
  %176 = vmatprep.subr.mxu0 0.0
  %177 = vmatpush2.msra.mxu0 %v64
  %178 = vmatprep.subr.mxu0 0.0
  %179 = vmatpush2.msra.mxu0 %v63
  %180 = vmatprep.subr.mxu0 0.0
  %181 = vmatpush2.msra.mxu0 %v62
  %182 = vmatprep.mubr.f32.mxu0 %v15
  %183 = vmatmul.mubr.f32.gmra.mxu0 %v14
  %v184 = vpop.f32.mrf.mxu0
  %v185 = vadd.f32 0.0, %v184
  %v186 = vpop.f32.mrf.mxu0
  %187 = vmatprep.mubr.f32.mxu0 %v19
  %188 = vmatmul.mubr.f32.gmra.mxu0 %v18
  %v189 = vpop.f32.mrf.mxu0
  %v190 = vadd.f32 0.0, %v189
  %v191 = vpop.f32.mrf.mxu0
  %192 = vmatprep.mubr.f32.mxu0 %v23
  %193 = vmatmul.mubr.f32.gmra.mxu0 %v22
  %v194 = vpop.f32.mrf.mxu0
  %v195 = vadd.f32 0.0, %v194
  %v196 = vpop.f32.mrf.mxu0
  %197 = vmatprep.mubr.f32.mxu0 %v27
  %198 = vmatmul.mubr.f32.gmra.mxu0 %v26
  %v199 = vpop.f32.mrf.mxu0
  %v200 = vadd.f32 0.0, %v199
  %v201 = vpop.f32.mrf.mxu0
  %202 = vmatprep.mubr.f32.mxu0 %v31
  %203 = vmatmul.mubr.f32.gmra.mxu0 %v30
  %v204 = vpop.f32.mrf.mxu0
  %v205 = vadd.f32 0.0, %v204
  %v206 = vpop.f32.mrf.mxu0
  %207 = vmatprep.mubr.f32.mxu0 %v35
  %208 = vmatmul.mubr.f32.gmra.mxu0 %v34
  %v209 = vpop.f32.mrf.mxu0
  %v210 = vadd.f32 0.0, %v209
  %v211 = vpop.f32.mrf.mxu0
  %212 = vmatprep.mubr.f32.mxu0 %v39
  %213 = vmatmul.mubr.f32.gmra.mxu0 %v38
  %v214 = vpop.f32.mrf.mxu0
  %v215 = vadd.f32 0.0, %v214
  %v216 = vpop.f32.mrf.mxu0
  %217 = vmatprep.mubr.f32.mxu0 %v43
  %218 = vmatmul.mubr.f32.gmra.mxu0 %v42
  %v219 = vpop.f32.mrf.mxu0
  %v220 = vadd.f32 0.0, %v219
  %v221 = vpop.f32.mrf.mxu0
  %222 = vdwg.mxu0
  %223 = vmatprep.subr.mxu0 0.0
  %224 = vmatpush1.msra.mxu0 %v93
  %225 = vmatprep.subr.mxu0 0.0
  %226 = vmatpush1.msra.mxu0 %v92
  %227 = vmatprep.subr.mxu0 0.0
  %228 = vmatpush1.msra.mxu0 %v91
  %229 = vmatprep.subr.mxu0 0.0
  %230 = vmatpush1.msra.mxu0 %v90
  %231 = vmatprep.subr.mxu0 0.0
  %232 = vmatpush1.msra.mxu0 %v89
  %233 = vmatprep.subr.mxu0 0.0
  %234 = vmatpush1.msra.mxu0 %v88
  %235 = vmatprep.subr.mxu0 0.0
  %236 = vmatpush1.msra.mxu0 %v87
  %237 = vmatprep.subr.mxu0 0.0
  %238 = vmatpush1.msra.mxu0 %v86
  %239 = vmatprep.subr.mxu0 0.0
  %240 = vmatpush1.msra.mxu0 %v85
  %241 = vmatprep.subr.mxu0 0.0
  %242 = vmatpush1.msra.mxu0 %v84
  %243 = vmatprep.subr.mxu0 0.0
  %244 = vmatpush1.msra.mxu0 %v83
  %245 = vmatprep.subr.mxu0 0.0
  %246 = vmatpush1.msra.mxu0 %v82
  %247 = vmatprep.subr.mxu0 0.0
  %248 = vmatpush1.msra.mxu0 %v81
  %249 = vmatprep.subr.mxu0 0.0
  %250 = vmatpush1.msra.mxu0 %v80
  %251 = vmatprep.subr.mxu0 0.0
  %252 = vmatpush1.msra.mxu0 %v79
  %253 = vmatprep.subr.mxu0 0.0
  %254 = vmatpush1.msra.mxu0 %v78
  %255 = vmatprep.subr.mxu0 0.0
  %256 = vmatpush2.msra.mxu0 %v109
  %257 = vmatprep.subr.mxu0 0.0
  %258 = vmatpush2.msra.mxu0 %v108
  %259 = vmatprep.subr.mxu0 0.0
  %260 = vmatpush2.msra.mxu0 %v107
  %261 = vmatprep.subr.mxu0 0.0
  %262 = vmatpush2.msra.mxu0 %v106
  %263 = vmatprep.subr.mxu0 0.0
  %264 = vmatpush2.msra.mxu0 %v105
  %265 = vmatprep.subr.mxu0 0.0
  %266 = vmatpush2.msra.mxu0 %v104
  %267 = vmatprep.subr.mxu0 0.0
  %268 = vmatpush2.msra.mxu0 %v103
  %269 = vmatprep.subr.mxu0 0.0
  %270 = vmatpush2.msra.mxu0 %v102
  %271 = vmatprep.subr.mxu0 0.0
  %272 = vmatpush2.msra.mxu0 %v101
  %273 = vmatprep.subr.mxu0 0.0
  %274 = vmatpush2.msra.mxu0 %v100
  %275 = vmatprep.subr.mxu0 0.0
  %276 = vmatpush2.msra.mxu0 %v99
  %277 = vmatprep.subr.mxu0 0.0
  %278 = vmatpush2.msra.mxu0 %v98
  %279 = vmatprep.subr.mxu0 0.0
  %280 = vmatpush2.msra.mxu0 %v97
  %281 = vmatprep.subr.mxu0 0.0
  %282 = vmatpush2.msra.mxu0 %v96
  %283 = vmatprep.subr.mxu0 0.0
  %284 = vmatpush2.msra.mxu0 %v95
  %285 = vmatprep.subr.mxu0 0.0
  %286 = vmatpush2.msra.mxu0 %v94
  %287 = vmatprep.mubr.f32.mxu0 %v17
  %288 = vmatmul.mubr.f32.gmra.mxu0 %v16
  %v289 = vpop.f32.mrf.mxu0
  %v290 = vadd.f32 %v185, %v289
  %v291 = vpop.f32.mrf.mxu0
  %292 = vmatprep.mubr.f32.mxu0 %v21
  %293 = vmatmul.mubr.f32.gmra.mxu0 %v20
  %v294 = vpop.f32.mrf.mxu0
  %v295 = vadd.f32 %v190, %v294
  %v296 = vpop.f32.mrf.mxu0
  %297 = vmatprep.mubr.f32.mxu0 %v25
  %298 = vmatmul.mubr.f32.gmra.mxu0 %v24
  %v299 = vpop.f32.mrf.mxu0
  %v300 = vadd.f32 %v195, %v299
  %v301 = vpop.f32.mrf.mxu0
  %302 = vmatprep.mubr.f32.mxu0 %v29
  %303 = vmatmul.mubr.f32.gmra.mxu0 %v28
  %v304 = vpop.f32.mrf.mxu0
  %v305 = vadd.f32 %v200, %v304
  %v306 = vpop.f32.mrf.mxu0
  %307 = vmatprep.mubr.f32.mxu0 %v33
  %308 = vmatmul.mubr.f32.gmra.mxu0 %v32
  %v309 = vpop.f32.mrf.mxu0
  %v310 = vadd.f32 %v205, %v309
  %v311 = vpop.f32.mrf.mxu0
  %312 = vmatprep.mubr.f32.mxu0 %v37
  %313 = vmatmul.mubr.f32.gmra.mxu0 %v36
  %v314 = vpop.f32.mrf.mxu0
  %v315 = vadd.f32 %v210, %v314
  %v316 = vpop.f32.mrf.mxu0
  %317 = vmatprep.mubr.f32.mxu0 %v41
  %318 = vmatmul.mubr.f32.gmra.mxu0 %v40
  %v319 = vpop.f32.mrf.mxu0
  %v320 = vadd.f32 %v215, %v319
  %v321 = vpop.f32.mrf.mxu0
  %322 = vmatprep.mubr.f32.mxu0 %v45
  %323 = vmatmul.mubr.f32.gmra.mxu0 %v44
  %v324 = vpop.f32.mrf.mxu0
  %v325 = vadd.f32 %v220, %v324
  %v326 = vpop.f32.mrf.mxu0
  %327 = vdwg.mxu0
  %v328 = vsub.f32 %v110, 1.0
  %v329 = vsub.f32 %v111, 1.0
  %v330 = vsub.f32 %v112, 1.0
  %v331 = vsub.f32 %v113, 1.0
  %v332 = vsub.f32 %v114, 1.0
  %v333 = vsub.f32 %v115, 1.0
  %v334 = vsub.f32 %v116, 1.0
  %v335 = vsub.f32 %v117, 1.0
  %v336 = vmul.f32 %v328, 9e+15
  %v337 = vmul.f32 %v329, 9e+15
  %v338 = vmul.f32 %v330, 9e+15
  %v339 = vmul.f32 %v331, 9e+15
  %v340 = vmul.f32 %v332, 9e+15
  %v341 = vmul.f32 %v333, 9e+15
  %v342 = vmul.f32 %v334, 9e+15
  %v343 = vmul.f32 %v335, 9e+15
  %352 = vrot.lane.b32.xlu0 %v290, 63
  %v353 = vpop.permute.xlu0 %352
  %354 = vrot.lane.b32.xlu0 %v295, 63
  %v355 = vpop.permute.xlu0 %354
  %356 = vrot.lane.b32.xlu0 %v300, 63
  %v357 = vpop.permute.xlu0 %356
  %358 = vrot.lane.b32.xlu0 %v305, 63
  %v359 = vpop.permute.xlu0 %358
  %360 = vrot.lane.b32.xlu0 %v310, 63
  %v361 = vpop.permute.xlu0 %360
  %362 = vrot.lane.b32.xlu0 %v315, 63
  %v363 = vpop.permute.xlu0 %362
  %364 = vrot.lane.b32.xlu0 %v320, 63
  %v365 = vpop.permute.xlu0 %364
  %366 = vrot.lane.b32.xlu0 %v325, 63
  %v367 = vpop.permute.xlu0 %366
  %376 = vxpose.xlu0.b32.start [1/16] %v353, 128
  %377 = vxpose.xlu0.b32.cont [2/16] %v355, 128
  %378 = vxpose.xlu0.b32.cont [3/16] %v357, 128
  %379 = vxpose.xlu0.b32.cont [4/16] %v359, 128
  %380 = vxpose.xlu0.b32.cont [5/16] %v361, 128
  %381 = vxpose.xlu0.b32.cont [6/16] %v363, 128
  %382 = vxpose.xlu0.b32.cont [7/16] %v365, 128
  %383 = vxpose.xlu0.b32.cont [8/16] %v367, 128
  %384 = vxpose.xlu0.b32.cont [9/16] 0.0, 128
  %385 = vxpose.xlu0.b32.cont [10/16] 0.0, 128
  %386 = vxpose.xlu0.b32.cont [11/16] 0.0, 128
  %387 = vxpose.xlu0.b32.cont [12/16] 0.0, 128
  %388 = vxpose.xlu0.b32.cont [13/16] 0.0, 128
  %389 = vxpose.xlu0.b32.cont [14/16] 0.0, 128
  %390 = vxpose.xlu0.b32.cont [15/16] 0.0, 128
  %391 = vxpose.xlu0.b32.end [16/16] 0.0, 128
  %v392 = vpop.trf.xlu0
  %v393 = vpop.trf.xlu0
  %v394 = vpop.trf.xlu0
  %v395 = vpop.trf.xlu0
  %v396 = vpop.trf.xlu0
  %v397 = vpop.trf.xlu0
  %v398 = vpop.trf.xlu0
  %v399 = vpop.trf.xlu0
  %v400 = vpop.trf.xlu0
  %v401 = vpop.trf.xlu0
  %v402 = vpop.trf.xlu0
  %v403 = vpop.trf.xlu0
  %v404 = vpop.trf.xlu0
  %v405 = vpop.trf.xlu0
  %v406 = vpop.trf.xlu0
  %v407 = vpop.trf.xlu0
  %408 = vset.pattern.permute.xlu0 64
  %409 = vperm.xlu0 %408, %v290
  %v410 = vpop.permute.xlu0 %409
  %412 = vset.pattern.permute.xlu0 64
  %413 = vperm.xlu0 %412, %v295
  %v414 = vpop.permute.xlu0 %413
  %416 = vset.pattern.permute.xlu0 64
  %417 = vperm.xlu0 %416, %v300
  %v418 = vpop.permute.xlu0 %417
  %420 = vset.pattern.permute.xlu0 64
  %421 = vperm.xlu0 %420, %v305
  %v422 = vpop.permute.xlu0 %421
  %424 = vset.pattern.permute.xlu0 64
  %425 = vperm.xlu0 %424, %v310
  %v426 = vpop.permute.xlu0 %425
  %428 = vset.pattern.permute.xlu0 64
  %429 = vperm.xlu0 %428, %v315
  %v430 = vpop.permute.xlu0 %429
  %432 = vset.pattern.permute.xlu0 64
  %433 = vperm.xlu0 %432, %v320
  %v434 = vpop.permute.xlu0 %433
  %436 = vset.pattern.permute.xlu0 64
  %437 = vperm.xlu0 %436, %v325
  %v438 = vpop.permute.xlu0 %437
  %v440 = vlaneseq
  %v441 = vshrl.u32 %v440, 7
  %v442 = vsub.s32 0, %v441
  %v443 = vrot.slane %v392, %v442
  %v444 = vadd.f32 %v410, %v443
  %v445 = vadd.f32 %v414, %v443
  %v446 = vadd.f32 %v418, %v443
  %v447 = vadd.f32 %v422, %v443
  %v448 = vadd.f32 %v426, %v443
  %v449 = vadd.f32 %v430, %v443
  %v450 = vadd.f32 %v434, %v443
  %v451 = vadd.f32 %v438, %v443
  %vm452 = vcmp.gt.f32.partialorder %v444, 0.0
  %vm453 = vcmp.gt.f32.partialorder %v445, 0.0
  %vm454 = vcmp.gt.f32.partialorder %v446, 0.0
  %vm455 = vcmp.gt.f32.partialorder %v447, 0.0
  %vm456 = vcmp.gt.f32.partialorder %v448, 0.0
  %vm457 = vcmp.gt.f32.partialorder %v449, 0.0
  %vm458 = vcmp.gt.f32.partialorder %v450, 0.0
  %vm459 = vcmp.gt.f32.partialorder %v451, 0.0
  %v460 = vmul.f32 %v444, 0.2
  %v461 = vmul.f32 %v445, 0.2
  %v462 = vmul.f32 %v446, 0.2
  %v463 = vmul.f32 %v447, 0.2
  %v464 = vmul.f32 %v448, 0.2
  %v465 = vmul.f32 %v449, 0.2
  %v466 = vmul.f32 %v450, 0.2
  %v467 = vmul.f32 %v451, 0.2
  %v468 = vsel %vm452, %v444, %v460
  %v469 = vsel %vm453, %v445, %v461
  %v470 = vsel %vm454, %v446, %v462
  %v471 = vsel %vm455, %v447, %v463
  %v472 = vsel %vm456, %v448, %v464
  %v473 = vsel %vm457, %v449, %v465
  %v474 = vsel %vm458, %v450, %v466
  %v475 = vsel %vm459, %v451, %v467
  %v476 = vadd.f32 %v468, %v336
  %v477 = vadd.f32 %v469, %v337
  %v478 = vadd.f32 %v470, %v338
  %v479 = vadd.f32 %v471, %v339
  %v480 = vadd.f32 %v472, %v340
  %v481 = vadd.f32 %v473, %v341
  %v482 = vadd.f32 %v474, %v342
  %v483 = vadd.f32 %v475, %v343
  %vm484 = vcmask 523264
  %v485 = vsel %vm484, %v476, -inf
  %486 = vmax.xlane.f32.xlu0 %v485
  %v487 = vpop.xlane.xlu0 %486
  %v488 = vsel %vm484, %v477, -inf
  %489 = vmax.xlane.f32.xlu0 %v488
  %v490 = vpop.xlane.xlu0 %489
  %v491 = vsel %vm484, %v478, -inf
  %492 = vmax.xlane.f32.xlu0 %v491
  %v493 = vpop.xlane.xlu0 %492
  %v494 = vsel %vm484, %v479, -inf
  %495 = vmax.xlane.f32.xlu0 %v494
  %v496 = vpop.xlane.xlu0 %495
  %v497 = vsel %vm484, %v480, -inf
  %498 = vmax.xlane.f32.xlu0 %v497
  %v499 = vpop.xlane.xlu0 %498
  %v500 = vsel %vm484, %v481, -inf
  %501 = vmax.xlane.f32.xlu0 %v500
  %v502 = vpop.xlane.xlu0 %501
  %v503 = vsel %vm484, %v482, -inf
  %504 = vmax.xlane.f32.xlu0 %v503
  %v505 = vpop.xlane.xlu0 %504
  %v506 = vsel %vm484, %v483, -inf
  %507 = vmax.xlane.f32.xlu0 %v506
  %v508 = vpop.xlane.xlu0 %507
  %v509 = vsub.f32 %v476, %v487
  %v510 = vsub.f32 %v477, %v490
  %v511 = vsub.f32 %v478, %v493
  %v512 = vsub.f32 %v479, %v496
  %v513 = vsub.f32 %v480, %v499
  %v514 = vsub.f32 %v481, %v502
  %v515 = vsub.f32 %v482, %v505
  %v516 = vsub.f32 %v483, %v508
  %v517 = vmul.f32 %v509, 1.442695
  %v518 = vpow.pop %v517
  %v519 = vmul.f32 %v510, 1.442695
  %v520 = vpow.pop %v519
  %v521 = vmul.f32 %v511, 1.442695
  %v522 = vpow.pop %v521
  %v523 = vmul.f32 %v512, 1.442695
  %v524 = vpow.pop %v523
  %v525 = vmul.f32 %v513, 1.442695
  %v526 = vpow.pop %v525
  %v527 = vmul.f32 %v514, 1.442695
  %v528 = vpow.pop %v527
  %v529 = vmul.f32 %v515, 1.442695
  %v530 = vpow.pop %v529
  %v531 = vmul.f32 %v516, 1.442695
  %v532 = vpow.pop %v531
  %v533 = vsel %vm484, %v518, 0.0
  %534 = vadd.xlane.f32.xlu0 %v533
  %v535 = vpop.xlane.xlu0 %534
  %v536 = vsel %vm484, %v520, 0.0
  %537 = vadd.xlane.f32.xlu0 %v536
  %v538 = vpop.xlane.xlu0 %537
  %v539 = vsel %vm484, %v522, 0.0
  %540 = vadd.xlane.f32.xlu0 %v539
  %v541 = vpop.xlane.xlu0 %540
  %v542 = vsel %vm484, %v524, 0.0
  %543 = vadd.xlane.f32.xlu0 %v542
  %v544 = vpop.xlane.xlu0 %543
  %v545 = vsel %vm484, %v526, 0.0
  %546 = vadd.xlane.f32.xlu0 %v545
  %v547 = vpop.xlane.xlu0 %546
  %v548 = vsel %vm484, %v528, 0.0
  %549 = vadd.xlane.f32.xlu0 %v548
  %v550 = vpop.xlane.xlu0 %549
  %v551 = vsel %vm484, %v530, 0.0
  %552 = vadd.xlane.f32.xlu0 %v551
  %v553 = vpop.xlane.xlu0 %552
  %v554 = vsel %vm484, %v532, 0.0
  %555 = vadd.xlane.f32.xlu0 %v554
  %v556 = vpop.xlane.xlu0 %555
  %v557 = vrcp.pop %v535
  %v558 = vrcp.pop %v538
  %v559 = vrcp.pop %v541
  %v560 = vrcp.pop %v544
  %v561 = vrcp.pop %v547
  %v562 = vrcp.pop %v550
  %v563 = vrcp.pop %v553
  %v564 = vrcp.pop %v556
  %v565 = vmul.f32 %v518, %v557
  %v566 = vmul.f32 %v520, %v558
  %v567 = vmul.f32 %v522, %v559
  %v568 = vmul.f32 %v524, %v560
  %v569 = vmul.f32 %v526, %v561
  %v570 = vmul.f32 %v528, %v562
  %v571 = vmul.f32 %v530, %v563
  %v572 = vmul.f32 %v532, %v564
  %v574 = vsel %vm484, %v565, 0
  %v577 = vsel %vm484, %v566, 0
  %v580 = vsel %vm484, %v567, 0
  %v583 = vsel %vm484, %v568, 0
  %v586 = vsel %vm484, %v569, 0
  %v589 = vsel %vm484, %v570, 0
  %v592 = vsel %vm484, %v571, 0
  %v595 = vsel %vm484, %v572, 0
  %597 = vmatprep.subr.mxu0 0.0
  %598 = vmatpush1.msra.mxu0 0.0
  %599 = vmatprep.subr.mxu0 0.0
  %600 = vmatpush1.msra.mxu0 0.0
  %601 = vmatprep.subr.mxu0 0.0
  %602 = vmatpush1.msra.mxu0 0.0
  %603 = vmatprep.subr.mxu0 0.0
  %604 = vmatpush1.msra.mxu0 0.0
  %605 = vmatprep.subr.mxu0 0.0
  %606 = vmatpush1.msra.mxu0 0.0
  %607 = vmatprep.subr.mxu0 0.0
  %608 = vmatpush1.msra.mxu0 0.0
  %609 = vmatprep.subr.mxu0 0.0
  %610 = vmatpush1.msra.mxu0 0.0
  %611 = vmatprep.subr.mxu0 0.0
  %612 = vmatpush1.msra.mxu0 0.0
  %613 = vmatprep.subr.mxu0 0.0
  %614 = vmatpush1.msra.mxu0 %v325
  %615 = vmatprep.subr.mxu0 0.0
  %616 = vmatpush1.msra.mxu0 %v320
  %617 = vmatprep.subr.mxu0 0.0
  %618 = vmatpush1.msra.mxu0 %v315
  %619 = vmatprep.subr.mxu0 0.0
  %620 = vmatpush1.msra.mxu0 %v310
  %621 = vmatprep.subr.mxu0 0.0
  %622 = vmatpush1.msra.mxu0 %v305
  %623 = vmatprep.subr.mxu0 0.0
  %624 = vmatpush1.msra.mxu0 %v300
  %625 = vmatprep.subr.mxu0 0.0
  %626 = vmatpush1.msra.mxu0 %v295
  %627 = vmatprep.subr.mxu0 0.0
  %628 = vmatpush1.msra.mxu0 %v290
  %629 = vmatprep.subr.mxu0 0.0
  %630 = vmatpush2.msra.mxu0 0.0
  %631 = vmatprep.subr.mxu0 0.0
  %632 = vmatpush2.msra.mxu0 0.0
  %633 = vmatprep.subr.mxu0 0.0
  %634 = vmatpush2.msra.mxu0 0.0
  %635 = vmatprep.subr.mxu0 0.0
  %636 = vmatpush2.msra.mxu0 0.0
  %637 = vmatprep.subr.mxu0 0.0
  %638 = vmatpush2.msra.mxu0 0.0
  %639 = vmatprep.subr.mxu0 0.0
  %640 = vmatpush2.msra.mxu0 0.0
  %641 = vmatprep.subr.mxu0 0.0
  %642 = vmatpush2.msra.mxu0 0.0
  %643 = vmatprep.subr.mxu0 0.0
  %644 = vmatpush2.msra.mxu0 0.0
  %645 = vmatprep.subr.mxu0 0.0
  %646 = vmatpush2.msra.mxu0 0.0
  %647 = vmatprep.subr.mxu0 0.0
  %648 = vmatpush2.msra.mxu0 0.0
  %649 = vmatprep.subr.mxu0 0.0
  %650 = vmatpush2.msra.mxu0 0.0
  %651 = vmatprep.subr.mxu0 0.0
  %652 = vmatpush2.msra.mxu0 0.0
  %653 = vmatprep.subr.mxu0 0.0
  %654 = vmatpush2.msra.mxu0 0.0
  %655 = vmatprep.subr.mxu0 0.0
  %656 = vmatpush2.msra.mxu0 0.0
  %657 = vmatprep.subr.mxu0 0.0
  %658 = vmatpush2.msra.mxu0 0.0
  %659 = vmatprep.subr.mxu0 0.0
  %660 = vmatpush2.msra.mxu0 0.0
  %661 = vmatprep.mubr.f32.mxu0 0.0
  %662 = vmatmul.mubr.f32.gmra.mxu0 %v574
  %v663 = vpop.f32.mrf.mxu0
  %v664 = vadd.f32 0.0, %v663
  %v665 = vpop.f32.mrf.mxu0
  %666 = vmatprep.mubr.f32.mxu0 0.0
  %667 = vmatmul.mubr.f32.gmra.mxu0 %v577
  %v668 = vpop.f32.mrf.mxu0
  %v669 = vadd.f32 0.0, %v668
  %v670 = vpop.f32.mrf.mxu0
  %671 = vmatprep.mubr.f32.mxu0 0.0
  %672 = vmatmul.mubr.f32.gmra.mxu0 %v580
  %v673 = vpop.f32.mrf.mxu0
  %v674 = vadd.f32 0.0, %v673
  %v675 = vpop.f32.mrf.mxu0
  %676 = vmatprep.mubr.f32.mxu0 0.0
  %677 = vmatmul.mubr.f32.gmra.mxu0 %v583
  %v678 = vpop.f32.mrf.mxu0
  %v679 = vadd.f32 0.0, %v678
  %v680 = vpop.f32.mrf.mxu0
  %681 = vmatprep.mubr.f32.mxu0 0.0
  %682 = vmatmul.mubr.f32.gmra.mxu0 %v586
  %v683 = vpop.f32.mrf.mxu0
  %v684 = vadd.f32 0.0, %v683
  %v685 = vpop.f32.mrf.mxu0
  %686 = vmatprep.mubr.f32.mxu0 0.0
  %687 = vmatmul.mubr.f32.gmra.mxu0 %v589
  %v688 = vpop.f32.mrf.mxu0
  %v689 = vadd.f32 0.0, %v688
  %v690 = vpop.f32.mrf.mxu0
  %691 = vmatprep.mubr.f32.mxu0 0.0
  %692 = vmatmul.mubr.f32.gmra.mxu0 %v592
  %v693 = vpop.f32.mrf.mxu0
  %v694 = vadd.f32 0.0, %v693
  %v695 = vpop.f32.mrf.mxu0
  %696 = vmatprep.mubr.f32.mxu0 0.0
  %697 = vmatmul.mubr.f32.gmra.mxu0 %v595
  %v698 = vpop.f32.mrf.mxu0
  %v699 = vadd.f32 0.0, %v698
  %v700 = vpop.f32.mrf.mxu0
  %701 = vdwg.mxu0
  %vm702 = vcmp.gt.f32.partialorder %v664, 0.0
  %vm703 = vcmp.gt.f32.partialorder %v669, 0.0
  %vm704 = vcmp.gt.f32.partialorder %v674, 0.0
  %vm705 = vcmp.gt.f32.partialorder %v679, 0.0
  %vm706 = vcmp.gt.f32.partialorder %v684, 0.0
  %vm707 = vcmp.gt.f32.partialorder %v689, 0.0
  %vm708 = vcmp.gt.f32.partialorder %v694, 0.0
  %vm709 = vcmp.gt.f32.partialorder %v699, 0.0
  %v710 = vmul.f32 %v664, 1.442695
  %v711 = vpow.pop %v710
  %v712 = vmul.f32 %v669, 1.442695
  %v713 = vpow.pop %v712
  %v714 = vmul.f32 %v674, 1.442695
  %v715 = vpow.pop %v714
  %v716 = vmul.f32 %v679, 1.442695
  %v717 = vpow.pop %v716
  %v718 = vmul.f32 %v684, 1.442695
  %v719 = vpow.pop %v718
  %v720 = vmul.f32 %v689, 1.442695
  %v721 = vpow.pop %v720
  %v722 = vmul.f32 %v694, 1.442695
  %v723 = vpow.pop %v722
  %v724 = vmul.f32 %v699, 1.442695
  %v725 = vpow.pop %v724
  %v726 = vsub.f32 %v711, 1.0
  %v727 = vsub.f32 %v713, 1.0
  %v728 = vsub.f32 %v715, 1.0
  %v729 = vsub.f32 %v717, 1.0
  %v730 = vsub.f32 %v719, 1.0
  %v731 = vsub.f32 %v721, 1.0
  %v732 = vsub.f32 %v723, 1.0
  %v733 = vsub.f32 %v725, 1.0
  %v734 = vsel %vm702, %v664, %v726
  %v735 = vsel %vm703, %v669, %v727
  %v736 = vsel %vm704, %v674, %v728
  %v737 = vsel %vm705, %v679, %v729
  %v738 = vsel %vm706, %v684, %v730
  %v739 = vsel %vm707, %v689, %v731
  %v740 = vsel %vm708, %v694, %v732
  %v741 = vsel %vm709, %v699, %v733
  %v742 = vsel %vm484, %v734, -inf
  %743 = vmax.xlane.f32.xlu0 %v742
  %v744 = vpop.xlane.xlu0 %743
  %v745 = vsel %vm484, %v735, -inf
  %746 = vmax.xlane.f32.xlu0 %v745
  %v747 = vpop.xlane.xlu0 %746
  %v748 = vsel %vm484, %v736, -inf
  %749 = vmax.xlane.f32.xlu0 %v748
  %v750 = vpop.xlane.xlu0 %749
  %v751 = vsel %vm484, %v737, -inf
  %752 = vmax.xlane.f32.xlu0 %v751
  %v753 = vpop.xlane.xlu0 %752
  %v754 = vsel %vm484, %v738, -inf
  %755 = vmax.xlane.f32.xlu0 %v754
  %v756 = vpop.xlane.xlu0 %755
  %v757 = vsel %vm484, %v739, -inf
  %758 = vmax.xlane.f32.xlu0 %v757
  %v759 = vpop.xlane.xlu0 %758
  %v760 = vsel %vm484, %v740, -inf
  %761 = vmax.xlane.f32.xlu0 %v760
  %v762 = vpop.xlane.xlu0 %761
  %v763 = vsel %vm484, %v741, -inf
  %764 = vmax.xlane.f32.xlu0 %v763
  %v765 = vpop.xlane.xlu0 %764
  %v766 = vsub.f32 %v734, %v744
  %v767 = vsub.f32 %v735, %v747
  %v768 = vsub.f32 %v736, %v750
  %v769 = vsub.f32 %v737, %v753
  %v770 = vsub.f32 %v738, %v756
  %v771 = vsub.f32 %v739, %v759
  %v772 = vsub.f32 %v740, %v762
  %v773 = vsub.f32 %v741, %v765
  %v774 = vmul.f32 %v766, 1.442695
  %v775 = vpow.pop %v774
  %v776 = vmul.f32 %v767, 1.442695
  %v777 = vpow.pop %v776
  %v778 = vmul.f32 %v768, 1.442695
  %v779 = vpow.pop %v778
  %v780 = vmul.f32 %v769, 1.442695
  %v781 = vpow.pop %v780
  %v782 = vmul.f32 %v770, 1.442695
  %v783 = vpow.pop %v782
  %v784 = vmul.f32 %v771, 1.442695
  %v785 = vpow.pop %v784
  %v786 = vmul.f32 %v772, 1.442695
  %v787 = vpow.pop %v786
  %v788 = vmul.f32 %v773, 1.442695
  %v789 = vpow.pop %v788
  %v790 = vsel %vm484, %v775, 0.0
  %791 = vadd.xlane.f32.xlu0 %v790
  %v792 = vpop.xlane.xlu0 %791
  %v793 = vsel %vm484, %v777, 0.0
  %794 = vadd.xlane.f32.xlu0 %v793
  %v795 = vpop.xlane.xlu0 %794
  %v796 = vsel %vm484, %v779, 0.0
  %797 = vadd.xlane.f32.xlu0 %v796
  %v798 = vpop.xlane.xlu0 %797
  %v799 = vsel %vm484, %v781, 0.0
  %800 = vadd.xlane.f32.xlu0 %v799
  %v801 = vpop.xlane.xlu0 %800
  %v802 = vsel %vm484, %v783, 0.0
  %803 = vadd.xlane.f32.xlu0 %v802
  %v804 = vpop.xlane.xlu0 %803
  %v805 = vsel %vm484, %v785, 0.0
  %806 = vadd.xlane.f32.xlu0 %v805
  %v807 = vpop.xlane.xlu0 %806
  %v808 = vsel %vm484, %v787, 0.0
  %809 = vadd.xlane.f32.xlu0 %v808
  %v810 = vpop.xlane.xlu0 %809
  %v811 = vsel %vm484, %v789, 0.0
  %812 = vadd.xlane.f32.xlu0 %v811
  %v813 = vpop.xlane.xlu0 %812
  %v814 = vlog2.pop %v792
  %v815 = vmul.f32 %v814, 0.6931472
  %v816 = vlog2.pop %v795
  %v817 = vmul.f32 %v816, 0.6931472
  %v818 = vlog2.pop %v798
  %v819 = vmul.f32 %v818, 0.6931472
  %v820 = vlog2.pop %v801
  %v821 = vmul.f32 %v820, 0.6931472
  %v822 = vlog2.pop %v804
  %v823 = vmul.f32 %v822, 0.6931472
  %v824 = vlog2.pop %v807
  %v825 = vmul.f32 %v824, 0.6931472
  %v826 = vlog2.pop %v810
  %v827 = vmul.f32 %v826, 0.6931472
  %v828 = vlog2.pop %v813
  %v829 = vmul.f32 %v828, 0.6931472
  %v830 = vsub.f32 %v766, %v815
  %v831 = vsub.f32 %v767, %v817
  %v832 = vsub.f32 %v768, %v819
  %v833 = vsub.f32 %v769, %v821
  %v834 = vsub.f32 %v770, %v823
  %v835 = vsub.f32 %v771, %v825
  %v836 = vsub.f32 %v772, %v827
  %v837 = vsub.f32 %v773, %v829
  %838 = vst.msk [vmem:[%s3] sm:$0xff] %vm484, %v830
  %839 = vst.msk [vmem:[%s3 + $0x8] sm:$0xff] %vm484, %v831
  %840 = vst.msk [vmem:[%s3 + $0x10] sm:$0xff] %vm484, %v832
  %841 = vst.msk [vmem:[%s3 + $0x18] sm:$0xff] %vm484, %v833
  %842 = vst.msk [vmem:[%s3 + $0x20] sm:$0xff] %vm484, %v834
  %843 = vst.msk [vmem:[%s3 + $0x28] sm:$0xff] %vm484, %v835
  %844 = vst.msk [vmem:[%s3 + $0x30] sm:$0xff] %vm484, %v836
  %845 = vst.msk [vmem:[%s3 + $0x38] sm:$0xff] %vm484, %v837
  // Predicated region
  $region14: #{holomol_forward.6} parent=0 // pred_check
    _
  $region15: #{holomol_forward.6} parent=0 // pred_check_branch
    %847 = sbr.rel (0) target = $region17
  $region16: #{holomol_forward.6} parent=0 // pred_region
    _
  $region17: #{holomol_forward.6} parent=0 // pred_fallthru
    _
  // Predicated region
  $region18: #{holomol_forward.6} parent=0 // pred_check
    _
  $region19: #{holomol_forward.6} parent=0 // pred_check_branch
    %849 = sbr.rel (0) target = $region21
  $region20: #{holomol_forward.6} parent=0 // pred_region
    _
  $region21: #{holomol_forward.6} parent=0 // pred_fallthru
    _

// kernel: holomol_forward.9
$region0: #{holomol_forward.9}
  #allocation0 [shape = 'u32[]', space=smem, size = 0x4, offset = 0x4, fixed_abs, tag = 'smem constant byte address 0x4 - core index']
  #allocation1 [shape = 'u32[144,128]{1,0:T(1,128)}', space=vmem, size = 0x12000, scoped, tag = 'internal scratch']
  %s0 = inlined_call_operand.vmem [shape: f32[64,128], index: 0, kind: input, shape index: {}]
  %s1 = inlined_call_operand.vmem [shape: f32[128,64], index: 1, kind: input, shape index: {}]
  %s2 = inlined_call_operand.hbm [shape: f32[64,64], index: 2, kind: output, shape index: {}]
  %s3 = sld [smem:[#allocation0]]
  $region18: #{holomol_forward.9} parent=0
    _
  %s5 = ssub.s32 1, %s3
  %s6 = scalar_select 0, %s5, %s3
  $region1: #{holomol_forward.9} parent=0
    #allocation2 [shape = 'u8[32768]{0}', space=vmem, size = 0x8000, scoped, tag = 'output window, operand 0, single buffered']
    #allocation3 [shape = 's32[1]{0}', space=sflag, size = 0x4, scoped, tag = 'scoped memory for holomol_forward.9']
    %7 = vsyncpa [#allocation3], 0
    // Predicated region
    $region2: #{holomol_forward.9} parent=1 // pred_check
      _
    $region3: #{holomol_forward.9} parent=1 // pred_check_branch
      %9 = sbr.rel (0) target = $region5
    $region4: #{holomol_forward.9} parent=1 // pred_region
      _
    $region5: #{holomol_forward.9} parent=1 // pred_fallthru
      _
    // Predicated region
    $region6: #{holomol_forward.9} parent=1 // pred_check
      _
    $region7: #{holomol_forward.9} parent=1 // pred_check_branch
      %11 = sbr.rel (0) target = $region9
    $region8: #{holomol_forward.9} parent=1 // pred_region
      _
    $region9: #{holomol_forward.9} parent=1 // pred_fallthru
      _
    %v12 = vld [vmem:[%s0] sm:$0xff]
    %v13 = vld [vmem:[%s0 + $0x8] sm:$0xff]
    %v14 = vld [vmem:[%s0 + $0x10] sm:$0xff]
    %v15 = vld [vmem:[%s0 + $0x18] sm:$0xff]
    %v16 = vld [vmem:[%s0 + $0x20] sm:$0xff]
    %v17 = vld [vmem:[%s0 + $0x28] sm:$0xff]
    %v18 = vld [vmem:[%s0 + $0x30] sm:$0xff]
    %v19 = vld [vmem:[%s0 + $0x38] sm:$0xff]
    %v20 = vld [vmem:[%s1] sm:$0xff]
    %v21 = vld [vmem:[%s1 + $0x8] sm:$0xff]
    %v22 = vld [vmem:[%s1 + $0x10] sm:$0xff]
    %v23 = vld [vmem:[%s1 + $0x18] sm:$0xff]
    %v24 = vld [vmem:[%s1 + $0x20] sm:$0xff]
    %v25 = vld [vmem:[%s1 + $0x28] sm:$0xff]
    %v26 = vld [vmem:[%s1 + $0x30] sm:$0xff]
    %v27 = vld [vmem:[%s1 + $0x38] sm:$0xff]
    %v28 = vld [vmem:[%s1 + $0x40] sm:$0xff]
    %v29 = vld [vmem:[%s1 + $0x48] sm:$0xff]
    %v30 = vld [vmem:[%s1 + $0x50] sm:$0xff]
    %v31 = vld [vmem:[%s1 + $0x58] sm:$0xff]
    %v32 = vld [vmem:[%s1 + $0x60] sm:$0xff]
    %v33 = vld [vmem:[%s1 + $0x68] sm:$0xff]
    %v34 = vld [vmem:[%s1 + $0x70] sm:$0xff]
    %v35 = vld [vmem:[%s1 + $0x78] sm:$0xff]
    %36 = vmatprep.subr.mxu0 0.0
    %37 = vmatpush1.msra.mxu0 %v35
    %38 = vmatprep.subr.mxu0 0.0
    %39 = vmatpush1.msra.mxu0 %v34
    %40 = vmatprep.subr.mxu0 0.0
    %41 = vmatpush1.msra.mxu0 %v33
    %42 = vmatprep.subr.mxu0 0.0
    %43 = vmatpush1.msra.mxu0 %v32
    %44 = vmatprep.subr.mxu0 0.0
    %45 = vmatpush1.msra.mxu0 %v31
    %46 = vmatprep.subr.mxu0 0.0
    %47 = vmatpush1.msra.mxu0 %v30
    %48 = vmatprep.subr.mxu0 0.0
    %49 = vmatpush1.msra.mxu0 %v29
    %50 = vmatprep.subr.mxu0 0.0
    %51 = vmatpush1.msra.mxu0 %v28
    %52 = vmatprep.subr.mxu0 0.0
    %53 = vmatpush1.msra.mxu0 %v27
    %54 = vmatprep.subr.mxu0 0.0
    %55 = vmatpush1.msra.mxu0 %v26
    %56 = vmatprep.subr.mxu0 0.0
    %57 = vmatpush1.msra.mxu0 %v25
    %58 = vmatprep.subr.mxu0 0.0
    %59 = vmatpush1.msra.mxu0 %v24
    %60 = vmatprep.subr.mxu0 0.0
    %61 = vmatpush1.msra.mxu0 %v23
    %62 = vmatprep.subr.mxu0 0.0
    %63 = vmatpush1.msra.mxu0 %v22
    %64 = vmatprep.subr.mxu0 0.0
    %65 = vmatpush1.msra.mxu0 %v21
    %66 = vmatprep.subr.mxu0 0.0
    %67 = vmatpush1.msra.mxu0 %v20
    %68 = vmatprep.subr.mxu0 0.0
    %69 = vmatpush2.msra.mxu0 0.0
    %70 = vmatprep.subr.mxu0 0.0
    %71 = vmatpush2.msra.mxu0 0.0
    %72 = vmatprep.subr.mxu0 0.0
    %73 = vmatpush2.msra.mxu0 0.0
    %74 = vmatprep.subr.mxu0 0.0
    %75 = vmatpush2.msra.mxu0 0.0
    %76 = vmatprep.subr.mxu0 0.0
    %77 = vmatpush2.msra.mxu0 0.0
    %78 = vmatprep.subr.mxu0 0.0
    %79 = vmatpush2.msra.mxu0 0.0
    %80 = vmatprep.subr.mxu0 0.0
    %81 = vmatpush2.msra.mxu0 0.0
    %82 = vmatprep.subr.mxu0 0.0
    %83 = vmatpush2.msra.mxu0 0.0
    %84 = vmatprep.subr.mxu0 0.0
    %85 = vmatpush2.msra.mxu0 0.0
    %86 = vmatprep.subr.mxu0 0.0
    %87 = vmatpush2.msra.mxu0 0.0
    %88 = vmatprep.subr.mxu0 0.0
    %89 = vmatpush2.msra.mxu0 0.0
    %90 = vmatprep.subr.mxu0 0.0
    %91 = vmatpush2.msra.mxu0 0.0
    %92 = vmatprep.subr.mxu0 0.0
    %93 = vmatpush2.msra.mxu0 0.0
    %94 = vmatprep.subr.mxu0 0.0
    %95 = vmatpush2.msra.mxu0 0.0
    %96 = vmatprep.subr.mxu0 0.0
    %97 = vmatpush2.msra.mxu0 0.0
    %98 = vmatprep.subr.mxu0 0.0
    %99 = vmatpush2.msra.mxu0 0.0
    %100 = vmatprep.mubr.f32.mxu0 0.0
    %101 = vmatmul.mubr.f32.gmra.mxu0 %v12
    %v102 = vpop.f32.mrf.mxu0
    %v103 = vadd.f32 0.0, %v102
    %v104 = vpop.f32.mrf.mxu0
    %105 = vmatprep.mubr.f32.mxu0 0.0
    %106 = vmatmul.mubr.f32.gmra.mxu0 %v13
    %v107 = vpop.f32.mrf.mxu0
    %v108 = vadd.f32 0.0, %v107
    %v109 = vpop.f32.mrf.mxu0
    %110 = vmatprep.mubr.f32.mxu0 0.0
    %111 = vmatmul.mubr.f32.gmra.mxu0 %v14
    %v112 = vpop.f32.mrf.mxu0
    %v113 = vadd.f32 0.0, %v112
    %v114 = vpop.f32.mrf.mxu0
    %115 = vmatprep.mubr.f32.mxu0 0.0
    %116 = vmatmul.mubr.f32.gmra.mxu0 %v15
    %v117 = vpop.f32.mrf.mxu0
    %v118 = vadd.f32 0.0, %v117
    %v119 = vpop.f32.mrf.mxu0
    %120 = vmatprep.mubr.f32.mxu0 0.0
    %121 = vmatmul.mubr.f32.gmra.mxu0 %v16
    %v122 = vpop.f32.mrf.mxu0
    %v123 = vadd.f32 0.0, %v122
    %v124 = vpop.f32.mrf.mxu0
    %125 = vmatprep.mubr.f32.mxu0 0.0
    %126 = vmatmul.mubr.f32.gmra.mxu0 %v17
    %v127 = vpop.f32.mrf.mxu0
    %v128 = vadd.f32 0.0, %v127
    %v129 = vpop.f32.mrf.mxu0
    %130 = vmatprep.mubr.f32.mxu0 0.0
    %131 = vmatmul.mubr.f32.gmra.mxu0 %v18
    %v132 = vpop.f32.mrf.mxu0
    %v133 = vadd.f32 0.0, %v132
    %v134 = vpop.f32.mrf.mxu0
    %135 = vmatprep.mubr.f32.mxu0 0.0
    %136 = vmatmul.mubr.f32.gmra.mxu0 %v19
    %v137 = vpop.f32.mrf.mxu0
    %v138 = vadd.f32 0.0, %v137
    %v139 = vpop.f32.mrf.mxu0
    %140 = vdwg.mxu0
    %vm141 = vcmask 523264
    %v142 = vsel %vm141, %v103, -inf
    %143 = vmax.xlane.f32.xlu0 %v142
    %v144 = vpop.xlane.xlu0 %143
    %v145 = vsel %vm141, %v108, -inf
    %146 = vmax.xlane.f32.xlu0 %v145
    %v147 = vpop.xlane.xlu0 %146
    %v148 = vsel %vm141, %v113, -inf
    %149 = vmax.xlane.f32.xlu0 %v148
    %v150 = vpop.xlane.xlu0 %149
    %v151 = vsel %vm141, %v118, -inf
    %152 = vmax.xlane.f32.xlu0 %v151
    %v153 = vpop.xlane.xlu0 %152
    %v154 = vsel %vm141, %v123, -inf
    %155 = vmax.xlane.f32.xlu0 %v154
    %v156 = vpop.xlane.xlu0 %155
    %v157 = vsel %vm141, %v128, -inf
    %158 = vmax.xlane.f32.xlu0 %v157
    %v159 = vpop.xlane.xlu0 %158
    %v160 = vsel %vm141, %v133, -inf
    %161 = vmax.xlane.f32.xlu0 %v160
    %v162 = vpop.xlane.xlu0 %161
    %v163 = vsel %vm141, %v138, -inf
    %164 = vmax.xlane.f32.xlu0 %v163
    %v165 = vpop.xlane.xlu0 %164
    %v166 = vsub.f32 %v103, %v144
    %v167 = vsub.f32 %v108, %v147
    %v168 = vsub.f32 %v113, %v150
    %v169 = vsub.f32 %v118, %v153
    %v170 = vsub.f32 %v123, %v156
    %v171 = vsub.f32 %v128, %v159
    %v172 = vsub.f32 %v133, %v162
    %v173 = vsub.f32 %v138, %v165
    %v174 = vmul.f32 %v166, 1.442695
    %v175 = vpow.pop %v174
    %v176 = vmul.f32 %v167, 1.442695
    %v177 = vpow.pop %v176
    %v178 = vmul.f32 %v168, 1.442695
    %v179 = vpow.pop %v178
    %v180 = vmul.f32 %v169, 1.442695
    %v181 = vpow.pop %v180
    %v182 = vmul.f32 %v170, 1.442695
    %v183 = vpow.pop %v182
    %v184 = vmul.f32 %v171, 1.442695
    %v185 = vpow.pop %v184
    %v186 = vmul.f32 %v172, 1.442695
    %v187 = vpow.pop %v186
    %v188 = vmul.f32 %v173, 1.442695
    %v189 = vpow.pop %v188
    %v190 = vsel %vm141, %v175, 0.0
    %191 = vadd.xlane.f32.xlu0 %v190
    %v192 = vpop.xlane.xlu0 %191
    %v193 = vsel %vm141, %v177, 0.0
    %194 = vadd.xlane.f32.xlu0 %v193
    %v195 = vpop.xlane.xlu0 %194
    %v196 = vsel %vm141, %v179, 0.0
    %197 = vadd.xlane.f32.xlu0 %v196
    %v198 = vpop.xlane.xlu0 %197
    %v199 = vsel %vm141, %v181, 0.0
    %200 = vadd.xlane.f32.xlu0 %v199
    %v201 = vpop.xlane.xlu0 %200
    %v202 = vsel %vm141, %v183, 0.0
    %203 = vadd.xlane.f32.xlu0 %v202
    %v204 = vpop.xlane.xlu0 %203
    %v205 = vsel %vm141, %v185, 0.0
    %206 = vadd.xlane.f32.xlu0 %v205
    %v207 = vpop.xlane.xlu0 %206
    %v208 = vsel %vm141, %v187, 0.0
    %209 = vadd.xlane.f32.xlu0 %v208
    %v210 = vpop.xlane.xlu0 %209
    %v211 = vsel %vm141, %v189, 0.0
    %212 = vadd.xlane.f32.xlu0 %v211
    %v213 = vpop.xlane.xlu0 %212
    %v214 = vlog2.pop %v192
    %v215 = vmul.f32 %v214, 0.6931472
    %v216 = vlog2.pop %v195
    %v217 = vmul.f32 %v216, 0.6931472
    %v218 = vlog2.pop %v198
    %v219 = vmul.f32 %v218, 0.6931472
    %v220 = vlog2.pop %v201
    %v221 = vmul.f32 %v220, 0.6931472
    %v222 = vlog2.pop %v204
    %v223 = vmul.f32 %v222, 0.6931472
    %v224 = vlog2.pop %v207
    %v225 = vmul.f32 %v224, 0.6931472
    %v226 = vlog2.pop %v210
    %v227 = vmul.f32 %v226, 0.6931472
    %v228 = vlog2.pop %v213
    %v229 = vmul.f32 %v228, 0.6931472
    %v230 = vsub.f32 %v166, %v215
    %v231 = vsub.f32 %v167, %v217
    %v232 = vsub.f32 %v168, %v219
    %v233 = vsub.f32 %v169, %v221
    %v234 = vsub.f32 %v170, %v223
    %v235 = vsub.f32 %v171, %v225
    %v236 = vsub.f32 %v172, %v227
    %v237 = vsub.f32 %v173, %v229
    %238 = vst.msk [vmem:[#allocation2] sm:$0xff] %vm141, %v230
    %239 = vst.msk [vmem:[#allocation2 + $0x8] sm:$0xff] %vm141, %v231
    %240 = vst.msk [vmem:[#allocation2 + $0x10] sm:$0xff] %vm141, %v232
    %241 = vst.msk [vmem:[#allocation2 + $0x18] sm:$0xff] %vm141, %v233
    %242 = vst.msk [vmem:[#allocation2 + $0x20] sm:$0xff] %vm141, %v234
    %243 = vst.msk [vmem:[#allocation2 + $0x28] sm:$0xff] %vm141, %v235
    %244 = vst.msk [vmem:[#allocation2 + $0x30] sm:$0xff] %vm141, %v236
    %245 = vst.msk [vmem:[#allocation2 + $0x38] sm:$0xff] %vm141, %v237
    // Predicated region
    $region10: #{holomol_forward.9} parent=1 // pred_check
      _
    $region11: #{holomol_forward.9} parent=1 // pred_check_branch
      %247 = sbr.rel (0) target = $region13
    $region12: #{holomol_forward.9} parent=1 // pred_region
      %s249 = ssub.s32 1024, 1024
      %250 = vsyncadd [#allocation3], %s249
      %s251 = sshll.u32 [#allocation2], 4
      %s252 = int_to_ptr.vmem [resolvable:$true] %s251
      %257 = dma.vmem_to_hbm [thread:$0]  %s252, 1024, %s2, [#allocation3], 128, 128, 8
    $region13: #{holomol_forward.9} parent=1 // pred_fallthru
      _
    // Predicated region
    $region14: #{holomol_forward.9} parent=1 // pred_check
      _
    $region15: #{holomol_forward.9} parent=1 // pred_check_branch
      %259 = sbr.rel (0) target = $region17
    $region16: #{holomol_forward.9} parent=1 // pred_region
      %260 = dma.done [#allocation3], 1024
    $region17: #{holomol_forward.9} parent=1 // pred_fallthru
      _
    %261 = vsyncpa [#allocation3], 1

</llo_original>
